<compile_context>
chip_gen: v5e
topology: v5e:2x2
jax: 0.10.0
libtpu: 0.0.40
codegen_flags: <defaults>
</compile_context>

<pallas_src>
import math
import numpy as np
import jax
import jax.numpy as jnp
from jax import lax
from jax.experimental import pallas as pl
from jax.experimental.pallas import tpu as pltpu

# ----------------------------- configuration --------------------------------
B = 2              # batch
C = 1              # audio channels (net in_channels=1)
AUDIO_LEN = 2048   # samples        (real: ~319360)
SR = 32000
N_FFT = 64         # real: 1024
WIN_LEN = 64       # real: 800
HOP = 32           # real: 320
N_MELS = 32        # real: 128
N_BINS = N_FFT // 2 + 1
N_BINS_PAD = 128   # lane-dense spectral-bin axis (real 513 -> 640)

PATCH = 8          # real: 16
FSTRIDE = 4        # real: 10
TSTRIDE = 4        # real: 10
EMBED_DIM = 64     # real: 768
DEPTH = 2          # real: 12
HEADS = 4          # real: 12
HEAD_DIM = EMBED_DIM // HEADS
MLP_HIDDEN = 4 * EMBED_DIM
OUT_DIM = 32       # real: 512 (self.linear 768->512)

N_FRAMES = 1 + (AUDIO_LEN - 1) // HOP                 # 64
FP = (N_MELS - PATCH) // FSTRIDE + 1                  # 7
TP = (N_FRAMES - PATCH) // TSTRIDE + 1                # 15
N_PATCHES = FP * TP                                   # 105
TOK_PREFIX = 8                                        # rows 0=cls,1=dist,2..7 pad
SEQ_PAD = 128                                         # padded token axis (8,128 aligned)
assert TOK_PREFIX + N_PATCHES <= SEQ_PAD


# ----------------------------- in-kernel helpers ------------------------------
def _ln(v, g, b, eps=1e-6):
    mu = jnp.mean(v, axis=-1, keepdims=True)
    var = jnp.mean((v - mu) ** 2, axis=-1, keepdims=True)
    return (v - mu) * lax.rsqrt(var + eps) * g + b


def _gelu(v):  # nn.GELU default = exact (erf)
    return 0.5 * v * (1.0 + lax.erf(v * (1.0 / math.sqrt(2.0))))


# ----------------------------- mel-spectrogram kernel ------------------------
def mel_pallas(frames, window, cossin, fb):
    """window*frames -> single combined cos|sin DFT matmul -> power -> mel -> log -> norm.

    Output is time-major (frames, n_mels) so no XLA transpose is needed later.
    """
    BC, F, NF = frames.shape
    NM = fb.shape[1]

    def kern(fr_ref, win_ref, cs_ref, fb_ref, o_ref):
        xw = fr_ref[0] * win_ref[...]                           # (F, NF) f32
        spec = jnp.dot(xw, cs_ref[...],
                       preferred_element_type=jnp.float32)      # (F, 2*NBP)
        re = spec[:, :N_BINS_PAD]                               # 128-aligned slices
        im = spec[:, N_BINS_PAD:]
        power = re * re + im * im                               # (F, NBP)
        mel = jnp.dot(power, fb_ref[...],
                      preferred_element_type=jnp.float32)       # (F, NM)
        mel = jnp.log(mel + 1e-5)
        o_ref[0] = (mel + 4.5) / 5.0                            # "fast normalization"

    return pl.pallas_call(
        kern,
        grid=(BC,),
        out_shape=jax.ShapeDtypeStruct((BC, F, NM), jnp.float32),
        in_specs=[pl.BlockSpec((1, F, NF), lambda i: (i, 0, 0)),
                  pl.BlockSpec((1, NF), lambda i: (0, 0)),
                  pl.BlockSpec((NF, 2 * N_BINS_PAD), lambda i: (0, 0)),
                  pl.BlockSpec((N_BINS_PAD, NM), lambda i: (0, 0))],
        out_specs=pl.BlockSpec((1, F, NM), lambda i: (i, 0, 0)),
        compiler_params=pltpu.CompilerParams(dimension_semantics=("parallel",)),
    )(frames, window, cossin, fb)


# ------------------- fused patch-embed + transformer + head ------------------
def passt_transformer_pallas(patches, pos, toks, p):
    """grid=(B, DEPTH): d==0 embeds patches into a VMEM-resident residual
    stream, every d applies one pre-LN block, d==DEPTH-1 applies the final
    LN + (cls+dist)/2 + head Linear.  Only (B, OUT_DIM) leaves VMEM."""
    Bb = patches.shape[0]
    D = EMBED_DIM
    scale = 1.0 / math.sqrt(HEAD_DIM)
    bp = p["blocks"]

    def kern(patch_ref, pw_ref, pb_ref, pos_ref, tok_ref,
             ln1g, ln1b, qkvw, qkvb, projw, projb,
             ln2g, ln2b, fc1w, fc1b, fc2w, fc2b,
             ng, nb, hw, hb,
             o_ref, x_res, attn_buf):
        d_step = pl.program_id(1)

        # ---- patch embed + pos emb + cls/dist tokens (first depth step) ----
        @pl.when(d_step == 0)
        def _():
            emb = jnp.dot(patch_ref[0].astype(jnp.bfloat16), pw_ref[...],
                          preferred_element_type=jnp.float32)
            emb = emb + pb_ref[...] + pos_ref[...]
            x_res[...] = jnp.zeros((SEQ_PAD, D), jnp.float32)
            x_res[0:2, :] = tok_ref[...]                         # cls, dist
            x_res[TOK_PREFIX:TOK_PREFIX + N_PATCHES, :] = emb    # aligned prefix

        x0 = x_res[...]                                          # (S, D) residual

        # ------------------------------ MHSA --------------------------------
        h1 = _ln(x0, ln1g[0], ln1b[0])
        qkv = jnp.dot(h1.astype(jnp.bfloat16), qkvw[0],
                      preferred_element_type=jnp.float32) + qkvb[0]   # (S, 3D)
        q_bf = (qkv[:, 0:D] * scale).astype(jnp.bfloat16)        # scale folded into q
        k_bf = qkv[:, D:2 * D].astype(jnp.bfloat16)
        v_bf = qkv[:, 2 * D:3 * D].astype(jnp.bfloat16)

        key_id = lax.broadcasted_iota(jnp.int32, (1, SEQ_PAD), 1)
        valid = (key_id < 2) | ((key_id >= TOK_PREFIX) &
                                (key_id < TOK_PREFIX + N_PATCHES))
        kbias = jnp.where(valid, 0.0, -1e30)                     # mask padded keys

        # Per-head dots via dot_general (contract ((1,),(1,)) -> no kh.T);
        # head outputs land in attn_buf lane-slices (no concatenate).
        # TODO(synk): at real HEAD_DIM=64 switch to a head-batched einsum /
        #             fori_loop reusing one (S,S) scratch.
        for hi in range(HEADS):
            lo = hi * HEAD_DIM
            s = lax.dot_general(q_bf[:, lo:lo + HEAD_DIM],
                                k_bf[:, lo:lo + HEAD_DIM],
                                dimension_numbers=(((1,), (1,)), ((), ())),
                                preferred_element_type=jnp.float32) + kbias
            s = s - jnp.max(s, axis=-1, keepdims=True)
            pr = jnp.exp(s)
            pr = pr * pl.reciprocal(jnp.sum(pr, axis=-1, keepdims=True),
                                    approx=True)
            attn_buf[:, lo:lo + HEAD_DIM] = jnp.dot(
                pr.astype(jnp.bfloat16), v_bf[:, lo:lo + HEAD_DIM],
                preferred_element_type=jnp.float32)

        o = jnp.dot(attn_buf[...].astype(jnp.bfloat16), projw[0],
                    preferred_element_type=jnp.float32) + projb[0]
        x1 = x0 + o                                              # residual in VMEM

        # ------------------------------ MLP ----------------------------------
        h2 = _ln(x1, ln2g[0], ln2b[0])
        hh = jnp.dot(h2.astype(jnp.bfloat16), fc1w[0],
                     preferred_element_type=jnp.float32) + fc1b[0]
        hh = _gelu(hh)
        hh = jnp.dot(hh.astype(jnp.bfloat16), fc2w[0],
                     preferred_element_type=jnp.float32) + fc2b[0]
        x2 = x1 + hh
        x_res[...] = x2

        # ---- final LN + (cls+dist)/2 + Linear head (last depth step) --------
        @pl.when(d_step == DEPTH - 1)
        def _():
            cd = _ln(x2[0:2, :], ng[...], nb[...])               # (2, D)
            emb = 0.5 * (cd[0:1, :] + cd[1:2, :])                # (1, D)
            o_ref[0] = jnp.dot(emb.astype(jnp.bfloat16), hw[...],
                               preferred_element_type=jnp.float32) + hb[...]

    const = lambda shp: pl.BlockSpec(shp, lambda b, d: (0, 0))
    depth = lambda shp: pl.BlockSpec((1,) + shp, lambda b, d: (d, 0, 0))

    grid_spec = pltpu.PrefetchScalarGridSpec(
        num_scalar_prefetch=0,
        grid=(Bb, DEPTH),
        in_specs=[
            pl.BlockSpec((1, N_PATCHES, PATCH * PATCH), lambda b, d: (b, 0, 0)),
            const((PATCH * PATCH, D)),                   # patch_w
            const((1, D)),                               # patch_b
            const((N_PATCHES, D)),                       # pos emb
            const((2, D)),                               # cls/dist tokens
            depth((1, D)), depth((1, D)),                # ln1 g,b
            depth((D, 3 * D)), depth((1, 3 * D)),        # qkv w,b
            depth((D, D)), depth((1, D)),                # proj w,b
            depth((1, D)), depth((1, D)),                # ln2 g,b
            depth((D, MLP_HIDDEN)), depth((1, MLP_HIDDEN)),  # fc1 w,b
            depth((MLP_HIDDEN, D)), depth((1, D)),       # fc2 w,b
            const((1, D)), const((1, D)),                # final norm g,b
            const((D, OUT_DIM)), const((1, OUT_DIM)),    # head w,b
        ],
        out_specs=pl.BlockSpec((1, 1, OUT_DIM), lambda b, d: (b, 0, 0)),
        scratch_shapes=[pltpu.VMEM((SEQ_PAD, D), jnp.float32),   # residual stream
                        pltpu.VMEM((SEQ_PAD, D), jnp.float32)],  # attn head buffer
    )
    out = pl.pallas_call(
        kern,
        grid_spec=grid_spec,
        out_shape=jax.ShapeDtypeStruct((Bb, 1, OUT_DIM), jnp.float32),
        compiler_params=pltpu.CompilerParams(
            dimension_semantics=("parallel", "arbitrary"),
            vmem_limit_bytes=32 * 1024 * 1024),
    )(patches,
      p["patch_w"], p["patch_b"], pos, toks,
      bp["ln1_g"], bp["ln1_b"], bp["qkv_w"], bp["qkv_b"],
      bp["proj_w"], bp["proj_b"], bp["ln2_g"], bp["ln2_b"],
      bp["fc1_w"], bp["fc1_b"], bp["fc2_w"], bp["fc2_b"],
      p["norm_g"], p["norm_b"], p["head_w"], p["head_b"])
    return out.reshape(Bb, OUT_DIM)


# ----------------------------- fixed DSP buffers ------------------------------
def hann_periodic(n):
    return (0.5 - 0.5 * np.cos(2.0 * np.pi * np.arange(n) / n)).astype(np.float32)


def centered_window(win_len, n_fft):
    w = hann_periodic(win_len)
    if win_len < n_fft:                      # torch.stft centers the window
        lpad = (n_fft - win_len) // 2
        w = np.pad(w, (lpad, n_fft - win_len - lpad))
    return w.astype(np.float32)


def dft_cossin(n_fft, n_bins_pad):
    """Concatenated [cos | sin] DFT matrix, each half zero-padded to 128 bins."""
    n_bins = n_fft // 2 + 1
    n = np.arange(n_fft)[:, None].astype(np.float64)
    k = np.arange(n_bins)[None, :].astype(np.float64)
    ang = 2.0 * np.pi * n * k / n_fft
    m = np.zeros((n_fft, 2 * n_bins_pad), np.float32)
    m[:, :n_bins] = np.cos(ang)
    m[:, n_bins_pad:n_bins_pad + n_bins] = np.sin(ang)
    return m


def mel_filterbank(n_mels, n_fft, sr, fmin, fmax, n_bins_pad):
    # TODO(synk): triangular 2/(r-l) weighting approximates Slaney area norm (norm=1).
    def hz2mel(f): return 2595.0 * np.log10(1.0 + f / 700.0)
    def mel2hz(m): return 700.0 * (10.0 ** (m / 2595.0) - 1.0)
    n_bins = n_fft // 2 + 1
    freqs = np.linspace(0.0, sr / 2.0, n_bins)
    mel_pts = np.linspace(hz2mel(fmin), hz2mel(fmax), n_mels + 2)
    hz_pts = mel2hz(mel_pts)
    fb = np.zeros((n_bins_pad, n_mels), np.float32)
    for m in range(n_mels):
        l, c, r = hz_pts[m], hz_pts[m + 1], hz_pts[m + 2]
        up = (freqs - l) / max(c - l, 1e-9)
        down = (r - freqs) / max(r - c, 1e-9)
        tri = np.maximum(0.0, np.minimum(up, down))
        fb[:n_bins, m] = tri * (2.0 / max(r - l, 1e-9))
    return fb


_WINDOW = jnp.asarray(centered_window(WIN_LEN, N_FFT)).reshape(1, N_FFT)
_COSSIN = jnp.asarray(dft_cossin(N_FFT, N_BINS_PAD))                    # f32
_MELFB = jnp.asarray(mel_filterbank(N_MELS, N_FFT, SR, 0.0, SR / 2.0,
                                    N_BINS_PAD))                        # f32


# ----------------------------- forward pass ----------------------------------
def mel_forward(x):
    """(B, C, L) audio -> (B, C, n_frames, n_mels) mel spectrogram (time-major)."""
    Bc, Cc, L = x.shape
    xa = x.reshape(Bc * Cc, L)
    # preemphasis conv1d with kernel [-0.97, 1]
    xa = xa[:, 1:] - 0.97 * xa[:, :-1]
    # torch.stft(center=True) reflect padding + framing
    # TODO(synk): at real scale do the framing in-kernel with pl.ds instead of
    #             this JAX gather (which materializes ~n_fft/hop x the audio).
    pad = N_FFT // 2
    xa = jnp.pad(xa, ((0, 0), (pad, pad)), mode="reflect")
    n_frames = 1 + (xa.shape[1] - N_FFT) // HOP
    idx = jnp.arange(n_frames)[:, None] * HOP + jnp.arange(N_FFT)[None, :]
    frames = xa[:, idx]                                     # (B*C, F, n_fft)
    mel = mel_pallas(frames, _WINDOW, _COSSIN, _MELFB)      # (B*C, F, n_mels)
    return mel.reshape(Bc, Cc, n_frames, N_MELS)            # time-major, no transpose


def passt_net(spec_t, p):
    """(B, 1, n_frames, n_mels) time-major spectrogram -> (B, OUT_DIM)."""
    Bb = spec_t.shape[0]
    x0 = spec_t[:, 0]                                        # (B, T, n_mels)
    # TODO(synk): overlapping-patch extraction stays as a JAX gather here; at
    #             real scale move it inside the fused kernel via scalar-
    #             prefetched offsets / pl.ds against a pl.ANY spectrogram ref.
    t_idx = (jnp.arange(TP) * TSTRIDE)[:, None] + jnp.arange(PATCH)[None, :]
    f_idx = (jnp.arange(FP) * FSTRIDE)[:, None] + jnp.arange(PATCH)[None, :]
    a = x0[:, t_idx, :]                                      # (B, TP, Pt, n_mels)
    b = a[:, :, :, f_idx]                                    # (B, TP, Pt, FP, Pf)
    patches = b.transpose(0, 3, 1, 4, 2).reshape(Bb, N_PATCHES, PATCH * PATCH)

    # disentangled freq/time positional embeddings (f-major, t-minor ordering)
    pos = (p["freq_pos"][:, None, :] + p["time_pos"][None, :, :]).reshape(
        N_PATCHES, EMBED_DIM)
    toks = jnp.stack([p["cls_tok"] + p["tok_pos"][0],
                      p["dist_tok"] + p["tok_pos"][1]], axis=0)      # (2, D)

    return passt_transformer_pallas(patches, pos, toks, p)


def my_passt_forward(x, params):
    spec = mel_forward(x)                                    # (B, C, T, n_mels)
    return passt_net(spec, params)                           # (B, OUT_DIM)


# ----------------------------- parameter init --------------------------------
def init_params(key):
    keys = iter(jax.random.split(key, 32))

    def nrm(shape, std=0.02, dtype=jnp.float32):
        return (std * jax.random.normal(next(keys), shape, jnp.float32)
                ).astype(dtype)

    bf = jnp.bfloat16
    D = EMBED_DIM
    return {
        "patch_w": nrm((PATCH * PATCH, D), dtype=bf),
        "patch_b": jnp.zeros((1, D), jnp.float32),
        "freq_pos": nrm((FP, D)),
        "time_pos": nrm((TP, D)),
        "tok_pos": nrm((2, D)),
        "cls_tok": nrm((D,)),
        "dist_tok": nrm((D,)),
        "norm_g": jnp.ones((1, D), jnp.float32),
        "norm_b": jnp.zeros((1, D), jnp.float32),
        "head_w": nrm((D, OUT_DIM), dtype=bf),
        "head_b": jnp.zeros((1, OUT_DIM), jnp.float32),
        # per-block weights stacked along a leading depth axis
        "blocks": {
            "ln1_g": jnp.ones((DEPTH, 1, D), jnp.float32),
            "ln1_b": jnp.zeros((DEPTH, 1, D), jnp.float32),
            "qkv_w": nrm((DEPTH, D, 3 * D), dtype=bf),
            "qkv_b": jnp.zeros((DEPTH, 1, 3 * D), jnp.float32),
            "proj_w": nrm((DEPTH, D, D), dtype=bf),
            "proj_b": jnp.zeros((DEPTH, 1, D), jnp.float32),
            "ln2_g": jnp.ones((DEPTH, 1, D), jnp.float32),
            "ln2_b": jnp.zeros((DEPTH, 1, D), jnp.float32),
            "fc1_w": nrm((DEPTH, D, MLP_HIDDEN), dtype=bf),
            "fc1_b": jnp.zeros((DEPTH, 1, MLP_HIDDEN), jnp.float32),
            "fc2_w": nrm((DEPTH, MLP_HIDDEN, D), dtype=bf),
            "fc2_b": jnp.zeros((DEPTH, 1, D), jnp.float32),
        },
    }


# ----------------------------------- main -------------------------------------
if __name__ == "__main__":
    root = jax.random.PRNGKey(0)
    k_in, k_par = jax.random.split(root)
    x = jax.random.normal(k_in, (B, C, AUDIO_LEN), dtype=jnp.float32)
    params = init_params(k_par)

    out = jax.jit(my_passt_forward)(x, params)
    out = jax.block_until_ready(out)

    assert out.shape == (B, OUT_DIM), out.shape
    assert bool(jnp.all(jnp.isfinite(out)))
    print("KERNEL_OK")
</pallas_src>

<mosaic_0001>
module attributes {stable_mosaic.version = 11 : i64} {
  func.func @kern(%arg0: i32, %arg1: memref<1x64x64xf32, #tpu.memory_space<vmem>>, %arg2: memref<1x64xf32, #tpu.memory_space<vmem>>, %arg3: memref<64x256xf32, #tpu.memory_space<vmem>>, %arg4: memref<128x32xf32, #tpu.memory_space<vmem>>, %arg5: memref<1x64x32xf32, #tpu.memory_space<vmem>>) attributes {dimension_semantics = [#tpu.dimension_semantics<parallel>], iteration_bounds = array<i64: 2>, scalar_prefetch = 0 : i64, scratch_operands = 0 : i64, tpu.core_type = #tpu.core_type<tc>, window_params = [{transform_indices = @transform_0, window_bounds = array<i64: 1, 64, 64>}, {pipeline_mode = #tpu.pipeline_mode<synchronous>, transform_indices = @transform_1, window_bounds = array<i64: 1, 64>}, {pipeline_mode = #tpu.pipeline_mode<synchronous>, transform_indices = @transform_2, window_bounds = array<i64: 64, 256>}, {pipeline_mode = #tpu.pipeline_mode<synchronous>, transform_indices = @transform_3, window_bounds = array<i64: 128, 32>}, {transform_indices = @transform_4, window_bounds = array<i64: 1, 64, 32>}]} {
    %c0 = arith.constant 0 : index
    %c0_0 = arith.constant 0 : index
    %c0_1 = arith.constant 0 : index
    %0 = vector.load %arg1[%c0, %c0_0, %c0_1] : memref<1x64x64xf32, #tpu.memory_space<vmem>>, vector<1x64x64xf32>
    %1 = vector.shape_cast %0 : vector<1x64x64xf32> to vector<64x64xf32>
    %c0_2 = arith.constant 0 : index
    %c0_3 = arith.constant 0 : index
    %2 = vector.load %arg2[%c0_2, %c0_3] : memref<1x64xf32, #tpu.memory_space<vmem>>, vector<1x64xf32>
    %3 = vector.broadcast %2 : vector<1x64xf32> to vector<64x64xf32>
    %4 = arith.mulf %1, %3 : vector<64x64xf32>
    %c0_4 = arith.constant 0 : index
    %c0_5 = arith.constant 0 : index
    %5 = vector.load %arg3[%c0_4, %c0_5] : memref<64x256xf32, #tpu.memory_space<vmem>>, vector<64x256xf32>
    %cst = arith.constant dense<0.000000e+00> : vector<64x256xf32>
    %6 = tpu.matmul %4, %5, %cst {dimension_numbers = #tpu.dot_dimension_numbers<[1], [0], [0], [1], [0, 0, 1, 1], [], []>} : vector<64x64xf32>, vector<64x256xf32>, vector<64x256xf32> -> vector<64x256xf32>
    %7 = vector.extract_strided_slice %6 {offsets = [0, 0], sizes = [64, 128], strides = [1, 1]} : vector<64x256xf32> to vector<64x128xf32>
    %8 = vector.extract_strided_slice %6 {offsets = [0, 128], sizes = [64, 128], strides = [1, 1]} : vector<64x256xf32> to vector<64x128xf32>
    %9 = arith.mulf %7, %7 : vector<64x128xf32>
    %10 = arith.mulf %8, %8 : vector<64x128xf32>
    %11 = arith.addf %9, %10 : vector<64x128xf32>
    %c0_6 = arith.constant 0 : index
    %c0_7 = arith.constant 0 : index
    %12 = vector.load %arg4[%c0_6, %c0_7] : memref<128x32xf32, #tpu.memory_space<vmem>>, vector<128x32xf32>
    %cst_8 = arith.constant dense<0.000000e+00> : vector<64x32xf32>
    %13 = tpu.matmul %11, %12, %cst_8 {dimension_numbers = #tpu.dot_dimension_numbers<[1], [0], [0], [1], [0, 0, 1, 1], [], []>} : vector<64x128xf32>, vector<128x32xf32>, vector<64x32xf32> -> vector<64x32xf32>
    %cst_9 = arith.constant 9.99999974E-6 : f32
    %14 = vector.broadcast %cst_9 : f32 to vector<64x32xf32>
    %15 = arith.addf %13, %14 : vector<64x32xf32>
    %16 = math.log %15 : vector<64x32xf32>
    %cst_10 = arith.constant 4.500000e+00 : f32
    %17 = vector.broadcast %cst_10 : f32 to vector<64x32xf32>
    %18 = arith.addf %16, %17 : vector<64x32xf32>
    %cst_11 = arith.constant 5.000000e+00 : f32
    %19 = vector.broadcast %cst_11 : f32 to vector<64x32xf32>
    %20 = arith.divf %18, %19 : vector<64x32xf32>
    %c0_12 = arith.constant 0 : index
    %c0_13 = arith.constant 0 : index
    %c0_14 = arith.constant 0 : index
    %21 = vector.load %arg5[%c0_12, %c0_13, %c0_14] : memref<1x64x32xf32, #tpu.memory_space<vmem>>, vector<1x64x32xf32>
    %22 = vector.shape_cast %21 : vector<1x64x32xf32> to vector<64x32xf32>
    %23 = vector.shape_cast %20 : vector<64x32xf32> to vector<1x64x32xf32>
    tpu.vector_store %arg5[%c0_12, %c0_13, %c0_14], %23 {strides = array<i32>} : memref<1x64x32xf32, #tpu.memory_space<vmem>>, vector<1x64x32xf32>,
    return
  }
  func.func @transform_0(%arg0: i32) -> (i32, i32, i32) {
    %c0_i32 = arith.constant 0 : i32
    %c0_i32_0 = arith.constant 0 : i32
    %c0_i32_1 = arith.constant 0 : i32
    return %arg0, %c0_i32, %c0_i32_0 : i32, i32, i32
  }
  func.func @transform_1(%arg0: i32) -> (i32, i32) {
    %c0_i32 = arith.constant 0 : i32
    %c0_i32_0 = arith.constant 0 : i32
    %c0_i32_1 = arith.constant 0 : i32
    return %c0_i32, %c0_i32_0 : i32, i32
  }
  func.func @transform_2(%arg0: i32) -> (i32, i32) {
    %c0_i32 = arith.constant 0 : i32
    %c0_i32_0 = arith.constant 0 : i32
    %c0_i32_1 = arith.constant 0 : i32
    return %c0_i32, %c0_i32_0 : i32, i32
  }
  func.func @transform_3(%arg0: i32) -> (i32, i32) {
    %c0_i32 = arith.constant 0 : i32
    %c0_i32_0 = arith.constant 0 : i32
    %c0_i32_1 = arith.constant 0 : i32
    return %c0_i32, %c0_i32_0 : i32, i32
  }
  func.func @transform_4(%arg0: i32) -> (i32, i32, i32) {
    %c0_i32 = arith.constant 0 : i32
    %c0_i32_0 = arith.constant 0 : i32
    %c0_i32_1 = arith.constant 0 : i32
    return %arg0, %c0_i32, %c0_i32_0 : i32, i32, i32
  }
}

module attributes {stable_mosaic.version = 11 : i64} {
  func.func @kern(%arg0: i32, %arg1: i32, %arg2: memref<1x105x64xf32, #tpu.memory_space<vmem>>, %arg3: memref<64x64xbf16, #tpu.memory_space<vmem>>, %arg4: memref<1x64xf32, #tpu.memory_space<vmem>>, %arg5: memref<105x64xf32, #tpu.memory_space<vmem>>, %arg6: memref<2x64xf32, #tpu.memory_space<vmem>>, %arg7: memref<1x1x64xf32, #tpu.memory_space<vmem>>, %arg8: memref<1x1x64xf32, #tpu.memory_space<vmem>>, %arg9: memref<1x64x192xbf16, #tpu.memory_space<vmem>>, %arg10: memref<1x1x192xf32, #tpu.memory_space<vmem>>, %arg11: memref<1x64x64xbf16, #tpu.memory_space<vmem>>, %arg12: memref<1x1x64xf32, #tpu.memory_space<vmem>>, %arg13: memref<1x1x64xf32, #tpu.memory_space<vmem>>, %arg14: memref<1x1x64xf32, #tpu.memory_space<vmem>>, %arg15: memref<1x64x256xbf16, #tpu.memory_space<vmem>>, %arg16: memref<1x1x256xf32, #tpu.memory_space<vmem>>, %arg17: memref<1x256x64xbf16, #tpu.memory_space<vmem>>, %arg18: memref<1x1x64xf32, #tpu.memory_space<vmem>>, %arg19: memref<1x64xf32, #tpu.memory_space<vmem>>, %arg20: memref<1x64xf32, #tpu.memory_space<vmem>>, %arg21: memref<64x32xbf16, #tpu.memory_space<vmem>>, %arg22: memref<1x32xf32, #tpu.memory_space<vmem>>, %arg23: memref<1x1x32xf32, #tpu.memory_space<vmem>>, %arg24: memref<128x64xf32, #tpu.memory_space<vmem>>, %arg25: memref<128x64xf32, #tpu.memory_space<vmem>>) attributes {dimension_semantics = [#tpu.dimension_semantics<parallel>, #tpu.dimension_semantics<arbitrary>], iteration_bounds = array<i64: 2, 2>, scalar_prefetch = 0 : i64, scratch_operands = 2 : i64, tpu.core_type = #tpu.core_type<tc>, window_params = [{transform_indices = @transform_0, window_bounds = array<i64: 1, 105, 64>}, {pipeline_mode = #tpu.pipeline_mode<synchronous>, transform_indices = @transform_1, window_bounds = array<i64: 64, 64>}, {pipeline_mode = #tpu.pipeline_mode<synchronous>, transform_indices = @transform_2, window_bounds = array<i64: 1, 64>}, {pipeline_mode = #tpu.pipeline_mode<synchronous>, transform_indices = @transform_3, window_bounds = array<i64: 105, 64>}, {pipeline_mode = #tpu.pipeline_mode<synchronous>, transform_indices = @transform_4, window_bounds = array<i64: 2, 64>}, {transform_indices = @transform_5, window_bounds = array<i64: 1, 1, 64>}, {transform_indices = @transform_6, window_bounds = array<i64: 1, 1, 64>}, {transform_indices = @transform_7, window_bounds = array<i64: 1, 64, 192>}, {transform_indices = @transform_8, window_bounds = array<i64: 1, 1, 192>}, {transform_indices = @transform_9, window_bounds = array<i64: 1, 64, 64>}, {transform_indices = @transform_10, window_bounds = array<i64: 1, 1, 64>}, {transform_indices = @transform_11, window_bounds = array<i64: 1, 1, 64>}, {transform_indices = @transform_12, window_bounds = array<i64: 1, 1, 64>}, {transform_indices = @transform_13, window_bounds = array<i64: 1, 64, 256>}, {transform_indices = @transform_14, window_bounds = array<i64: 1, 1, 256>}, {transform_indices = @transform_15, window_bounds = array<i64: 1, 256, 64>}, {transform_indices = @transform_16, window_bounds = array<i64: 1, 1, 64>}, {pipeline_mode = #tpu.pipeline_mode<synchronous>, transform_indices = @transform_17, window_bounds = array<i64: 1, 64>}, {pipeline_mode = #tpu.pipeline_mode<synchronous>, transform_indices = @transform_18, window_bounds = array<i64: 1, 64>}, {pipeline_mode = #tpu.pipeline_mode<synchronous>, transform_indices = @transform_19, window_bounds = array<i64: 64, 32>}, {pipeline_mode = #tpu.pipeline_mode<synchronous>, transform_indices = @transform_20, window_bounds = array<i64: 1, 32>}, {transform_indices = @transform_21, window_bounds = array<i64: 1, 1, 32>}]} {
    %c0_i32 = arith.constant 0 : i32
    %0 = arith.cmpi eq, %arg1, %c0_i32 : i32
    %1 = arith.extui %0 : i1 to i32
    %c0_i32_0 = arith.constant 0 : i32
    %2 = arith.cmpi ne, %1, %c0_i32_0 : i32
    scf.if %2 {
      %c0_83 = arith.constant 0 : index
      %c0_84 = arith.constant 0 : index
      %c0_85 = arith.constant 0 : index
      %199 = vector.load %arg2[%c0_83, %c0_84, %c0_85] : memref<1x105x64xf32, #tpu.memory_space<vmem>>, vector<1x105x64xf32>
      %200 = vector.shape_cast %199 : vector<1x105x64xf32> to vector<105x64xf32>
      %201 = arith.truncf %200 : vector<105x64xf32> to vector<105x64xbf16>
      %c0_86 = arith.constant 0 : index
      %c0_87 = arith.constant 0 : index
      %202 = vector.load %arg3[%c0_86, %c0_87] : memref<64x64xbf16, #tpu.memory_space<vmem>>, vector<64x64xbf16>
      %cst_88 = arith.constant dense<0.000000e+00> : vector<105x64xf32>
      %203 = tpu.matmul %201, %202, %cst_88 {dimension_numbers = #tpu.dot_dimension_numbers<[1], [0], [0], [1], [0, 0, 1, 1], [], []>} : vector<105x64xbf16>, vector<64x64xbf16>, vector<105x64xf32> -> vector<105x64xf32>
      %c0_89 = arith.constant 0 : index
      %c0_90 = arith.constant 0 : index
      %204 = vector.load %arg4[%c0_89, %c0_90] : memref<1x64xf32, #tpu.memory_space<vmem>>, vector<1x64xf32>
      %205 = vector.broadcast %204 : vector<1x64xf32> to vector<105x64xf32>
      %206 = arith.addf %203, %205 : vector<105x64xf32>
      %c0_91 = arith.constant 0 : index
      %c0_92 = arith.constant 0 : index
      %207 = vector.load %arg5[%c0_91, %c0_92] : memref<105x64xf32, #tpu.memory_space<vmem>>, vector<105x64xf32>
      %208 = arith.addf %206, %207 : vector<105x64xf32>
      %cst_93 = arith.constant 0.000000e+00 : f32
      %209 = vector.broadcast %cst_93 : f32 to vector<128x64xf32>
      %c0_94 = arith.constant 0 : index
      %c0_95 = arith.constant 0 : index
      %210 = vector.load %arg24[%c0_94, %c0_95] : memref<128x64xf32, #tpu.memory_space<vmem>>, vector<128x64xf32>
      tpu.vector_store %arg24[%c0_94, %c0_95], %209 {strides = array<i32>} : memref<128x64xf32, #tpu.memory_space<vmem>>, vector<128x64xf32>,
      %c0_96 = arith.constant 0 : index
      %c0_97 = arith.constant 0 : index
      %211 = vector.load %arg6[%c0_96, %c0_97] : memref<2x64xf32, #tpu.memory_space<vmem>>, vector<2x64xf32>
      %c0_98 = arith.constant 0 : index
      %c0_99 = arith.constant 0 : index
      %212 = vector.load %arg24[%c0_98, %c0_99] : memref<128x64xf32, #tpu.memory_space<vmem>>, vector<2x64xf32>
      tpu.vector_store %arg24[%c0_98, %c0_99], %211 {strides = array<i32>} : memref<128x64xf32, #tpu.memory_space<vmem>>, vector<2x64xf32>,
      %c8 = arith.constant 8 : index
      %c0_100 = arith.constant 0 : index
      %213 = vector.load %arg24[%c8, %c0_100] : memref<128x64xf32, #tpu.memory_space<vmem>>, vector<105x64xf32>
      tpu.vector_store %arg24[%c8, %c0_100], %208 {strides = array<i32>} : memref<128x64xf32, #tpu.memory_space<vmem>>, vector<105x64xf32>,
    } else {
    }
    %c0 = arith.constant 0 : index
    %c0_1 = arith.constant 0 : index
    %3 = vector.load %arg24[%c0, %c0_1] : memref<128x64xf32, #tpu.memory_space<vmem>>, vector<128x64xf32>
    %c0_2 = arith.constant 0 : index
    %c0_3 = arith.constant 0 : index
    %c0_4 = arith.constant 0 : index
    %4 = vector.load %arg7[%c0_2, %c0_3, %c0_4] : memref<1x1x64xf32, #tpu.memory_space<vmem>>, vector<1x1x64xf32>
    %5 = vector.shape_cast %4 : vector<1x1x64xf32> to vector<1x64xf32>
    %c0_5 = arith.constant 0 : index
    %c0_6 = arith.constant 0 : index
    %c0_7 = arith.constant 0 : index
    %6 = vector.load %arg8[%c0_5, %c0_6, %c0_7] : memref<1x1x64xf32, #tpu.memory_space<vmem>>, vector<1x1x64xf32>
    %7 = vector.shape_cast %6 : vector<1x1x64xf32> to vector<1x64xf32>
    %cst = arith.constant dense<0.000000e+00> : vector<128xf32>
    %8 = vector.multi_reduction <add>, %3, %cst [1] : vector<128x64xf32> to vector<128xf32>
    %9 = vector.shape_cast %8 : vector<128xf32> to vector<128x1xf32>
    %cst_8 = arith.constant 6.400000e+01 : f32
    %10 = vector.broadcast %cst_8 : f32 to vector<128x1xf32>
    %11 = arith.divf %9, %10 : vector<128x1xf32>
    %12 = vector.broadcast %11 : vector<128x1xf32> to vector<128x64xf32>
    %13 = arith.subf %3, %12 : vector<128x64xf32>
    %14 = arith.mulf %13, %13 : vector<128x64xf32>
    %cst_9 = arith.constant dense<0.000000e+00> : vector<128xf32>
    %15 = vector.multi_reduction <add>, %14, %cst_9 [1] : vector<128x64xf32> to vector<128xf32>
    %16 = vector.shape_cast %15 : vector<128xf32> to vector<128x1xf32>
    %cst_10 = arith.constant 6.400000e+01 : f32
    %17 = vector.broadcast %cst_10 : f32 to vector<128x1xf32>
    %18 = arith.divf %16, %17 : vector<128x1xf32>
    %19 = vector.broadcast %11 : vector<128x1xf32> to vector<128x64xf32>
    %20 = arith.subf %3, %19 : vector<128x64xf32>
    %cst_11 = arith.constant 9.99999997E-7 : f32
    %21 = vector.broadcast %cst_11 : f32 to vector<128x1xf32>
    %22 = arith.addf %18, %21 : vector<128x1xf32>
    %23 = math.rsqrt %22 : vector<128x1xf32>
    %24 = vector.broadcast %23 : vector<128x1xf32> to vector<128x64xf32>
    %25 = arith.mulf %20, %24 : vector<128x64xf32>
    %26 = vector.broadcast %5 : vector<1x64xf32> to vector<128x64xf32>
    %27 = arith.mulf %25, %26 : vector<128x64xf32>
    %28 = vector.broadcast %7 : vector<1x64xf32> to vector<128x64xf32>
    %29 = arith.addf %27, %28 : vector<128x64xf32>
    %30 = arith.truncf %29 : vector<128x64xf32> to vector<128x64xbf16>
    %c0_12 = arith.constant 0 : index
    %c0_13 = arith.constant 0 : index
    %c0_14 = arith.constant 0 : index
    %31 = vector.load %arg9[%c0_12, %c0_13, %c0_14] : memref<1x64x192xbf16, #tpu.memory_space<vmem>>, vector<1x64x192xbf16>
    %32 = vector.shape_cast %31 : vector<1x64x192xbf16> to vector<64x192xbf16>
    %cst_15 = arith.constant dense<0.000000e+00> : vector<128x192xf32>
    %33 = tpu.matmul %30, %32, %cst_15 {dimension_numbers = #tpu.dot_dimension_numbers<[1], [0], [0], [1], [0, 0, 1, 1], [], []>} : vector<128x64xbf16>, vector<64x192xbf16>, vector<128x192xf32> -> vector<128x192xf32>
    %c0_16 = arith.constant 0 : index
    %c0_17 = arith.constant 0 : index
    %c0_18 = arith.constant 0 : index
    %34 = vector.load %arg10[%c0_16, %c0_17, %c0_18] : memref<1x1x192xf32, #tpu.memory_space<vmem>>, vector<1x1x192xf32>
    %35 = vector.shape_cast %34 : vector<1x1x192xf32> to vector<1x192xf32>
    %36 = vector.broadcast %35 : vector<1x192xf32> to vector<128x192xf32>
    %37 = arith.addf %33, %36 : vector<128x192xf32>
    %38 = vector.extract_strided_slice %37 {offsets = [0, 0], sizes = [128, 64], strides = [1, 1]} : vector<128x192xf32> to vector<128x64xf32>
    %cst_19 = arith.constant 2.500000e-01 : f32
    %39 = vector.broadcast %cst_19 : f32 to vector<128x64xf32>
    %40 = arith.mulf %38, %39 : vector<128x64xf32>
    %41 = arith.truncf %40 : vector<128x64xf32> to vector<128x64xbf16>
    %42 = vector.extract_strided_slice %37 {offsets = [0, 64], sizes = [128, 64], strides = [1, 1]} : vector<128x192xf32> to vector<128x64xf32>
    %43 = arith.truncf %42 : vector<128x64xf32> to vector<128x64xbf16>
    %44 = vector.extract_strided_slice %37 {offsets = [0, 128], sizes = [128, 64], strides = [1, 1]} : vector<128x192xf32> to vector<128x64xf32>
    %45 = arith.truncf %44 : vector<128x64xf32> to vector<128x64xbf16>
    %46 = tpu.iota {dimensions = array<i32: 1>} : vector<1x128xi32>
    %c2_i32 = arith.constant 2 : i32
    %47 = vector.broadcast %c2_i32 : i32 to vector<1x128xi32>
    %48 = arith.cmpi slt, %46, %47 : vector<1x128xi32>
    %c8_i32 = arith.constant 8 : i32
    %49 = vector.broadcast %c8_i32 : i32 to vector<1x128xi32>
    %50 = arith.cmpi sge, %46, %49 : vector<1x128xi32>
    %c113_i32 = arith.constant 113 : i32
    %51 = vector.broadcast %c113_i32 : i32 to vector<1x128xi32>
    %52 = arith.cmpi slt, %46, %51 : vector<1x128xi32>
    %53 = arith.andi %50, %52 : vector<1x128xi1>
    %54 = arith.ori %48, %53 : vector<1x128xi1>
    %cst_20 = arith.constant 0.000000e+00 : f32
    %cst_21 = arith.constant -1.000000e+30 : f32
    %55 = vector.broadcast %cst_20 : f32 to vector<1x128xf32>
    %56 = vector.broadcast %cst_21 : f32 to vector<1x128xf32>
    %57 = arith.select %54, %55, %56 : vector<1x128xi1>, vector<1x128xf32>
    %58 = vector.extract_strided_slice %41 {offsets = [0, 0], sizes = [128, 16], strides = [1, 1]} : vector<128x64xbf16> to vector<128x16xbf16>
    %59 = vector.extract_strided_slice %43 {offsets = [0, 0], sizes = [128, 16], strides = [1, 1]} : vector<128x64xbf16> to vector<128x16xbf16>
    %cst_22 = arith.constant dense<0.000000e+00> : vector<128x128xf32>
    %60 = tpu.matmul %58, %59, %cst_22 {dimension_numbers = #tpu.dot_dimension_numbers<[1], [1], [0], [0], [0, 0, 1, 0], [], []>} : vector<128x16xbf16>, vector<128x16xbf16>, vector<128x128xf32> -> vector<128x128xf32>
    %61 = vector.broadcast %57 : vector<1x128xf32> to vector<128x128xf32>
    %62 = arith.addf %60, %61 : vector<128x128xf32>
    %cst_23 = arith.constant dense<0xFF800000> : vector<128xf32>
    %63 = vector.multi_reduction <maximumf>, %62, %cst_23 [1] : vector<128x128xf32> to vector<128xf32>
    %64 = vector.shape_cast %63 : vector<128xf32> to vector<128x1xf32>
    %65 = vector.broadcast %64 : vector<128x1xf32> to vector<128x128xf32>
    %66 = arith.subf %62, %65 : vector<128x128xf32>
    %67 = math.exp %66 : vector<128x128xf32>
    %cst_24 = arith.constant dense<0.000000e+00> : vector<128xf32>
    %68 = vector.multi_reduction <add>, %67, %cst_24 [1] : vector<128x128xf32> to vector<128xf32>
    %69 = vector.shape_cast %68 : vector<128xf32> to vector<128x1xf32>
    %70 = tpu.reciprocal %69 {approx = true} : vector<128x1xf32> -> vector<128x1xf32>
    %71 = vector.broadcast %70 : vector<128x1xf32> to vector<128x128xf32>
    %72 = arith.mulf %67, %71 : vector<128x128xf32>
    %73 = arith.truncf %72 : vector<128x128xf32> to vector<128x128xbf16>
    %74 = vector.extract_strided_slice %45 {offsets = [0, 0], sizes = [128, 16], strides = [1, 1]} : vector<128x64xbf16> to vector<128x16xbf16>
    %cst_25 = arith.constant dense<0.000000e+00> : vector<128x16xf32>
    %75 = tpu.matmul %73, %74, %cst_25 {dimension_numbers = #tpu.dot_dimension_numbers<[1], [0], [0], [1], [0, 0, 1, 1], [], []>} : vector<128x128xbf16>, vector<128x16xbf16>, vector<128x16xf32> -> vector<128x16xf32>
    %c0_26 = arith.constant 0 : index
    %c0_27 = arith.constant 0 : index
    %76 = vector.load %arg25[%c0_26, %c0_27] : memref<128x64xf32, #tpu.memory_space<vmem>>, vector<128x16xf32>
    tpu.vector_store %arg25[%c0_26, %c0_27], %75 {strides = array<i32>} : memref<128x64xf32, #tpu.memory_space<vmem>>, vector<128x16xf32>,
    %77 = vector.extract_strided_slice %41 {offsets = [0, 16], sizes = [128, 16], strides = [1, 1]} : vector<128x64xbf16> to vector<128x16xbf16>
    %78 = vector.extract_strided_slice %43 {offsets = [0, 16], sizes = [128, 16], strides = [1, 1]} : vector<128x64xbf16> to vector<128x16xbf16>
    %cst_28 = arith.constant dense<0.000000e+00> : vector<128x128xf32>
    %79 = tpu.matmul %77, %78, %cst_28 {dimension_numbers = #tpu.dot_dimension_numbers<[1], [1], [0], [0], [0, 0, 1, 0], [], []>} : vector<128x16xbf16>, vector<128x16xbf16>, vector<128x128xf32> -> vector<128x128xf32>
    %80 = vector.broadcast %57 : vector<1x128xf32> to vector<128x128xf32>
    %81 = arith.addf %79, %80 : vector<128x128xf32>
    %cst_29 = arith.constant dense<0xFF800000> : vector<128xf32>
    %82 = vector.multi_reduction <maximumf>, %81, %cst_29 [1] : vector<128x128xf32> to vector<128xf32>
    %83 = vector.shape_cast %82 : vector<128xf32> to vector<128x1xf32>
    %84 = vector.broadcast %83 : vector<128x1xf32> to vector<128x128xf32>
    %85 = arith.subf %81, %84 : vector<128x128xf32>
    %86 = math.exp %85 : vector<128x128xf32>
    %cst_30 = arith.constant dense<0.000000e+00> : vector<128xf32>
    %87 = vector.multi_reduction <add>, %86, %cst_30 [1] : vector<128x128xf32> to vector<128xf32>
    %88 = vector.shape_cast %87 : vector<128xf32> to vector<128x1xf32>
    %89 = tpu.reciprocal %88 {approx = true} : vector<128x1xf32> -> vector<128x1xf32>
    %90 = vector.broadcast %89 : vector<128x1xf32> to vector<128x128xf32>
    %91 = arith.mulf %86, %90 : vector<128x128xf32>
    %92 = arith.truncf %91 : vector<128x128xf32> to vector<128x128xbf16>
    %93 = vector.extract_strided_slice %45 {offsets = [0, 16], sizes = [128, 16], strides = [1, 1]} : vector<128x64xbf16> to vector<128x16xbf16>
    %cst_31 = arith.constant dense<0.000000e+00> : vector<128x16xf32>
    %94 = tpu.matmul %92, %93, %cst_31 {dimension_numbers = #tpu.dot_dimension_numbers<[1], [0], [0], [1], [0, 0, 1, 1], [], []>} : vector<128x128xbf16>, vector<128x16xbf16>, vector<128x16xf32> -> vector<128x16xf32>
    %c0_32 = arith.constant 0 : index
    %c16 = arith.constant 16 : index
    %95 = vector.load %arg25[%c0_32, %c16] : memref<128x64xf32, #tpu.memory_space<vmem>>, vector<128x16xf32>
    tpu.vector_store %arg25[%c0_32, %c16], %94 {strides = array<i32>} : memref<128x64xf32, #tpu.memory_space<vmem>>, vector<128x16xf32>,
    %96 = vector.extract_strided_slice %41 {offsets = [0, 32], sizes = [128, 16], strides = [1, 1]} : vector<128x64xbf16> to vector<128x16xbf16>
    %97 = vector.extract_strided_slice %43 {offsets = [0, 32], sizes = [128, 16], strides = [1, 1]} : vector<128x64xbf16> to vector<128x16xbf16>
    %cst_33 = arith.constant dense<0.000000e+00> : vector<128x128xf32>
    %98 = tpu.matmul %96, %97, %cst_33 {dimension_numbers = #tpu.dot_dimension_numbers<[1], [1], [0], [0], [0, 0, 1, 0], [], []>} : vector<128x16xbf16>, vector<128x16xbf16>, vector<128x128xf32> -> vector<128x128xf32>
    %99 = vector.broadcast %57 : vector<1x128xf32> to vector<128x128xf32>
    %100 = arith.addf %98, %99 : vector<128x128xf32>
    %cst_34 = arith.constant dense<0xFF800000> : vector<128xf32>
    %101 = vector.multi_reduction <maximumf>, %100, %cst_34 [1] : vector<128x128xf32> to vector<128xf32>
    %102 = vector.shape_cast %101 : vector<128xf32> to vector<128x1xf32>
    %103 = vector.broadcast %102 : vector<128x1xf32> to vector<128x128xf32>
    %104 = arith.subf %100, %103 : vector<128x128xf32>
    %105 = math.exp %104 : vector<128x128xf32>
    %cst_35 = arith.constant dense<0.000000e+00> : vector<128xf32>
    %106 = vector.multi_reduction <add>, %105, %cst_35 [1] : vector<128x128xf32> to vector<128xf32>
    %107 = vector.shape_cast %106 : vector<128xf32> to vector<128x1xf32>
    %108 = tpu.reciprocal %107 {approx = true} : vector<128x1xf32> -> vector<128x1xf32>
    %109 = vector.broadcast %108 : vector<128x1xf32> to vector<128x128xf32>
    %110 = arith.mulf %105, %109 : vector<128x128xf32>
    %111 = arith.truncf %110 : vector<128x128xf32> to vector<128x128xbf16>
    %112 = vector.extract_strided_slice %45 {offsets = [0, 32], sizes = [128, 16], strides = [1, 1]} : vector<128x64xbf16> to vector<128x16xbf16>
    %cst_36 = arith.constant dense<0.000000e+00> : vector<128x16xf32>
    %113 = tpu.matmul %111, %112, %cst_36 {dimension_numbers = #tpu.dot_dimension_numbers<[1], [0], [0], [1], [0, 0, 1, 1], [], []>} : vector<128x128xbf16>, vector<128x16xbf16>, vector<128x16xf32> -> vector<128x16xf32>
    %c0_37 = arith.constant 0 : index
    %c32 = arith.constant 32 : index
    %114 = vector.load %arg25[%c0_37, %c32] : memref<128x64xf32, #tpu.memory_space<vmem>>, vector<128x16xf32>
    tpu.vector_store %arg25[%c0_37, %c32], %113 {strides = array<i32>} : memref<128x64xf32, #tpu.memory_space<vmem>>, vector<128x16xf32>,
    %115 = vector.extract_strided_slice %41 {offsets = [0, 48], sizes = [128, 16], strides = [1, 1]} : vector<128x64xbf16> to vector<128x16xbf16>
    %116 = vector.extract_strided_slice %43 {offsets = [0, 48], sizes = [128, 16], strides = [1, 1]} : vector<128x64xbf16> to vector<128x16xbf16>
    %cst_38 = arith.constant dense<0.000000e+00> : vector<128x128xf32>
    %117 = tpu.matmul %115, %116, %cst_38 {dimension_numbers = #tpu.dot_dimension_numbers<[1], [1], [0], [0], [0, 0, 1, 0], [], []>} : vector<128x16xbf16>, vector<128x16xbf16>, vector<128x128xf32> -> vector<128x128xf32>
    %118 = vector.broadcast %57 : vector<1x128xf32> to vector<128x128xf32>
    %119 = arith.addf %117, %118 : vector<128x128xf32>
    %cst_39 = arith.constant dense<0xFF800000> : vector<128xf32>
    %120 = vector.multi_reduction <maximumf>, %119, %cst_39 [1] : vector<128x128xf32> to vector<128xf32>
    %121 = vector.shape_cast %120 : vector<128xf32> to vector<128x1xf32>
    %122 = vector.broadcast %121 : vector<128x1xf32> to vector<128x128xf32>
    %123 = arith.subf %119, %122 : vector<128x128xf32>
    %124 = math.exp %123 : vector<128x128xf32>
    %cst_40 = arith.constant dense<0.000000e+00> : vector<128xf32>
    %125 = vector.multi_reduction <add>, %124, %cst_40 [1] : vector<128x128xf32> to vector<128xf32>
    %126 = vector.shape_cast %125 : vector<128xf32> to vector<128x1xf32>
    %127 = tpu.reciprocal %126 {approx = true} : vector<128x1xf32> -> vector<128x1xf32>
    %128 = vector.broadcast %127 : vector<128x1xf32> to vector<128x128xf32>
    %129 = arith.mulf %124, %128 : vector<128x128xf32>
    %130 = arith.truncf %129 : vector<128x128xf32> to vector<128x128xbf16>
    %131 = vector.extract_strided_slice %45 {offsets = [0, 48], sizes = [128, 16], strides = [1, 1]} : vector<128x64xbf16> to vector<128x16xbf16>
    %cst_41 = arith.constant dense<0.000000e+00> : vector<128x16xf32>
    %132 = tpu.matmul %130, %131, %cst_41 {dimension_numbers = #tpu.dot_dimension_numbers<[1], [0], [0], [1], [0, 0, 1, 1], [], []>} : vector<128x128xbf16>, vector<128x16xbf16>, vector<128x16xf32> -> vector<128x16xf32>
    %c0_42 = arith.constant 0 : index
    %c48 = arith.constant 48 : index
    %133 = vector.load %arg25[%c0_42, %c48] : memref<128x64xf32, #tpu.memory_space<vmem>>, vector<128x16xf32>
    tpu.vector_store %arg25[%c0_42, %c48], %132 {strides = array<i32>} : memref<128x64xf32, #tpu.memory_space<vmem>>, vector<128x16xf32>,
    %c0_43 = arith.constant 0 : index
    %c0_44 = arith.constant 0 : index
    %134 = vector.load %arg25[%c0_43, %c0_44] : memref<128x64xf32, #tpu.memory_space<vmem>>, vector<128x64xf32>
    %135 = arith.truncf %134 : vector<128x64xf32> to vector<128x64xbf16>
    %c0_45 = arith.constant 0 : index
    %c0_46 = arith.constant 0 : index
    %c0_47 = arith.constant 0 : index
    %136 = vector.load %arg11[%c0_45, %c0_46, %c0_47] : memref<1x64x64xbf16, #tpu.memory_space<vmem>>, vector<1x64x64xbf16>
    %137 = vector.shape_cast %136 : vector<1x64x64xbf16> to vector<64x64xbf16>
    %cst_48 = arith.constant dense<0.000000e+00> : vector<128x64xf32>
    %138 = tpu.matmul %135, %137, %cst_48 {dimension_numbers = #tpu.dot_dimension_numbers<[1], [0], [0], [1], [0, 0, 1, 1], [], []>} : vector<128x64xbf16>, vector<64x64xbf16>, vector<128x64xf32> -> vector<128x64xf32>
    %c0_49 = arith.constant 0 : index
    %c0_50 = arith.constant 0 : index
    %c0_51 = arith.constant 0 : index
    %139 = vector.load %arg12[%c0_49, %c0_50, %c0_51] : memref<1x1x64xf32, #tpu.memory_space<vmem>>, vector<1x1x64xf32>
    %140 = vector.shape_cast %139 : vector<1x1x64xf32> to vector<1x64xf32>
    %141 = vector.broadcast %140 : vector<1x64xf32> to vector<128x64xf32>
    %142 = arith.addf %138, %141 : vector<128x64xf32>
    %143 = arith.addf %3, %142 : vector<128x64xf32>
    %c0_52 = arith.constant 0 : index
    %c0_53 = arith.constant 0 : index
    %c0_54 = arith.constant 0 : index
    %144 = vector.load %arg13[%c0_52, %c0_53, %c0_54] : memref<1x1x64xf32, #tpu.memory_space<vmem>>, vector<1x1x64xf32>
    %145 = vector.shape_cast %144 : vector<1x1x64xf32> to vector<1x64xf32>
    %c0_55 = arith.constant 0 : index
    %c0_56 = arith.constant 0 : index
    %c0_57 = arith.constant 0 : index
    %146 = vector.load %arg14[%c0_55, %c0_56, %c0_57] : memref<1x1x64xf32, #tpu.memory_space<vmem>>, vector<1x1x64xf32>
    %147 = vector.shape_cast %146 : vector<1x1x64xf32> to vector<1x64xf32>
    %cst_58 = arith.constant dense<0.000000e+00> : vector<128xf32>
    %148 = vector.multi_reduction <add>, %143, %cst_58 [1] : vector<128x64xf32> to vector<128xf32>
    %149 = vector.shape_cast %148 : vector<128xf32> to vector<128x1xf32>
    %cst_59 = arith.constant 6.400000e+01 : f32
    %150 = vector.broadcast %cst_59 : f32 to vector<128x1xf32>
    %151 = arith.divf %149, %150 : vector<128x1xf32>
    %152 = vector.broadcast %151 : vector<128x1xf32> to vector<128x64xf32>
    %153 = arith.subf %143, %152 : vector<128x64xf32>
    %154 = arith.mulf %153, %153 : vector<128x64xf32>
    %cst_60 = arith.constant dense<0.000000e+00> : vector<128xf32>
    %155 = vector.multi_reduction <add>, %154, %cst_60 [1] : vector<128x64xf32> to vector<128xf32>
    %156 = vector.shape_cast %155 : vector<128xf32> to vector<128x1xf32>
    %cst_61 = arith.constant 6.400000e+01 : f32
    %157 = vector.broadcast %cst_61 : f32 to vector<128x1xf32>
    %158 = arith.divf %156, %157 : vector<128x1xf32>
    %159 = vector.broadcast %151 : vector<128x1xf32> to vector<128x64xf32>
    %160 = arith.subf %143, %159 : vector<128x64xf32>
    %cst_62 = arith.constant 9.99999997E-7 : f32
    %161 = vector.broadcast %cst_62 : f32 to vector<128x1xf32>
    %162 = arith.addf %158, %161 : vector<128x1xf32>
    %163 = math.rsqrt %162 : vector<128x1xf32>
    %164 = vector.broadcast %163 : vector<128x1xf32> to vector<128x64xf32>
    %165 = arith.mulf %160, %164 : vector<128x64xf32>
    %166 = vector.broadcast %145 : vector<1x64xf32> to vector<128x64xf32>
    %167 = arith.mulf %165, %166 : vector<128x64xf32>
    %168 = vector.broadcast %147 : vector<1x64xf32> to vector<128x64xf32>
    %169 = arith.addf %167, %168 : vector<128x64xf32>
    %170 = arith.truncf %169 : vector<128x64xf32> to vector<128x64xbf16>
    %c0_63 = arith.constant 0 : index
    %c0_64 = arith.constant 0 : index
    %c0_65 = arith.constant 0 : index
    %171 = vector.load %arg15[%c0_63, %c0_64, %c0_65] : memref<1x64x256xbf16, #tpu.memory_space<vmem>>, vector<1x64x256xbf16>
    %172 = vector.shape_cast %171 : vector<1x64x256xbf16> to vector<64x256xbf16>
    %cst_66 = arith.constant dense<0.000000e+00> : vector<128x256xf32>
    %173 = tpu.matmul %170, %172, %cst_66 {dimension_numbers = #tpu.dot_dimension_numbers<[1], [0], [0], [1], [0, 0, 1, 1], [], []>} : vector<128x64xbf16>, vector<64x256xbf16>, vector<128x256xf32> -> vector<128x256xf32>
    %c0_67 = arith.constant 0 : index
    %c0_68 = arith.constant 0 : index
    %c0_69 = arith.constant 0 : index
    %174 = vector.load %arg16[%c0_67, %c0_68, %c0_69] : memref<1x1x256xf32, #tpu.memory_space<vmem>>, vector<1x1x256xf32>
    %175 = vector.shape_cast %174 : vector<1x1x256xf32> to vector<1x256xf32>
    %176 = vector.broadcast %175 : vector<1x256xf32> to vector<128x256xf32>
    %177 = arith.addf %173, %176 : vector<128x256xf32>
    %cst_70 = arith.constant 5.000000e-01 : f32
    %178 = vector.broadcast %cst_70 : f32 to vector<128x256xf32>
    %179 = arith.mulf %178, %177 : vector<128x256xf32>
    %cst_71 = arith.constant 0.707106769 : f32
    %180 = vector.broadcast %cst_71 : f32 to vector<128x256xf32>
    %181 = arith.mulf %177, %180 : vector<128x256xf32>
    %182 = math.erf %181 : vector<128x256xf32>
    %cst_72 = arith.constant 1.000000e+00 : f32
    %183 = vector.broadcast %cst_72 : f32 to vector<128x256xf32>
    %184 = arith.addf %183, %182 : vector<128x256xf32>
    %185 = arith.mulf %179, %184 : vector<128x256xf32>
    %186 = arith.truncf %185 : vector<128x256xf32> to vector<128x256xbf16>
    %c0_73 = arith.constant 0 : index
    %c0_74 = arith.constant 0 : index
    %c0_75 = arith.constant 0 : index
    %187 = vector.load %arg17[%c0_73, %c0_74, %c0_75] : memref<1x256x64xbf16, #tpu.memory_space<vmem>>, vector<1x256x64xbf16>
    %188 = vector.shape_cast %187 : vector<1x256x64xbf16> to vector<256x64xbf16>
    %cst_76 = arith.constant dense<0.000000e+00> : vector<128x64xf32>
    %189 = tpu.matmul %186, %188, %cst_76 {dimension_numbers = #tpu.dot_dimension_numbers<[1], [0], [0], [1], [0, 0, 1, 1], [], []>} : vector<128x256xbf16>, vector<256x64xbf16>, vector<128x64xf32> -> vector<128x64xf32>
    %c0_77 = arith.constant 0 : index
    %c0_78 = arith.constant 0 : index
    %c0_79 = arith.constant 0 : index
    %190 = vector.load %arg18[%c0_77, %c0_78, %c0_79] : memref<1x1x64xf32, #tpu.memory_space<vmem>>, vector<1x1x64xf32>
    %191 = vector.shape_cast %190 : vector<1x1x64xf32> to vector<1x64xf32>
    %192 = vector.broadcast %191 : vector<1x64xf32> to vector<128x64xf32>
    %193 = arith.addf %189, %192 : vector<128x64xf32>
    %194 = arith.addf %143, %193 : vector<128x64xf32>
    %c0_80 = arith.constant 0 : index
    %c0_81 = arith.constant 0 : index
    %195 = vector.load %arg24[%c0_80, %c0_81] : memref<128x64xf32, #tpu.memory_space<vmem>>, vector<128x64xf32>
    tpu.vector_store %arg24[%c0_80, %c0_81], %194 {strides = array<i32>} : memref<128x64xf32, #tpu.memory_space<vmem>>, vector<128x64xf32>,
    %c1_i32 = arith.constant 1 : i32
    %196 = arith.cmpi eq, %arg1, %c1_i32 : i32
    %197 = arith.extui %196 : i1 to i32
    %c0_i32_82 = arith.constant 0 : i32
    %198 = arith.cmpi ne, %197, %c0_i32_82 : i32
    scf.if %198 {
      %199 = vector.extract_strided_slice %194 {offsets = [0, 0], sizes = [2, 64], strides = [1, 1]} : vector<128x64xf32> to vector<2x64xf32>
      %c0_83 = arith.constant 0 : index
      %c0_84 = arith.constant 0 : index
      %200 = vector.load %arg19[%c0_83, %c0_84] : memref<1x64xf32, #tpu.memory_space<vmem>>, vector<1x64xf32>
      %c0_85 = arith.constant 0 : index
      %c0_86 = arith.constant 0 : index
      %201 = vector.load %arg20[%c0_85, %c0_86] : memref<1x64xf32, #tpu.memory_space<vmem>>, vector<1x64xf32>
      %cst_87 = arith.constant dense<0.000000e+00> : vector<2xf32>
      %202 = vector.multi_reduction <add>, %199, %cst_87 [1] : vector<2x64xf32> to vector<2xf32>
      %203 = vector.shape_cast %202 : vector<2xf32> to vector<2x1xf32>
      %cst_88 = arith.constant 6.400000e+01 : f32
      %204 = vector.broadcast %cst_88 : f32 to vector<2x1xf32>
      %205 = arith.divf %203, %204 : vector<2x1xf32>
      %206 = vector.broadcast %205 : vector<2x1xf32> to vector<2x64xf32>
      %207 = arith.subf %199, %206 : vector<2x64xf32>
      %208 = arith.mulf %207, %207 : vector<2x64xf32>
      %cst_89 = arith.constant dense<0.000000e+00> : vector<2xf32>
      %209 = vector.multi_reduction <add>, %208, %cst_89 [1] : vector<2x64xf32> to vector<2xf32>
      %210 = vector.shape_cast %209 : vector<2xf32> to vector<2x1xf32>
      %cst_90 = arith.constant 6.400000e+01 : f32
      %211 = vector.broadcast %cst_90 : f32 to vector<2x1xf32>
      %212 = arith.divf %210, %211 : vector<2x1xf32>
      %213 = vector.broadcast %205 : vector<2x1xf32> to vector<2x64xf32>
      %214 = arith.subf %199, %213 : vector<2x64xf32>
      %cst_91 = arith.constant 9.99999997E-7 : f32
      %215 = vector.broadcast %cst_91 : f32 to vector<2x1xf32>
      %216 = arith.addf %212, %215 : vector<2x1xf32>
      %217 = math.rsqrt %216 : vector<2x1xf32>
      %218 = vector.broadcast %217 : vector<2x1xf32> to vector<2x64xf32>
      %219 = arith.mulf %214, %218 : vector<2x64xf32>
      %220 = vector.broadcast %200 : vector<1x64xf32> to vector<2x64xf32>
      %221 = arith.mulf %219, %220 : vector<2x64xf32>
      %222 = vector.broadcast %201 : vector<1x64xf32> to vector<2x64xf32>
      %223 = arith.addf %221, %222 : vector<2x64xf32>
      %224 = vector.extract_strided_slice %223 {offsets = [0, 0], sizes = [1, 64], strides = [1, 1]} : vector<2x64xf32> to vector<1x64xf32>
      %225 = vector.extract_strided_slice %223 {offsets = [1, 0], sizes = [1, 64], strides = [1, 1]} : vector<2x64xf32> to vector<1x64xf32>
      %226 = arith.addf %224, %225 : vector<1x64xf32>
      %cst_92 = arith.constant 5.000000e-01 : f32
      %227 = vector.broadcast %cst_92 : f32 to vector<1x64xf32>
      %228 = arith.mulf %227, %226 : vector<1x64xf32>
      %229 = arith.truncf %228 : vector<1x64xf32> to vector<1x64xbf16>
      %c0_93 = arith.constant 0 : index
      %c0_94 = arith.constant 0 : index
      %230 = vector.load %arg21[%c0_93, %c0_94] : memref<64x32xbf16, #tpu.memory_space<vmem>>, vector<64x32xbf16>
      %cst_95 = arith.constant dense<0.000000e+00> : vector<1x32xf32>
      %231 = tpu.matmul %229, %230, %cst_95 {dimension_numbers = #tpu.dot_dimension_numbers<[1], [0], [0], [1], [0, 0, 1, 1], [], []>} : vector<1x64xbf16>, vector<64x32xbf16>, vector<1x32xf32> -> vector<1x32xf32>
      %c0_96 = arith.constant 0 : index
      %c0_97 = arith.constant 0 : index
      %232 = vector.load %arg22[%c0_96, %c0_97] : memref<1x32xf32, #tpu.memory_space<vmem>>, vector<1x32xf32>
      %233 = arith.addf %231, %232 : vector<1x32xf32>
      %c0_98 = arith.constant 0 : index
      %c0_99 = arith.constant 0 : index
      %c0_100 = arith.constant 0 : index
      %234 = vector.load %arg23[%c0_98, %c0_99, %c0_100] : memref<1x1x32xf32, #tpu.memory_space<vmem>>, vector<1x1x32xf32>
      %235 = vector.shape_cast %234 : vector<1x1x32xf32> to vector<1x32xf32>
      %236 = vector.shape_cast %233 : vector<1x32xf32> to vector<1x1x32xf32>
      tpu.vector_store %arg23[%c0_98, %c0_99, %c0_100], %236 {strides = array<i32>} : memref<1x1x32xf32, #tpu.memory_space<vmem>>, vector<1x1x32xf32>,
    } else {
    }
    return
  }
  func.func @transform_0(%arg0: i32, %arg1: i32) -> (i32, i32, i32) {
    %c0_i32 = arith.constant 0 : i32
    %c0_i32_0 = arith.constant 0 : i32
    %c0_i32_1 = arith.constant 0 : i32
    return %arg0, %c0_i32, %c0_i32_0 : i32, i32, i32
  }
  func.func @transform_1(%arg0: i32, %arg1: i32) -> (i32, i32) {
    %c0_i32 = arith.constant 0 : i32
    %c0_i32_0 = arith.constant 0 : i32
    %c0_i32_1 = arith.constant 0 : i32
    return %c0_i32, %c0_i32_0 : i32, i32
  }
  func.func @transform_2(%arg0: i32, %arg1: i32) -> (i32, i32) {
    %c0_i32 = arith.constant 0 : i32
    %c0_i32_0 = arith.constant 0 : i32
    %c0_i32_1 = arith.constant 0 : i32
    return %c0_i32, %c0_i32_0 : i32, i32
  }
  func.func @transform_3(%arg0: i32, %arg1: i32) -> (i32, i32) {
    %c0_i32 = arith.constant 0 : i32
    %c0_i32_0 = arith.constant 0 : i32
    %c0_i32_1 = arith.constant 0 : i32
    return %c0_i32, %c0_i32_0 : i32, i32
  }
  func.func @transform_4(%arg0: i32, %arg1: i32) -> (i32, i32) {
    %c0_i32 = arith.constant 0 : i32
    %c0_i32_0 = arith.constant 0 : i32
    %c0_i32_1 = arith.constant 0 : i32
    return %c0_i32, %c0_i32_0 : i32, i32
  }
  func.func @transform_5(%arg0: i32, %arg1: i32) -> (i32, i32, i32) {
    %c0_i32 = arith.constant 0 : i32
    %c0_i32_0 = arith.constant 0 : i32
    %c0_i32_1 = arith.constant 0 : i32
    return %arg1, %c0_i32, %c0_i32_0 : i32, i32, i32
  }
  func.func @transform_6(%arg0: i32, %arg1: i32) -> (i32, i32, i32) {
    %c0_i32 = arith.constant 0 : i32
    %c0_i32_0 = arith.constant 0 : i32
    %c0_i32_1 = arith.constant 0 : i32
    return %arg1, %c0_i32, %c0_i32_0 : i32, i32, i32
  }
  func.func @transform_7(%arg0: i32, %arg1: i32) -> (i32, i32, i32) {
    %c0_i32 = arith.constant 0 : i32
    %c0_i32_0 = arith.constant 0 : i32
    %c0_i32_1 = arith.constant 0 : i32
    return %arg1, %c0_i32, %c0_i32_0 : i32, i32, i32
  }
  func.func @transform_8(%arg0: i32, %arg1: i32) -> (i32, i32, i32) {
    %c0_i32 = arith.constant 0 : i32
    %c0_i32_0 = arith.constant 0 : i32
    %c0_i32_1 = arith.constant 0 : i32
    return %arg1, %c0_i32, %c0_i32_0 : i32, i32, i32
  }
  func.func @transform_9(%arg0: i32, %arg1: i32) -> (i32, i32, i32) {
    %c0_i32 = arith.constant 0 : i32
    %c0_i32_0 = arith.constant 0 : i32
    %c0_i32_1 = arith.constant 0 : i32
    return %arg1, %c0_i32, %c0_i32_0 : i32, i32, i32
  }
  func.func @transform_10(%arg0: i32, %arg1: i32) -> (i32, i32, i32) {
    %c0_i32 = arith.constant 0 : i32
    %c0_i32_0 = arith.constant 0 : i32
    %c0_i32_1 = arith.constant 0 : i32
    return %arg1, %c0_i32, %c0_i32_0 : i32, i32, i32
  }
  func.func @transform_11(%arg0: i32, %arg1: i32) -> (i32, i32, i32) {
    %c0_i32 = arith.constant 0 : i32
    %c0_i32_0 = arith.constant 0 : i32
    %c0_i32_1 = arith.constant 0 : i32
    return %arg1, %c0_i32, %c0_i32_0 : i32, i32, i32
  }
  func.func @transform_12(%arg0: i32, %arg1: i32) -> (i32, i32, i32) {
    %c0_i32 = arith.constant 0 : i32
    %c0_i32_0 = arith.constant 0 : i32
    %c0_i32_1 = arith.constant 0 : i32
    return %arg1, %c0_i32, %c0_i32_0 : i32, i32, i32
  }
  func.func @transform_13(%arg0: i32, %arg1: i32) -> (i32, i32, i32) {
    %c0_i32 = arith.constant 0 : i32
    %c0_i32_0 = arith.constant 0 : i32
    %c0_i32_1 = arith.constant 0 : i32
    return %arg1, %c0_i32, %c0_i32_0 : i32, i32, i32
  }
  func.func @transform_14(%arg0: i32, %arg1: i32) -> (i32, i32, i32) {
    %c0_i32 = arith.constant 0 : i32
    %c0_i32_0 = arith.constant 0 : i32
    %c0_i32_1 = arith.constant 0 : i32
    return %arg1, %c0_i32, %c0_i32_0 : i32, i32, i32
  }
  func.func @transform_15(%arg0: i32, %arg1: i32) -> (i32, i32, i32) {
    %c0_i32 = arith.constant 0 : i32
    %c0_i32_0 = arith.constant 0 : i32
    %c0_i32_1 = arith.constant 0 : i32
    return %arg1, %c0_i32, %c0_i32_0 : i32, i32, i32
  }
  func.func @transform_16(%arg0: i32, %arg1: i32) -> (i32, i32, i32) {
    %c0_i32 = arith.constant 0 : i32
    %c0_i32_0 = arith.constant 0 : i32
    %c0_i32_1 = arith.constant 0 : i32
    return %arg1, %c0_i32, %c0_i32_0 : i32, i32, i32
  }
  func.func @transform_17(%arg0: i32, %arg1: i32) -> (i32, i32) {
    %c0_i32 = arith.constant 0 : i32
    %c0_i32_0 = arith.constant 0 : i32
    %c0_i32_1 = arith.constant 0 : i32
    return %c0_i32, %c0_i32_0 : i32, i32
  }
  func.func @transform_18(%arg0: i32, %arg1: i32) -> (i32, i32) {
    %c0_i32 = arith.constant 0 : i32
    %c0_i32_0 = arith.constant 0 : i32
    %c0_i32_1 = arith.constant 0 : i32
    return %c0_i32, %c0_i32_0 : i32, i32
  }
  func.func @transform_19(%arg0: i32, %arg1: i32) -> (i32, i32) {
    %c0_i32 = arith.constant 0 : i32
    %c0_i32_0 = arith.constant 0 : i32
    %c0_i32_1 = arith.constant 0 : i32
    return %c0_i32, %c0_i32_0 : i32, i32
  }
  func.func @transform_20(%arg0: i32, %arg1: i32) -> (i32, i32) {
    %c0_i32 = arith.constant 0 : i32
    %c0_i32_0 = arith.constant 0 : i32
    %c0_i32_1 = arith.constant 0 : i32
    return %c0_i32, %c0_i32_0 : i32, i32
  }
  func.func @transform_21(%arg0: i32, %arg1: i32) -> (i32, i32, i32) {
    %c0_i32 = arith.constant 0 : i32
    %c0_i32_0 = arith.constant 0 : i32
    %c0_i32_1 = arith.constant 0 : i32
    return %arg0, %c0_i32, %c0_i32_0 : i32, i32, i32
  }
}

</mosaic_0001>

<llo_original>
// kernel: my_passt_forward.2
$region0: #{my_passt_forward.2}
  #allocation0 [shape = 'u32[]', space=smem, size = 0x4, offset = 0x4, fixed_abs, tag = 'smem constant byte address 0x4 - core index']
  #allocation1 [shape = 'u32[72,128]{1,0:T(1,128)}', space=vmem, size = 0x9000, scoped, tag = 'internal scratch']
  %s0 = inlined_call_operand.vmem [shape: f32[2,64,64], index: 0, kind: input, shape index: {}]
  %s1 = inlined_call_operand.vmem [shape: f32[1,64], index: 1, kind: input, shape index: {}]
  %s2 = inlined_call_operand.vmem [shape: f32[64,256], index: 2, kind: input, shape index: {}]
  %s3 = inlined_call_operand.vmem [shape: f32[128,32], index: 3, kind: input, shape index: {}]
  %s4 = inlined_call_operand.vmem [shape: f32[2,64,32], index: 4, kind: output, shape index: {}]
  %s5 = sld [smem:[#allocation0]]
  $region49: #{my_passt_forward.2} parent=0
    _
  %s7 = ssub.s32 1, %s5
  %s8 = scalar_select 0, %s7, %s5
  loop: start=0, step=1, limit=4
  $region2: #{my_passt_forward.2} parent=0 // loop_pre_header
    _
  $region3: #{my_passt_forward.2} parent=0 // loop_header
    %s10 = sphi 0, %s14
    %p11 = scmp.ge.s32.totalorder %s10, 4
    %s20 = sphi 0, %s22
    %s23 = sphi 0, %s20
    %s24 = sphi 0, %s23
    %s40 = sphi 0, %s24
    %s44 = sphi 0, %s44
    %s46 = sphi 0, %s44
    %s47 = sphi 0, %s46
    %s61 = sphi 0, %s47
    %s65 = sphi 0, %s65
    %s67 = sphi 0, %s65
    %s68 = sphi 0, %s67
    %s82 = sphi 0, %s68
    %s86 = sphi 0, %s86
    %s88 = sphi 0, %s86
    %s89 = sphi 0, %s88
    %s103 = sphi 0, %s89
    %s109 = sphi 0, %s111
    %s112 = sphi 0, %s109
    %s113 = sphi 0, %s112
    %s129 = sphi 0, %s113
  $region4: #{my_passt_forward.2} parent=0 // loop_header_branch
    %13 = sbr.rel (%p11) target = $region8
  $region5: #{my_passt_forward.2} parent=0 // loop_body
    %s15 = ssub.s32 %s10, 1
    %s16 = ssub.s32 %s10, 2
    %s17 = sadd.s32 %s10, 1
    %s18 = ssub.s32 %s10, %s17
    %p19 = scmp.eq.s32.totalorder %s18, 0
    %s21 = sadd.s32 %s20, 1
    %s22 = scalar_select %p19, %s20, %s21
    %p25 = pneg %p19
    %p26 = scmp.eq.s32.totalorder %s10, 1
    %p27 = por %p25, %p26
    %p28 = scmp.ne.s32.totalorder %s20, %s23
    %p29 = scmp.eq.s32.totalorder %s10, 0
    %p30 = por %p28, %p29
    %p31 = scmp.ne.s32.totalorder %s20, %s23
    %p32 = scmp.eq.s32.totalorder %s15, 1
    %p33 = por %p31, %p32
    %p34 = scmp.ne.s32.totalorder %s23, %s24
    %p35 = scmp.eq.s32.totalorder %s15, 0
    %p36 = por %p34, %p35
    %p37 = scmp.ne.s32.totalorder %s23, %s24
    %p38 = scmp.eq.s32.totalorder %s16, 1
    %p39 = por %p37, %p38
    %p41 = scmp.ne.s32.totalorder %s24, %s40
    %p42 = scmp.eq.s32.totalorder %s16, 0
    %p43 = por %p41, %p42
    %s45 = sadd.s32 %s44, 1
    %p48 = scmp.eq.s32.totalorder %s10, 1
    %p49 = scmp.ne.s32.totalorder %s44, %s46
    %p50 = scmp.eq.s32.totalorder %s10, 0
    %p51 = por %p49, %p50
    %p52 = scmp.ne.s32.totalorder %s44, %s46
    %p53 = scmp.eq.s32.totalorder %s15, 1
    %p54 = por %p52, %p53
    %p55 = scmp.ne.s32.totalorder %s46, %s47
    %p56 = scmp.eq.s32.totalorder %s15, 0
    %p57 = por %p55, %p56
    %p58 = scmp.ne.s32.totalorder %s46, %s47
    %p59 = scmp.eq.s32.totalorder %s16, 1
    %p60 = por %p58, %p59
    %p62 = scmp.ne.s32.totalorder %s47, %s61
    %p63 = scmp.eq.s32.totalorder %s16, 0
    %p64 = por %p62, %p63
    %s66 = sadd.s32 %s65, 1
    %p69 = scmp.eq.s32.totalorder %s10, 1
    %p70 = scmp.ne.s32.totalorder %s65, %s67
    %p71 = scmp.eq.s32.totalorder %s10, 0
    %p72 = por %p70, %p71
    %p73 = scmp.ne.s32.totalorder %s65, %s67
    %p74 = scmp.eq.s32.totalorder %s15, 1
    %p75 = por %p73, %p74
    %p76 = scmp.ne.s32.totalorder %s67, %s68
    %p77 = scmp.eq.s32.totalorder %s15, 0
    %p78 = por %p76, %p77
    %p79 = scmp.ne.s32.totalorder %s67, %s68
    %p80 = scmp.eq.s32.totalorder %s16, 1
    %p81 = por %p79, %p80
    %p83 = scmp.ne.s32.totalorder %s68, %s82
    %p84 = scmp.eq.s32.totalorder %s16, 0
    %p85 = por %p83, %p84
    %s87 = sadd.s32 %s86, 1
    %p90 = scmp.eq.s32.totalorder %s10, 1
    %p91 = scmp.ne.s32.totalorder %s86, %s88
    %p92 = scmp.eq.s32.totalorder %s10, 0
    %p93 = por %p91, %p92
    %p94 = scmp.ne.s32.totalorder %s86, %s88
    %p95 = scmp.eq.s32.totalorder %s15, 1
    %p96 = por %p94, %p95
    %p97 = scmp.ne.s32.totalorder %s88, %s89
    %p98 = scmp.eq.s32.totalorder %s15, 0
    %p99 = por %p97, %p98
    %p100 = scmp.ne.s32.totalorder %s88, %s89
    %p101 = scmp.eq.s32.totalorder %s16, 1
    %p102 = por %p100, %p101
    %p104 = scmp.ne.s32.totalorder %s89, %s103
    %p105 = scmp.eq.s32.totalorder %s16, 0
    %p106 = por %p104, %p105
    %s107 = ssub.s32 %s10, %s17
    %p108 = scmp.eq.s32.totalorder %s107, 0
    %s110 = sadd.s32 %s109, 1
    %s111 = scalar_select %p108, %s109, %s110
    %p114 = pneg %p108
    %p115 = scmp.eq.s32.totalorder %s10, 1
    %p116 = por %p114, %p115
    %p117 = scmp.ne.s32.totalorder %s109, %s112
    %p118 = scmp.eq.s32.totalorder %s10, 0
    %p119 = por %p117, %p118
    %p120 = scmp.ne.s32.totalorder %s109, %s112
    %p121 = scmp.eq.s32.totalorder %s15, 1
    %p122 = por %p120, %p121
    %p123 = scmp.ne.s32.totalorder %s112, %s113
    %p124 = scmp.eq.s32.totalorder %s15, 0
    %p125 = por %p123, %p124
    %p126 = scmp.ne.s32.totalorder %s112, %s113
    %p127 = scmp.eq.s32.totalorder %s16, 1
    %p128 = por %p126, %p127
    %p130 = scmp.ne.s32.totalorder %s113, %s129
    %p131 = scmp.eq.s32.totalorder %s16, 0
    %p132 = por %p130, %p131
    %p133 = scmp.le.s32.totalorder 1, %s10
    %p134 = scmp.lt.s32.totalorder %s10, 3
    %p135 = pnand %p133, %p134
    %p136 = pneg %p135
    // Predicated region
    $region9: #{my_passt_forward.2} parent=5 // pred_check
      _
    $region10: #{my_passt_forward.2} parent=5 // pred_check_branch
      %138 = sbr.rel (%p135) target = $region12
    $region11: #{my_passt_forward.2} parent=5 // pred_region
      %s139 = ssub.s32 %s10, 1
      // Predicated region
      $region13: #{my_passt_forward.2} parent=11 // pred_check
        %p140 = pneg %p57
      $region14: #{my_passt_forward.2} parent=11 // pred_check_branch
        %142 = sbr.rel (%p140) target = $region16
      $region15: #{my_passt_forward.2} parent=11 // pred_region
        _
      $region16: #{my_passt_forward.2} parent=11 // pred_fallthru
        _
      // Predicated region
      $region17: #{my_passt_forward.2} parent=11 // pred_check
        %p143 = pneg %p78
      $region18: #{my_passt_forward.2} parent=11 // pred_check_branch
        %145 = sbr.rel (%p143) target = $region20
      $region19: #{my_passt_forward.2} parent=11 // pred_region
        _
      $region20: #{my_passt_forward.2} parent=11 // pred_fallthru
        _
      // Predicated region
      $region21: #{my_passt_forward.2} parent=11 // pred_check
        %p146 = pneg %p99
      $region22: #{my_passt_forward.2} parent=11 // pred_check_branch
        %148 = sbr.rel (%p146) target = $region24
      $region23: #{my_passt_forward.2} parent=11 // pred_region
        _
      $region24: #{my_passt_forward.2} parent=11 // pred_fallthru
        _
    $region12: #{my_passt_forward.2} parent=5 // pred_fallthru
      _
    %p149 = scmp.lt.s32.totalorder %s10, 2
    // Predicated region
    $region25: #{my_passt_forward.2} parent=5 // pred_check
      %p150 = pneg %p149
    $region26: #{my_passt_forward.2} parent=5 // pred_check_branch
      %152 = sbr.rel (%p150) target = $region28
    $region27: #{my_passt_forward.2} parent=5 // pred_region
      // Predicated region
      $region29: #{my_passt_forward.2} parent=27 // pred_check
        %p153 = pneg %p30
      $region30: #{my_passt_forward.2} parent=27 // pred_check_branch
        %155 = sbr.rel (%p153) target = $region32
      $region31: #{my_passt_forward.2} parent=27 // pred_region
        %p156 = scmp.lt.s32.totalorder %s10, 1
        %s157 = scalar_select %p156, %s10, 1
        %s158 = smul.addr %s157, 8
        %s159 = smul.addr %s158, 8
        %s160 = scalar_lea.vmem %s0, %s159
      $region32: #{my_passt_forward.2} parent=27 // pred_fallthru
        _
    $region28: #{my_passt_forward.2} parent=5 // pred_fallthru
      _
    %p161 = scmp.le.s32.totalorder 1, %s10
    %p162 = scmp.lt.s32.totalorder %s10, 3
    %p163 = pnand %p161, %p162
    %p164 = pneg %p163
    // Predicated region
    $region33: #{my_passt_forward.2} parent=5 // pred_check
      _
    $region34: #{my_passt_forward.2} parent=5 // pred_check_branch
      %166 = sbr.rel (%p163) target = $region36
    $region35: #{my_passt_forward.2} parent=5 // pred_region
      %s167 = ssub.s32 %s10, 1
      %p168 = scmp.lt.s32.totalorder %s15, 1
      %s169 = scalar_select %p168, %s15, 1
      %s170 = smul.addr %s169, 8
      %s171 = smul.addr %s170, 8
      %s172 = scalar_lea.vmem %s0, %s171
      %p173 = pneg %p36
      %p174 = pneg %p33
      %p175 = pneg %p57
      %p176 = pneg %p54
      %p177 = pneg %p78
      %p178 = pneg %p75
      %p179 = pneg %p99
      %p180 = pneg %p96
      %p181 = pneg %p125
      %p182 = pneg %p122
      %p183 = scmp.lt.s32.totalorder %s15, 1
      %s184 = scalar_select %p183, %s15, 1
      %s185 = smul.addr %s184, 8
      %s186 = smul.addr %s185, 8
      %s187 = scalar_lea.vmem %s4, %s186
      %p188 = scmp.lt.s32.totalorder %s15, 1
      %s189 = scalar_select %p188, %s15, 1
      %s190 = smul.addr %s189, 8
      %s191 = smul.addr %s190, 8
      %s192 = scalar_lea.vmem %s0, %s191
      %p193 = scmp.lt.s32.totalorder %s15, 1
      %s194 = scalar_select %p193, %s15, 1
      %s195 = smul.addr %s194, 8
      %s196 = smul.addr %s195, 8
      %s197 = scalar_lea.vmem %s4, %s196
      %v198 = vld [vmem:[%s192] sm:$0xff]
      %v199 = vld [vmem:[%s192 + $0x8] sm:$0xff]
      %v200 = vld [vmem:[%s192 + $0x10] sm:$0xff]
      %v201 = vld [vmem:[%s192 + $0x18] sm:$0xff]
      %v202 = vld [vmem:[%s192 + $0x20] sm:$0xff]
      %v203 = vld [vmem:[%s192 + $0x28] sm:$0xff]
      %v204 = vld [vmem:[%s192 + $0x30] sm:$0xff]
      %v205 = vld [vmem:[%s192 + $0x38] sm:$0xff]
      %v206 = vld [vmem:[%s1] sm:$0x1]
      %v208 = vperm.slane %v206, 0
      %v210 = vmul.f32 %v198, %v208
      %v211 = vmul.f32 %v199, %v208
      %v212 = vmul.f32 %v200, %v208
      %v213 = vmul.f32 %v201, %v208
      %v214 = vmul.f32 %v202, %v208
      %v215 = vmul.f32 %v203, %v208
      %v216 = vmul.f32 %v204, %v208
      %v217 = vmul.f32 %v205, %v208
      %v218 = vld [vmem:[%s2] sm:$0xff]
      %v219 = vld [vmem:[%s2 + $0x8] sm:$0xff]
      %v220 = vld [vmem:[%s2 + $0x10] sm:$0xff]
      %v221 = vld [vmem:[%s2 + $0x18] sm:$0xff]
      %v222 = vld [vmem:[%s2 + $0x20] sm:$0xff]
      %v223 = vld [vmem:[%s2 + $0x28] sm:$0xff]
      %v224 = vld [vmem:[%s2 + $0x30] sm:$0xff]
      %v225 = vld [vmem:[%s2 + $0x38] sm:$0xff]
      %v226 = vld [vmem:[%s2 + $0x40] sm:$0xff]
      %v227 = vld [vmem:[%s2 + $0x48] sm:$0xff]
      %v228 = vld [vmem:[%s2 + $0x50] sm:$0xff]
      %v229 = vld [vmem:[%s2 + $0x58] sm:$0xff]
      %v230 = vld [vmem:[%s2 + $0x60] sm:$0xff]
      %v231 = vld [vmem:[%s2 + $0x68] sm:$0xff]
      %v232 = vld [vmem:[%s2 + $0x70] sm:$0xff]
      %v233 = vld [vmem:[%s2 + $0x78] sm:$0xff]
      %vm234 = vcmask 523264
      %v236 = vsel %vm234, %v210, 0
      %v239 = vsel %vm234, %v211, 0
      %v242 = vsel %vm234, %v212, 0
      %v245 = vsel %vm234, %v213, 0
      %v248 = vsel %vm234, %v214, 0
      %v251 = vsel %vm234, %v215, 0
      %v254 = vsel %vm234, %v216, 0
      %v257 = vsel %vm234, %v217, 0
      %259 = vmatpush.msra.mxu0 0.0
      %260 = vmatpush.msra.mxu0 0.0
      %261 = vmatpush.msra.mxu0 0.0
      %262 = vmatpush.msra.mxu0 0.0
      %263 = vmatpush.msra.mxu0 0.0
      %264 = vmatpush.msra.mxu0 0.0
      %265 = vmatpush.msra.mxu0 0.0
      %266 = vmatpush.msra.mxu0 0.0
      %267 = vmatpush.msra.mxu0 %v232
      %268 = vmatpush.msra.mxu0 %v230
      %269 = vmatpush.msra.mxu0 %v228
      %270 = vmatpush.msra.mxu0 %v226
      %271 = vmatpush.msra.mxu0 %v224
      %272 = vmatpush.msra.mxu0 %v222
      %273 = vmatpush.msra.mxu0 %v220
      %274 = vmatpush.msra.mxu0 %v218
      %275 = vmatmul.f32.gmra.mxu0 %v236
      %v276 = vpop.f32.mrf.mxu0
      %v277 = vadd.f32 0.0, %v276
      %278 = vmatmul.f32.gmra.mxu0 %v239
      %v279 = vpop.f32.mrf.mxu0
      %v280 = vadd.f32 0.0, %v279
      %281 = vmatmul.f32.gmra.mxu0 %v242
      %v282 = vpop.f32.mrf.mxu0
      %v283 = vadd.f32 0.0, %v282
      %284 = vmatmul.f32.gmra.mxu0 %v245
      %v285 = vpop.f32.mrf.mxu0
      %v286 = vadd.f32 0.0, %v285
      %287 = vmatmul.f32.gmra.mxu0 %v248
      %v288 = vpop.f32.mrf.mxu0
      %v289 = vadd.f32 0.0, %v288
      %290 = vmatmul.f32.gmra.mxu0 %v251
      %v291 = vpop.f32.mrf.mxu0
      %v292 = vadd.f32 0.0, %v291
      %293 = vmatmul.f32.gmra.mxu0 %v254
      %v294 = vpop.f32.mrf.mxu0
      %v295 = vadd.f32 0.0, %v294
      %296 = vmatmul.f32.gmra.mxu0 %v257
      %v297 = vpop.f32.mrf.mxu0
      %v298 = vadd.f32 0.0, %v297
      %299 = vdwg.mxu0
      %300 = vmatpush.msra.mxu0 0.0
      %301 = vmatpush.msra.mxu0 0.0
      %302 = vmatpush.msra.mxu0 0.0
      %303 = vmatpush.msra.mxu0 0.0
      %304 = vmatpush.msra.mxu0 0.0
      %305 = vmatpush.msra.mxu0 0.0
      %306 = vmatpush.msra.mxu0 0.0
      %307 = vmatpush.msra.mxu0 0.0
      %308 = vmatpush.msra.mxu0 %v233
      %309 = vmatpush.msra.mxu0 %v231
      %310 = vmatpush.msra.mxu0 %v229
      %311 = vmatpush.msra.mxu0 %v227
      %312 = vmatpush.msra.mxu0 %v225
      %313 = vmatpush.msra.mxu0 %v223
      %314 = vmatpush.msra.mxu0 %v221
      %315 = vmatpush.msra.mxu0 %v219
      %316 = vmatmul.f32.gmra.mxu0 %v236
      %v317 = vpop.f32.mrf.mxu0
      %v318 = vadd.f32 0.0, %v317
      %319 = vmatmul.f32.gmra.mxu0 %v239
      %v320 = vpop.f32.mrf.mxu0
      %v321 = vadd.f32 0.0, %v320
      %322 = vmatmul.f32.gmra.mxu0 %v242
      %v323 = vpop.f32.mrf.mxu0
      %v324 = vadd.f32 0.0, %v323
      %325 = vmatmul.f32.gmra.mxu0 %v245
      %v326 = vpop.f32.mrf.mxu0
      %v327 = vadd.f32 0.0, %v326
      %328 = vmatmul.f32.gmra.mxu0 %v248
      %v329 = vpop.f32.mrf.mxu0
      %v330 = vadd.f32 0.0, %v329
      %331 = vmatmul.f32.gmra.mxu0 %v251
      %v332 = vpop.f32.mrf.mxu0
      %v333 = vadd.f32 0.0, %v332
      %334 = vmatmul.f32.gmra.mxu0 %v254
      %v335 = vpop.f32.mrf.mxu0
      %v336 = vadd.f32 0.0, %v335
      %337 = vmatmul.f32.gmra.mxu0 %v257
      %v338 = vpop.f32.mrf.mxu0
      %v339 = vadd.f32 0.0, %v338
      %340 = vdwg.mxu0
      %v341 = vmul.f32 %v277, %v277
      %v342 = vmul.f32 %v280, %v280
      %v343 = vmul.f32 %v283, %v283
      %v344 = vmul.f32 %v286, %v286
      %v345 = vmul.f32 %v289, %v289
      %v346 = vmul.f32 %v292, %v292
      %v347 = vmul.f32 %v295, %v295
      %v348 = vmul.f32 %v298, %v298
      %v349 = vmul.f32 %v318, %v318
      %v350 = vmul.f32 %v321, %v321
      %v351 = vmul.f32 %v324, %v324
      %v352 = vmul.f32 %v327, %v327
      %v353 = vmul.f32 %v330, %v330
      %v354 = vmul.f32 %v333, %v333
      %v355 = vmul.f32 %v336, %v336
      %v356 = vmul.f32 %v339, %v339
      %v357 = vadd.f32 %v341, %v349
      %v358 = vadd.f32 %v342, %v350
      %v359 = vadd.f32 %v343, %v351
      %v360 = vadd.f32 %v344, %v352
      %v361 = vadd.f32 %v345, %v353
      %v362 = vadd.f32 %v346, %v354
      %v363 = vadd.f32 %v347, %v355
      %v364 = vadd.f32 %v348, %v356
      %v365 = vld [vmem:[%s3] sm:$0xff]
      %v366 = vld [vmem:[%s3 + $0x8] sm:$0xff]
      %v367 = vld [vmem:[%s3 + $0x10] sm:$0xff]
      %v368 = vld [vmem:[%s3 + $0x18] sm:$0xff]
      %v369 = vld [vmem:[%s3 + $0x20] sm:$0xff]
      %v370 = vld [vmem:[%s3 + $0x28] sm:$0xff]
      %v371 = vld [vmem:[%s3 + $0x30] sm:$0xff]
      %v372 = vld [vmem:[%s3 + $0x38] sm:$0xff]
      %v373 = vld [vmem:[%s3 + $0x40] sm:$0xff]
      %v374 = vld [vmem:[%s3 + $0x48] sm:$0xff]
      %v375 = vld [vmem:[%s3 + $0x50] sm:$0xff]
      %v376 = vld [vmem:[%s3 + $0x58] sm:$0xff]
      %v377 = vld [vmem:[%s3 + $0x60] sm:$0xff]
      %v378 = vld [vmem:[%s3 + $0x68] sm:$0xff]
      %v379 = vld [vmem:[%s3 + $0x70] sm:$0xff]
      %v380 = vld [vmem:[%s3 + $0x78] sm:$0xff]
      %381 = vmatpush.msra.mxu0 %v380
      %382 = vmatpush.msra.mxu0 %v379
      %383 = vmatpush.msra.mxu0 %v378
      %384 = vmatpush.msra.mxu0 %v377
      %385 = vmatpush.msra.mxu0 %v376
      %386 = vmatpush.msra.mxu0 %v375
      %387 = vmatpush.msra.mxu0 %v374
      %388 = vmatpush.msra.mxu0 %v373
      %389 = vmatpush.msra.mxu0 %v372
      %390 = vmatpush.msra.mxu0 %v371
      %391 = vmatpush.msra.mxu0 %v370
      %392 = vmatpush.msra.mxu0 %v369
      %393 = vmatpush.msra.mxu0 %v368
      %394 = vmatpush.msra.mxu0 %v367
      %395 = vmatpush.msra.mxu0 %v366
      %396 = vmatpush.msra.mxu0 %v365
      %397 = vmatmul.f32.gmra.mxu0 %v357
      %v398 = vpop.f32.mrf.mxu0
      %v399 = vadd.f32 1e-05, %v398
      %400 = vmatmul.f32.gmra.mxu0 %v358
      %v401 = vpop.f32.mrf.mxu0
      %v402 = vadd.f32 1e-05, %v401
      %403 = vmatmul.f32.gmra.mxu0 %v359
      %v404 = vpop.f32.mrf.mxu0
      %v405 = vadd.f32 1e-05, %v404
      %406 = vmatmul.f32.gmra.mxu0 %v360
      %v407 = vpop.f32.mrf.mxu0
      %v408 = vadd.f32 1e-05, %v407
      %409 = vmatmul.f32.gmra.mxu0 %v361
      %v410 = vpop.f32.mrf.mxu0
      %v411 = vadd.f32 1e-05, %v410
      %412 = vmatmul.f32.gmra.mxu0 %v362
      %v413 = vpop.f32.mrf.mxu0
      %v414 = vadd.f32 1e-05, %v413
      %415 = vmatmul.f32.gmra.mxu0 %v363
      %v416 = vpop.f32.mrf.mxu0
      %v417 = vadd.f32 1e-05, %v416
      %418 = vmatmul.f32.gmra.mxu0 %v364
      %v419 = vpop.f32.mrf.mxu0
      %v420 = vadd.f32 1e-05, %v419
      %421 = vdwg.mxu0
      %v422 = vlog2.pop %v399
      %v423 = vmul.f32 %v422, 0.6931472
      %v424 = vlog2.pop %v402
      %v425 = vmul.f32 %v424, 0.6931472
      %v426 = vlog2.pop %v405
      %v427 = vmul.f32 %v426, 0.6931472
      %v428 = vlog2.pop %v408
      %v429 = vmul.f32 %v428, 0.6931472
      %v430 = vlog2.pop %v411
      %v431 = vmul.f32 %v430, 0.6931472
      %v432 = vlog2.pop %v414
      %v433 = vmul.f32 %v432, 0.6931472
      %v434 = vlog2.pop %v417
      %v435 = vmul.f32 %v434, 0.6931472
      %v436 = vlog2.pop %v420
      %v437 = vmul.f32 %v436, 0.6931472
      %v438 = vadd.f32 %v423, 4.5
      %v439 = vadd.f32 %v425, 4.5
      %v440 = vadd.f32 %v427, 4.5
      %v441 = vadd.f32 %v429, 4.5
      %v442 = vadd.f32 %v431, 4.5
      %v443 = vadd.f32 %v433, 4.5
      %v444 = vadd.f32 %v435, 4.5
      %v445 = vadd.f32 %v437, 4.5
      %v446 = vrcp.pop 5.0
      %v447 = vmul.f32 5.0, %v446
      %v448 = vsub.f32 1.0, %v447
      %v449 = vmul.f32 %v446, %v448
      %v450 = vadd.f32 %v446, %v449
      %vm451 = vweird.f32 %v446
      %v452 = vsel %vm451, %v446, %v450
      %v453 = vmul.f32 %v438, %v452
      %v454 = vmul.f32 %v439, %v452
      %v455 = vmul.f32 %v440, %v452
      %v456 = vmul.f32 %v441, %v452
      %v457 = vmul.f32 %v442, %v452
      %v458 = vmul.f32 %v443, %v452
      %v459 = vmul.f32 %v444, %v452
      %v460 = vmul.f32 %v445, %v452
      %vm461 = vcmask 261120
      %462 = vst.msk [vmem:[%s197] sm:$0xff] %vm461, %v453
      %463 = vst.msk [vmem:[%s197 + $0x8] sm:$0xff] %vm461, %v454
      %464 = vst.msk [vmem:[%s197 + $0x10] sm:$0xff] %vm461, %v455
      %465 = vst.msk [vmem:[%s197 + $0x18] sm:$0xff] %vm461, %v456
      %466 = vst.msk [vmem:[%s197 + $0x20] sm:$0xff] %vm461, %v457
      %467 = vst.msk [vmem:[%s197 + $0x28] sm:$0xff] %vm461, %v458
      %468 = vst.msk [vmem:[%s197 + $0x30] sm:$0xff] %vm461, %v459
      %469 = vst.msk [vmem:[%s197 + $0x38] sm:$0xff] %vm461, %v460
      %p470 = scmp.lt.s32.totalorder %s15, 1
      %s471 = scalar_select %p470, %s15, 1
      %s472 = smul.addr %s471, 8
      %s473 = smul.addr %s472, 8
      %s474 = scalar_lea.vmem %s4, %s473
      // Predicated region
      $region37: #{my_passt_forward.2} parent=35 // pred_check
        %p475 = pneg %p122
      $region38: #{my_passt_forward.2} parent=35 // pred_check_branch
        %477 = sbr.rel (%p475) target = $region40
      $region39: #{my_passt_forward.2} parent=35 // pred_region
        _
      $region40: #{my_passt_forward.2} parent=35 // pred_fallthru
        _
    $region36: #{my_passt_forward.2} parent=5 // pred_fallthru
      _
    %p478 = scmp.le.s32.totalorder 2, %s10
    // Predicated region
    $region41: #{my_passt_forward.2} parent=5 // pred_check
      %p479 = pneg %p478
    $region42: #{my_passt_forward.2} parent=5 // pred_check_branch
      %481 = sbr.rel (%p479) target = $region44
    $region43: #{my_passt_forward.2} parent=5 // pred_region
      %s482 = ssub.s32 %s10, 2
      // Predicated region
      $region45: #{my_passt_forward.2} parent=43 // pred_check
        %p483 = pneg %p128
      $region46: #{my_passt_forward.2} parent=43 // pred_check_branch
        %485 = sbr.rel (%p483) target = $region48
      $region47: #{my_passt_forward.2} parent=43 // pred_region
        %p486 = scmp.lt.s32.totalorder %s16, 1
        %s487 = scalar_select %p486, %s16, 1
        %s488 = smul.addr %s487, 8
        %s489 = smul.addr %s488, 8
        %s490 = scalar_lea.vmem %s4, %s489
      $region48: #{my_passt_forward.2} parent=43 // pred_fallthru
        _
    $region44: #{my_passt_forward.2} parent=5 // pred_fallthru
      _
  $region6: #{my_passt_forward.2} parent=0 // loop_footer
    %s14 = sadd.s32 1, %s10
  $region7: #{my_passt_forward.2} parent=0 // loop_footer_branch
    %9 = sbr.rel target = $region3
  $region8: #{my_passt_forward.2} parent=0 // loop_exit
    _

// kernel: my_passt_forward.3
$region0: #{my_passt_forward.3}
  #allocation0 [shape = 'u32[]', space=smem, size = 0x4, offset = 0x4, fixed_abs, tag = 'smem constant byte address 0x4 - core index']
  #allocation1 [shape = 'u32[72,128]{1,0:T(1,128)}', space=vmem, size = 0x9000, scoped, tag = 'internal scratch']
  #allocation2 [shape = 'f32[128,64]{1,0:T(8,128)}', space=vmem, size = 0x10000, scoped, tag = 'scratch operand']
  #allocation3 [shape = 'f32[128,64]{1,0:T(8,128)}', space=vmem, size = 0x10000, scoped, tag = 'scratch operand']
  %s0 = inlined_call_operand.vmem [shape: f32[2,105,64], index: 0, kind: input, shape index: {}]
  %s1 = inlined_call_operand.vmem [shape: bf16[64,64], index: 1, kind: input, shape index: {}]
  %s2 = inlined_call_operand.vmem [shape: f32[1,64], index: 2, kind: input, shape index: {}]
  %s3 = inlined_call_operand.vmem [shape: f32[105,64], index: 3, kind: input, shape index: {}]
  %s4 = inlined_call_operand.vmem [shape: f32[2,64], index: 4, kind: input, shape index: {}]
  %s5 = inlined_call_operand.vmem [shape: f32[2,1,64], index: 5, kind: input, shape index: {}]
  %s6 = inlined_call_operand.vmem [shape: f32[2,1,64], index: 6, kind: input, shape index: {}]
  %s7 = inlined_call_operand.vmem [shape: bf16[2,64,192], index: 7, kind: input, shape index: {}]
  %s8 = inlined_call_operand.vmem [shape: f32[2,1,192], index: 8, kind: input, shape index: {}]
  %s9 = inlined_call_operand.vmem [shape: bf16[2,64,64], index: 9, kind: input, shape index: {}]
  %s10 = inlined_call_operand.vmem [shape: f32[2,1,64], index: 10, kind: input, shape index: {}]
  %s11 = inlined_call_operand.vmem [shape: f32[2,1,64], index: 11, kind: input, shape index: {}]
  %s12 = inlined_call_operand.vmem [shape: f32[2,1,64], index: 12, kind: input, shape index: {}]
  %s13 = inlined_call_operand.vmem [shape: bf16[2,64,256], index: 13, kind: input, shape index: {}]
  %s14 = inlined_call_operand.vmem [shape: f32[2,1,256], index: 14, kind: input, shape index: {}]
  %s15 = inlined_call_operand.vmem [shape: bf16[2,256,64], index: 15, kind: input, shape index: {}]
  %s16 = inlined_call_operand.vmem [shape: f32[2,1,64], index: 16, kind: input, shape index: {}]
  %s17 = inlined_call_operand.vmem [shape: f32[1,64], index: 17, kind: input, shape index: {}]
  %s18 = inlined_call_operand.vmem [shape: f32[1,64], index: 18, kind: input, shape index: {}]
  %s19 = inlined_call_operand.vmem [shape: bf16[64,32], index: 19, kind: input, shape index: {}]
  %s20 = inlined_call_operand.vmem [shape: f32[1,32], index: 20, kind: input, shape index: {}]
  %s21 = inlined_call_operand.hbm [shape: f32[2,1,32], index: 21, kind: output, shape index: {}]
  %s22 = sld [smem:[#allocation0]]
  $region125: #{my_passt_forward.3} parent=0
    _
  %s24 = ssub.s32 1, %s22
  %s25 = scalar_select 0, %s24, %s22
  $region1: #{my_passt_forward.3} parent=0
    #allocation4 [shape = 'u8[1024]{0}', space=vmem, size = 0x400, scoped, tag = 'output window, operand 0']
    #allocation5 [shape = 's32[2]{0}', space=sflag, size = 0x8, scoped, tag = 'scoped memory for my_passt_forward.3']
    %26 = vsyncpa [#allocation5], 0
    %s27 = scalar_lea.sflag [#allocation5], 1
    %28 = vsyncpa %s27, 0
    loop: start=0, step=1, limit=6
    $region2: #{my_passt_forward.3} parent=1 // loop_pre_header
      _
    $region3: #{my_passt_forward.3} parent=1 // loop_header
      %s30 = sphi 0, %s34
      %p31 = scmp.ge.s32.totalorder %s30, 6
      %s37 = sphi 0, %s49
      %s38 = sphi 0, %s45
      %s39 = sphi 0, %s37
      %s40 = sphi 0, %s38
      %s41 = sphi 0, %s39
      %s42 = sphi 0, %s40
      %s52 = sphi 0, %s54
      %s55 = sphi 0, %s52
      %s56 = sphi 0, %s55
      %s72 = sphi 0, %s56
      %s76 = sphi 0, %s76
      %s78 = sphi 0, %s76
      %s79 = sphi 0, %s78
      %s93 = sphi 0, %s79
      %s97 = sphi 0, %s97
      %s99 = sphi 0, %s97
      %s100 = sphi 0, %s99
      %s114 = sphi 0, %s100
      %s118 = sphi 0, %s118
      %s120 = sphi 0, %s118
      %s121 = sphi 0, %s120
      %s135 = sphi 0, %s121
      %s139 = sphi 0, %s139
      %s141 = sphi 0, %s139
      %s142 = sphi 0, %s141
      %s156 = sphi 0, %s142
      %s162 = sphi 0, %s164
      %s165 = sphi 0, %s162
      %s166 = sphi 0, %s165
      %s182 = sphi 0, %s166
      %s188 = sphi 0, %s190
      %s191 = sphi 0, %s188
      %s192 = sphi 0, %s191
      %s208 = sphi 0, %s192
      %s214 = sphi 0, %s216
      %s217 = sphi 0, %s214
      %s218 = sphi 0, %s217
      %s234 = sphi 0, %s218
      %s240 = sphi 0, %s242
      %s243 = sphi 0, %s240
      %s244 = sphi 0, %s243
      %s260 = sphi 0, %s244
      %s266 = sphi 0, %s268
      %s269 = sphi 0, %s266
      %s270 = sphi 0, %s269
      %s286 = sphi 0, %s270
      %s292 = sphi 0, %s294
      %s295 = sphi 0, %s292
      %s296 = sphi 0, %s295
      %s312 = sphi 0, %s296
      %s318 = sphi 0, %s320
      %s321 = sphi 0, %s318
      %s322 = sphi 0, %s321
      %s338 = sphi 0, %s322
      %s344 = sphi 0, %s346
      %s347 = sphi 0, %s344
      %s348 = sphi 0, %s347
      %s364 = sphi 0, %s348
      %s370 = sphi 0, %s372
      %s373 = sphi 0, %s370
      %s374 = sphi 0, %s373
      %s390 = sphi 0, %s374
      %s396 = sphi 0, %s398
      %s399 = sphi 0, %s396
      %s400 = sphi 0, %s399
      %s416 = sphi 0, %s400
      %s422 = sphi 0, %s424
      %s425 = sphi 0, %s422
      %s426 = sphi 0, %s425
      %s442 = sphi 0, %s426
      %s448 = sphi 0, %s450
      %s451 = sphi 0, %s448
      %s452 = sphi 0, %s451
      %s468 = sphi 0, %s452
      %s472 = sphi 0, %s472
      %s474 = sphi 0, %s472
      %s475 = sphi 0, %s474
      %s489 = sphi 0, %s475
      %s493 = sphi 0, %s493
      %s495 = sphi 0, %s493
      %s496 = sphi 0, %s495
      %s510 = sphi 0, %s496
      %s514 = sphi 0, %s514
      %s516 = sphi 0, %s514
      %s517 = sphi 0, %s516
      %s531 = sphi 0, %s517
      %s535 = sphi 0, %s535
      %s537 = sphi 0, %s535
      %s538 = sphi 0, %s537
      %s552 = sphi 0, %s538
      %s558 = sphi 0, %s560
      %s561 = sphi 0, %s558
      %s562 = sphi 0, %s561
      %s578 = sphi 0, %s562
    $region4: #{my_passt_forward.3} parent=1 // loop_header_branch
      %33 = sbr.rel (%p31) target = $region8
    $region5: #{my_passt_forward.3} parent=1 // loop_body
      %s35 = ssub.s32 %s30, 1
      %s36 = ssub.s32 %s30, 2
      %s43 = sadd.s32 1, %s38
      %p44 = scmp.ge.s32.totalorder %s43, 2
      %s45 = scalar_select %p44, 0, %s43
      %s46 = sadd.s32 1, %s37
      %s47 = scalar_select %p44, %s46, %s37
      %p48 = scmp.ge.s32.totalorder %s47, 2
      %s49 = scalar_select %p48, 0, %s47
      %s50 = ssub.s32 %s37, %s49
      %p51 = scmp.eq.s32.totalorder %s50, 0
      %s53 = sadd.s32 %s52, 1
      %s54 = scalar_select %p51, %s52, %s53
      %p57 = pneg %p51
      %p58 = scmp.eq.s32.totalorder %s30, 3
      %p59 = por %p57, %p58
      %p60 = scmp.ne.s32.totalorder %s52, %s55
      %p61 = scmp.eq.s32.totalorder %s30, 0
      %p62 = por %p60, %p61
      %p63 = scmp.ne.s32.totalorder %s52, %s55
      %p64 = scmp.eq.s32.totalorder %s35, 3
      %p65 = por %p63, %p64
      %p66 = scmp.ne.s32.totalorder %s55, %s56
      %p67 = scmp.eq.s32.totalorder %s35, 0
      %p68 = por %p66, %p67
      %p69 = scmp.ne.s32.totalorder %s55, %s56
      %p70 = scmp.eq.s32.totalorder %s36, 3
      %p71 = por %p69, %p70
      %p73 = scmp.ne.s32.totalorder %s56, %s72
      %p74 = scmp.eq.s32.totalorder %s36, 0
      %p75 = por %p73, %p74
      %s77 = sadd.s32 %s76, 1
      %p80 = scmp.eq.s32.totalorder %s30, 3
      %p81 = scmp.ne.s32.totalorder %s76, %s78
      %p82 = scmp.eq.s32.totalorder %s30, 0
      %p83 = por %p81, %p82
      %p84 = scmp.ne.s32.totalorder %s76, %s78
      %p85 = scmp.eq.s32.totalorder %s35, 3
      %p86 = por %p84, %p85
      %p87 = scmp.ne.s32.totalorder %s78, %s79
      %p88 = scmp.eq.s32.totalorder %s35, 0
      %p89 = por %p87, %p88
      %p90 = scmp.ne.s32.totalorder %s78, %s79
      %p91 = scmp.eq.s32.totalorder %s36, 3
      %p92 = por %p90, %p91
      %p94 = scmp.ne.s32.totalorder %s79, %s93
      %p95 = scmp.eq.s32.totalorder %s36, 0
      %p96 = por %p94, %p95
      %s98 = sadd.s32 %s97, 1
      %p101 = scmp.eq.s32.totalorder %s30, 3
      %p102 = scmp.ne.s32.totalorder %s97, %s99
      %p103 = scmp.eq.s32.totalorder %s30, 0
      %p104 = por %p102, %p103
      %p105 = scmp.ne.s32.totalorder %s97, %s99
      %p106 = scmp.eq.s32.totalorder %s35, 3
      %p107 = por %p105, %p106
      %p108 = scmp.ne.s32.totalorder %s99, %s100
      %p109 = scmp.eq.s32.totalorder %s35, 0
      %p110 = por %p108, %p109
      %p111 = scmp.ne.s32.totalorder %s99, %s100
      %p112 = scmp.eq.s32.totalorder %s36, 3
      %p113 = por %p111, %p112
      %p115 = scmp.ne.s32.totalorder %s100, %s114
      %p116 = scmp.eq.s32.totalorder %s36, 0
      %p117 = por %p115, %p116
      %s119 = sadd.s32 %s118, 1
      %p122 = scmp.eq.s32.totalorder %s30, 3
      %p123 = scmp.ne.s32.totalorder %s118, %s120
      %p124 = scmp.eq.s32.totalorder %s30, 0
      %p125 = por %p123, %p124
      %p126 = scmp.ne.s32.totalorder %s118, %s120
      %p127 = scmp.eq.s32.totalorder %s35, 3
      %p128 = por %p126, %p127
      %p129 = scmp.ne.s32.totalorder %s120, %s121
      %p130 = scmp.eq.s32.totalorder %s35, 0
      %p131 = por %p129, %p130
      %p132 = scmp.ne.s32.totalorder %s120, %s121
      %p133 = scmp.eq.s32.totalorder %s36, 3
      %p134 = por %p132, %p133
      %p136 = scmp.ne.s32.totalorder %s121, %s135
      %p137 = scmp.eq.s32.totalorder %s36, 0
      %p138 = por %p136, %p137
      %s140 = sadd.s32 %s139, 1
      %p143 = scmp.eq.s32.totalorder %s30, 3
      %p144 = scmp.ne.s32.totalorder %s139, %s141
      %p145 = scmp.eq.s32.totalorder %s30, 0
      %p146 = por %p144, %p145
      %p147 = scmp.ne.s32.totalorder %s139, %s141
      %p148 = scmp.eq.s32.totalorder %s35, 3
      %p149 = por %p147, %p148
      %p150 = scmp.ne.s32.totalorder %s141, %s142
      %p151 = scmp.eq.s32.totalorder %s35, 0
      %p152 = por %p150, %p151
      %p153 = scmp.ne.s32.totalorder %s141, %s142
      %p154 = scmp.eq.s32.totalorder %s36, 3
      %p155 = por %p153, %p154
      %p157 = scmp.ne.s32.totalorder %s142, %s156
      %p158 = scmp.eq.s32.totalorder %s36, 0
      %p159 = por %p157, %p158
      %s160 = ssub.s32 %s38, %s45
      %p161 = scmp.eq.s32.totalorder %s160, 0
      %s163 = sadd.s32 %s162, 1
      %s164 = scalar_select %p161, %s162, %s163
      %p167 = pneg %p161
      %p168 = scmp.eq.s32.totalorder %s30, 3
      %p169 = por %p167, %p168
      %p170 = scmp.ne.s32.totalorder %s162, %s165
      %p171 = scmp.eq.s32.totalorder %s30, 0
      %p172 = por %p170, %p171
      %p173 = scmp.ne.s32.totalorder %s162, %s165
      %p174 = scmp.eq.s32.totalorder %s35, 3
      %p175 = por %p173, %p174
      %p176 = scmp.ne.s32.totalorder %s165, %s166
      %p177 = scmp.eq.s32.totalorder %s35, 0
      %p178 = por %p176, %p177
      %p179 = scmp.ne.s32.totalorder %s165, %s166
      %p180 = scmp.eq.s32.totalorder %s36, 3
      %p181 = por %p179, %p180
      %p183 = scmp.ne.s32.totalorder %s166, %s182
      %p184 = scmp.eq.s32.totalorder %s36, 0
      %p185 = por %p183, %p184
      %s186 = ssub.s32 %s38, %s45
      %p187 = scmp.eq.s32.totalorder %s186, 0
      %s189 = sadd.s32 %s188, 1
      %s190 = scalar_select %p187, %s188, %s189
      %p193 = pneg %p187
      %p194 = scmp.eq.s32.totalorder %s30, 3
      %p195 = por %p193, %p194
      %p196 = scmp.ne.s32.totalorder %s188, %s191
      %p197 = scmp.eq.s32.totalorder %s30, 0
      %p198 = por %p196, %p197
      %p199 = scmp.ne.s32.totalorder %s188, %s191
      %p200 = scmp.eq.s32.totalorder %s35, 3
      %p201 = por %p199, %p200
      %p202 = scmp.ne.s32.totalorder %s191, %s192
      %p203 = scmp.eq.s32.totalorder %s35, 0
      %p204 = por %p202, %p203
      %p205 = scmp.ne.s32.totalorder %s191, %s192
      %p206 = scmp.eq.s32.totalorder %s36, 3
      %p207 = por %p205, %p206
      %p209 = scmp.ne.s32.totalorder %s192, %s208
      %p210 = scmp.eq.s32.totalorder %s36, 0
      %p211 = por %p209, %p210
      %s212 = ssub.s32 %s38, %s45
      %p213 = scmp.eq.s32.totalorder %s212, 0
      %s215 = sadd.s32 %s214, 1
      %s216 = scalar_select %p213, %s214, %s215
      %p219 = pneg %p213
      %p220 = scmp.eq.s32.totalorder %s30, 3
      %p221 = por %p219, %p220
      %p222 = scmp.ne.s32.totalorder %s214, %s217
      %p223 = scmp.eq.s32.totalorder %s30, 0
      %p224 = por %p222, %p223
      %p225 = scmp.ne.s32.totalorder %s214, %s217
      %p226 = scmp.eq.s32.totalorder %s35, 3
      %p227 = por %p225, %p226
      %p228 = scmp.ne.s32.totalorder %s217, %s218
      %p229 = scmp.eq.s32.totalorder %s35, 0
      %p230 = por %p228, %p229
      %p231 = scmp.ne.s32.totalorder %s217, %s218
      %p232 = scmp.eq.s32.totalorder %s36, 3
      %p233 = por %p231, %p232
      %p235 = scmp.ne.s32.totalorder %s218, %s234
      %p236 = scmp.eq.s32.totalorder %s36, 0
      %p237 = por %p235, %p236
      %s238 = ssub.s32 %s38, %s45
      %p239 = scmp.eq.s32.totalorder %s238, 0
      %s241 = sadd.s32 %s240, 1
      %s242 = scalar_select %p239, %s240, %s241
      %p245 = pneg %p239
      %p246 = scmp.eq.s32.totalorder %s30, 3
      %p247 = por %p245, %p246
      %p248 = scmp.ne.s32.totalorder %s240, %s243
      %p249 = scmp.eq.s32.totalorder %s30, 0
      %p250 = por %p248, %p249
      %p251 = scmp.ne.s32.totalorder %s240, %s243
      %p252 = scmp.eq.s32.totalorder %s35, 3
      %p253 = por %p251, %p252
      %p254 = scmp.ne.s32.totalorder %s243, %s244
      %p255 = scmp.eq.s32.totalorder %s35, 0
      %p256 = por %p254, %p255
      %p257 = scmp.ne.s32.totalorder %s243, %s244
      %p258 = scmp.eq.s32.totalorder %s36, 3
      %p259 = por %p257, %p258
      %p261 = scmp.ne.s32.totalorder %s244, %s260
      %p262 = scmp.eq.s32.totalorder %s36, 0
      %p263 = por %p261, %p262
      %s264 = ssub.s32 %s38, %s45
      %p265 = scmp.eq.s32.totalorder %s264, 0
      %s267 = sadd.s32 %s266, 1
      %s268 = scalar_select %p265, %s266, %s267
      %p271 = pneg %p265
      %p272 = scmp.eq.s32.totalorder %s30, 3
      %p273 = por %p271, %p272
      %p274 = scmp.ne.s32.totalorder %s266, %s269
      %p275 = scmp.eq.s32.totalorder %s30, 0
      %p276 = por %p274, %p275
      %p277 = scmp.ne.s32.totalorder %s266, %s269
      %p278 = scmp.eq.s32.totalorder %s35, 3
      %p279 = por %p277, %p278
      %p280 = scmp.ne.s32.totalorder %s269, %s270
      %p281 = scmp.eq.s32.totalorder %s35, 0
      %p282 = por %p280, %p281
      %p283 = scmp.ne.s32.totalorder %s269, %s270
      %p284 = scmp.eq.s32.totalorder %s36, 3
      %p285 = por %p283, %p284
      %p287 = scmp.ne.s32.totalorder %s270, %s286
      %p288 = scmp.eq.s32.totalorder %s36, 0
      %p289 = por %p287, %p288
      %s290 = ssub.s32 %s38, %s45
      %p291 = scmp.eq.s32.totalorder %s290, 0
      %s293 = sadd.s32 %s292, 1
      %s294 = scalar_select %p291, %s292, %s293
      %p297 = pneg %p291
      %p298 = scmp.eq.s32.totalorder %s30, 3
      %p299 = por %p297, %p298
      %p300 = scmp.ne.s32.totalorder %s292, %s295
      %p301 = scmp.eq.s32.totalorder %s30, 0
      %p302 = por %p300, %p301
      %p303 = scmp.ne.s32.totalorder %s292, %s295
      %p304 = scmp.eq.s32.totalorder %s35, 3
      %p305 = por %p303, %p304
      %p306 = scmp.ne.s32.totalorder %s295, %s296
      %p307 = scmp.eq.s32.totalorder %s35, 0
      %p308 = por %p306, %p307
      %p309 = scmp.ne.s32.totalorder %s295, %s296
      %p310 = scmp.eq.s32.totalorder %s36, 3
      %p311 = por %p309, %p310
      %p313 = scmp.ne.s32.totalorder %s296, %s312
      %p314 = scmp.eq.s32.totalorder %s36, 0
      %p315 = por %p313, %p314
      %s316 = ssub.s32 %s38, %s45
      %p317 = scmp.eq.s32.totalorder %s316, 0
      %s319 = sadd.s32 %s318, 1
      %s320 = scalar_select %p317, %s318, %s319
      %p323 = pneg %p317
      %p324 = scmp.eq.s32.totalorder %s30, 3
      %p325 = por %p323, %p324
      %p326 = scmp.ne.s32.totalorder %s318, %s321
      %p327 = scmp.eq.s32.totalorder %s30, 0
      %p328 = por %p326, %p327
      %p329 = scmp.ne.s32.totalorder %s318, %s321
      %p330 = scmp.eq.s32.totalorder %s35, 3
      %p331 = por %p329, %p330
      %p332 = scmp.ne.s32.totalorder %s321, %s322
      %p333 = scmp.eq.s32.totalorder %s35, 0
      %p334 = por %p332, %p333
      %p335 = scmp.ne.s32.totalorder %s321, %s322
      %p336 = scmp.eq.s32.totalorder %s36, 3
      %p337 = por %p335, %p336
      %p339 = scmp.ne.s32.totalorder %s322, %s338
      %p340 = scmp.eq.s32.totalorder %s36, 0
      %p341 = por %p339, %p340
      %s342 = ssub.s32 %s38, %s45
      %p343 = scmp.eq.s32.totalorder %s342, 0
      %s345 = sadd.s32 %s344, 1
      %s346 = scalar_select %p343, %s344, %s345
      %p349 = pneg %p343
      %p350 = scmp.eq.s32.totalorder %s30, 3
      %p351 = por %p349, %p350
      %p352 = scmp.ne.s32.totalorder %s344, %s347
      %p353 = scmp.eq.s32.totalorder %s30, 0
      %p354 = por %p352, %p353
      %p355 = scmp.ne.s32.totalorder %s344, %s347
      %p356 = scmp.eq.s32.totalorder %s35, 3
      %p357 = por %p355, %p356
      %p358 = scmp.ne.s32.totalorder %s347, %s348
      %p359 = scmp.eq.s32.totalorder %s35, 0
      %p360 = por %p358, %p359
      %p361 = scmp.ne.s32.totalorder %s347, %s348
      %p362 = scmp.eq.s32.totalorder %s36, 3
      %p363 = por %p361, %p362
      %p365 = scmp.ne.s32.totalorder %s348, %s364
      %p366 = scmp.eq.s32.totalorder %s36, 0
      %p367 = por %p365, %p366
      %s368 = ssub.s32 %s38, %s45
      %p369 = scmp.eq.s32.totalorder %s368, 0
      %s371 = sadd.s32 %s370, 1
      %s372 = scalar_select %p369, %s370, %s371
      %p375 = pneg %p369
      %p376 = scmp.eq.s32.totalorder %s30, 3
      %p377 = por %p375, %p376
      %p378 = scmp.ne.s32.totalorder %s370, %s373
      %p379 = scmp.eq.s32.totalorder %s30, 0
      %p380 = por %p378, %p379
      %p381 = scmp.ne.s32.totalorder %s370, %s373
      %p382 = scmp.eq.s32.totalorder %s35, 3
      %p383 = por %p381, %p382
      %p384 = scmp.ne.s32.totalorder %s373, %s374
      %p385 = scmp.eq.s32.totalorder %s35, 0
      %p386 = por %p384, %p385
      %p387 = scmp.ne.s32.totalorder %s373, %s374
      %p388 = scmp.eq.s32.totalorder %s36, 3
      %p389 = por %p387, %p388
      %p391 = scmp.ne.s32.totalorder %s374, %s390
      %p392 = scmp.eq.s32.totalorder %s36, 0
      %p393 = por %p391, %p392
      %s394 = ssub.s32 %s38, %s45
      %p395 = scmp.eq.s32.totalorder %s394, 0
      %s397 = sadd.s32 %s396, 1
      %s398 = scalar_select %p395, %s396, %s397
      %p401 = pneg %p395
      %p402 = scmp.eq.s32.totalorder %s30, 3
      %p403 = por %p401, %p402
      %p404 = scmp.ne.s32.totalorder %s396, %s399
      %p405 = scmp.eq.s32.totalorder %s30, 0
      %p406 = por %p404, %p405
      %p407 = scmp.ne.s32.totalorder %s396, %s399
      %p408 = scmp.eq.s32.totalorder %s35, 3
      %p409 = por %p407, %p408
      %p410 = scmp.ne.s32.totalorder %s399, %s400
      %p411 = scmp.eq.s32.totalorder %s35, 0
      %p412 = por %p410, %p411
      %p413 = scmp.ne.s32.totalorder %s399, %s400
      %p414 = scmp.eq.s32.totalorder %s36, 3
      %p415 = por %p413, %p414
      %p417 = scmp.ne.s32.totalorder %s400, %s416
      %p418 = scmp.eq.s32.totalorder %s36, 0
      %p419 = por %p417, %p418
      %s420 = ssub.s32 %s38, %s45
      %p421 = scmp.eq.s32.totalorder %s420, 0
      %s423 = sadd.s32 %s422, 1
      %s424 = scalar_select %p421, %s422, %s423
      %p427 = pneg %p421
      %p428 = scmp.eq.s32.totalorder %s30, 3
      %p429 = por %p427, %p428
      %p430 = scmp.ne.s32.totalorder %s422, %s425
      %p431 = scmp.eq.s32.totalorder %s30, 0
      %p432 = por %p430, %p431
      %p433 = scmp.ne.s32.totalorder %s422, %s425
      %p434 = scmp.eq.s32.totalorder %s35, 3
      %p435 = por %p433, %p434
      %p436 = scmp.ne.s32.totalorder %s425, %s426
      %p437 = scmp.eq.s32.totalorder %s35, 0
      %p438 = por %p436, %p437
      %p439 = scmp.ne.s32.totalorder %s425, %s426
      %p440 = scmp.eq.s32.totalorder %s36, 3
      %p441 = por %p439, %p440
      %p443 = scmp.ne.s32.totalorder %s426, %s442
      %p444 = scmp.eq.s32.totalorder %s36, 0
      %p445 = por %p443, %p444
      %s446 = ssub.s32 %s38, %s45
      %p447 = scmp.eq.s32.totalorder %s446, 0
      %s449 = sadd.s32 %s448, 1
      %s450 = scalar_select %p447, %s448, %s449
      %p453 = pneg %p447
      %p454 = scmp.eq.s32.totalorder %s30, 3
      %p455 = por %p453, %p454
      %p456 = scmp.ne.s32.totalorder %s448, %s451
      %p457 = scmp.eq.s32.totalorder %s30, 0
      %p458 = por %p456, %p457
      %p459 = scmp.ne.s32.totalorder %s448, %s451
      %p460 = scmp.eq.s32.totalorder %s35, 3
      %p461 = por %p459, %p460
      %p462 = scmp.ne.s32.totalorder %s451, %s452
      %p463 = scmp.eq.s32.totalorder %s35, 0
      %p464 = por %p462, %p463
      %p465 = scmp.ne.s32.totalorder %s451, %s452
      %p466 = scmp.eq.s32.totalorder %s36, 3
      %p467 = por %p465, %p466
      %p469 = scmp.ne.s32.totalorder %s452, %s468
      %p470 = scmp.eq.s32.totalorder %s36, 0
      %p471 = por %p469, %p470
      %s473 = sadd.s32 %s472, 1
      %p476 = scmp.eq.s32.totalorder %s30, 3
      %p477 = scmp.ne.s32.totalorder %s472, %s474
      %p478 = scmp.eq.s32.totalorder %s30, 0
      %p479 = por %p477, %p478
      %p480 = scmp.ne.s32.totalorder %s472, %s474
      %p481 = scmp.eq.s32.totalorder %s35, 3
      %p482 = por %p480, %p481
      %p483 = scmp.ne.s32.totalorder %s474, %s475
      %p484 = scmp.eq.s32.totalorder %s35, 0
      %p485 = por %p483, %p484
      %p486 = scmp.ne.s32.totalorder %s474, %s475
      %p487 = scmp.eq.s32.totalorder %s36, 3
      %p488 = por %p486, %p487
      %p490 = scmp.ne.s32.totalorder %s475, %s489
      %p491 = scmp.eq.s32.totalorder %s36, 0
      %p492 = por %p490, %p491
      %s494 = sadd.s32 %s493, 1
      %p497 = scmp.eq.s32.totalorder %s30, 3
      %p498 = scmp.ne.s32.totalorder %s493, %s495
      %p499 = scmp.eq.s32.totalorder %s30, 0
      %p500 = por %p498, %p499
      %p501 = scmp.ne.s32.totalorder %s493, %s495
      %p502 = scmp.eq.s32.totalorder %s35, 3
      %p503 = por %p501, %p502
      %p504 = scmp.ne.s32.totalorder %s495, %s496
      %p505 = scmp.eq.s32.totalorder %s35, 0
      %p506 = por %p504, %p505
      %p507 = scmp.ne.s32.totalorder %s495, %s496
      %p508 = scmp.eq.s32.totalorder %s36, 3
      %p509 = por %p507, %p508
      %p511 = scmp.ne.s32.totalorder %s496, %s510
      %p512 = scmp.eq.s32.totalorder %s36, 0
      %p513 = por %p511, %p512
      %s515 = sadd.s32 %s514, 1
      %p518 = scmp.eq.s32.totalorder %s30, 3
      %p519 = scmp.ne.s32.totalorder %s514, %s516
      %p520 = scmp.eq.s32.totalorder %s30, 0
      %p521 = por %p519, %p520
      %p522 = scmp.ne.s32.totalorder %s514, %s516
      %p523 = scmp.eq.s32.totalorder %s35, 3
      %p524 = por %p522, %p523
      %p525 = scmp.ne.s32.totalorder %s516, %s517
      %p526 = scmp.eq.s32.totalorder %s35, 0
      %p527 = por %p525, %p526
      %p528 = scmp.ne.s32.totalorder %s516, %s517
      %p529 = scmp.eq.s32.totalorder %s36, 3
      %p530 = por %p528, %p529
      %p532 = scmp.ne.s32.totalorder %s517, %s531
      %p533 = scmp.eq.s32.totalorder %s36, 0
      %p534 = por %p532, %p533
      %s536 = sadd.s32 %s535, 1
      %p539 = scmp.eq.s32.totalorder %s30, 3
      %p540 = scmp.ne.s32.totalorder %s535, %s537
      %p541 = scmp.eq.s32.totalorder %s30, 0
      %p542 = por %p540, %p541
      %p543 = scmp.ne.s32.totalorder %s535, %s537
      %p544 = scmp.eq.s32.totalorder %s35, 3
      %p545 = por %p543, %p544
      %p546 = scmp.ne.s32.totalorder %s537, %s538
      %p547 = scmp.eq.s32.totalorder %s35, 0
      %p548 = por %p546, %p547
      %p549 = scmp.ne.s32.totalorder %s537, %s538
      %p550 = scmp.eq.s32.totalorder %s36, 3
      %p551 = por %p549, %p550
      %p553 = scmp.ne.s32.totalorder %s538, %s552
      %p554 = scmp.eq.s32.totalorder %s36, 0
      %p555 = por %p553, %p554
      %s556 = ssub.s32 %s37, %s49
      %p557 = scmp.eq.s32.totalorder %s556, 0
      %s559 = sadd.s32 %s558, 1
      %s560 = scalar_select %p557, %s558, %s559
      %p563 = pneg %p557
      %p564 = scmp.eq.s32.totalorder %s30, 3
      %p565 = por %p563, %p564
      %p566 = scmp.ne.s32.totalorder %s558, %s561
      %p567 = scmp.eq.s32.totalorder %s30, 0
      %p568 = por %p566, %p567
      %p569 = scmp.ne.s32.totalorder %s558, %s561
      %p570 = scmp.eq.s32.totalorder %s35, 3
      %p571 = por %p569, %p570
      %p572 = scmp.ne.s32.totalorder %s561, %s562
      %p573 = scmp.eq.s32.totalorder %s35, 0
      %p574 = por %p572, %p573
      %p575 = scmp.ne.s32.totalorder %s561, %s562
      %p576 = scmp.eq.s32.totalorder %s36, 3
      %p577 = por %p575, %p576
      %p579 = scmp.ne.s32.totalorder %s562, %s578
      %p580 = scmp.eq.s32.totalorder %s36, 0
      %p581 = por %p579, %p580
      %p582 = scmp.le.s32.totalorder 1, %s30
      %p583 = scmp.lt.s32.totalorder %s30, 5
      %p584 = pnand %p582, %p583
      %p585 = pneg %p584
      // Predicated region
      $region9: #{my_passt_forward.3} parent=5 // pred_check
        _
      $region10: #{my_passt_forward.3} parent=5 // pred_check_branch
        %587 = sbr.rel (%p584) target = $region12
      $region11: #{my_passt_forward.3} parent=5 // pred_region
        %s588 = ssub.s32 %s30, 1
        // Predicated region
        $region13: #{my_passt_forward.3} parent=11 // pred_check
          %p589 = pneg %p89
        $region14: #{my_passt_forward.3} parent=11 // pred_check_branch
          %591 = sbr.rel (%p589) target = $region16
        $region15: #{my_passt_forward.3} parent=11 // pred_region
          _
        $region16: #{my_passt_forward.3} parent=11 // pred_fallthru
          _
        // Predicated region
        $region17: #{my_passt_forward.3} parent=11 // pred_check
          %p592 = pneg %p110
        $region18: #{my_passt_forward.3} parent=11 // pred_check_branch
          %594 = sbr.rel (%p592) target = $region20
        $region19: #{my_passt_forward.3} parent=11 // pred_region
          _
        $region20: #{my_passt_forward.3} parent=11 // pred_fallthru
          _
        // Predicated region
        $region21: #{my_passt_forward.3} parent=11 // pred_check
          %p595 = pneg %p131
        $region22: #{my_passt_forward.3} parent=11 // pred_check_branch
          %597 = sbr.rel (%p595) target = $region24
        $region23: #{my_passt_forward.3} parent=11 // pred_region
          _
        $region24: #{my_passt_forward.3} parent=11 // pred_fallthru
          _
        // Predicated region
        $region25: #{my_passt_forward.3} parent=11 // pred_check
          %p598 = pneg %p152
        $region26: #{my_passt_forward.3} parent=11 // pred_check_branch
          %600 = sbr.rel (%p598) target = $region28
        $region27: #{my_passt_forward.3} parent=11 // pred_region
          _
        $region28: #{my_passt_forward.3} parent=11 // pred_fallthru
          _
        // Predicated region
        $region29: #{my_passt_forward.3} parent=11 // pred_check
          %p601 = pneg %p485
        $region30: #{my_passt_forward.3} parent=11 // pred_check_branch
          %603 = sbr.rel (%p601) target = $region32
        $region31: #{my_passt_forward.3} parent=11 // pred_region
          _
        $region32: #{my_passt_forward.3} parent=11 // pred_fallthru
          _
        // Predicated region
        $region33: #{my_passt_forward.3} parent=11 // pred_check
          %p604 = pneg %p506
        $region34: #{my_passt_forward.3} parent=11 // pred_check_branch
          %606 = sbr.rel (%p604) target = $region36
        $region35: #{my_passt_forward.3} parent=11 // pred_region
          _
        $region36: #{my_passt_forward.3} parent=11 // pred_fallthru
          _
        // Predicated region
        $region37: #{my_passt_forward.3} parent=11 // pred_check
          %p607 = pneg %p527
        $region38: #{my_passt_forward.3} parent=11 // pred_check_branch
          %609 = sbr.rel (%p607) target = $region40
        $region39: #{my_passt_forward.3} parent=11 // pred_region
          _
        $region40: #{my_passt_forward.3} parent=11 // pred_fallthru
          _
        // Predicated region
        $region41: #{my_passt_forward.3} parent=11 // pred_check
          %p610 = pneg %p548
        $region42: #{my_passt_forward.3} parent=11 // pred_check_branch
          %612 = sbr.rel (%p610) target = $region44
        $region43: #{my_passt_forward.3} parent=11 // pred_region
          _
        $region44: #{my_passt_forward.3} parent=11 // pred_fallthru
          _
      $region12: #{my_passt_forward.3} parent=5 // pred_fallthru
        _
      %p613 = scmp.lt.s32.totalorder %s30, 4
      // Predicated region
      $region45: #{my_passt_forward.3} parent=5 // pred_check
        %p614 = pneg %p613
      $region46: #{my_passt_forward.3} parent=5 // pred_check_branch
        %616 = sbr.rel (%p614) target = $region48
      $region47: #{my_passt_forward.3} parent=5 // pred_region
        // Predicated region
        $region49: #{my_passt_forward.3} parent=47 // pred_check
          %p617 = pneg %p62
        $region50: #{my_passt_forward.3} parent=47 // pred_check_branch
          %619 = sbr.rel (%p617) target = $region52
        $region51: #{my_passt_forward.3} parent=47 // pred_region
          %p620 = scmp.lt.s32.totalorder %s37, 1
          %s621 = scalar_select %p620, %s37, 1
          %s622 = smul.addr %s621, 14
          %s623 = smul.addr %s622, 8
          %s624 = scalar_lea.vmem %s0, %s623
        $region52: #{my_passt_forward.3} parent=47 // pred_fallthru
          _
        // Predicated region
        $region53: #{my_passt_forward.3} parent=47 // pred_check
          %p625 = pneg %p172
        $region54: #{my_passt_forward.3} parent=47 // pred_check_branch
          %627 = sbr.rel (%p625) target = $region56
        $region55: #{my_passt_forward.3} parent=47 // pred_region
          %p628 = scmp.lt.s32.totalorder %s38, 1
          %s629 = scalar_select %p628, %s38, 1
          %s630 = scalar_lea.vmem %s5, %s629
        $region56: #{my_passt_forward.3} parent=47 // pred_fallthru
          _
        // Predicated region
        $region57: #{my_passt_forward.3} parent=47 // pred_check
          %p631 = pneg %p198
        $region58: #{my_passt_forward.3} parent=47 // pred_check_branch
          %633 = sbr.rel (%p631) target = $region60
        $region59: #{my_passt_forward.3} parent=47 // pred_region
          %p634 = scmp.lt.s32.totalorder %s38, 1
          %s635 = scalar_select %p634, %s38, 1
          %s636 = scalar_lea.vmem %s6, %s635
        $region60: #{my_passt_forward.3} parent=47 // pred_fallthru
          _
        // Predicated region
        $region61: #{my_passt_forward.3} parent=47 // pred_check
          %p637 = pneg %p224
        $region62: #{my_passt_forward.3} parent=47 // pred_check_branch
          %639 = sbr.rel (%p637) target = $region64
        $region63: #{my_passt_forward.3} parent=47 // pred_region
          %p640 = scmp.lt.s32.totalorder %s38, 1
          %s641 = scalar_select %p640, %s38, 1
          %s642 = smul.addr %s641, 16
          %s643 = smul.addr %s642, 4
          %s644 = scalar_lea.vmem %s7, %s643
        $region64: #{my_passt_forward.3} parent=47 // pred_fallthru
          _
        // Predicated region
        $region65: #{my_passt_forward.3} parent=47 // pred_check
          %p645 = pneg %p250
        $region66: #{my_passt_forward.3} parent=47 // pred_check_branch
          %647 = sbr.rel (%p645) target = $region68
        $region67: #{my_passt_forward.3} parent=47 // pred_region
          %p648 = scmp.lt.s32.totalorder %s38, 1
          %s649 = scalar_select %p648, %s38, 1
          %s650 = smul.addr %s649, 2
          %s651 = scalar_lea.vmem %s8, %s650
        $region68: #{my_passt_forward.3} parent=47 // pred_fallthru
          _
        // Predicated region
        $region69: #{my_passt_forward.3} parent=47 // pred_check
          %p652 = pneg %p276
        $region70: #{my_passt_forward.3} parent=47 // pred_check_branch
          %654 = sbr.rel (%p652) target = $region72
        $region71: #{my_passt_forward.3} parent=47 // pred_region
          %p655 = scmp.lt.s32.totalorder %s38, 1
          %s656 = scalar_select %p655, %s38, 1
          %s657 = smul.addr %s656, 8
          %s658 = smul.addr %s657, 4
          %s659 = scalar_lea.vmem %s9, %s658
        $region72: #{my_passt_forward.3} parent=47 // pred_fallthru
          _
        // Predicated region
        $region73: #{my_passt_forward.3} parent=47 // pred_check
          %p660 = pneg %p302
        $region74: #{my_passt_forward.3} parent=47 // pred_check_branch
          %662 = sbr.rel (%p660) target = $region76
        $region75: #{my_passt_forward.3} parent=47 // pred_region
          %p663 = scmp.lt.s32.totalorder %s38, 1
          %s664 = scalar_select %p663, %s38, 1
          %s665 = scalar_lea.vmem %s10, %s664
        $region76: #{my_passt_forward.3} parent=47 // pred_fallthru
          _
        // Predicated region
        $region77: #{my_passt_forward.3} parent=47 // pred_check
          %p666 = pneg %p328
        $region78: #{my_passt_forward.3} parent=47 // pred_check_branch
          %668 = sbr.rel (%p666) target = $region80
        $region79: #{my_passt_forward.3} parent=47 // pred_region
          %p669 = scmp.lt.s32.totalorder %s38, 1
          %s670 = scalar_select %p669, %s38, 1
          %s671 = scalar_lea.vmem %s11, %s670
        $region80: #{my_passt_forward.3} parent=47 // pred_fallthru
          _
        // Predicated region
        $region81: #{my_passt_forward.3} parent=47 // pred_check
          %p672 = pneg %p354
        $region82: #{my_passt_forward.3} parent=47 // pred_check_branch
          %674 = sbr.rel (%p672) target = $region84
        $region83: #{my_passt_forward.3} parent=47 // pred_region
          %p675 = scmp.lt.s32.totalorder %s38, 1
          %s676 = scalar_select %p675, %s38, 1
          %s677 = scalar_lea.vmem %s12, %s676
        $region84: #{my_passt_forward.3} parent=47 // pred_fallthru
          _
        // Predicated region
        $region85: #{my_passt_forward.3} parent=47 // pred_check
          %p678 = pneg %p380
        $region86: #{my_passt_forward.3} parent=47 // pred_check_branch
          %680 = sbr.rel (%p678) target = $region88
        $region87: #{my_passt_forward.3} parent=47 // pred_region
          %p681 = scmp.lt.s32.totalorder %s38, 1
          %s682 = scalar_select %p681, %s38, 1
          %s683 = smul.addr %s682, 16
          %s684 = smul.addr %s683, 4
          %s685 = scalar_lea.vmem %s13, %s684
        $region88: #{my_passt_forward.3} parent=47 // pred_fallthru
          _
        // Predicated region
        $region89: #{my_passt_forward.3} parent=47 // pred_check
          %p686 = pneg %p406
        $region90: #{my_passt_forward.3} parent=47 // pred_check_branch
          %688 = sbr.rel (%p686) target = $region92
        $region91: #{my_passt_forward.3} parent=47 // pred_region
          %p689 = scmp.lt.s32.totalorder %s38, 1
          %s690 = scalar_select %p689, %s38, 1
          %s691 = smul.addr %s690, 2
          %s692 = scalar_lea.vmem %s14, %s691
        $region92: #{my_passt_forward.3} parent=47 // pred_fallthru
          _
        // Predicated region
        $region93: #{my_passt_forward.3} parent=47 // pred_check
          %p693 = pneg %p432
        $region94: #{my_passt_forward.3} parent=47 // pred_check_branch
          %695 = sbr.rel (%p693) target = $region96
        $region95: #{my_passt_forward.3} parent=47 // pred_region
          %p696 = scmp.lt.s32.totalorder %s38, 1
          %s697 = scalar_select %p696, %s38, 1
          %s698 = smul.addr %s697, 32
          %s699 = smul.addr %s698, 4
          %s700 = scalar_lea.vmem %s15, %s699
        $region96: #{my_passt_forward.3} parent=47 // pred_fallthru
          _
        // Predicated region
        $region97: #{my_passt_forward.3} parent=47 // pred_check
          %p701 = pneg %p458
        $region98: #{my_passt_forward.3} parent=47 // pred_check_branch
          %703 = sbr.rel (%p701) target = $region100
        $region99: #{my_passt_forward.3} parent=47 // pred_region
          %p704 = scmp.lt.s32.totalorder %s38, 1
          %s705 = scalar_select %p704, %s38, 1
          %s706 = scalar_lea.vmem %s16, %s705
        $region100: #{my_passt_forward.3} parent=47 // pred_fallthru
          _
      $region48: #{my_passt_forward.3} parent=5 // pred_fallthru
        _
      %p707 = scmp.le.s32.totalorder 1, %s30
      %p708 = scmp.lt.s32.totalorder %s30, 5
      %p709 = pnand %p707, %p708
      %p710 = pneg %p709
      // Predicated region
      $region101: #{my_passt_forward.3} parent=5 // pred_check
        _
      $region102: #{my_passt_forward.3} parent=5 // pred_check_branch
        %712 = sbr.rel (%p709) target = $region104
      $region103: #{my_passt_forward.3} parent=5 // pred_region
        %s713 = ssub.s32 %s30, 1
        %p714 = scmp.lt.s32.totalorder %s39, 1
        %s715 = scalar_select %p714, %s39, 1
        %s716 = smul.addr %s715, 14
        %s717 = smul.addr %s716, 8
        %s718 = scalar_lea.vmem %s0, %s717
        %p719 = pneg %p68
        %p720 = pneg %p65
        %p721 = pneg %p89
        %p722 = pneg %p86
        %p723 = pneg %p110
        %p724 = pneg %p107
        %p725 = pneg %p131
        %p726 = pneg %p128
        %p727 = pneg %p152
        %p728 = pneg %p149
        %p729 = scmp.lt.s32.totalorder %s40, 1
        %s730 = scalar_select %p729, %s40, 1
        %s731 = scalar_lea.vmem %s5, %s730
        %p732 = pneg %p178
        %p733 = pneg %p175
        %p734 = scmp.lt.s32.totalorder %s40, 1
        %s735 = scalar_select %p734, %s40, 1
        %s736 = scalar_lea.vmem %s6, %s735
        %p737 = pneg %p204
        %p738 = pneg %p201
        %p739 = scmp.lt.s32.totalorder %s40, 1
        %s740 = scalar_select %p739, %s40, 1
        %s741 = smul.addr %s740, 16
        %s742 = smul.addr %s741, 4
        %s743 = scalar_lea.vmem %s7, %s742
        %p744 = pneg %p230
        %p745 = pneg %p227
        %p746 = scmp.lt.s32.totalorder %s40, 1
        %s747 = scalar_select %p746, %s40, 1
        %s748 = smul.addr %s747, 2
        %s749 = scalar_lea.vmem %s8, %s748
        %p750 = pneg %p256
        %p751 = pneg %p253
        %p752 = scmp.lt.s32.totalorder %s40, 1
        %s753 = scalar_select %p752, %s40, 1
        %s754 = smul.addr %s753, 8
        %s755 = smul.addr %s754, 4
        %s756 = scalar_lea.vmem %s9, %s755
        %p757 = pneg %p282
        %p758 = pneg %p279
        %p759 = scmp.lt.s32.totalorder %s40, 1
        %s760 = scalar_select %p759, %s40, 1
        %s761 = scalar_lea.vmem %s10, %s760
        %p762 = pneg %p308
        %p763 = pneg %p305
        %p764 = scmp.lt.s32.totalorder %s40, 1
        %s765 = scalar_select %p764, %s40, 1
        %s766 = scalar_lea.vmem %s11, %s765
        %p767 = pneg %p334
        %p768 = pneg %p331
        %p769 = scmp.lt.s32.totalorder %s40, 1
        %s770 = scalar_select %p769, %s40, 1
        %s771 = scalar_lea.vmem %s12, %s770
        %p772 = pneg %p360
        %p773 = pneg %p357
        %p774 = scmp.lt.s32.totalorder %s40, 1
        %s775 = scalar_select %p774, %s40, 1
        %s776 = smul.addr %s775, 16
        %s777 = smul.addr %s776, 4
        %s778 = scalar_lea.vmem %s13, %s777
        %p779 = pneg %p386
        %p780 = pneg %p383
        %p781 = scmp.lt.s32.totalorder %s40, 1
        %s782 = scalar_select %p781, %s40, 1
        %s783 = smul.addr %s782, 2
        %s784 = scalar_lea.vmem %s14, %s783
        %p785 = pneg %p412
        %p786 = pneg %p409
        %p787 = scmp.lt.s32.totalorder %s40, 1
        %s788 = scalar_select %p787, %s40, 1
        %s789 = smul.addr %s788, 32
        %s790 = smul.addr %s789, 4
        %s791 = scalar_lea.vmem %s15, %s790
        %p792 = pneg %p438
        %p793 = pneg %p435
        %p794 = scmp.lt.s32.totalorder %s40, 1
        %s795 = scalar_select %p794, %s40, 1
        %s796 = scalar_lea.vmem %s16, %s795
        %p797 = pneg %p464
        %p798 = pneg %p461
        %p799 = pneg %p485
        %p800 = pneg %p482
        %p801 = pneg %p506
        %p802 = pneg %p503
        %p803 = pneg %p527
        %p804 = pneg %p524
        %p805 = pneg %p548
        %p806 = pneg %p545
        %p807 = pneg %p574
        %p808 = pneg %p571
        %s809 = sand.u32 %s561, 1
        %s810 = scalar_lea.sflag [#allocation5], %s809
        %s811 = sand.u32 %s561, 1
        %s812 = scalar_lea.vmem [#allocation4], %s811
        %p813 = scmp.lt.s32.totalorder %s39, 1
        %s814 = scalar_select %p813, %s39, 1
        %s815 = smul.addr %s814, 14
        %s816 = smul.addr %s815, 8
        %s817 = scalar_lea.vmem %s0, %s816
        %p818 = scmp.lt.s32.totalorder %s40, 1
        %s819 = scalar_select %p818, %s40, 1
        %s820 = scalar_lea.vmem %s5, %s819
        %p821 = scmp.lt.s32.totalorder %s40, 1
        %s822 = scalar_select %p821, %s40, 1
        %s823 = scalar_lea.vmem %s6, %s822
        %p824 = scmp.lt.s32.totalorder %s40, 1
        %s825 = scalar_select %p824, %s40, 1
        %s826 = smul.addr %s825, 16
        %s827 = smul.addr %s826, 4
        %s828 = scalar_lea.vmem %s7, %s827
        %p829 = scmp.lt.s32.totalorder %s40, 1
        %s830 = scalar_select %p829, %s40, 1
        %s831 = smul.addr %s830, 2
        %s832 = scalar_lea.vmem %s8, %s831
        %p833 = scmp.lt.s32.totalorder %s40, 1
        %s834 = scalar_select %p833, %s40, 1
        %s835 = smul.addr %s834, 8
        %s836 = smul.addr %s835, 4
        %s837 = scalar_lea.vmem %s9, %s836
        %p838 = scmp.lt.s32.totalorder %s40, 1
        %s839 = scalar_select %p838, %s40, 1
        %s840 = scalar_lea.vmem %s10, %s839
        %p841 = scmp.lt.s32.totalorder %s40, 1
        %s842 = scalar_select %p841, %s40, 1
        %s843 = scalar_lea.vmem %s11, %s842
        %p844 = scmp.lt.s32.totalorder %s40, 1
        %s845 = scalar_select %p844, %s40, 1
        %s846 = scalar_lea.vmem %s12, %s845
        %p847 = scmp.lt.s32.totalorder %s40, 1
        %s848 = scalar_select %p847, %s40, 1
        %s849 = smul.addr %s848, 16
        %s850 = smul.addr %s849, 4
        %s851 = scalar_lea.vmem %s13, %s850
        %p852 = scmp.lt.s32.totalorder %s40, 1
        %s853 = scalar_select %p852, %s40, 1
        %s854 = smul.addr %s853, 2
        %s855 = scalar_lea.vmem %s14, %s854
        %p856 = scmp.lt.s32.totalorder %s40, 1
        %s857 = scalar_select %p856, %s40, 1
        %s858 = smul.addr %s857, 32
        %s859 = smul.addr %s858, 4
        %s860 = scalar_lea.vmem %s15, %s859
        %p861 = scmp.lt.s32.totalorder %s40, 1
        %s862 = scalar_select %p861, %s40, 1
        %s863 = scalar_lea.vmem %s16, %s862
        %p865 = scmp.eq.s32.totalorder %s40, 0
        // Predicated region
        $region105: #{my_passt_forward.3} parent=103 // pred_check
          %p866 = pneg %p865
        $region106: #{my_passt_forward.3} parent=103 // pred_check_branch
          %868 = sbr.rel (%p866) target = $region108
        $region107: #{my_passt_forward.3} parent=103 // pred_region
          %v869 = vld [vmem:[%s817] sm:$0xff]
          %v870 = vld [vmem:[%s817 + $0x8] sm:$0xff]
          %v871 = vld [vmem:[%s817 + $0x10] sm:$0xff]
          %v872 = vld [vmem:[%s817 + $0x18] sm:$0xff]
          %v873 = vld [vmem:[%s817 + $0x20] sm:$0xff]
          %v874 = vld [vmem:[%s817 + $0x28] sm:$0xff]
          %v875 = vld [vmem:[%s817 + $0x30] sm:$0xff]
          %v876 = vld [vmem:[%s817 + $0x38] sm:$0xff]
          %v877 = vld [vmem:[%s817 + $0x40] sm:$0xff]
          %v878 = vld [vmem:[%s817 + $0x48] sm:$0xff]
          %v879 = vld [vmem:[%s817 + $0x50] sm:$0xff]
          %v880 = vld [vmem:[%s817 + $0x58] sm:$0xff]
          %v881 = vld [vmem:[%s817 + $0x60] sm:$0xff]
          %v882 = vld [vmem:[%s817 + $0x68] sm:$0x1]
          %v883 = vpack.c.bf16 %v870, %v869
          %v884 = vpack.c.bf16 %v872, %v871
          %v885 = vpack.c.bf16 %v874, %v873
          %v886 = vpack.c.bf16 %v876, %v875
          %v887 = vpack.c.bf16 %v878, %v877
          %v888 = vpack.c.bf16 %v880, %v879
          %v889 = vpack.c.bf16 %v882, %v881
          %v890 = vld [vmem:[%s1] sm:$0xf]
          %v891 = vld [vmem:[%s1 + $0x4] sm:$0xf]
          %v892 = vld [vmem:[%s1 + $0x8] sm:$0xf]
          %v893 = vld [vmem:[%s1 + $0xc] sm:$0xf]
          %v894 = vld [vmem:[%s1 + $0x10] sm:$0xf]
          %v895 = vld [vmem:[%s1 + $0x14] sm:$0xf]
          %v896 = vld [vmem:[%s1 + $0x18] sm:$0xf]
          %v897 = vld [vmem:[%s1 + $0x1c] sm:$0xf]
          %v898 = vld [vmem:[%s2] sm:$0x1]
          %v900 = vperm.slane %v898, 0
          %v910 = vunpack.c.l.b16 %v890
          %v911 = vunpack.c.l.b16 %v891
          %v912 = vunpack.c.l.b16 %v892
          %v913 = vunpack.c.l.b16 %v893
          %v914 = vunpack.c.l.b16 %v894
          %v915 = vunpack.c.l.b16 %v895
          %v916 = vunpack.c.l.b16 %v896
          %v917 = vunpack.c.l.b16 %v897
          %v918 = vpack.c.b16 %v911, %v910
          %v919 = vpack.c.b16 %v913, %v912
          %v920 = vpack.c.b16 %v915, %v914
          %v921 = vpack.c.b16 %v917, %v916
          %vm926 = vcmask 523264
          %v928 = vsel %vm926, %v883, 0
          %v931 = vsel %vm926, %v884, 0
          %v934 = vsel %vm926, %v885, 0
          %v937 = vsel %vm926, %v886, 0
          %v940 = vsel %vm926, %v887, 0
          %v943 = vsel %vm926, %v888, 0
          %v946 = vsel %vm926, %v889, 0
          %948 = vmatpush.bf16.msra.mxu0 0
          %949 = vmatpush.bf16.msra.mxu0 0
          %950 = vmatpush.bf16.msra.mxu0 0
          %951 = vmatpush.bf16.msra.mxu0 0
          %952 = vmatpush.bf16.msra.mxu0 %v921
          %953 = vmatpush.bf16.msra.mxu0 %v920
          %954 = vmatpush.bf16.msra.mxu0 %v919
          %955 = vmatpush.bf16.msra.mxu0 %v918
          %956 = vmatmul.bf16.gmra.mxu0 %v928
          %v957 = vpop.f32.mrf.mxu0
          %v958 = vadd.f32 %v900, %v957
          %v959 = vpop.f32.mrf.mxu0
          %v960 = vadd.f32 %v900, %v959
          %961 = vmatmul.bf16.gmra.mxu0 %v931
          %v962 = vpop.f32.mrf.mxu0
          %v963 = vadd.f32 %v900, %v962
          %v964 = vpop.f32.mrf.mxu0
          %v965 = vadd.f32 %v900, %v964
          %966 = vmatmul.bf16.gmra.mxu0 %v934
          %v967 = vpop.f32.mrf.mxu0
          %v968 = vadd.f32 %v900, %v967
          %v969 = vpop.f32.mrf.mxu0
          %v970 = vadd.f32 %v900, %v969
          %971 = vmatmul.bf16.gmra.mxu0 %v937
          %v972 = vpop.f32.mrf.mxu0
          %v973 = vadd.f32 %v900, %v972
          %v974 = vpop.f32.mrf.mxu0
          %v975 = vadd.f32 %v900, %v974
          %976 = vmatmul.bf16.gmra.mxu0 %v940
          %v977 = vpop.f32.mrf.mxu0
          %v978 = vadd.f32 %v900, %v977
          %v979 = vpop.f32.mrf.mxu0
          %v980 = vadd.f32 %v900, %v979
          %981 = vmatmul.bf16.gmra.mxu0 %v943
          %v982 = vpop.f32.mrf.mxu0
          %v983 = vadd.f32 %v900, %v982
          %v984 = vpop.f32.mrf.mxu0
          %v985 = vadd.f32 %v900, %v984
          %986 = vmatmul.bf16.gmra.mxu0 %v946
          %v987 = vpop.f32.mrf.mxu0
          %v988 = vadd.f32 %v900, %v987
          %v989 = vpop.f32.mrf.mxu0
          %v990 = vadd.f32 %v900, %v989
          %991 = vdwg.mxu0
          %v992 = vld [vmem:[%s3] sm:$0xff]
          %v993 = vld [vmem:[%s3 + $0x8] sm:$0xff]
          %v994 = vld [vmem:[%s3 + $0x10] sm:$0xff]
          %v995 = vld [vmem:[%s3 + $0x18] sm:$0xff]
          %v996 = vld [vmem:[%s3 + $0x20] sm:$0xff]
          %v997 = vld [vmem:[%s3 + $0x28] sm:$0xff]
          %v998 = vld [vmem:[%s3 + $0x30] sm:$0xff]
          %v999 = vld [vmem:[%s3 + $0x38] sm:$0xff]
          %v1000 = vld [vmem:[%s3 + $0x40] sm:$0xff]
          %v1001 = vld [vmem:[%s3 + $0x48] sm:$0xff]
          %v1002 = vld [vmem:[%s3 + $0x50] sm:$0xff]
          %v1003 = vld [vmem:[%s3 + $0x58] sm:$0xff]
          %v1004 = vld [vmem:[%s3 + $0x60] sm:$0xff]
          %v1005 = vld [vmem:[%s3 + $0x68] sm:$0x1]
          %v1006 = vadd.f32 %v958, %v992
          %v1007 = vadd.f32 %v960, %v993
          %v1008 = vadd.f32 %v963, %v994
          %v1009 = vadd.f32 %v965, %v995
          %v1010 = vadd.f32 %v968, %v996
          %v1011 = vadd.f32 %v970, %v997
          %v1012 = vadd.f32 %v973, %v998
          %v1013 = vadd.f32 %v975, %v999
          %v1014 = vadd.f32 %v978, %v1000
          %v1015 = vadd.f32 %v980, %v1001
          %v1016 = vadd.f32 %v983, %v1002
          %v1017 = vadd.f32 %v985, %v1003
          %v1018 = vadd.f32 %v988, %v1004
          %v1019 = vadd.f32 %v990, %v1005
          %1020 = vst.msk [vmem:[#allocation2] sm:$0xff] %vm926, 0.0
          %1021 = vst.msk [vmem:[#allocation2 + $0x8] sm:$0xff] %vm926, 0.0
          %1022 = vst.msk [vmem:[#allocation2 + $0x10] sm:$0xff] %vm926, 0.0
          %1023 = vst.msk [vmem:[#allocation2 + $0x18] sm:$0xff] %vm926, 0.0
          %1024 = vst.msk [vmem:[#allocation2 + $0x20] sm:$0xff] %vm926, 0.0
          %1025 = vst.msk [vmem:[#allocation2 + $0x28] sm:$0xff] %vm926, 0.0
          %1026 = vst.msk [vmem:[#allocation2 + $0x30] sm:$0xff] %vm926, 0.0
          %1027 = vst.msk [vmem:[#allocation2 + $0x38] sm:$0xff] %vm926, 0.0
          %1028 = vst.msk [vmem:[#allocation2 + $0x40] sm:$0xff] %vm926, 0.0
          %1029 = vst.msk [vmem:[#allocation2 + $0x48] sm:$0xff] %vm926, 0.0
          %1030 = vst.msk [vmem:[#allocation2 + $0x50] sm:$0xff] %vm926, 0.0
          %1031 = vst.msk [vmem:[#allocation2 + $0x58] sm:$0xff] %vm926, 0.0
          %1032 = vst.msk [vmem:[#allocation2 + $0x60] sm:$0xff] %vm926, 0.0
          %1033 = vst.msk [vmem:[#allocation2 + $0x68] sm:$0xff] %vm926, 0.0
          %1034 = vst.msk [vmem:[#allocation2 + $0x70] sm:$0xff] %vm926, 0.0
          %1035 = vst.msk [vmem:[#allocation2 + $0x78] sm:$0xff] %vm926, 0.0
          %v1036 = vld [vmem:[%s4] sm:$0x3]
          %vm1037 = vcmask 517120
          %1038 = vst.msk [vmem:[#allocation2] sm:$0x3] %vm1037, %v1036
          %1039 = vst.msk [vmem:[#allocation2 + $0x8] sm:$0xff] %vm926, %v1006
          %1040 = vst.msk [vmem:[#allocation2 + $0x10] sm:$0xff] %vm926, %v1007
          %1041 = vst.msk [vmem:[#allocation2 + $0x18] sm:$0xff] %vm926, %v1008
          %1042 = vst.msk [vmem:[#allocation2 + $0x20] sm:$0xff] %vm926, %v1009
          %1043 = vst.msk [vmem:[#allocation2 + $0x28] sm:$0xff] %vm926, %v1010
          %1044 = vst.msk [vmem:[#allocation2 + $0x30] sm:$0xff] %vm926, %v1011
          %1045 = vst.msk [vmem:[#allocation2 + $0x38] sm:$0xff] %vm926, %v1012
          %1046 = vst.msk [vmem:[#allocation2 + $0x40] sm:$0xff] %vm926, %v1013
          %1047 = vst.msk [vmem:[#allocation2 + $0x48] sm:$0xff] %vm926, %v1014
          %1048 = vst.msk [vmem:[#allocation2 + $0x50] sm:$0xff] %vm926, %v1015
          %1049 = vst.msk [vmem:[#allocation2 + $0x58] sm:$0xff] %vm926, %v1016
          %1050 = vst.msk [vmem:[#allocation2 + $0x60] sm:$0xff] %vm926, %v1017
          %1051 = vst.msk [vmem:[#allocation2 + $0x68] sm:$0xff] %vm926, %v1018
          %vm1052 = vcmask 516096
          %1053 = vst.msk [vmem:[#allocation2 + $0x70] sm:$0x1] %vm1052, %v1019
        $region108: #{my_passt_forward.3} parent=103 // pred_fallthru
          _
        %v1054 = vld [vmem:[#allocation2] sm:$0xff]
        %v1055 = vld [vmem:[#allocation2 + $0x8] sm:$0xff]
        %v1056 = vld [vmem:[#allocation2 + $0x10] sm:$0xff]
        %v1057 = vld [vmem:[#allocation2 + $0x18] sm:$0xff]
        %v1058 = vld [vmem:[#allocation2 + $0x20] sm:$0xff]
        %v1059 = vld [vmem:[#allocation2 + $0x28] sm:$0xff]
        %v1060 = vld [vmem:[#allocation2 + $0x30] sm:$0xff]
        %v1061 = vld [vmem:[#allocation2 + $0x38] sm:$0xff]
        %v1062 = vld [vmem:[#allocation2 + $0x40] sm:$0xff]
        %v1063 = vld [vmem:[#allocation2 + $0x48] sm:$0xff]
        %v1064 = vld [vmem:[#allocation2 + $0x50] sm:$0xff]
        %v1065 = vld [vmem:[#allocation2 + $0x58] sm:$0xff]
        %v1066 = vld [vmem:[#allocation2 + $0x60] sm:$0xff]
        %v1067 = vld [vmem:[#allocation2 + $0x68] sm:$0xff]
        %v1068 = vld [vmem:[#allocation2 + $0x70] sm:$0xff]
        %v1069 = vld [vmem:[#allocation2 + $0x78] sm:$0xff]
        %v1070 = vld [vmem:[%s820] sm:$0x1]
        %v1071 = vld [vmem:[%s823] sm:$0x1]
        %vm1072 = vcmask 523264
        %v1073 = vsel %vm1072, %v1054, 0.0
        %1074 = vadd.xlane.f32.xlu0 %v1073
        %v1075 = vpop.xlane.xlu0 %1074
        %v1076 = vsel %vm1072, %v1055, 0.0
        %1077 = vadd.xlane.f32.xlu0 %v1076
        %v1078 = vpop.xlane.xlu0 %1077
        %v1079 = vsel %vm1072, %v1056, 0.0
        %1080 = vadd.xlane.f32.xlu0 %v1079
        %v1081 = vpop.xlane.xlu0 %1080
        %v1082 = vsel %vm1072, %v1057, 0.0
        %1083 = vadd.xlane.f32.xlu0 %v1082
        %v1084 = vpop.xlane.xlu0 %1083
        %v1085 = vsel %vm1072, %v1058, 0.0
        %1086 = vadd.xlane.f32.xlu0 %v1085
        %v1087 = vpop.xlane.xlu0 %1086
        %v1088 = vsel %vm1072, %v1059, 0.0
        %1089 = vadd.xlane.f32.xlu0 %v1088
        %v1090 = vpop.xlane.xlu0 %1089
        %v1091 = vsel %vm1072, %v1060, 0.0
        %1092 = vadd.xlane.f32.xlu0 %v1091
        %v1093 = vpop.xlane.xlu0 %1092
        %v1094 = vsel %vm1072, %v1061, 0.0
        %1095 = vadd.xlane.f32.xlu0 %v1094
        %v1096 = vpop.xlane.xlu0 %1095
        %v1097 = vsel %vm1072, %v1062, 0.0
        %1098 = vadd.xlane.f32.xlu0 %v1097
        %v1099 = vpop.xlane.xlu0 %1098
        %v1100 = vsel %vm1072, %v1063, 0.0
        %1101 = vadd.xlane.f32.xlu0 %v1100
        %v1102 = vpop.xlane.xlu0 %1101
        %v1103 = vsel %vm1072, %v1064, 0.0
        %1104 = vadd.xlane.f32.xlu0 %v1103
        %v1105 = vpop.xlane.xlu0 %1104
        %v1106 = vsel %vm1072, %v1065, 0.0
        %1107 = vadd.xlane.f32.xlu0 %v1106
        %v1108 = vpop.xlane.xlu0 %1107
        %v1109 = vsel %vm1072, %v1066, 0.0
        %1110 = vadd.xlane.f32.xlu0 %v1109
        %v1111 = vpop.xlane.xlu0 %1110
        %v1112 = vsel %vm1072, %v1067, 0.0
        %1113 = vadd.xlane.f32.xlu0 %v1112
        %v1114 = vpop.xlane.xlu0 %1113
        %v1115 = vsel %vm1072, %v1068, 0.0
        %1116 = vadd.xlane.f32.xlu0 %v1115
        %v1117 = vpop.xlane.xlu0 %1116
        %v1118 = vsel %vm1072, %v1069, 0.0
        %1119 = vadd.xlane.f32.xlu0 %v1118
        %v1120 = vpop.xlane.xlu0 %1119
        %v1121 = vrcp.pop 64.0
        %v1122 = vmul.f32 64.0, %v1121
        %v1123 = vsub.f32 1.0, %v1122
        %v1124 = vmul.f32 %v1121, %v1123
        %v1125 = vadd.f32 %v1121, %v1124
        %vm1126 = vweird.f32 %v1121
        %v1127 = vsel %vm1126, %v1121, %v1125
        %v1128 = vmul.f32 %v1075, %v1127
        %v1129 = vmul.f32 %v1078, %v1127
        %v1130 = vmul.f32 %v1081, %v1127
        %v1131 = vmul.f32 %v1084, %v1127
        %v1132 = vmul.f32 %v1087, %v1127
        %v1133 = vmul.f32 %v1090, %v1127
        %v1134 = vmul.f32 %v1093, %v1127
        %v1135 = vmul.f32 %v1096, %v1127
        %v1136 = vmul.f32 %v1099, %v1127
        %v1137 = vmul.f32 %v1102, %v1127
        %v1138 = vmul.f32 %v1105, %v1127
        %v1139 = vmul.f32 %v1108, %v1127
        %v1140 = vmul.f32 %v1111, %v1127
        %v1141 = vmul.f32 %v1114, %v1127
        %v1142 = vmul.f32 %v1117, %v1127
        %v1143 = vmul.f32 %v1120, %v1127
        %v1144 = vsub.f32 %v1054, %v1128
        %v1145 = vsub.f32 %v1055, %v1129
        %v1146 = vsub.f32 %v1056, %v1130
        %v1147 = vsub.f32 %v1057, %v1131
        %v1148 = vsub.f32 %v1058, %v1132
        %v1149 = vsub.f32 %v1059, %v1133
        %v1150 = vsub.f32 %v1060, %v1134
        %v1151 = vsub.f32 %v1061, %v1135
        %v1152 = vsub.f32 %v1062, %v1136
        %v1153 = vsub.f32 %v1063, %v1137
        %v1154 = vsub.f32 %v1064, %v1138
        %v1155 = vsub.f32 %v1065, %v1139
        %v1156 = vsub.f32 %v1066, %v1140
        %v1157 = vsub.f32 %v1067, %v1141
        %v1158 = vsub.f32 %v1068, %v1142
        %v1159 = vsub.f32 %v1069, %v1143
        %v1160 = vmul.f32 %v1144, %v1144
        %v1161 = vmul.f32 %v1145, %v1145
        %v1162 = vmul.f32 %v1146, %v1146
        %v1163 = vmul.f32 %v1147, %v1147
        %v1164 = vmul.f32 %v1148, %v1148
        %v1165 = vmul.f32 %v1149, %v1149
        %v1166 = vmul.f32 %v1150, %v1150
        %v1167 = vmul.f32 %v1151, %v1151
        %v1168 = vmul.f32 %v1152, %v1152
        %v1169 = vmul.f32 %v1153, %v1153
        %v1170 = vmul.f32 %v1154, %v1154
        %v1171 = vmul.f32 %v1155, %v1155
        %v1172 = vmul.f32 %v1156, %v1156
        %v1173 = vmul.f32 %v1157, %v1157
        %v1174 = vmul.f32 %v1158, %v1158
        %v1175 = vmul.f32 %v1159, %v1159
        %v1176 = vsel %vm1072, %v1160, 0.0
        %1177 = vadd.xlane.f32.xlu0 %v1176
        %v1178 = vpop.xlane.xlu0 %1177
        %v1179 = vsel %vm1072, %v1161, 0.0
        %1180 = vadd.xlane.f32.xlu0 %v1179
        %v1181 = vpop.xlane.xlu0 %1180
        %v1182 = vsel %vm1072, %v1162, 0.0
        %1183 = vadd.xlane.f32.xlu0 %v1182
        %v1184 = vpop.xlane.xlu0 %1183
        %v1185 = vsel %vm1072, %v1163, 0.0
        %1186 = vadd.xlane.f32.xlu0 %v1185
        %v1187 = vpop.xlane.xlu0 %1186
        %v1188 = vsel %vm1072, %v1164, 0.0
        %1189 = vadd.xlane.f32.xlu0 %v1188
        %v1190 = vpop.xlane.xlu0 %1189
        %v1191 = vsel %vm1072, %v1165, 0.0
        %1192 = vadd.xlane.f32.xlu0 %v1191
        %v1193 = vpop.xlane.xlu0 %1192
        %v1194 = vsel %vm1072, %v1166, 0.0
        %1195 = vadd.xlane.f32.xlu0 %v1194
        %v1196 = vpop.xlane.xlu0 %1195
        %v1197 = vsel %vm1072, %v1167, 0.0
        %1198 = vadd.xlane.f32.xlu0 %v1197
        %v1199 = vpop.xlane.xlu0 %1198
        %v1200 = vsel %vm1072, %v1168, 0.0
        %1201 = vadd.xlane.f32.xlu0 %v1200
        %v1202 = vpop.xlane.xlu0 %1201
        %v1203 = vsel %vm1072, %v1169, 0.0
        %1204 = vadd.xlane.f32.xlu0 %v1203
        %v1205 = vpop.xlane.xlu0 %1204
        %v1206 = vsel %vm1072, %v1170, 0.0
        %1207 = vadd.xlane.f32.xlu0 %v1206
        %v1208 = vpop.xlane.xlu0 %1207
        %v1209 = vsel %vm1072, %v1171, 0.0
        %1210 = vadd.xlane.f32.xlu0 %v1209
        %v1211 = vpop.xlane.xlu0 %1210
        %v1212 = vsel %vm1072, %v1172, 0.0
        %1213 = vadd.xlane.f32.xlu0 %v1212
        %v1214 = vpop.xlane.xlu0 %1213
        %v1215 = vsel %vm1072, %v1173, 0.0
        %1216 = vadd.xlane.f32.xlu0 %v1215
        %v1217 = vpop.xlane.xlu0 %1216
        %v1218 = vsel %vm1072, %v1174, 0.0
        %1219 = vadd.xlane.f32.xlu0 %v1218
        %v1220 = vpop.xlane.xlu0 %1219
        %v1221 = vsel %vm1072, %v1175, 0.0
        %1222 = vadd.xlane.f32.xlu0 %v1221
        %v1223 = vpop.xlane.xlu0 %1222
        %v1224 = vmul.f32 %v1178, %v1127
        %v1225 = vmul.f32 %v1181, %v1127
        %v1226 = vmul.f32 %v1184, %v1127
        %v1227 = vmul.f32 %v1187, %v1127
        %v1228 = vmul.f32 %v1190, %v1127
        %v1229 = vmul.f32 %v1193, %v1127
        %v1230 = vmul.f32 %v1196, %v1127
        %v1231 = vmul.f32 %v1199, %v1127
        %v1232 = vmul.f32 %v1202, %v1127
        %v1233 = vmul.f32 %v1205, %v1127
        %v1234 = vmul.f32 %v1208, %v1127
        %v1235 = vmul.f32 %v1211, %v1127
        %v1236 = vmul.f32 %v1214, %v1127
        %v1237 = vmul.f32 %v1217, %v1127
        %v1238 = vmul.f32 %v1220, %v1127
        %v1239 = vmul.f32 %v1223, %v1127
        %v1240 = vadd.f32 %v1224, 1e-06
        %v1241 = vadd.f32 %v1225, 1e-06
        %v1242 = vadd.f32 %v1226, 1e-06
        %v1243 = vadd.f32 %v1227, 1e-06
        %v1244 = vadd.f32 %v1228, 1e-06
        %v1245 = vadd.f32 %v1229, 1e-06
        %v1246 = vadd.f32 %v1230, 1e-06
        %v1247 = vadd.f32 %v1231, 1e-06
        %v1248 = vadd.f32 %v1232, 1e-06
        %v1249 = vadd.f32 %v1233, 1e-06
        %v1250 = vadd.f32 %v1234, 1e-06
        %v1251 = vadd.f32 %v1235, 1e-06
        %v1252 = vadd.f32 %v1236, 1e-06
        %v1253 = vadd.f32 %v1237, 1e-06
        %v1254 = vadd.f32 %v1238, 1e-06
        %v1255 = vadd.f32 %v1239, 1e-06
        %v1256 = vrsqrt.pop %v1240
        %v1257 = vmul.f32 %v1256, %v1240
        %v1258 = vmul.f32 %v1257, %v1256
        %v1259 = vmul.f32 0.5, %v1258
        %v1260 = vsub.f32 1.5, %v1259
        %v1261 = vmul.f32 %v1256, %v1260
        %vm1262 = vweird.f32 %v1240
        %vm1263 = vweird.f32 %v1256
        %vm1264 = vmor %vm1262, %vm1263
        %v1265 = vsel %vm1264, %v1256, %v1261
        %v1266 = vrsqrt.pop %v1241
        %v1267 = vmul.f32 %v1266, %v1241
        %v1268 = vmul.f32 %v1267, %v1266
        %v1269 = vmul.f32 0.5, %v1268
        %v1270 = vsub.f32 1.5, %v1269
        %v1271 = vmul.f32 %v1266, %v1270
        %vm1272 = vweird.f32 %v1241
        %vm1273 = vweird.f32 %v1266
        %vm1274 = vmor %vm1272, %vm1273
        %v1275 = vsel %vm1274, %v1266, %v1271
        %v1276 = vrsqrt.pop %v1242
        %v1277 = vmul.f32 %v1276, %v1242
        %v1278 = vmul.f32 %v1277, %v1276
        %v1279 = vmul.f32 0.5, %v1278
        %v1280 = vsub.f32 1.5, %v1279
        %v1281 = vmul.f32 %v1276, %v1280
        %vm1282 = vweird.f32 %v1242
        %vm1283 = vweird.f32 %v1276
        %vm1284 = vmor %vm1282, %vm1283
        %v1285 = vsel %vm1284, %v1276, %v1281
        %v1286 = vrsqrt.pop %v1243
        %v1287 = vmul.f32 %v1286, %v1243
        %v1288 = vmul.f32 %v1287, %v1286
        %v1289 = vmul.f32 0.5, %v1288
        %v1290 = vsub.f32 1.5, %v1289
        %v1291 = vmul.f32 %v1286, %v1290
        %vm1292 = vweird.f32 %v1243
        %vm1293 = vweird.f32 %v1286
        %vm1294 = vmor %vm1292, %vm1293
        %v1295 = vsel %vm1294, %v1286, %v1291
        %v1296 = vrsqrt.pop %v1244
        %v1297 = vmul.f32 %v1296, %v1244
        %v1298 = vmul.f32 %v1297, %v1296
        %v1299 = vmul.f32 0.5, %v1298
        %v1300 = vsub.f32 1.5, %v1299
        %v1301 = vmul.f32 %v1296, %v1300
        %vm1302 = vweird.f32 %v1244
        %vm1303 = vweird.f32 %v1296
        %vm1304 = vmor %vm1302, %vm1303
        %v1305 = vsel %vm1304, %v1296, %v1301
        %v1306 = vrsqrt.pop %v1245
        %v1307 = vmul.f32 %v1306, %v1245
        %v1308 = vmul.f32 %v1307, %v1306
        %v1309 = vmul.f32 0.5, %v1308
        %v1310 = vsub.f32 1.5, %v1309
        %v1311 = vmul.f32 %v1306, %v1310
        %vm1312 = vweird.f32 %v1245
        %vm1313 = vweird.f32 %v1306
        %vm1314 = vmor %vm1312, %vm1313
        %v1315 = vsel %vm1314, %v1306, %v1311
        %v1316 = vrsqrt.pop %v1246
        %v1317 = vmul.f32 %v1316, %v1246
        %v1318 = vmul.f32 %v1317, %v1316
        %v1319 = vmul.f32 0.5, %v1318
        %v1320 = vsub.f32 1.5, %v1319
        %v1321 = vmul.f32 %v1316, %v1320
        %vm1322 = vweird.f32 %v1246
        %vm1323 = vweird.f32 %v1316
        %vm1324 = vmor %vm1322, %vm1323
        %v1325 = vsel %vm1324, %v1316, %v1321
        %v1326 = vrsqrt.pop %v1247
        %v1327 = vmul.f32 %v1326, %v1247
        %v1328 = vmul.f32 %v1327, %v1326
        %v1329 = vmul.f32 0.5, %v1328
        %v1330 = vsub.f32 1.5, %v1329
        %v1331 = vmul.f32 %v1326, %v1330
        %vm1332 = vweird.f32 %v1247
        %vm1333 = vweird.f32 %v1326
        %vm1334 = vmor %vm1332, %vm1333
        %v1335 = vsel %vm1334, %v1326, %v1331
        %v1336 = vrsqrt.pop %v1248
        %v1337 = vmul.f32 %v1336, %v1248
        %v1338 = vmul.f32 %v1337, %v1336
        %v1339 = vmul.f32 0.5, %v1338
        %v1340 = vsub.f32 1.5, %v1339
        %v1341 = vmul.f32 %v1336, %v1340
        %vm1342 = vweird.f32 %v1248
        %vm1343 = vweird.f32 %v1336
        %vm1344 = vmor %vm1342, %vm1343
        %v1345 = vsel %vm1344, %v1336, %v1341
        %v1346 = vrsqrt.pop %v1249
        %v1347 = vmul.f32 %v1346, %v1249
        %v1348 = vmul.f32 %v1347, %v1346
        %v1349 = vmul.f32 0.5, %v1348
        %v1350 = vsub.f32 1.5, %v1349
        %v1351 = vmul.f32 %v1346, %v1350
        %vm1352 = vweird.f32 %v1249
        %vm1353 = vweird.f32 %v1346
        %vm1354 = vmor %vm1352, %vm1353
        %v1355 = vsel %vm1354, %v1346, %v1351
        %v1356 = vrsqrt.pop %v1250
        %v1357 = vmul.f32 %v1356, %v1250
        %v1358 = vmul.f32 %v1357, %v1356
        %v1359 = vmul.f32 0.5, %v1358
        %v1360 = vsub.f32 1.5, %v1359
        %v1361 = vmul.f32 %v1356, %v1360
        %vm1362 = vweird.f32 %v1250
        %vm1363 = vweird.f32 %v1356
        %vm1364 = vmor %vm1362, %vm1363
        %v1365 = vsel %vm1364, %v1356, %v1361
        %v1366 = vrsqrt.pop %v1251
        %v1367 = vmul.f32 %v1366, %v1251
        %v1368 = vmul.f32 %v1367, %v1366
        %v1369 = vmul.f32 0.5, %v1368
        %v1370 = vsub.f32 1.5, %v1369
        %v1371 = vmul.f32 %v1366, %v1370
        %vm1372 = vweird.f32 %v1251
        %vm1373 = vweird.f32 %v1366
        %vm1374 = vmor %vm1372, %vm1373
        %v1375 = vsel %vm1374, %v1366, %v1371
        %v1376 = vrsqrt.pop %v1252
        %v1377 = vmul.f32 %v1376, %v1252
        %v1378 = vmul.f32 %v1377, %v1376
        %v1379 = vmul.f32 0.5, %v1378
        %v1380 = vsub.f32 1.5, %v1379
        %v1381 = vmul.f32 %v1376, %v1380
        %vm1382 = vweird.f32 %v1252
        %vm1383 = vweird.f32 %v1376
        %vm1384 = vmor %vm1382, %vm1383
        %v1385 = vsel %vm1384, %v1376, %v1381
        %v1386 = vrsqrt.pop %v1253
        %v1387 = vmul.f32 %v1386, %v1253
        %v1388 = vmul.f32 %v1387, %v1386
        %v1389 = vmul.f32 0.5, %v1388
        %v1390 = vsub.f32 1.5, %v1389
        %v1391 = vmul.f32 %v1386, %v1390
        %vm1392 = vweird.f32 %v1253
        %vm1393 = vweird.f32 %v1386
        %vm1394 = vmor %vm1392, %vm1393
        %v1395 = vsel %vm1394, %v1386, %v1391
        %v1396 = vrsqrt.pop %v1254
        %v1397 = vmul.f32 %v1396, %v1254
        %v1398 = vmul.f32 %v1397, %v1396
        %v1399 = vmul.f32 0.5, %v1398
        %v1400 = vsub.f32 1.5, %v1399
        %v1401 = vmul.f32 %v1396, %v1400
        %vm1402 = vweird.f32 %v1254
        %vm1403 = vweird.f32 %v1396
        %vm1404 = vmor %vm1402, %vm1403
        %v1405 = vsel %vm1404, %v1396, %v1401
        %v1406 = vrsqrt.pop %v1255
        %v1407 = vmul.f32 %v1406, %v1255
        %v1408 = vmul.f32 %v1407, %v1406
        %v1409 = vmul.f32 0.5, %v1408
        %v1410 = vsub.f32 1.5, %v1409
        %v1411 = vmul.f32 %v1406, %v1410
        %vm1412 = vweird.f32 %v1255
        %vm1413 = vweird.f32 %v1406
        %vm1414 = vmor %vm1412, %vm1413
        %v1415 = vsel %vm1414, %v1406, %v1411
        %v1416 = vmul.f32 %v1144, %v1265
        %v1417 = vmul.f32 %v1145, %v1275
        %v1418 = vmul.f32 %v1146, %v1285
        %v1419 = vmul.f32 %v1147, %v1295
        %v1420 = vmul.f32 %v1148, %v1305
        %v1421 = vmul.f32 %v1149, %v1315
        %v1422 = vmul.f32 %v1150, %v1325
        %v1423 = vmul.f32 %v1151, %v1335
        %v1424 = vmul.f32 %v1152, %v1345
        %v1425 = vmul.f32 %v1153, %v1355
        %v1426 = vmul.f32 %v1154, %v1365
        %v1427 = vmul.f32 %v1155, %v1375
        %v1428 = vmul.f32 %v1156, %v1385
        %v1429 = vmul.f32 %v1157, %v1395
        %v1430 = vmul.f32 %v1158, %v1405
        %v1431 = vmul.f32 %v1159, %v1415
        %v1433 = vperm.slane %v1070, 0
        %v1435 = vmul.f32 %v1416, %v1433
        %v1436 = vmul.f32 %v1417, %v1433
        %v1437 = vmul.f32 %v1418, %v1433
        %v1438 = vmul.f32 %v1419, %v1433
        %v1439 = vmul.f32 %v1420, %v1433
        %v1440 = vmul.f32 %v1421, %v1433
        %v1441 = vmul.f32 %v1422, %v1433
        %v1442 = vmul.f32 %v1423, %v1433
        %v1443 = vmul.f32 %v1424, %v1433
        %v1444 = vmul.f32 %v1425, %v1433
        %v1445 = vmul.f32 %v1426, %v1433
        %v1446 = vmul.f32 %v1427, %v1433
        %v1447 = vmul.f32 %v1428, %v1433
        %v1448 = vmul.f32 %v1429, %v1433
        %v1449 = vmul.f32 %v1430, %v1433
        %v1450 = vmul.f32 %v1431, %v1433
        %v1452 = vperm.slane %v1071, 0
        %v1454 = vadd.f32 %v1435, %v1452
        %v1455 = vadd.f32 %v1436, %v1452
        %v1456 = vadd.f32 %v1437, %v1452
        %v1457 = vadd.f32 %v1438, %v1452
        %v1458 = vadd.f32 %v1439, %v1452
        %v1459 = vadd.f32 %v1440, %v1452
        %v1460 = vadd.f32 %v1441, %v1452
        %v1461 = vadd.f32 %v1442, %v1452
        %v1462 = vadd.f32 %v1443, %v1452
        %v1463 = vadd.f32 %v1444, %v1452
        %v1464 = vadd.f32 %v1445, %v1452
        %v1465 = vadd.f32 %v1446, %v1452
        %v1466 = vadd.f32 %v1447, %v1452
        %v1467 = vadd.f32 %v1448, %v1452
        %v1468 = vadd.f32 %v1449, %v1452
        %v1469 = vadd.f32 %v1450, %v1452
        %v1470 = vpack.c.bf16 %v1455, %v1454
        %v1471 = vpack.c.bf16 %v1457, %v1456
        %v1472 = vpack.c.bf16 %v1459, %v1458
        %v1473 = vpack.c.bf16 %v1461, %v1460
        %v1474 = vpack.c.bf16 %v1463, %v1462
        %v1475 = vpack.c.bf16 %v1465, %v1464
        %v1476 = vpack.c.bf16 %v1467, %v1466
        %v1477 = vpack.c.bf16 %v1469, %v1468
        %v1478 = vld [vmem:[%s828] sm:$0xff]
        %v1479 = vld [vmem:[%s828 + $0x8] sm:$0xff]
        %v1480 = vld [vmem:[%s828 + $0x10] sm:$0xff]
        %v1481 = vld [vmem:[%s828 + $0x18] sm:$0xff]
        %v1482 = vld [vmem:[%s828 + $0x20] sm:$0xff]
        %v1483 = vld [vmem:[%s828 + $0x28] sm:$0xff]
        %v1484 = vld [vmem:[%s828 + $0x30] sm:$0xff]
        %v1485 = vld [vmem:[%s828 + $0x38] sm:$0xff]
        %v1486 = vld [vmem:[%s832] sm:$0x3]
        %v1488 = vperm.slane %v1486, 0
        %v1489 = vperm.slane %v1486, 1
        %v1500 = vunpack.c.l.b16 %v1478
        %v1501 = vunpack.c.h.b16 %v1478
        %v1502 = vunpack.c.l.b16 %v1479
        %v1503 = vunpack.c.h.b16 %v1479
        %v1504 = vunpack.c.l.b16 %v1480
        %v1505 = vunpack.c.h.b16 %v1480
        %v1506 = vunpack.c.l.b16 %v1481
        %v1507 = vunpack.c.h.b16 %v1481
        %v1508 = vunpack.c.l.b16 %v1482
        %v1509 = vunpack.c.h.b16 %v1482
        %v1510 = vunpack.c.l.b16 %v1483
        %v1511 = vunpack.c.h.b16 %v1483
        %v1512 = vunpack.c.l.b16 %v1484
        %v1513 = vunpack.c.h.b16 %v1484
        %v1514 = vunpack.c.l.b16 %v1485
        %v1515 = vunpack.c.h.b16 %v1485
        %v1516 = vpack.c.b16 %v1502, %v1500
        %v1517 = vpack.c.b16 %v1503, %v1501
        %v1518 = vpack.c.b16 %v1506, %v1504
        %v1519 = vpack.c.b16 %v1507, %v1505
        %v1520 = vpack.c.b16 %v1510, %v1508
        %v1521 = vpack.c.b16 %v1511, %v1509
        %v1522 = vpack.c.b16 %v1514, %v1512
        %v1523 = vpack.c.b16 %v1515, %v1513
        %v1533 = vsel %vm1072, %v1470, 0
        %v1536 = vsel %vm1072, %v1471, 0
        %v1539 = vsel %vm1072, %v1472, 0
        %v1542 = vsel %vm1072, %v1473, 0
        %v1545 = vsel %vm1072, %v1474, 0
        %v1548 = vsel %vm1072, %v1475, 0
        %v1551 = vsel %vm1072, %v1476, 0
        %v1554 = vsel %vm1072, %v1477, 0
        %1556 = vmatpush.bf16.msra.mxu0 0
        %1557 = vmatpush.bf16.msra.mxu0 0
        %1558 = vmatpush.bf16.msra.mxu0 0
        %1559 = vmatpush.bf16.msra.mxu0 0
        %1560 = vmatpush.bf16.msra.mxu0 %v1522
        %1561 = vmatpush.bf16.msra.mxu0 %v1520
        %1562 = vmatpush.bf16.msra.mxu0 %v1518
        %1563 = vmatpush.bf16.msra.mxu0 %v1516
        %1564 = vmatmul.bf16.gmra.mxu0 %v1533
        %v1565 = vpop.f32.mrf.mxu0
        %v1566 = vadd.f32 %v1488, %v1565
        %v1567 = vpop.f32.mrf.mxu0
        %v1568 = vadd.f32 %v1488, %v1567
        %1569 = vmatmul.bf16.gmra.mxu0 %v1536
        %v1570 = vpop.f32.mrf.mxu0
        %v1571 = vadd.f32 %v1488, %v1570
        %v1572 = vpop.f32.mrf.mxu0
        %v1573 = vadd.f32 %v1488, %v1572
        %1574 = vmatmul.bf16.gmra.mxu0 %v1539
        %v1575 = vpop.f32.mrf.mxu0
        %v1576 = vadd.f32 %v1488, %v1575
        %v1577 = vpop.f32.mrf.mxu0
        %v1578 = vadd.f32 %v1488, %v1577
        %1579 = vmatmul.bf16.gmra.mxu0 %v1542
        %v1580 = vpop.f32.mrf.mxu0
        %v1581 = vadd.f32 %v1488, %v1580
        %v1582 = vpop.f32.mrf.mxu0
        %v1583 = vadd.f32 %v1488, %v1582
        %1584 = vmatmul.bf16.gmra.mxu0 %v1545
        %v1585 = vpop.f32.mrf.mxu0
        %v1586 = vadd.f32 %v1488, %v1585
        %v1587 = vpop.f32.mrf.mxu0
        %v1588 = vadd.f32 %v1488, %v1587
        %1589 = vmatmul.bf16.gmra.mxu0 %v1548
        %v1590 = vpop.f32.mrf.mxu0
        %v1591 = vadd.f32 %v1488, %v1590
        %v1592 = vpop.f32.mrf.mxu0
        %v1593 = vadd.f32 %v1488, %v1592
        %1594 = vmatmul.bf16.gmra.mxu0 %v1551
        %v1595 = vpop.f32.mrf.mxu0
        %v1596 = vadd.f32 %v1488, %v1595
        %v1597 = vpop.f32.mrf.mxu0
        %v1598 = vadd.f32 %v1488, %v1597
        %1599 = vmatmul.bf16.gmra.mxu0 %v1554
        %v1600 = vpop.f32.mrf.mxu0
        %v1601 = vadd.f32 %v1488, %v1600
        %v1602 = vpop.f32.mrf.mxu0
        %v1603 = vadd.f32 %v1488, %v1602
        %1604 = vdwg.mxu0
        %1605 = vmatpush.bf16.msra.mxu0 0
        %1606 = vmatpush.bf16.msra.mxu0 0
        %1607 = vmatpush.bf16.msra.mxu0 0
        %1608 = vmatpush.bf16.msra.mxu0 0
        %1609 = vmatpush.bf16.msra.mxu0 %v1523
        %1610 = vmatpush.bf16.msra.mxu0 %v1521
        %1611 = vmatpush.bf16.msra.mxu0 %v1519
        %1612 = vmatpush.bf16.msra.mxu0 %v1517
        %1613 = vmatmul.bf16.gmra.mxu0 %v1533
        %v1614 = vpop.f32.mrf.mxu0
        %v1615 = vadd.f32 %v1489, %v1614
        %v1616 = vpop.f32.mrf.mxu0
        %v1617 = vadd.f32 %v1489, %v1616
        %1618 = vmatmul.bf16.gmra.mxu0 %v1536
        %v1619 = vpop.f32.mrf.mxu0
        %v1620 = vadd.f32 %v1489, %v1619
        %v1621 = vpop.f32.mrf.mxu0
        %v1622 = vadd.f32 %v1489, %v1621
        %1623 = vmatmul.bf16.gmra.mxu0 %v1539
        %v1624 = vpop.f32.mrf.mxu0
        %v1625 = vadd.f32 %v1489, %v1624
        %v1626 = vpop.f32.mrf.mxu0
        %v1627 = vadd.f32 %v1489, %v1626
        %1628 = vmatmul.bf16.gmra.mxu0 %v1542
        %v1629 = vpop.f32.mrf.mxu0
        %v1630 = vadd.f32 %v1489, %v1629
        %v1631 = vpop.f32.mrf.mxu0
        %v1632 = vadd.f32 %v1489, %v1631
        %1633 = vmatmul.bf16.gmra.mxu0 %v1545
        %v1634 = vpop.f32.mrf.mxu0
        %v1635 = vadd.f32 %v1489, %v1634
        %v1636 = vpop.f32.mrf.mxu0
        %v1637 = vadd.f32 %v1489, %v1636
        %1638 = vmatmul.bf16.gmra.mxu0 %v1548
        %v1639 = vpop.f32.mrf.mxu0
        %v1640 = vadd.f32 %v1489, %v1639
        %v1641 = vpop.f32.mrf.mxu0
        %v1642 = vadd.f32 %v1489, %v1641
        %1643 = vmatmul.bf16.gmra.mxu0 %v1551
        %v1644 = vpop.f32.mrf.mxu0
        %v1645 = vadd.f32 %v1489, %v1644
        %v1646 = vpop.f32.mrf.mxu0
        %v1647 = vadd.f32 %v1489, %v1646
        %1648 = vmatmul.bf16.gmra.mxu0 %v1554
        %v1649 = vpop.f32.mrf.mxu0
        %v1650 = vadd.f32 %v1489, %v1649
        %v1651 = vpop.f32.mrf.mxu0
        %v1652 = vadd.f32 %v1489, %v1651
        %1653 = vdwg.mxu0
        %v1654 = vmul.f32 %v1566, 0.25
        %v1655 = vmul.f32 %v1568, 0.25
        %v1656 = vmul.f32 %v1571, 0.25
        %v1657 = vmul.f32 %v1573, 0.25
        %v1658 = vmul.f32 %v1576, 0.25
        %v1659 = vmul.f32 %v1578, 0.25
        %v1660 = vmul.f32 %v1581, 0.25
        %v1661 = vmul.f32 %v1583, 0.25
        %v1662 = vmul.f32 %v1586, 0.25
        %v1663 = vmul.f32 %v1588, 0.25
        %v1664 = vmul.f32 %v1591, 0.25
        %v1665 = vmul.f32 %v1593, 0.25
        %v1666 = vmul.f32 %v1596, 0.25
        %v1667 = vmul.f32 %v1598, 0.25
        %v1668 = vmul.f32 %v1601, 0.25
        %v1669 = vmul.f32 %v1603, 0.25
        %v1670 = vpack.c.bf16 %v1654, %v1654
        %v1671 = vpack.c.bf16 %v1655, %v1655
        %v1672 = vpack.c.bf16 %v1656, %v1656
        %v1673 = vpack.c.bf16 %v1657, %v1657
        %v1674 = vpack.c.bf16 %v1658, %v1658
        %v1675 = vpack.c.bf16 %v1659, %v1659
        %v1676 = vpack.c.bf16 %v1660, %v1660
        %v1677 = vpack.c.bf16 %v1661, %v1661
        %v1678 = vpack.c.bf16 %v1662, %v1662
        %v1679 = vpack.c.bf16 %v1663, %v1663
        %v1680 = vpack.c.bf16 %v1664, %v1664
        %v1681 = vpack.c.bf16 %v1665, %v1665
        %v1682 = vpack.c.bf16 %v1666, %v1666
        %v1683 = vpack.c.bf16 %v1667, %v1667
        %v1684 = vpack.c.bf16 %v1668, %v1668
        %v1685 = vpack.c.bf16 %v1669, %v1669
        %v1686 = vpack.c.bf16 %v1566, %v1566
        %v1687 = vpack.c.bf16 %v1568, %v1568
        %v1688 = vpack.c.bf16 %v1571, %v1571
        %v1689 = vpack.c.bf16 %v1573, %v1573
        %v1690 = vpack.c.bf16 %v1576, %v1576
        %v1691 = vpack.c.bf16 %v1578, %v1578
        %v1692 = vpack.c.bf16 %v1581, %v1581
        %v1693 = vpack.c.bf16 %v1583, %v1583
        %v1694 = vpack.c.bf16 %v1586, %v1586
        %v1695 = vpack.c.bf16 %v1588, %v1588
        %v1696 = vpack.c.bf16 %v1591, %v1591
        %v1697 = vpack.c.bf16 %v1593, %v1593
        %v1698 = vpack.c.bf16 %v1596, %v1596
        %v1699 = vpack.c.bf16 %v1598, %v1598
        %v1700 = vpack.c.bf16 %v1601, %v1601
        %v1701 = vpack.c.bf16 %v1603, %v1603
        %v1702 = vpack.c.bf16 %v1615, %v1615
        %v1703 = vpack.c.bf16 %v1617, %v1617
        %v1704 = vpack.c.bf16 %v1620, %v1620
        %v1705 = vpack.c.bf16 %v1622, %v1622
        %v1706 = vpack.c.bf16 %v1625, %v1625
        %v1707 = vpack.c.bf16 %v1627, %v1627
        %v1708 = vpack.c.bf16 %v1630, %v1630
        %v1709 = vpack.c.bf16 %v1632, %v1632
        %v1710 = vpack.c.bf16 %v1635, %v1635
        %v1711 = vpack.c.bf16 %v1637, %v1637
        %v1712 = vpack.c.bf16 %v1640, %v1640
        %v1713 = vpack.c.bf16 %v1642, %v1642
        %v1714 = vpack.c.bf16 %v1645, %v1645
        %v1715 = vpack.c.bf16 %v1647, %v1647
        %v1716 = vpack.c.bf16 %v1650, %v1650
        %v1717 = vpack.c.bf16 %v1652, %v1652
        %v1718 = vlaneseq
        %v1719 = vand.u32 %v1718, 127
        %vm1720 = vcmp.lt.s32.totalorder %v1719, 2
        %vm1721 = vcmp.ge.s32.totalorder %v1719, 8
        %vm1722 = vcmp.lt.s32.totalorder %v1719, 113
        %vm1723 = vmand %vm1721, %vm1722
        %vm1724 = vmor %vm1720, %vm1723
        %v1725 = vsel %vm1724, 0.0, -1e+30
        %v1742 = vunpack.c.l.b16 %v1670
        %v1743 = vunpack.c.l.b16 %v1671
        %v1744 = vunpack.c.l.b16 %v1672
        %v1745 = vunpack.c.l.b16 %v1673
        %v1746 = vunpack.c.l.b16 %v1674
        %v1747 = vunpack.c.l.b16 %v1675
        %v1748 = vunpack.c.l.b16 %v1676
        %v1749 = vunpack.c.l.b16 %v1677
        %v1750 = vunpack.c.l.b16 %v1678
        %v1751 = vunpack.c.l.b16 %v1679
        %v1752 = vunpack.c.l.b16 %v1680
        %v1753 = vunpack.c.l.b16 %v1681
        %v1754 = vunpack.c.l.b16 %v1682
        %v1755 = vunpack.c.l.b16 %v1683
        %v1756 = vunpack.c.l.b16 %v1684
        %v1757 = vunpack.c.l.b16 %v1685
        %v1758 = vpack.c.b16 %v1743, %v1742
        %v1759 = vpack.c.b16 %v1745, %v1744
        %v1760 = vpack.c.b16 %v1747, %v1746
        %v1761 = vpack.c.b16 %v1749, %v1748
        %v1762 = vpack.c.b16 %v1751, %v1750
        %v1763 = vpack.c.b16 %v1753, %v1752
        %v1764 = vpack.c.b16 %v1755, %v1754
        %v1765 = vpack.c.b16 %v1757, %v1756
        %v1782 = vunpack.c.l.b16 %v1686
        %v1783 = vunpack.c.l.b16 %v1687
        %v1784 = vunpack.c.l.b16 %v1688
        %v1785 = vunpack.c.l.b16 %v1689
        %v1786 = vunpack.c.l.b16 %v1690
        %v1787 = vunpack.c.l.b16 %v1691
        %v1788 = vunpack.c.l.b16 %v1692
        %v1789 = vunpack.c.l.b16 %v1693
        %v1790 = vunpack.c.l.b16 %v1694
        %v1791 = vunpack.c.l.b16 %v1695
        %v1792 = vunpack.c.l.b16 %v1696
        %v1793 = vunpack.c.l.b16 %v1697
        %v1794 = vunpack.c.l.b16 %v1698
        %v1795 = vunpack.c.l.b16 %v1699
        %v1796 = vunpack.c.l.b16 %v1700
        %v1797 = vunpack.c.l.b16 %v1701
        %v1798 = vpack.c.b16 %v1783, %v1782
        %v1799 = vpack.c.b16 %v1785, %v1784
        %v1800 = vpack.c.b16 %v1787, %v1786
        %v1801 = vpack.c.b16 %v1789, %v1788
        %v1802 = vpack.c.b16 %v1791, %v1790
        %v1803 = vpack.c.b16 %v1793, %v1792
        %v1804 = vpack.c.b16 %v1795, %v1794
        %v1805 = vpack.c.b16 %v1797, %v1796
        %1806 = vrot.lane.b32.xlu0 %v1798, 64
        %v1807 = vpop.permute.xlu0 %1806
        %1808 = vrot.lane.b32.xlu0 %v1799, 64
        %v1809 = vpop.permute.xlu0 %1808
        %1810 = vrot.lane.b32.xlu0 %v1800, 64
        %v1811 = vpop.permute.xlu0 %1810
        %1812 = vrot.lane.b32.xlu0 %v1801, 64
        %v1813 = vpop.permute.xlu0 %1812
        %1814 = vrot.lane.b32.xlu0 %v1802, 64
        %v1815 = vpop.permute.xlu0 %1814
        %1816 = vrot.lane.b32.xlu0 %v1803, 64
        %v1817 = vpop.permute.xlu0 %1816
        %1818 = vrot.lane.b32.xlu0 %v1804, 64
        %v1819 = vpop.permute.xlu0 %1818
        %1820 = vrot.lane.b32.xlu0 %v1805, 64
        %v1821 = vpop.permute.xlu0 %1820
        %vm1822 = vcmask 130048
        %v1824 = vsel %vm1822, %v1758, 0
        %v1827 = vsel %vm1822, %v1759, 0
        %v1830 = vsel %vm1822, %v1760, 0
        %v1833 = vsel %vm1822, %v1761, 0
        %v1836 = vsel %vm1822, %v1762, 0
        %v1839 = vsel %vm1822, %v1763, 0
        %v1842 = vsel %vm1822, %v1764, 0
        %v1845 = vsel %vm1822, %v1765, 0
        %v1848 = vsel %vm1822, %v1807, 0
        %v1851 = vsel %vm1822, %v1809, 0
        %v1854 = vsel %vm1822, %v1811, 0
        %v1857 = vsel %vm1822, %v1813, 0
        %v1860 = vsel %vm1822, %v1815, 0
        %v1863 = vsel %vm1822, %v1817, 0
        %v1866 = vsel %vm1822, %v1819, 0
        %v1869 = vsel %vm1822, %v1821, 0
        %1871 = vmatpush.bf16.xpose.msra.mxu0 %v1869
        %1872 = vmatpush.bf16.xpose.msra.mxu0 %v1866
        %1873 = vmatpush.bf16.xpose.msra.mxu0 %v1863
        %1874 = vmatpush.bf16.xpose.msra.mxu0 %v1860
        %1875 = vmatpush.bf16.xpose.msra.mxu0 %v1857
        %1876 = vmatpush.bf16.xpose.msra.mxu0 %v1854
        %1877 = vmatpush.bf16.xpose.msra.mxu0 %v1851
        %1878 = vmatpush.bf16.xpose.msra.mxu0 %v1848
        %1879 = vmatmul.bf16.gmra.mxu0 %v1824
        %v1880 = vpop.f32.mrf.mxu0
        %v1881 = vadd.f32 %v1725, %v1880
        %v1882 = vpop.f32.mrf.mxu0
        %v1883 = vadd.f32 %v1725, %v1882
        %1884 = vmatmul.bf16.gmra.mxu0 %v1827
        %v1885 = vpop.f32.mrf.mxu0
        %v1886 = vadd.f32 %v1725, %v1885
        %v1887 = vpop.f32.mrf.mxu0
        %v1888 = vadd.f32 %v1725, %v1887
        %1889 = vmatmul.bf16.gmra.mxu0 %v1830
        %v1890 = vpop.f32.mrf.mxu0
        %v1891 = vadd.f32 %v1725, %v1890
        %v1892 = vpop.f32.mrf.mxu0
        %v1893 = vadd.f32 %v1725, %v1892
        %1894 = vmatmul.bf16.gmra.mxu0 %v1833
        %v1895 = vpop.f32.mrf.mxu0
        %v1896 = vadd.f32 %v1725, %v1895
        %v1897 = vpop.f32.mrf.mxu0
        %v1898 = vadd.f32 %v1725, %v1897
        %1899 = vmatmul.bf16.gmra.mxu0 %v1836
        %v1900 = vpop.f32.mrf.mxu0
        %v1901 = vadd.f32 %v1725, %v1900
        %v1902 = vpop.f32.mrf.mxu0
        %v1903 = vadd.f32 %v1725, %v1902
        %1904 = vmatmul.bf16.gmra.mxu0 %v1839
        %v1905 = vpop.f32.mrf.mxu0
        %v1906 = vadd.f32 %v1725, %v1905
        %v1907 = vpop.f32.mrf.mxu0
        %v1908 = vadd.f32 %v1725, %v1907
        %1909 = vmatmul.bf16.gmra.mxu0 %v1842
        %v1910 = vpop.f32.mrf.mxu0
        %v1911 = vadd.f32 %v1725, %v1910
        %v1912 = vpop.f32.mrf.mxu0
        %v1913 = vadd.f32 %v1725, %v1912
        %1914 = vmatmul.bf16.gmra.mxu0 %v1845
        %v1915 = vpop.f32.mrf.mxu0
        %v1916 = vadd.f32 %v1725, %v1915
        %v1917 = vpop.f32.mrf.mxu0
        %v1918 = vadd.f32 %v1725, %v1917
        %1919 = vdwg.mxu0
        %1920 = vmax.xlane.f32.xlu0 %v1881
        %v1921 = vpop.xlane.xlu0 %1920
        %1922 = vmax.xlane.f32.xlu0 %v1883
        %v1923 = vpop.xlane.xlu0 %1922
        %1924 = vmax.xlane.f32.xlu0 %v1886
        %v1925 = vpop.xlane.xlu0 %1924
        %1926 = vmax.xlane.f32.xlu0 %v1888
        %v1927 = vpop.xlane.xlu0 %1926
        %1928 = vmax.xlane.f32.xlu0 %v1891
        %v1929 = vpop.xlane.xlu0 %1928
        %1930 = vmax.xlane.f32.xlu0 %v1893
        %v1931 = vpop.xlane.xlu0 %1930
        %1932 = vmax.xlane.f32.xlu0 %v1896
        %v1933 = vpop.xlane.xlu0 %1932
        %1934 = vmax.xlane.f32.xlu0 %v1898
        %v1935 = vpop.xlane.xlu0 %1934
        %1936 = vmax.xlane.f32.xlu0 %v1901
        %v1937 = vpop.xlane.xlu0 %1936
        %1938 = vmax.xlane.f32.xlu0 %v1903
        %v1939 = vpop.xlane.xlu0 %1938
        %1940 = vmax.xlane.f32.xlu0 %v1906
        %v1941 = vpop.xlane.xlu0 %1940
        %1942 = vmax.xlane.f32.xlu0 %v1908
        %v1943 = vpop.xlane.xlu0 %1942
        %1944 = vmax.xlane.f32.xlu0 %v1911
        %v1945 = vpop.xlane.xlu0 %1944
        %1946 = vmax.xlane.f32.xlu0 %v1913
        %v1947 = vpop.xlane.xlu0 %1946
        %1948 = vmax.xlane.f32.xlu0 %v1916
        %v1949 = vpop.xlane.xlu0 %1948
        %1950 = vmax.xlane.f32.xlu0 %v1918
        %v1951 = vpop.xlane.xlu0 %1950
        %v1952 = vsub.f32 %v1881, %v1921
        %v1953 = vsub.f32 %v1883, %v1923
        %v1954 = vsub.f32 %v1886, %v1925
        %v1955 = vsub.f32 %v1888, %v1927
        %v1956 = vsub.f32 %v1891, %v1929
        %v1957 = vsub.f32 %v1893, %v1931
        %v1958 = vsub.f32 %v1896, %v1933
        %v1959 = vsub.f32 %v1898, %v1935
        %v1960 = vsub.f32 %v1901, %v1937
        %v1961 = vsub.f32 %v1903, %v1939
        %v1962 = vsub.f32 %v1906, %v1941
        %v1963 = vsub.f32 %v1908, %v1943
        %v1964 = vsub.f32 %v1911, %v1945
        %v1965 = vsub.f32 %v1913, %v1947
        %v1966 = vsub.f32 %v1916, %v1949
        %v1967 = vsub.f32 %v1918, %v1951
        %v1968 = vmul.f32 %v1952, 1.442695
        %v1969 = vpow.pop %v1968
        %v1970 = vmul.f32 %v1953, 1.442695
        %v1971 = vpow.pop %v1970
        %v1972 = vmul.f32 %v1954, 1.442695
        %v1973 = vpow.pop %v1972
        %v1974 = vmul.f32 %v1955, 1.442695
        %v1975 = vpow.pop %v1974
        %v1976 = vmul.f32 %v1956, 1.442695
        %v1977 = vpow.pop %v1976
        %v1978 = vmul.f32 %v1957, 1.442695
        %v1979 = vpow.pop %v1978
        %v1980 = vmul.f32 %v1958, 1.442695
        %v1981 = vpow.pop %v1980
        %v1982 = vmul.f32 %v1959, 1.442695
        %v1983 = vpow.pop %v1982
        %v1984 = vmul.f32 %v1960, 1.442695
        %v1985 = vpow.pop %v1984
        %v1986 = vmul.f32 %v1961, 1.442695
        %v1987 = vpow.pop %v1986
        %v1988 = vmul.f32 %v1962, 1.442695
        %v1989 = vpow.pop %v1988
        %v1990 = vmul.f32 %v1963, 1.442695
        %v1991 = vpow.pop %v1990
        %v1992 = vmul.f32 %v1964, 1.442695
        %v1993 = vpow.pop %v1992
        %v1994 = vmul.f32 %v1965, 1.442695
        %v1995 = vpow.pop %v1994
        %v1996 = vmul.f32 %v1966, 1.442695
        %v1997 = vpow.pop %v1996
        %v1998 = vmul.f32 %v1967, 1.442695
        %v1999 = vpow.pop %v1998
        %2000 = vadd.xlane.f32.xlu0 %v1969
        %v2001 = vpop.xlane.xlu0 %2000
        %2002 = vadd.xlane.f32.xlu0 %v1971
        %v2003 = vpop.xlane.xlu0 %2002
        %2004 = vadd.xlane.f32.xlu0 %v1973
        %v2005 = vpop.xlane.xlu0 %2004
        %2006 = vadd.xlane.f32.xlu0 %v1975
        %v2007 = vpop.xlane.xlu0 %2006
        %2008 = vadd.xlane.f32.xlu0 %v1977
        %v2009 = vpop.xlane.xlu0 %2008
        %2010 = vadd.xlane.f32.xlu0 %v1979
        %v2011 = vpop.xlane.xlu0 %2010
        %2012 = vadd.xlane.f32.xlu0 %v1981
        %v2013 = vpop.xlane.xlu0 %2012
        %2014 = vadd.xlane.f32.xlu0 %v1983
        %v2015 = vpop.xlane.xlu0 %2014
        %2016 = vadd.xlane.f32.xlu0 %v1985
        %v2017 = vpop.xlane.xlu0 %2016
        %2018 = vadd.xlane.f32.xlu0 %v1987
        %v2019 = vpop.xlane.xlu0 %2018
        %2020 = vadd.xlane.f32.xlu0 %v1989
        %v2021 = vpop.xlane.xlu0 %2020
        %2022 = vadd.xlane.f32.xlu0 %v1991
        %v2023 = vpop.xlane.xlu0 %2022
        %2024 = vadd.xlane.f32.xlu0 %v1993
        %v2025 = vpop.xlane.xlu0 %2024
        %2026 = vadd.xlane.f32.xlu0 %v1995
        %v2027 = vpop.xlane.xlu0 %2026
        %2028 = vadd.xlane.f32.xlu0 %v1997
        %v2029 = vpop.xlane.xlu0 %2028
        %2030 = vadd.xlane.f32.xlu0 %v1999
        %v2031 = vpop.xlane.xlu0 %2030
        %v2032 = vrcp.pop %v2001
        %v2033 = vrcp.pop %v2003
        %v2034 = vrcp.pop %v2005
        %v2035 = vrcp.pop %v2007
        %v2036 = vrcp.pop %v2009
        %v2037 = vrcp.pop %v2011
        %v2038 = vrcp.pop %v2013
        %v2039 = vrcp.pop %v2015
        %v2040 = vrcp.pop %v2017
        %v2041 = vrcp.pop %v2019
        %v2042 = vrcp.pop %v2021
        %v2043 = vrcp.pop %v2023
        %v2044 = vrcp.pop %v2025
        %v2045 = vrcp.pop %v2027
        %v2046 = vrcp.pop %v2029
        %v2047 = vrcp.pop %v2031
        %v2048 = vmul.f32 %v1969, %v2032
        %v2049 = vmul.f32 %v1971, %v2033
        %v2050 = vmul.f32 %v1973, %v2034
        %v2051 = vmul.f32 %v1975, %v2035
        %v2052 = vmul.f32 %v1977, %v2036
        %v2053 = vmul.f32 %v1979, %v2037
        %v2054 = vmul.f32 %v1981, %v2038
        %v2055 = vmul.f32 %v1983, %v2039
        %v2056 = vmul.f32 %v1985, %v2040
        %v2057 = vmul.f32 %v1987, %v2041
        %v2058 = vmul.f32 %v1989, %v2042
        %v2059 = vmul.f32 %v1991, %v2043
        %v2060 = vmul.f32 %v1993, %v2044
        %v2061 = vmul.f32 %v1995, %v2045
        %v2062 = vmul.f32 %v1997, %v2046
        %v2063 = vmul.f32 %v1999, %v2047
        %v2064 = vpack.c.bf16 %v2049, %v2048
        %v2065 = vpack.c.bf16 %v2051, %v2050
        %v2066 = vpack.c.bf16 %v2053, %v2052
        %v2067 = vpack.c.bf16 %v2055, %v2054
        %v2068 = vpack.c.bf16 %v2057, %v2056
        %v2069 = vpack.c.bf16 %v2059, %v2058
        %v2070 = vpack.c.bf16 %v2061, %v2060
        %v2071 = vpack.c.bf16 %v2063, %v2062
        %v2088 = vunpack.c.l.b16 %v1702
        %v2089 = vunpack.c.l.b16 %v1703
        %v2090 = vunpack.c.l.b16 %v1704
        %v2091 = vunpack.c.l.b16 %v1705
        %v2092 = vunpack.c.l.b16 %v1706
        %v2093 = vunpack.c.l.b16 %v1707
        %v2094 = vunpack.c.l.b16 %v1708
        %v2095 = vunpack.c.l.b16 %v1709
        %v2096 = vunpack.c.l.b16 %v1710
        %v2097 = vunpack.c.l.b16 %v1711
        %v2098 = vunpack.c.l.b16 %v1712
        %v2099 = vunpack.c.l.b16 %v1713
        %v2100 = vunpack.c.l.b16 %v1714
        %v2101 = vunpack.c.l.b16 %v1715
        %v2102 = vunpack.c.l.b16 %v1716
        %v2103 = vunpack.c.l.b16 %v1717
        %v2104 = vpack.c.b16 %v2089, %v2088
        %v2105 = vpack.c.b16 %v2091, %v2090
        %v2106 = vpack.c.b16 %v2093, %v2092
        %v2107 = vpack.c.b16 %v2095, %v2094
        %v2108 = vpack.c.b16 %v2097, %v2096
        %v2109 = vpack.c.b16 %v2099, %v2098
        %v2110 = vpack.c.b16 %v2101, %v2100
        %v2111 = vpack.c.b16 %v2103, %v2102
        %2120 = vmatpush.bf16.msra.mxu0 %v2111
        %2121 = vmatpush.bf16.msra.mxu0 %v2110
        %2122 = vmatpush.bf16.msra.mxu0 %v2109
        %2123 = vmatpush.bf16.msra.mxu0 %v2108
        %2124 = vmatpush.bf16.msra.mxu0 %v2107
        %2125 = vmatpush.bf16.msra.mxu0 %v2106
        %2126 = vmatpush.bf16.msra.mxu0 %v2105
        %2127 = vmatpush.bf16.msra.mxu0 %v2104
        %2128 = vmatmul.bf16.gmra.mxu0 %v2064
        %v2129 = vpop.f32.mrf.mxu0
        %v2130 = vadd.f32 0.0, %v2129
        %v2131 = vpop.f32.mrf.mxu0
        %v2132 = vadd.f32 0.0, %v2131
        %2133 = vmatmul.bf16.gmra.mxu0 %v2065
        %v2134 = vpop.f32.mrf.mxu0
        %v2135 = vadd.f32 0.0, %v2134
        %v2136 = vpop.f32.mrf.mxu0
        %v2137 = vadd.f32 0.0, %v2136
        %2138 = vmatmul.bf16.gmra.mxu0 %v2066
        %v2139 = vpop.f32.mrf.mxu0
        %v2140 = vadd.f32 0.0, %v2139
        %v2141 = vpop.f32.mrf.mxu0
        %v2142 = vadd.f32 0.0, %v2141
        %2143 = vmatmul.bf16.gmra.mxu0 %v2067
        %v2144 = vpop.f32.mrf.mxu0
        %v2145 = vadd.f32 0.0, %v2144
        %v2146 = vpop.f32.mrf.mxu0
        %v2147 = vadd.f32 0.0, %v2146
        %2148 = vmatmul.bf16.gmra.mxu0 %v2068
        %v2149 = vpop.f32.mrf.mxu0
        %v2150 = vadd.f32 0.0, %v2149
        %v2151 = vpop.f32.mrf.mxu0
        %v2152 = vadd.f32 0.0, %v2151
        %2153 = vmatmul.bf16.gmra.mxu0 %v2069
        %v2154 = vpop.f32.mrf.mxu0
        %v2155 = vadd.f32 0.0, %v2154
        %v2156 = vpop.f32.mrf.mxu0
        %v2157 = vadd.f32 0.0, %v2156
        %2158 = vmatmul.bf16.gmra.mxu0 %v2070
        %v2159 = vpop.f32.mrf.mxu0
        %v2160 = vadd.f32 0.0, %v2159
        %v2161 = vpop.f32.mrf.mxu0
        %v2162 = vadd.f32 0.0, %v2161
        %2163 = vmatmul.bf16.gmra.mxu0 %v2071
        %v2164 = vpop.f32.mrf.mxu0
        %v2165 = vadd.f32 0.0, %v2164
        %v2166 = vpop.f32.mrf.mxu0
        %v2167 = vadd.f32 0.0, %v2166
        %2168 = vdwg.mxu0
        %2169 = vst.msk [vmem:[#allocation3] sm:$0xff] %vm1822, %v2130
        %2170 = vst.msk [vmem:[#allocation3 + $0x8] sm:$0xff] %vm1822, %v2132
        %2171 = vst.msk [vmem:[#allocation3 + $0x10] sm:$0xff] %vm1822, %v2135
        %2172 = vst.msk [vmem:[#allocation3 + $0x18] sm:$0xff] %vm1822, %v2137
        %2173 = vst.msk [vmem:[#allocation3 + $0x20] sm:$0xff] %vm1822, %v2140
        %2174 = vst.msk [vmem:[#allocation3 + $0x28] sm:$0xff] %vm1822, %v2142
        %2175 = vst.msk [vmem:[#allocation3 + $0x30] sm:$0xff] %vm1822, %v2145
        %2176 = vst.msk [vmem:[#allocation3 + $0x38] sm:$0xff] %vm1822, %v2147
        %2177 = vst.msk [vmem:[#allocation3 + $0x40] sm:$0xff] %vm1822, %v2150
        %2178 = vst.msk [vmem:[#allocation3 + $0x48] sm:$0xff] %vm1822, %v2152
        %2179 = vst.msk [vmem:[#allocation3 + $0x50] sm:$0xff] %vm1822, %v2155
        %2180 = vst.msk [vmem:[#allocation3 + $0x58] sm:$0xff] %vm1822, %v2157
        %2181 = vst.msk [vmem:[#allocation3 + $0x60] sm:$0xff] %vm1822, %v2160
        %2182 = vst.msk [vmem:[#allocation3 + $0x68] sm:$0xff] %vm1822, %v2162
        %2183 = vst.msk [vmem:[#allocation3 + $0x70] sm:$0xff] %vm1822, %v2165
        %2184 = vst.msk [vmem:[#allocation3 + $0x78] sm:$0xff] %vm1822, %v2167
        %2185 = vrot.lane.b32.xlu0 %v1758, 112
        %v2186 = vpop.permute.xlu0 %2185
        %2187 = vrot.lane.b32.xlu0 %v1759, 112
        %v2188 = vpop.permute.xlu0 %2187
        %2189 = vrot.lane.b32.xlu0 %v1760, 112
        %v2190 = vpop.permute.xlu0 %2189
        %2191 = vrot.lane.b32.xlu0 %v1761, 112
        %v2192 = vpop.permute.xlu0 %2191
        %2193 = vrot.lane.b32.xlu0 %v1762, 112
        %v2194 = vpop.permute.xlu0 %2193
        %2195 = vrot.lane.b32.xlu0 %v1763, 112
        %v2196 = vpop.permute.xlu0 %2195
        %2197 = vrot.lane.b32.xlu0 %v1764, 112
        %v2198 = vpop.permute.xlu0 %2197
        %2199 = vrot.lane.b32.xlu0 %v1765, 112
        %v2200 = vpop.permute.xlu0 %2199
        %2201 = vrot.lane.b32.xlu0 %v1798, 48
        %v2202 = vpop.permute.xlu0 %2201
        %2203 = vrot.lane.b32.xlu0 %v1799, 48
        %v2204 = vpop.permute.xlu0 %2203
        %2205 = vrot.lane.b32.xlu0 %v1800, 48
        %v2206 = vpop.permute.xlu0 %2205
        %2207 = vrot.lane.b32.xlu0 %v1801, 48
        %v2208 = vpop.permute.xlu0 %2207
        %2209 = vrot.lane.b32.xlu0 %v1802, 48
        %v2210 = vpop.permute.xlu0 %2209
        %2211 = vrot.lane.b32.xlu0 %v1803, 48
        %v2212 = vpop.permute.xlu0 %2211
        %2213 = vrot.lane.b32.xlu0 %v1804, 48
        %v2214 = vpop.permute.xlu0 %2213
        %2215 = vrot.lane.b32.xlu0 %v1805, 48
        %v2216 = vpop.permute.xlu0 %2215
        %v2218 = vsel %vm1822, %v2186, 0
        %v2221 = vsel %vm1822, %v2188, 0
        %v2224 = vsel %vm1822, %v2190, 0
        %v2227 = vsel %vm1822, %v2192, 0
        %v2230 = vsel %vm1822, %v2194, 0
        %v2233 = vsel %vm1822, %v2196, 0
        %v2236 = vsel %vm1822, %v2198, 0
        %v2239 = vsel %vm1822, %v2200, 0
        %v2242 = vsel %vm1822, %v2202, 0
        %v2245 = vsel %vm1822, %v2204, 0
        %v2248 = vsel %vm1822, %v2206, 0
        %v2251 = vsel %vm1822, %v2208, 0
        %v2254 = vsel %vm1822, %v2210, 0
        %v2257 = vsel %vm1822, %v2212, 0
        %v2260 = vsel %vm1822, %v2214, 0
        %v2263 = vsel %vm1822, %v2216, 0
        %2265 = vmatpush.bf16.xpose.msra.mxu0 %v2263
        %2266 = vmatpush.bf16.xpose.msra.mxu0 %v2260
        %2267 = vmatpush.bf16.xpose.msra.mxu0 %v2257
        %2268 = vmatpush.bf16.xpose.msra.mxu0 %v2254
        %2269 = vmatpush.bf16.xpose.msra.mxu0 %v2251
        %2270 = vmatpush.bf16.xpose.msra.mxu0 %v2248
        %2271 = vmatpush.bf16.xpose.msra.mxu0 %v2245
        %2272 = vmatpush.bf16.xpose.msra.mxu0 %v2242
        %2273 = vmatmul.bf16.gmra.mxu0 %v2218
        %v2274 = vpop.f32.mrf.mxu0
        %v2275 = vadd.f32 %v1725, %v2274
        %v2276 = vpop.f32.mrf.mxu0
        %v2277 = vadd.f32 %v1725, %v2276
        %2278 = vmatmul.bf16.gmra.mxu0 %v2221
        %v2279 = vpop.f32.mrf.mxu0
        %v2280 = vadd.f32 %v1725, %v2279
        %v2281 = vpop.f32.mrf.mxu0
        %v2282 = vadd.f32 %v1725, %v2281
        %2283 = vmatmul.bf16.gmra.mxu0 %v2224
        %v2284 = vpop.f32.mrf.mxu0
        %v2285 = vadd.f32 %v1725, %v2284
        %v2286 = vpop.f32.mrf.mxu0
        %v2287 = vadd.f32 %v1725, %v2286
        %2288 = vmatmul.bf16.gmra.mxu0 %v2227
        %v2289 = vpop.f32.mrf.mxu0
        %v2290 = vadd.f32 %v1725, %v2289
        %v2291 = vpop.f32.mrf.mxu0
        %v2292 = vadd.f32 %v1725, %v2291
        %2293 = vmatmul.bf16.gmra.mxu0 %v2230
        %v2294 = vpop.f32.mrf.mxu0
        %v2295 = vadd.f32 %v1725, %v2294
        %v2296 = vpop.f32.mrf.mxu0
        %v2297 = vadd.f32 %v1725, %v2296
        %2298 = vmatmul.bf16.gmra.mxu0 %v2233
        %v2299 = vpop.f32.mrf.mxu0
        %v2300 = vadd.f32 %v1725, %v2299
        %v2301 = vpop.f32.mrf.mxu0
        %v2302 = vadd.f32 %v1725, %v2301
        %2303 = vmatmul.bf16.gmra.mxu0 %v2236
        %v2304 = vpop.f32.mrf.mxu0
        %v2305 = vadd.f32 %v1725, %v2304
        %v2306 = vpop.f32.mrf.mxu0
        %v2307 = vadd.f32 %v1725, %v2306
        %2308 = vmatmul.bf16.gmra.mxu0 %v2239
        %v2309 = vpop.f32.mrf.mxu0
        %v2310 = vadd.f32 %v1725, %v2309
        %v2311 = vpop.f32.mrf.mxu0
        %v2312 = vadd.f32 %v1725, %v2311
        %2313 = vdwg.mxu0
        %2314 = vmax.xlane.f32.xlu0 %v2275
        %v2315 = vpop.xlane.xlu0 %2314
        %2316 = vmax.xlane.f32.xlu0 %v2277
        %v2317 = vpop.xlane.xlu0 %2316
        %2318 = vmax.xlane.f32.xlu0 %v2280
        %v2319 = vpop.xlane.xlu0 %2318
        %2320 = vmax.xlane.f32.xlu0 %v2282
        %v2321 = vpop.xlane.xlu0 %2320
        %2322 = vmax.xlane.f32.xlu0 %v2285
        %v2323 = vpop.xlane.xlu0 %2322
        %2324 = vmax.xlane.f32.xlu0 %v2287
        %v2325 = vpop.xlane.xlu0 %2324
        %2326 = vmax.xlane.f32.xlu0 %v2290
        %v2327 = vpop.xlane.xlu0 %2326
        %2328 = vmax.xlane.f32.xlu0 %v2292
        %v2329 = vpop.xlane.xlu0 %2328
        %2330 = vmax.xlane.f32.xlu0 %v2295
        %v2331 = vpop.xlane.xlu0 %2330
        %2332 = vmax.xlane.f32.xlu0 %v2297
        %v2333 = vpop.xlane.xlu0 %2332
        %2334 = vmax.xlane.f32.xlu0 %v2300
        %v2335 = vpop.xlane.xlu0 %2334
        %2336 = vmax.xlane.f32.xlu0 %v2302
        %v2337 = vpop.xlane.xlu0 %2336
        %2338 = vmax.xlane.f32.xlu0 %v2305
        %v2339 = vpop.xlane.xlu0 %2338
        %2340 = vmax.xlane.f32.xlu0 %v2307
        %v2341 = vpop.xlane.xlu0 %2340
        %2342 = vmax.xlane.f32.xlu0 %v2310
        %v2343 = vpop.xlane.xlu0 %2342
        %2344 = vmax.xlane.f32.xlu0 %v2312
        %v2345 = vpop.xlane.xlu0 %2344
        %v2346 = vsub.f32 %v2275, %v2315
        %v2347 = vsub.f32 %v2277, %v2317
        %v2348 = vsub.f32 %v2280, %v2319
        %v2349 = vsub.f32 %v2282, %v2321
        %v2350 = vsub.f32 %v2285, %v2323
        %v2351 = vsub.f32 %v2287, %v2325
        %v2352 = vsub.f32 %v2290, %v2327
        %v2353 = vsub.f32 %v2292, %v2329
        %v2354 = vsub.f32 %v2295, %v2331
        %v2355 = vsub.f32 %v2297, %v2333
        %v2356 = vsub.f32 %v2300, %v2335
        %v2357 = vsub.f32 %v2302, %v2337
        %v2358 = vsub.f32 %v2305, %v2339
        %v2359 = vsub.f32 %v2307, %v2341
        %v2360 = vsub.f32 %v2310, %v2343
        %v2361 = vsub.f32 %v2312, %v2345
        %v2362 = vmul.f32 %v2346, 1.442695
        %v2363 = vpow.pop %v2362
        %v2364 = vmul.f32 %v2347, 1.442695
        %v2365 = vpow.pop %v2364
        %v2366 = vmul.f32 %v2348, 1.442695
        %v2367 = vpow.pop %v2366
        %v2368 = vmul.f32 %v2349, 1.442695
        %v2369 = vpow.pop %v2368
        %v2370 = vmul.f32 %v2350, 1.442695
        %v2371 = vpow.pop %v2370
        %v2372 = vmul.f32 %v2351, 1.442695
        %v2373 = vpow.pop %v2372
        %v2374 = vmul.f32 %v2352, 1.442695
        %v2375 = vpow.pop %v2374
        %v2376 = vmul.f32 %v2353, 1.442695
        %v2377 = vpow.pop %v2376
        %v2378 = vmul.f32 %v2354, 1.442695
        %v2379 = vpow.pop %v2378
        %v2380 = vmul.f32 %v2355, 1.442695
        %v2381 = vpow.pop %v2380
        %v2382 = vmul.f32 %v2356, 1.442695
        %v2383 = vpow.pop %v2382
        %v2384 = vmul.f32 %v2357, 1.442695
        %v2385 = vpow.pop %v2384
        %v2386 = vmul.f32 %v2358, 1.442695
        %v2387 = vpow.pop %v2386
        %v2388 = vmul.f32 %v2359, 1.442695
        %v2389 = vpow.pop %v2388
        %v2390 = vmul.f32 %v2360, 1.442695
        %v2391 = vpow.pop %v2390
        %v2392 = vmul.f32 %v2361, 1.442695
        %v2393 = vpow.pop %v2392
        %2394 = vadd.xlane.f32.xlu0 %v2363
        %v2395 = vpop.xlane.xlu0 %2394
        %2396 = vadd.xlane.f32.xlu0 %v2365
        %v2397 = vpop.xlane.xlu0 %2396
        %2398 = vadd.xlane.f32.xlu0 %v2367
        %v2399 = vpop.xlane.xlu0 %2398
        %2400 = vadd.xlane.f32.xlu0 %v2369
        %v2401 = vpop.xlane.xlu0 %2400
        %2402 = vadd.xlane.f32.xlu0 %v2371
        %v2403 = vpop.xlane.xlu0 %2402
        %2404 = vadd.xlane.f32.xlu0 %v2373
        %v2405 = vpop.xlane.xlu0 %2404
        %2406 = vadd.xlane.f32.xlu0 %v2375
        %v2407 = vpop.xlane.xlu0 %2406
        %2408 = vadd.xlane.f32.xlu0 %v2377
        %v2409 = vpop.xlane.xlu0 %2408
        %2410 = vadd.xlane.f32.xlu0 %v2379
        %v2411 = vpop.xlane.xlu0 %2410
        %2412 = vadd.xlane.f32.xlu0 %v2381
        %v2413 = vpop.xlane.xlu0 %2412
        %2414 = vadd.xlane.f32.xlu0 %v2383
        %v2415 = vpop.xlane.xlu0 %2414
        %2416 = vadd.xlane.f32.xlu0 %v2385
        %v2417 = vpop.xlane.xlu0 %2416
        %2418 = vadd.xlane.f32.xlu0 %v2387
        %v2419 = vpop.xlane.xlu0 %2418
        %2420 = vadd.xlane.f32.xlu0 %v2389
        %v2421 = vpop.xlane.xlu0 %2420
        %2422 = vadd.xlane.f32.xlu0 %v2391
        %v2423 = vpop.xlane.xlu0 %2422
        %2424 = vadd.xlane.f32.xlu0 %v2393
        %v2425 = vpop.xlane.xlu0 %2424
        %v2426 = vrcp.pop %v2395
        %v2427 = vrcp.pop %v2397
        %v2428 = vrcp.pop %v2399
        %v2429 = vrcp.pop %v2401
        %v2430 = vrcp.pop %v2403
        %v2431 = vrcp.pop %v2405
        %v2432 = vrcp.pop %v2407
        %v2433 = vrcp.pop %v2409
        %v2434 = vrcp.pop %v2411
        %v2435 = vrcp.pop %v2413
        %v2436 = vrcp.pop %v2415
        %v2437 = vrcp.pop %v2417
        %v2438 = vrcp.pop %v2419
        %v2439 = vrcp.pop %v2421
        %v2440 = vrcp.pop %v2423
        %v2441 = vrcp.pop %v2425
        %v2442 = vmul.f32 %v2363, %v2426
        %v2443 = vmul.f32 %v2365, %v2427
        %v2444 = vmul.f32 %v2367, %v2428
        %v2445 = vmul.f32 %v2369, %v2429
        %v2446 = vmul.f32 %v2371, %v2430
        %v2447 = vmul.f32 %v2373, %v2431
        %v2448 = vmul.f32 %v2375, %v2432
        %v2449 = vmul.f32 %v2377, %v2433
        %v2450 = vmul.f32 %v2379, %v2434
        %v2451 = vmul.f32 %v2381, %v2435
        %v2452 = vmul.f32 %v2383, %v2436
        %v2453 = vmul.f32 %v2385, %v2437
        %v2454 = vmul.f32 %v2387, %v2438
        %v2455 = vmul.f32 %v2389, %v2439
        %v2456 = vmul.f32 %v2391, %v2440
        %v2457 = vmul.f32 %v2393, %v2441
        %v2458 = vpack.c.bf16 %v2443, %v2442
        %v2459 = vpack.c.bf16 %v2445, %v2444
        %v2460 = vpack.c.bf16 %v2447, %v2446
        %v2461 = vpack.c.bf16 %v2449, %v2448
        %v2462 = vpack.c.bf16 %v2451, %v2450
        %v2463 = vpack.c.bf16 %v2453, %v2452
        %v2464 = vpack.c.bf16 %v2455, %v2454
        %v2465 = vpack.c.bf16 %v2457, %v2456
        %2466 = vrot.lane.b32.xlu0 %v2104, 112
        %v2467 = vpop.permute.xlu0 %2466
        %2468 = vrot.lane.b32.xlu0 %v2105, 112
        %v2469 = vpop.permute.xlu0 %2468
        %2470 = vrot.lane.b32.xlu0 %v2106, 112
        %v2471 = vpop.permute.xlu0 %2470
        %2472 = vrot.lane.b32.xlu0 %v2107, 112
        %v2473 = vpop.permute.xlu0 %2472
        %2474 = vrot.lane.b32.xlu0 %v2108, 112
        %v2475 = vpop.permute.xlu0 %2474
        %2476 = vrot.lane.b32.xlu0 %v2109, 112
        %v2477 = vpop.permute.xlu0 %2476
        %2478 = vrot.lane.b32.xlu0 %v2110, 112
        %v2479 = vpop.permute.xlu0 %2478
        %2480 = vrot.lane.b32.xlu0 %v2111, 112
        %v2481 = vpop.permute.xlu0 %2480
        %2490 = vmatpush.bf16.msra.mxu0 %v2481
        %2491 = vmatpush.bf16.msra.mxu0 %v2479
        %2492 = vmatpush.bf16.msra.mxu0 %v2477
        %2493 = vmatpush.bf16.msra.mxu0 %v2475
        %2494 = vmatpush.bf16.msra.mxu0 %v2473
        %2495 = vmatpush.bf16.msra.mxu0 %v2471
        %2496 = vmatpush.bf16.msra.mxu0 %v2469
        %2497 = vmatpush.bf16.msra.mxu0 %v2467
        %2498 = vmatmul.bf16.gmra.mxu0 %v2458
        %v2499 = vpop.f32.mrf.mxu0
        %v2500 = vadd.f32 0.0, %v2499
        %v2501 = vpop.f32.mrf.mxu0
        %v2502 = vadd.f32 0.0, %v2501
        %2503 = vmatmul.bf16.gmra.mxu0 %v2459
        %v2504 = vpop.f32.mrf.mxu0
        %v2505 = vadd.f32 0.0, %v2504
        %v2506 = vpop.f32.mrf.mxu0
        %v2507 = vadd.f32 0.0, %v2506
        %2508 = vmatmul.bf16.gmra.mxu0 %v2460
        %v2509 = vpop.f32.mrf.mxu0
        %v2510 = vadd.f32 0.0, %v2509
        %v2511 = vpop.f32.mrf.mxu0
        %v2512 = vadd.f32 0.0, %v2511
        %2513 = vmatmul.bf16.gmra.mxu0 %v2461
        %v2514 = vpop.f32.mrf.mxu0
        %v2515 = vadd.f32 0.0, %v2514
        %v2516 = vpop.f32.mrf.mxu0
        %v2517 = vadd.f32 0.0, %v2516
        %2518 = vmatmul.bf16.gmra.mxu0 %v2462
        %v2519 = vpop.f32.mrf.mxu0
        %v2520 = vadd.f32 0.0, %v2519
        %v2521 = vpop.f32.mrf.mxu0
        %v2522 = vadd.f32 0.0, %v2521
        %2523 = vmatmul.bf16.gmra.mxu0 %v2463
        %v2524 = vpop.f32.mrf.mxu0
        %v2525 = vadd.f32 0.0, %v2524
        %v2526 = vpop.f32.mrf.mxu0
        %v2527 = vadd.f32 0.0, %v2526
        %2528 = vmatmul.bf16.gmra.mxu0 %v2464
        %v2529 = vpop.f32.mrf.mxu0
        %v2530 = vadd.f32 0.0, %v2529
        %v2531 = vpop.f32.mrf.mxu0
        %v2532 = vadd.f32 0.0, %v2531
        %2533 = vmatmul.bf16.gmra.mxu0 %v2465
        %v2534 = vpop.f32.mrf.mxu0
        %v2535 = vadd.f32 0.0, %v2534
        %v2536 = vpop.f32.mrf.mxu0
        %v2537 = vadd.f32 0.0, %v2536
        %2538 = vdwg.mxu0
        %2555 = vrot.lane.b32.xlu0 %v2500, 16
        %v2556 = vpop.permute.xlu0 %2555
        %2557 = vrot.lane.b32.xlu0 %v2502, 16
        %v2558 = vpop.permute.xlu0 %2557
        %2559 = vrot.lane.b32.xlu0 %v2505, 16
        %v2560 = vpop.permute.xlu0 %2559
        %2561 = vrot.lane.b32.xlu0 %v2507, 16
        %v2562 = vpop.permute.xlu0 %2561
        %2563 = vrot.lane.b32.xlu0 %v2510, 16
        %v2564 = vpop.permute.xlu0 %2563
        %2565 = vrot.lane.b32.xlu0 %v2512, 16
        %v2566 = vpop.permute.xlu0 %2565
        %2567 = vrot.lane.b32.xlu0 %v2515, 16
        %v2568 = vpop.permute.xlu0 %2567
        %2569 = vrot.lane.b32.xlu0 %v2517, 16
        %v2570 = vpop.permute.xlu0 %2569
        %2571 = vrot.lane.b32.xlu0 %v2520, 16
        %v2572 = vpop.permute.xlu0 %2571
        %2573 = vrot.lane.b32.xlu0 %v2522, 16
        %v2574 = vpop.permute.xlu0 %2573
        %2575 = vrot.lane.b32.xlu0 %v2525, 16
        %v2576 = vpop.permute.xlu0 %2575
        %2577 = vrot.lane.b32.xlu0 %v2527, 16
        %v2578 = vpop.permute.xlu0 %2577
        %2579 = vrot.lane.b32.xlu0 %v2530, 16
        %v2580 = vpop.permute.xlu0 %2579
        %2581 = vrot.lane.b32.xlu0 %v2532, 16
        %v2582 = vpop.permute.xlu0 %2581
        %2583 = vrot.lane.b32.xlu0 %v2535, 16
        %v2584 = vpop.permute.xlu0 %2583
        %2585 = vrot.lane.b32.xlu0 %v2537, 16
        %v2586 = vpop.permute.xlu0 %2585
        %vm2603 = vcmask 261248
        %2604 = vst.msk [vmem:[#allocation3] sm:$0xff] %vm2603, %v2556
        %2605 = vst.msk [vmem:[#allocation3 + $0x8] sm:$0xff] %vm2603, %v2558
        %2606 = vst.msk [vmem:[#allocation3 + $0x10] sm:$0xff] %vm2603, %v2560
        %2607 = vst.msk [vmem:[#allocation3 + $0x18] sm:$0xff] %vm2603, %v2562
        %2608 = vst.msk [vmem:[#allocation3 + $0x20] sm:$0xff] %vm2603, %v2564
        %2609 = vst.msk [vmem:[#allocation3 + $0x28] sm:$0xff] %vm2603, %v2566
        %2610 = vst.msk [vmem:[#allocation3 + $0x30] sm:$0xff] %vm2603, %v2568
        %2611 = vst.msk [vmem:[#allocation3 + $0x38] sm:$0xff] %vm2603, %v2570
        %2612 = vst.msk [vmem:[#allocation3 + $0x40] sm:$0xff] %vm2603, %v2572
        %2613 = vst.msk [vmem:[#allocation3 + $0x48] sm:$0xff] %vm2603, %v2574
        %2614 = vst.msk [vmem:[#allocation3 + $0x50] sm:$0xff] %vm2603, %v2576
        %2615 = vst.msk [vmem:[#allocation3 + $0x58] sm:$0xff] %vm2603, %v2578
        %2616 = vst.msk [vmem:[#allocation3 + $0x60] sm:$0xff] %vm2603, %v2580
        %2617 = vst.msk [vmem:[#allocation3 + $0x68] sm:$0xff] %vm2603, %v2582
        %2618 = vst.msk [vmem:[#allocation3 + $0x70] sm:$0xff] %vm2603, %v2584
        %2619 = vst.msk [vmem:[#allocation3 + $0x78] sm:$0xff] %vm2603, %v2586
        %2620 = vrot.lane.b32.xlu0 %v1758, 96
        %v2621 = vpop.permute.xlu0 %2620
        %2622 = vrot.lane.b32.xlu0 %v1759, 96
        %v2623 = vpop.permute.xlu0 %2622
        %2624 = vrot.lane.b32.xlu0 %v1760, 96
        %v2625 = vpop.permute.xlu0 %2624
        %2626 = vrot.lane.b32.xlu0 %v1761, 96
        %v2627 = vpop.permute.xlu0 %2626
        %2628 = vrot.lane.b32.xlu0 %v1762, 96
        %v2629 = vpop.permute.xlu0 %2628
        %2630 = vrot.lane.b32.xlu0 %v1763, 96
        %v2631 = vpop.permute.xlu0 %2630
        %2632 = vrot.lane.b32.xlu0 %v1764, 96
        %v2633 = vpop.permute.xlu0 %2632
        %2634 = vrot.lane.b32.xlu0 %v1765, 96
        %v2635 = vpop.permute.xlu0 %2634
        %2636 = vrot.lane.b32.xlu0 %v1798, 32
        %v2637 = vpop.permute.xlu0 %2636
        %2638 = vrot.lane.b32.xlu0 %v1799, 32
        %v2639 = vpop.permute.xlu0 %2638
        %2640 = vrot.lane.b32.xlu0 %v1800, 32
        %v2641 = vpop.permute.xlu0 %2640
        %2642 = vrot.lane.b32.xlu0 %v1801, 32
        %v2643 = vpop.permute.xlu0 %2642
        %2644 = vrot.lane.b32.xlu0 %v1802, 32
        %v2645 = vpop.permute.xlu0 %2644
        %2646 = vrot.lane.b32.xlu0 %v1803, 32
        %v2647 = vpop.permute.xlu0 %2646
        %2648 = vrot.lane.b32.xlu0 %v1804, 32
        %v2649 = vpop.permute.xlu0 %2648
        %2650 = vrot.lane.b32.xlu0 %v1805, 32
        %v2651 = vpop.permute.xlu0 %2650
        %v2653 = vsel %vm1822, %v2621, 0
        %v2656 = vsel %vm1822, %v2623, 0
        %v2659 = vsel %vm1822, %v2625, 0
        %v2662 = vsel %vm1822, %v2627, 0
        %v2665 = vsel %vm1822, %v2629, 0
        %v2668 = vsel %vm1822, %v2631, 0
        %v2671 = vsel %vm1822, %v2633, 0
        %v2674 = vsel %vm1822, %v2635, 0
        %v2677 = vsel %vm1822, %v2637, 0
        %v2680 = vsel %vm1822, %v2639, 0
        %v2683 = vsel %vm1822, %v2641, 0
        %v2686 = vsel %vm1822, %v2643, 0
        %v2689 = vsel %vm1822, %v2645, 0
        %v2692 = vsel %vm1822, %v2647, 0
        %v2695 = vsel %vm1822, %v2649, 0
        %v2698 = vsel %vm1822, %v2651, 0
        %2700 = vmatpush.bf16.xpose.msra.mxu0 %v2698
        %2701 = vmatpush.bf16.xpose.msra.mxu0 %v2695
        %2702 = vmatpush.bf16.xpose.msra.mxu0 %v2692
        %2703 = vmatpush.bf16.xpose.msra.mxu0 %v2689
        %2704 = vmatpush.bf16.xpose.msra.mxu0 %v2686
        %2705 = vmatpush.bf16.xpose.msra.mxu0 %v2683
        %2706 = vmatpush.bf16.xpose.msra.mxu0 %v2680
        %2707 = vmatpush.bf16.xpose.msra.mxu0 %v2677
        %2708 = vmatmul.bf16.gmra.mxu0 %v2653
        %v2709 = vpop.f32.mrf.mxu0
        %v2710 = vadd.f32 %v1725, %v2709
        %v2711 = vpop.f32.mrf.mxu0
        %v2712 = vadd.f32 %v1725, %v2711
        %2713 = vmatmul.bf16.gmra.mxu0 %v2656
        %v2714 = vpop.f32.mrf.mxu0
        %v2715 = vadd.f32 %v1725, %v2714
        %v2716 = vpop.f32.mrf.mxu0
        %v2717 = vadd.f32 %v1725, %v2716
        %2718 = vmatmul.bf16.gmra.mxu0 %v2659
        %v2719 = vpop.f32.mrf.mxu0
        %v2720 = vadd.f32 %v1725, %v2719
        %v2721 = vpop.f32.mrf.mxu0
        %v2722 = vadd.f32 %v1725, %v2721
        %2723 = vmatmul.bf16.gmra.mxu0 %v2662
        %v2724 = vpop.f32.mrf.mxu0
        %v2725 = vadd.f32 %v1725, %v2724
        %v2726 = vpop.f32.mrf.mxu0
        %v2727 = vadd.f32 %v1725, %v2726
        %2728 = vmatmul.bf16.gmra.mxu0 %v2665
        %v2729 = vpop.f32.mrf.mxu0
        %v2730 = vadd.f32 %v1725, %v2729
        %v2731 = vpop.f32.mrf.mxu0
        %v2732 = vadd.f32 %v1725, %v2731
        %2733 = vmatmul.bf16.gmra.mxu0 %v2668
        %v2734 = vpop.f32.mrf.mxu0
        %v2735 = vadd.f32 %v1725, %v2734
        %v2736 = vpop.f32.mrf.mxu0
        %v2737 = vadd.f32 %v1725, %v2736
        %2738 = vmatmul.bf16.gmra.mxu0 %v2671
        %v2739 = vpop.f32.mrf.mxu0
        %v2740 = vadd.f32 %v1725, %v2739
        %v2741 = vpop.f32.mrf.mxu0
        %v2742 = vadd.f32 %v1725, %v2741
        %2743 = vmatmul.bf16.gmra.mxu0 %v2674
        %v2744 = vpop.f32.mrf.mxu0
        %v2745 = vadd.f32 %v1725, %v2744
        %v2746 = vpop.f32.mrf.mxu0
        %v2747 = vadd.f32 %v1725, %v2746
        %2748 = vdwg.mxu0
        %2749 = vmax.xlane.f32.xlu0 %v2710
        %v2750 = vpop.xlane.xlu0 %2749
        %2751 = vmax.xlane.f32.xlu0 %v2712
        %v2752 = vpop.xlane.xlu0 %2751
        %2753 = vmax.xlane.f32.xlu0 %v2715
        %v2754 = vpop.xlane.xlu0 %2753
        %2755 = vmax.xlane.f32.xlu0 %v2717
        %v2756 = vpop.xlane.xlu0 %2755
        %2757 = vmax.xlane.f32.xlu0 %v2720
        %v2758 = vpop.xlane.xlu0 %2757
        %2759 = vmax.xlane.f32.xlu0 %v2722
        %v2760 = vpop.xlane.xlu0 %2759
        %2761 = vmax.xlane.f32.xlu0 %v2725
        %v2762 = vpop.xlane.xlu0 %2761
        %2763 = vmax.xlane.f32.xlu0 %v2727
        %v2764 = vpop.xlane.xlu0 %2763
        %2765 = vmax.xlane.f32.xlu0 %v2730
        %v2766 = vpop.xlane.xlu0 %2765
        %2767 = vmax.xlane.f32.xlu0 %v2732
        %v2768 = vpop.xlane.xlu0 %2767
        %2769 = vmax.xlane.f32.xlu0 %v2735
        %v2770 = vpop.xlane.xlu0 %2769
        %2771 = vmax.xlane.f32.xlu0 %v2737
        %v2772 = vpop.xlane.xlu0 %2771
        %2773 = vmax.xlane.f32.xlu0 %v2740
        %v2774 = vpop.xlane.xlu0 %2773
        %2775 = vmax.xlane.f32.xlu0 %v2742
        %v2776 = vpop.xlane.xlu0 %2775
        %2777 = vmax.xlane.f32.xlu0 %v2745
        %v2778 = vpop.xlane.xlu0 %2777
        %2779 = vmax.xlane.f32.xlu0 %v2747
        %v2780 = vpop.xlane.xlu0 %2779
        %v2781 = vsub.f32 %v2710, %v2750
        %v2782 = vsub.f32 %v2712, %v2752
        %v2783 = vsub.f32 %v2715, %v2754
        %v2784 = vsub.f32 %v2717, %v2756
        %v2785 = vsub.f32 %v2720, %v2758
        %v2786 = vsub.f32 %v2722, %v2760
        %v2787 = vsub.f32 %v2725, %v2762
        %v2788 = vsub.f32 %v2727, %v2764
        %v2789 = vsub.f32 %v2730, %v2766
        %v2790 = vsub.f32 %v2732, %v2768
        %v2791 = vsub.f32 %v2735, %v2770
        %v2792 = vsub.f32 %v2737, %v2772
        %v2793 = vsub.f32 %v2740, %v2774
        %v2794 = vsub.f32 %v2742, %v2776
        %v2795 = vsub.f32 %v2745, %v2778
        %v2796 = vsub.f32 %v2747, %v2780
        %v2797 = vmul.f32 %v2781, 1.442695
        %v2798 = vpow.pop %v2797
        %v2799 = vmul.f32 %v2782, 1.442695
        %v2800 = vpow.pop %v2799
        %v2801 = vmul.f32 %v2783, 1.442695
        %v2802 = vpow.pop %v2801
        %v2803 = vmul.f32 %v2784, 1.442695
        %v2804 = vpow.pop %v2803
        %v2805 = vmul.f32 %v2785, 1.442695
        %v2806 = vpow.pop %v2805
        %v2807 = vmul.f32 %v2786, 1.442695
        %v2808 = vpow.pop %v2807
        %v2809 = vmul.f32 %v2787, 1.442695
        %v2810 = vpow.pop %v2809
        %v2811 = vmul.f32 %v2788, 1.442695
        %v2812 = vpow.pop %v2811
        %v2813 = vmul.f32 %v2789, 1.442695
        %v2814 = vpow.pop %v2813
        %v2815 = vmul.f32 %v2790, 1.442695
        %v2816 = vpow.pop %v2815
        %v2817 = vmul.f32 %v2791, 1.442695
        %v2818 = vpow.pop %v2817
        %v2819 = vmul.f32 %v2792, 1.442695
        %v2820 = vpow.pop %v2819
        %v2821 = vmul.f32 %v2793, 1.442695
        %v2822 = vpow.pop %v2821
        %v2823 = vmul.f32 %v2794, 1.442695
        %v2824 = vpow.pop %v2823
        %v2825 = vmul.f32 %v2795, 1.442695
        %v2826 = vpow.pop %v2825
        %v2827 = vmul.f32 %v2796, 1.442695
        %v2828 = vpow.pop %v2827
        %2829 = vadd.xlane.f32.xlu0 %v2798
        %v2830 = vpop.xlane.xlu0 %2829
        %2831 = vadd.xlane.f32.xlu0 %v2800
        %v2832 = vpop.xlane.xlu0 %2831
        %2833 = vadd.xlane.f32.xlu0 %v2802
        %v2834 = vpop.xlane.xlu0 %2833
        %2835 = vadd.xlane.f32.xlu0 %v2804
        %v2836 = vpop.xlane.xlu0 %2835
        %2837 = vadd.xlane.f32.xlu0 %v2806
        %v2838 = vpop.xlane.xlu0 %2837
        %2839 = vadd.xlane.f32.xlu0 %v2808
        %v2840 = vpop.xlane.xlu0 %2839
        %2841 = vadd.xlane.f32.xlu0 %v2810
        %v2842 = vpop.xlane.xlu0 %2841
        %2843 = vadd.xlane.f32.xlu0 %v2812
        %v2844 = vpop.xlane.xlu0 %2843
        %2845 = vadd.xlane.f32.xlu0 %v2814
        %v2846 = vpop.xlane.xlu0 %2845
        %2847 = vadd.xlane.f32.xlu0 %v2816
        %v2848 = vpop.xlane.xlu0 %2847
        %2849 = vadd.xlane.f32.xlu0 %v2818
        %v2850 = vpop.xlane.xlu0 %2849
        %2851 = vadd.xlane.f32.xlu0 %v2820
        %v2852 = vpop.xlane.xlu0 %2851
        %2853 = vadd.xlane.f32.xlu0 %v2822
        %v2854 = vpop.xlane.xlu0 %2853
        %2855 = vadd.xlane.f32.xlu0 %v2824
        %v2856 = vpop.xlane.xlu0 %2855
        %2857 = vadd.xlane.f32.xlu0 %v2826
        %v2858 = vpop.xlane.xlu0 %2857
        %2859 = vadd.xlane.f32.xlu0 %v2828
        %v2860 = vpop.xlane.xlu0 %2859
        %v2861 = vrcp.pop %v2830
        %v2862 = vrcp.pop %v2832
        %v2863 = vrcp.pop %v2834
        %v2864 = vrcp.pop %v2836
        %v2865 = vrcp.pop %v2838
        %v2866 = vrcp.pop %v2840
        %v2867 = vrcp.pop %v2842
        %v2868 = vrcp.pop %v2844
        %v2869 = vrcp.pop %v2846
        %v2870 = vrcp.pop %v2848
        %v2871 = vrcp.pop %v2850
        %v2872 = vrcp.pop %v2852
        %v2873 = vrcp.pop %v2854
        %v2874 = vrcp.pop %v2856
        %v2875 = vrcp.pop %v2858
        %v2876 = vrcp.pop %v2860
        %v2877 = vmul.f32 %v2798, %v2861
        %v2878 = vmul.f32 %v2800, %v2862
        %v2879 = vmul.f32 %v2802, %v2863
        %v2880 = vmul.f32 %v2804, %v2864
        %v2881 = vmul.f32 %v2806, %v2865
        %v2882 = vmul.f32 %v2808, %v2866
        %v2883 = vmul.f32 %v2810, %v2867
        %v2884 = vmul.f32 %v2812, %v2868
        %v2885 = vmul.f32 %v2814, %v2869
        %v2886 = vmul.f32 %v2816, %v2870
        %v2887 = vmul.f32 %v2818, %v2871
        %v2888 = vmul.f32 %v2820, %v2872
        %v2889 = vmul.f32 %v2822, %v2873
        %v2890 = vmul.f32 %v2824, %v2874
        %v2891 = vmul.f32 %v2826, %v2875
        %v2892 = vmul.f32 %v2828, %v2876
        %v2893 = vpack.c.bf16 %v2878, %v2877
        %v2894 = vpack.c.bf16 %v2880, %v2879
        %v2895 = vpack.c.bf16 %v2882, %v2881
        %v2896 = vpack.c.bf16 %v2884, %v2883
        %v2897 = vpack.c.bf16 %v2886, %v2885
        %v2898 = vpack.c.bf16 %v2888, %v2887
        %v2899 = vpack.c.bf16 %v2890, %v2889
        %v2900 = vpack.c.bf16 %v2892, %v2891
        %2901 = vrot.lane.b32.xlu0 %v2104, 96
        %v2902 = vpop.permute.xlu0 %2901
        %2903 = vrot.lane.b32.xlu0 %v2105, 96
        %v2904 = vpop.permute.xlu0 %2903
        %2905 = vrot.lane.b32.xlu0 %v2106, 96
        %v2906 = vpop.permute.xlu0 %2905
        %2907 = vrot.lane.b32.xlu0 %v2107, 96
        %v2908 = vpop.permute.xlu0 %2907
        %2909 = vrot.lane.b32.xlu0 %v2108, 96
        %v2910 = vpop.permute.xlu0 %2909
        %2911 = vrot.lane.b32.xlu0 %v2109, 96
        %v2912 = vpop.permute.xlu0 %2911
        %2913 = vrot.lane.b32.xlu0 %v2110, 96
        %v2914 = vpop.permute.xlu0 %2913
        %2915 = vrot.lane.b32.xlu0 %v2111, 96
        %v2916 = vpop.permute.xlu0 %2915
        %2925 = vmatpush.bf16.msra.mxu0 %v2916
        %2926 = vmatpush.bf16.msra.mxu0 %v2914
        %2927 = vmatpush.bf16.msra.mxu0 %v2912
        %2928 = vmatpush.bf16.msra.mxu0 %v2910
        %2929 = vmatpush.bf16.msra.mxu0 %v2908
        %2930 = vmatpush.bf16.msra.mxu0 %v2906
        %2931 = vmatpush.bf16.msra.mxu0 %v2904
        %2932 = vmatpush.bf16.msra.mxu0 %v2902
        %2933 = vmatmul.bf16.gmra.mxu0 %v2893
        %v2934 = vpop.f32.mrf.mxu0
        %v2935 = vadd.f32 0.0, %v2934
        %v2936 = vpop.f32.mrf.mxu0
        %v2937 = vadd.f32 0.0, %v2936
        %2938 = vmatmul.bf16.gmra.mxu0 %v2894
        %v2939 = vpop.f32.mrf.mxu0
        %v2940 = vadd.f32 0.0, %v2939
        %v2941 = vpop.f32.mrf.mxu0
        %v2942 = vadd.f32 0.0, %v2941
        %2943 = vmatmul.bf16.gmra.mxu0 %v2895
        %v2944 = vpop.f32.mrf.mxu0
        %v2945 = vadd.f32 0.0, %v2944
        %v2946 = vpop.f32.mrf.mxu0
        %v2947 = vadd.f32 0.0, %v2946
        %2948 = vmatmul.bf16.gmra.mxu0 %v2896
        %v2949 = vpop.f32.mrf.mxu0
        %v2950 = vadd.f32 0.0, %v2949
        %v2951 = vpop.f32.mrf.mxu0
        %v2952 = vadd.f32 0.0, %v2951
        %2953 = vmatmul.bf16.gmra.mxu0 %v2897
        %v2954 = vpop.f32.mrf.mxu0
        %v2955 = vadd.f32 0.0, %v2954
        %v2956 = vpop.f32.mrf.mxu0
        %v2957 = vadd.f32 0.0, %v2956
        %2958 = vmatmul.bf16.gmra.mxu0 %v2898
        %v2959 = vpop.f32.mrf.mxu0
        %v2960 = vadd.f32 0.0, %v2959
        %v2961 = vpop.f32.mrf.mxu0
        %v2962 = vadd.f32 0.0, %v2961
        %2963 = vmatmul.bf16.gmra.mxu0 %v2899
        %v2964 = vpop.f32.mrf.mxu0
        %v2965 = vadd.f32 0.0, %v2964
        %v2966 = vpop.f32.mrf.mxu0
        %v2967 = vadd.f32 0.0, %v2966
        %2968 = vmatmul.bf16.gmra.mxu0 %v2900
        %v2969 = vpop.f32.mrf.mxu0
        %v2970 = vadd.f32 0.0, %v2969
        %v2971 = vpop.f32.mrf.mxu0
        %v2972 = vadd.f32 0.0, %v2971
        %2973 = vdwg.mxu0
        %2990 = vrot.lane.b32.xlu0 %v2935, 32
        %v2991 = vpop.permute.xlu0 %2990
        %2992 = vrot.lane.b32.xlu0 %v2937, 32
        %v2993 = vpop.permute.xlu0 %2992
        %2994 = vrot.lane.b32.xlu0 %v2940, 32
        %v2995 = vpop.permute.xlu0 %2994
        %2996 = vrot.lane.b32.xlu0 %v2942, 32
        %v2997 = vpop.permute.xlu0 %2996
        %2998 = vrot.lane.b32.xlu0 %v2945, 32
        %v2999 = vpop.permute.xlu0 %2998
        %3000 = vrot.lane.b32.xlu0 %v2947, 32
        %v3001 = vpop.permute.xlu0 %3000
        %3002 = vrot.lane.b32.xlu0 %v2950, 32
        %v3003 = vpop.permute.xlu0 %3002
        %3004 = vrot.lane.b32.xlu0 %v2952, 32
        %v3005 = vpop.permute.xlu0 %3004
        %3006 = vrot.lane.b32.xlu0 %v2955, 32
        %v3007 = vpop.permute.xlu0 %3006
        %3008 = vrot.lane.b32.xlu0 %v2957, 32
        %v3009 = vpop.permute.xlu0 %3008
        %3010 = vrot.lane.b32.xlu0 %v2960, 32
        %v3011 = vpop.permute.xlu0 %3010
        %3012 = vrot.lane.b32.xlu0 %v2962, 32
        %v3013 = vpop.permute.xlu0 %3012
        %3014 = vrot.lane.b32.xlu0 %v2965, 32
        %v3015 = vpop.permute.xlu0 %3014
        %3016 = vrot.lane.b32.xlu0 %v2967, 32
        %v3017 = vpop.permute.xlu0 %3016
        %3018 = vrot.lane.b32.xlu0 %v2970, 32
        %v3019 = vpop.permute.xlu0 %3018
        %3020 = vrot.lane.b32.xlu0 %v2972, 32
        %v3021 = vpop.permute.xlu0 %3020
        %vm3038 = vcmask 392448
        %3039 = vst.msk [vmem:[#allocation3] sm:$0xff] %vm3038, %v2991
        %3040 = vst.msk [vmem:[#allocation3 + $0x8] sm:$0xff] %vm3038, %v2993
        %3041 = vst.msk [vmem:[#allocation3 + $0x10] sm:$0xff] %vm3038, %v2995
        %3042 = vst.msk [vmem:[#allocation3 + $0x18] sm:$0xff] %vm3038, %v2997
        %3043 = vst.msk [vmem:[#allocation3 + $0x20] sm:$0xff] %vm3038, %v2999
        %3044 = vst.msk [vmem:[#allocation3 + $0x28] sm:$0xff] %vm3038, %v3001
        %3045 = vst.msk [vmem:[#allocation3 + $0x30] sm:$0xff] %vm3038, %v3003
        %3046 = vst.msk [vmem:[#allocation3 + $0x38] sm:$0xff] %vm3038, %v3005
        %3047 = vst.msk [vmem:[#allocation3 + $0x40] sm:$0xff] %vm3038, %v3007
        %3048 = vst.msk [vmem:[#allocation3 + $0x48] sm:$0xff] %vm3038, %v3009
        %3049 = vst.msk [vmem:[#allocation3 + $0x50] sm:$0xff] %vm3038, %v3011
        %3050 = vst.msk [vmem:[#allocation3 + $0x58] sm:$0xff] %vm3038, %v3013
        %3051 = vst.msk [vmem:[#allocation3 + $0x60] sm:$0xff] %vm3038, %v3015
        %3052 = vst.msk [vmem:[#allocation3 + $0x68] sm:$0xff] %vm3038, %v3017
        %3053 = vst.msk [vmem:[#allocation3 + $0x70] sm:$0xff] %vm3038, %v3019
        %3054 = vst.msk [vmem:[#allocation3 + $0x78] sm:$0xff] %vm3038, %v3021
        %3055 = vrot.lane.b32.xlu0 %v1758, 80
        %v3056 = vpop.permute.xlu0 %3055
        %3057 = vrot.lane.b32.xlu0 %v1759, 80
        %v3058 = vpop.permute.xlu0 %3057
        %3059 = vrot.lane.b32.xlu0 %v1760, 80
        %v3060 = vpop.permute.xlu0 %3059
        %3061 = vrot.lane.b32.xlu0 %v1761, 80
        %v3062 = vpop.permute.xlu0 %3061
        %3063 = vrot.lane.b32.xlu0 %v1762, 80
        %v3064 = vpop.permute.xlu0 %3063
        %3065 = vrot.lane.b32.xlu0 %v1763, 80
        %v3066 = vpop.permute.xlu0 %3065
        %3067 = vrot.lane.b32.xlu0 %v1764, 80
        %v3068 = vpop.permute.xlu0 %3067
        %3069 = vrot.lane.b32.xlu0 %v1765, 80
        %v3070 = vpop.permute.xlu0 %3069
        %3071 = vrot.lane.b32.xlu0 %v1798, 16
        %v3072 = vpop.permute.xlu0 %3071
        %3073 = vrot.lane.b32.xlu0 %v1799, 16
        %v3074 = vpop.permute.xlu0 %3073
        %3075 = vrot.lane.b32.xlu0 %v1800, 16
        %v3076 = vpop.permute.xlu0 %3075
        %3077 = vrot.lane.b32.xlu0 %v1801, 16
        %v3078 = vpop.permute.xlu0 %3077
        %3079 = vrot.lane.b32.xlu0 %v1802, 16
        %v3080 = vpop.permute.xlu0 %3079
        %3081 = vrot.lane.b32.xlu0 %v1803, 16
        %v3082 = vpop.permute.xlu0 %3081
        %3083 = vrot.lane.b32.xlu0 %v1804, 16
        %v3084 = vpop.permute.xlu0 %3083
        %3085 = vrot.lane.b32.xlu0 %v1805, 16
        %v3086 = vpop.permute.xlu0 %3085
        %v3088 = vsel %vm1822, %v3056, 0
        %v3091 = vsel %vm1822, %v3058, 0
        %v3094 = vsel %vm1822, %v3060, 0
        %v3097 = vsel %vm1822, %v3062, 0
        %v3100 = vsel %vm1822, %v3064, 0
        %v3103 = vsel %vm1822, %v3066, 0
        %v3106 = vsel %vm1822, %v3068, 0
        %v3109 = vsel %vm1822, %v3070, 0
        %v3112 = vsel %vm1822, %v3072, 0
        %v3115 = vsel %vm1822, %v3074, 0
        %v3118 = vsel %vm1822, %v3076, 0
        %v3121 = vsel %vm1822, %v3078, 0
        %v3124 = vsel %vm1822, %v3080, 0
        %v3127 = vsel %vm1822, %v3082, 0
        %v3130 = vsel %vm1822, %v3084, 0
        %v3133 = vsel %vm1822, %v3086, 0
        %3135 = vmatpush.bf16.xpose.msra.mxu0 %v3133
        %3136 = vmatpush.bf16.xpose.msra.mxu0 %v3130
        %3137 = vmatpush.bf16.xpose.msra.mxu0 %v3127
        %3138 = vmatpush.bf16.xpose.msra.mxu0 %v3124
        %3139 = vmatpush.bf16.xpose.msra.mxu0 %v3121
        %3140 = vmatpush.bf16.xpose.msra.mxu0 %v3118
        %3141 = vmatpush.bf16.xpose.msra.mxu0 %v3115
        %3142 = vmatpush.bf16.xpose.msra.mxu0 %v3112
        %3143 = vmatmul.bf16.gmra.mxu0 %v3088
        %v3144 = vpop.f32.mrf.mxu0
        %v3145 = vadd.f32 %v1725, %v3144
        %v3146 = vpop.f32.mrf.mxu0
        %v3147 = vadd.f32 %v1725, %v3146
        %3148 = vmatmul.bf16.gmra.mxu0 %v3091
        %v3149 = vpop.f32.mrf.mxu0
        %v3150 = vadd.f32 %v1725, %v3149
        %v3151 = vpop.f32.mrf.mxu0
        %v3152 = vadd.f32 %v1725, %v3151
        %3153 = vmatmul.bf16.gmra.mxu0 %v3094
        %v3154 = vpop.f32.mrf.mxu0
        %v3155 = vadd.f32 %v1725, %v3154
        %v3156 = vpop.f32.mrf.mxu0
        %v3157 = vadd.f32 %v1725, %v3156
        %3158 = vmatmul.bf16.gmra.mxu0 %v3097
        %v3159 = vpop.f32.mrf.mxu0
        %v3160 = vadd.f32 %v1725, %v3159
        %v3161 = vpop.f32.mrf.mxu0
        %v3162 = vadd.f32 %v1725, %v3161
        %3163 = vmatmul.bf16.gmra.mxu0 %v3100
        %v3164 = vpop.f32.mrf.mxu0
        %v3165 = vadd.f32 %v1725, %v3164
        %v3166 = vpop.f32.mrf.mxu0
        %v3167 = vadd.f32 %v1725, %v3166
        %3168 = vmatmul.bf16.gmra.mxu0 %v3103
        %v3169 = vpop.f32.mrf.mxu0
        %v3170 = vadd.f32 %v1725, %v3169
        %v3171 = vpop.f32.mrf.mxu0
        %v3172 = vadd.f32 %v1725, %v3171
        %3173 = vmatmul.bf16.gmra.mxu0 %v3106
        %v3174 = vpop.f32.mrf.mxu0
        %v3175 = vadd.f32 %v1725, %v3174
        %v3176 = vpop.f32.mrf.mxu0
        %v3177 = vadd.f32 %v1725, %v3176
        %3178 = vmatmul.bf16.gmra.mxu0 %v3109
        %v3179 = vpop.f32.mrf.mxu0
        %v3180 = vadd.f32 %v1725, %v3179
        %v3181 = vpop.f32.mrf.mxu0
        %v3182 = vadd.f32 %v1725, %v3181
        %3183 = vdwg.mxu0
        %3184 = vmax.xlane.f32.xlu0 %v3145
        %v3185 = vpop.xlane.xlu0 %3184
        %3186 = vmax.xlane.f32.xlu0 %v3147
        %v3187 = vpop.xlane.xlu0 %3186
        %3188 = vmax.xlane.f32.xlu0 %v3150
        %v3189 = vpop.xlane.xlu0 %3188
        %3190 = vmax.xlane.f32.xlu0 %v3152
        %v3191 = vpop.xlane.xlu0 %3190
        %3192 = vmax.xlane.f32.xlu0 %v3155
        %v3193 = vpop.xlane.xlu0 %3192
        %3194 = vmax.xlane.f32.xlu0 %v3157
        %v3195 = vpop.xlane.xlu0 %3194
        %3196 = vmax.xlane.f32.xlu0 %v3160
        %v3197 = vpop.xlane.xlu0 %3196
        %3198 = vmax.xlane.f32.xlu0 %v3162
        %v3199 = vpop.xlane.xlu0 %3198
        %3200 = vmax.xlane.f32.xlu0 %v3165
        %v3201 = vpop.xlane.xlu0 %3200
        %3202 = vmax.xlane.f32.xlu0 %v3167
        %v3203 = vpop.xlane.xlu0 %3202
        %3204 = vmax.xlane.f32.xlu0 %v3170
        %v3205 = vpop.xlane.xlu0 %3204
        %3206 = vmax.xlane.f32.xlu0 %v3172
        %v3207 = vpop.xlane.xlu0 %3206
        %3208 = vmax.xlane.f32.xlu0 %v3175
        %v3209 = vpop.xlane.xlu0 %3208
        %3210 = vmax.xlane.f32.xlu0 %v3177
        %v3211 = vpop.xlane.xlu0 %3210
        %3212 = vmax.xlane.f32.xlu0 %v3180
        %v3213 = vpop.xlane.xlu0 %3212
        %3214 = vmax.xlane.f32.xlu0 %v3182
        %v3215 = vpop.xlane.xlu0 %3214
        %v3216 = vsub.f32 %v3145, %v3185
        %v3217 = vsub.f32 %v3147, %v3187
        %v3218 = vsub.f32 %v3150, %v3189
        %v3219 = vsub.f32 %v3152, %v3191
        %v3220 = vsub.f32 %v3155, %v3193
        %v3221 = vsub.f32 %v3157, %v3195
        %v3222 = vsub.f32 %v3160, %v3197
        %v3223 = vsub.f32 %v3162, %v3199
        %v3224 = vsub.f32 %v3165, %v3201
        %v3225 = vsub.f32 %v3167, %v3203
        %v3226 = vsub.f32 %v3170, %v3205
        %v3227 = vsub.f32 %v3172, %v3207
        %v3228 = vsub.f32 %v3175, %v3209
        %v3229 = vsub.f32 %v3177, %v3211
        %v3230 = vsub.f32 %v3180, %v3213
        %v3231 = vsub.f32 %v3182, %v3215
        %v3232 = vmul.f32 %v3216, 1.442695
        %v3233 = vpow.pop %v3232
        %v3234 = vmul.f32 %v3217, 1.442695
        %v3235 = vpow.pop %v3234
        %v3236 = vmul.f32 %v3218, 1.442695
        %v3237 = vpow.pop %v3236
        %v3238 = vmul.f32 %v3219, 1.442695
        %v3239 = vpow.pop %v3238
        %v3240 = vmul.f32 %v3220, 1.442695
        %v3241 = vpow.pop %v3240
        %v3242 = vmul.f32 %v3221, 1.442695
        %v3243 = vpow.pop %v3242
        %v3244 = vmul.f32 %v3222, 1.442695
        %v3245 = vpow.pop %v3244
        %v3246 = vmul.f32 %v3223, 1.442695
        %v3247 = vpow.pop %v3246
        %v3248 = vmul.f32 %v3224, 1.442695
        %v3249 = vpow.pop %v3248
        %v3250 = vmul.f32 %v3225, 1.442695
        %v3251 = vpow.pop %v3250
        %v3252 = vmul.f32 %v3226, 1.442695
        %v3253 = vpow.pop %v3252
        %v3254 = vmul.f32 %v3227, 1.442695
        %v3255 = vpow.pop %v3254
        %v3256 = vmul.f32 %v3228, 1.442695
        %v3257 = vpow.pop %v3256
        %v3258 = vmul.f32 %v3229, 1.442695
        %v3259 = vpow.pop %v3258
        %v3260 = vmul.f32 %v3230, 1.442695
        %v3261 = vpow.pop %v3260
        %v3262 = vmul.f32 %v3231, 1.442695
        %v3263 = vpow.pop %v3262
        %3264 = vadd.xlane.f32.xlu0 %v3233
        %v3265 = vpop.xlane.xlu0 %3264
        %3266 = vadd.xlane.f32.xlu0 %v3235
        %v3267 = vpop.xlane.xlu0 %3266
        %3268 = vadd.xlane.f32.xlu0 %v3237
        %v3269 = vpop.xlane.xlu0 %3268
        %3270 = vadd.xlane.f32.xlu0 %v3239
        %v3271 = vpop.xlane.xlu0 %3270
        %3272 = vadd.xlane.f32.xlu0 %v3241
        %v3273 = vpop.xlane.xlu0 %3272
        %3274 = vadd.xlane.f32.xlu0 %v3243
        %v3275 = vpop.xlane.xlu0 %3274
        %3276 = vadd.xlane.f32.xlu0 %v3245
        %v3277 = vpop.xlane.xlu0 %3276
        %3278 = vadd.xlane.f32.xlu0 %v3247
        %v3279 = vpop.xlane.xlu0 %3278
        %3280 = vadd.xlane.f32.xlu0 %v3249
        %v3281 = vpop.xlane.xlu0 %3280
        %3282 = vadd.xlane.f32.xlu0 %v3251
        %v3283 = vpop.xlane.xlu0 %3282
        %3284 = vadd.xlane.f32.xlu0 %v3253
        %v3285 = vpop.xlane.xlu0 %3284
        %3286 = vadd.xlane.f32.xlu0 %v3255
        %v3287 = vpop.xlane.xlu0 %3286
        %3288 = vadd.xlane.f32.xlu0 %v3257
        %v3289 = vpop.xlane.xlu0 %3288
        %3290 = vadd.xlane.f32.xlu0 %v3259
        %v3291 = vpop.xlane.xlu0 %3290
        %3292 = vadd.xlane.f32.xlu0 %v3261
        %v3293 = vpop.xlane.xlu0 %3292
        %3294 = vadd.xlane.f32.xlu0 %v3263
        %v3295 = vpop.xlane.xlu0 %3294
        %v3296 = vrcp.pop %v3265
        %v3297 = vrcp.pop %v3267
        %v3298 = vrcp.pop %v3269
        %v3299 = vrcp.pop %v3271
        %v3300 = vrcp.pop %v3273
        %v3301 = vrcp.pop %v3275
        %v3302 = vrcp.pop %v3277
        %v3303 = vrcp.pop %v3279
        %v3304 = vrcp.pop %v3281
        %v3305 = vrcp.pop %v3283
        %v3306 = vrcp.pop %v3285
        %v3307 = vrcp.pop %v3287
        %v3308 = vrcp.pop %v3289
        %v3309 = vrcp.pop %v3291
        %v3310 = vrcp.pop %v3293
        %v3311 = vrcp.pop %v3295
        %v3312 = vmul.f32 %v3233, %v3296
        %v3313 = vmul.f32 %v3235, %v3297
        %v3314 = vmul.f32 %v3237, %v3298
        %v3315 = vmul.f32 %v3239, %v3299
        %v3316 = vmul.f32 %v3241, %v3300
        %v3317 = vmul.f32 %v3243, %v3301
        %v3318 = vmul.f32 %v3245, %v3302
        %v3319 = vmul.f32 %v3247, %v3303
        %v3320 = vmul.f32 %v3249, %v3304
        %v3321 = vmul.f32 %v3251, %v3305
        %v3322 = vmul.f32 %v3253, %v3306
        %v3323 = vmul.f32 %v3255, %v3307
        %v3324 = vmul.f32 %v3257, %v3308
        %v3325 = vmul.f32 %v3259, %v3309
        %v3326 = vmul.f32 %v3261, %v3310
        %v3327 = vmul.f32 %v3263, %v3311
        %v3328 = vpack.c.bf16 %v3313, %v3312
        %v3329 = vpack.c.bf16 %v3315, %v3314
        %v3330 = vpack.c.bf16 %v3317, %v3316
        %v3331 = vpack.c.bf16 %v3319, %v3318
        %v3332 = vpack.c.bf16 %v3321, %v3320
        %v3333 = vpack.c.bf16 %v3323, %v3322
        %v3334 = vpack.c.bf16 %v3325, %v3324
        %v3335 = vpack.c.bf16 %v3327, %v3326
        %3336 = vrot.lane.b32.xlu0 %v2104, 80
        %v3337 = vpop.permute.xlu0 %3336
        %3338 = vrot.lane.b32.xlu0 %v2105, 80
        %v3339 = vpop.permute.xlu0 %3338
        %3340 = vrot.lane.b32.xlu0 %v2106, 80
        %v3341 = vpop.permute.xlu0 %3340
        %3342 = vrot.lane.b32.xlu0 %v2107, 80
        %v3343 = vpop.permute.xlu0 %3342
        %3344 = vrot.lane.b32.xlu0 %v2108, 80
        %v3345 = vpop.permute.xlu0 %3344
        %3346 = vrot.lane.b32.xlu0 %v2109, 80
        %v3347 = vpop.permute.xlu0 %3346
        %3348 = vrot.lane.b32.xlu0 %v2110, 80
        %v3349 = vpop.permute.xlu0 %3348
        %3350 = vrot.lane.b32.xlu0 %v2111, 80
        %v3351 = vpop.permute.xlu0 %3350
        %3360 = vmatpush.bf16.msra.mxu0 %v3351
        %3361 = vmatpush.bf16.msra.mxu0 %v3349
        %3362 = vmatpush.bf16.msra.mxu0 %v3347
        %3363 = vmatpush.bf16.msra.mxu0 %v3345
        %3364 = vmatpush.bf16.msra.mxu0 %v3343
        %3365 = vmatpush.bf16.msra.mxu0 %v3341
        %3366 = vmatpush.bf16.msra.mxu0 %v3339
        %3367 = vmatpush.bf16.msra.mxu0 %v3337
        %3368 = vmatmul.bf16.gmra.mxu0 %v3328
        %v3369 = vpop.f32.mrf.mxu0
        %v3370 = vadd.f32 0.0, %v3369
        %v3371 = vpop.f32.mrf.mxu0
        %v3372 = vadd.f32 0.0, %v3371
        %3373 = vmatmul.bf16.gmra.mxu0 %v3329
        %v3374 = vpop.f32.mrf.mxu0
        %v3375 = vadd.f32 0.0, %v3374
        %v3376 = vpop.f32.mrf.mxu0
        %v3377 = vadd.f32 0.0, %v3376
        %3378 = vmatmul.bf16.gmra.mxu0 %v3330
        %v3379 = vpop.f32.mrf.mxu0
        %v3380 = vadd.f32 0.0, %v3379
        %v3381 = vpop.f32.mrf.mxu0
        %v3382 = vadd.f32 0.0, %v3381
        %3383 = vmatmul.bf16.gmra.mxu0 %v3331
        %v3384 = vpop.f32.mrf.mxu0
        %v3385 = vadd.f32 0.0, %v3384
        %v3386 = vpop.f32.mrf.mxu0
        %v3387 = vadd.f32 0.0, %v3386
        %3388 = vmatmul.bf16.gmra.mxu0 %v3332
        %v3389 = vpop.f32.mrf.mxu0
        %v3390 = vadd.f32 0.0, %v3389
        %v3391 = vpop.f32.mrf.mxu0
        %v3392 = vadd.f32 0.0, %v3391
        %3393 = vmatmul.bf16.gmra.mxu0 %v3333
        %v3394 = vpop.f32.mrf.mxu0
        %v3395 = vadd.f32 0.0, %v3394
        %v3396 = vpop.f32.mrf.mxu0
        %v3397 = vadd.f32 0.0, %v3396
        %3398 = vmatmul.bf16.gmra.mxu0 %v3334
        %v3399 = vpop.f32.mrf.mxu0
        %v3400 = vadd.f32 0.0, %v3399
        %v3401 = vpop.f32.mrf.mxu0
        %v3402 = vadd.f32 0.0, %v3401
        %3403 = vmatmul.bf16.gmra.mxu0 %v3335
        %v3404 = vpop.f32.mrf.mxu0
        %v3405 = vadd.f32 0.0, %v3404
        %v3406 = vpop.f32.mrf.mxu0
        %v3407 = vadd.f32 0.0, %v3406
        %3408 = vdwg.mxu0
        %3425 = vrot.lane.b32.xlu0 %v3370, 48
        %v3426 = vpop.permute.xlu0 %3425
        %3427 = vrot.lane.b32.xlu0 %v3372, 48
        %v3428 = vpop.permute.xlu0 %3427
        %3429 = vrot.lane.b32.xlu0 %v3375, 48
        %v3430 = vpop.permute.xlu0 %3429
        %3431 = vrot.lane.b32.xlu0 %v3377, 48
        %v3432 = vpop.permute.xlu0 %3431
        %3433 = vrot.lane.b32.xlu0 %v3380, 48
        %v3434 = vpop.permute.xlu0 %3433
        %3435 = vrot.lane.b32.xlu0 %v3382, 48
        %v3436 = vpop.permute.xlu0 %3435
        %3437 = vrot.lane.b32.xlu0 %v3385, 48
        %v3438 = vpop.permute.xlu0 %3437
        %3439 = vrot.lane.b32.xlu0 %v3387, 48
        %v3440 = vpop.permute.xlu0 %3439
        %3441 = vrot.lane.b32.xlu0 %v3390, 48
        %v3442 = vpop.permute.xlu0 %3441
        %3443 = vrot.lane.b32.xlu0 %v3392, 48
        %v3444 = vpop.permute.xlu0 %3443
        %3445 = vrot.lane.b32.xlu0 %v3395, 48
        %v3446 = vpop.permute.xlu0 %3445
        %3447 = vrot.lane.b32.xlu0 %v3397, 48
        %v3448 = vpop.permute.xlu0 %3447
        %3449 = vrot.lane.b32.xlu0 %v3400, 48
        %v3450 = vpop.permute.xlu0 %3449
        %3451 = vrot.lane.b32.xlu0 %v3402, 48
        %v3452 = vpop.permute.xlu0 %3451
        %3453 = vrot.lane.b32.xlu0 %v3405, 48
        %v3454 = vpop.permute.xlu0 %3453
        %3455 = vrot.lane.b32.xlu0 %v3407, 48
        %v3456 = vpop.permute.xlu0 %3455
        %vm3473 = vcmask 523648
        %3474 = vst.msk [vmem:[#allocation3] sm:$0xff] %vm3473, %v3426
        %3475 = vst.msk [vmem:[#allocation3 + $0x8] sm:$0xff] %vm3473, %v3428
        %3476 = vst.msk [vmem:[#allocation3 + $0x10] sm:$0xff] %vm3473, %v3430
        %3477 = vst.msk [vmem:[#allocation3 + $0x18] sm:$0xff] %vm3473, %v3432
        %3478 = vst.msk [vmem:[#allocation3 + $0x20] sm:$0xff] %vm3473, %v3434
        %3479 = vst.msk [vmem:[#allocation3 + $0x28] sm:$0xff] %vm3473, %v3436
        %3480 = vst.msk [vmem:[#allocation3 + $0x30] sm:$0xff] %vm3473, %v3438
        %3481 = vst.msk [vmem:[#allocation3 + $0x38] sm:$0xff] %vm3473, %v3440
        %3482 = vst.msk [vmem:[#allocation3 + $0x40] sm:$0xff] %vm3473, %v3442
        %3483 = vst.msk [vmem:[#allocation3 + $0x48] sm:$0xff] %vm3473, %v3444
        %3484 = vst.msk [vmem:[#allocation3 + $0x50] sm:$0xff] %vm3473, %v3446
        %3485 = vst.msk [vmem:[#allocation3 + $0x58] sm:$0xff] %vm3473, %v3448
        %3486 = vst.msk [vmem:[#allocation3 + $0x60] sm:$0xff] %vm3473, %v3450
        %3487 = vst.msk [vmem:[#allocation3 + $0x68] sm:$0xff] %vm3473, %v3452
        %3488 = vst.msk [vmem:[#allocation3 + $0x70] sm:$0xff] %vm3473, %v3454
        %3489 = vst.msk [vmem:[#allocation3 + $0x78] sm:$0xff] %vm3473, %v3456
        %v3490 = vld [vmem:[#allocation3] sm:$0xff]
        %v3491 = vld [vmem:[#allocation3 + $0x8] sm:$0xff]
        %v3492 = vld [vmem:[#allocation3 + $0x10] sm:$0xff]
        %v3493 = vld [vmem:[#allocation3 + $0x18] sm:$0xff]
        %v3494 = vld [vmem:[#allocation3 + $0x20] sm:$0xff]
        %v3495 = vld [vmem:[#allocation3 + $0x28] sm:$0xff]
        %v3496 = vld [vmem:[#allocation3 + $0x30] sm:$0xff]
        %v3497 = vld [vmem:[#allocation3 + $0x38] sm:$0xff]
        %v3498 = vld [vmem:[#allocation3 + $0x40] sm:$0xff]
        %v3499 = vld [vmem:[#allocation3 + $0x48] sm:$0xff]
        %v3500 = vld [vmem:[#allocation3 + $0x50] sm:$0xff]
        %v3501 = vld [vmem:[#allocation3 + $0x58] sm:$0xff]
        %v3502 = vld [vmem:[#allocation3 + $0x60] sm:$0xff]
        %v3503 = vld [vmem:[#allocation3 + $0x68] sm:$0xff]
        %v3504 = vld [vmem:[#allocation3 + $0x70] sm:$0xff]
        %v3505 = vld [vmem:[#allocation3 + $0x78] sm:$0xff]
        %v3506 = vpack.c.bf16 %v3491, %v3490
        %v3507 = vpack.c.bf16 %v3493, %v3492
        %v3508 = vpack.c.bf16 %v3495, %v3494
        %v3509 = vpack.c.bf16 %v3497, %v3496
        %v3510 = vpack.c.bf16 %v3499, %v3498
        %v3511 = vpack.c.bf16 %v3501, %v3500
        %v3512 = vpack.c.bf16 %v3503, %v3502
        %v3513 = vpack.c.bf16 %v3505, %v3504
        %v3514 = vld [vmem:[%s837] sm:$0xf]
        %v3515 = vld [vmem:[%s837 + $0x4] sm:$0xf]
        %v3516 = vld [vmem:[%s837 + $0x8] sm:$0xf]
        %v3517 = vld [vmem:[%s837 + $0xc] sm:$0xf]
        %v3518 = vld [vmem:[%s837 + $0x10] sm:$0xf]
        %v3519 = vld [vmem:[%s837 + $0x14] sm:$0xf]
        %v3520 = vld [vmem:[%s837 + $0x18] sm:$0xf]
        %v3521 = vld [vmem:[%s837 + $0x1c] sm:$0xf]
        %v3522 = vld [vmem:[%s840] sm:$0x1]
        %v3524 = vperm.slane %v3522, 0
        %v3534 = vunpack.c.l.b16 %v3514
        %v3535 = vunpack.c.l.b16 %v3515
        %v3536 = vunpack.c.l.b16 %v3516
        %v3537 = vunpack.c.l.b16 %v3517
        %v3538 = vunpack.c.l.b16 %v3518
        %v3539 = vunpack.c.l.b16 %v3519
        %v3540 = vunpack.c.l.b16 %v3520
        %v3541 = vunpack.c.l.b16 %v3521
        %v3542 = vpack.c.b16 %v3535, %v3534
        %v3543 = vpack.c.b16 %v3537, %v3536
        %v3544 = vpack.c.b16 %v3539, %v3538
        %v3545 = vpack.c.b16 %v3541, %v3540
        %v3551 = vsel %vm1072, %v3506, 0
        %v3554 = vsel %vm1072, %v3507, 0
        %v3557 = vsel %vm1072, %v3508, 0
        %v3560 = vsel %vm1072, %v3509, 0
        %v3563 = vsel %vm1072, %v3510, 0
        %v3566 = vsel %vm1072, %v3511, 0
        %v3569 = vsel %vm1072, %v3512, 0
        %v3572 = vsel %vm1072, %v3513, 0
        %3574 = vmatpush.bf16.msra.mxu0 0
        %3575 = vmatpush.bf16.msra.mxu0 0
        %3576 = vmatpush.bf16.msra.mxu0 0
        %3577 = vmatpush.bf16.msra.mxu0 0
        %3578 = vmatpush.bf16.msra.mxu0 %v3545
        %3579 = vmatpush.bf16.msra.mxu0 %v3544
        %3580 = vmatpush.bf16.msra.mxu0 %v3543
        %3581 = vmatpush.bf16.msra.mxu0 %v3542
        %3582 = vmatmul.bf16.gmra.mxu0 %v3551
        %v3583 = vpop.f32.mrf.mxu0
        %v3584 = vadd.f32 %v3524, %v3583
        %v3585 = vpop.f32.mrf.mxu0
        %v3586 = vadd.f32 %v3524, %v3585
        %3587 = vmatmul.bf16.gmra.mxu0 %v3554
        %v3588 = vpop.f32.mrf.mxu0
        %v3589 = vadd.f32 %v3524, %v3588
        %v3590 = vpop.f32.mrf.mxu0
        %v3591 = vadd.f32 %v3524, %v3590
        %3592 = vmatmul.bf16.gmra.mxu0 %v3557
        %v3593 = vpop.f32.mrf.mxu0
        %v3594 = vadd.f32 %v3524, %v3593
        %v3595 = vpop.f32.mrf.mxu0
        %v3596 = vadd.f32 %v3524, %v3595
        %3597 = vmatmul.bf16.gmra.mxu0 %v3560
        %v3598 = vpop.f32.mrf.mxu0
        %v3599 = vadd.f32 %v3524, %v3598
        %v3600 = vpop.f32.mrf.mxu0
        %v3601 = vadd.f32 %v3524, %v3600
        %3602 = vmatmul.bf16.gmra.mxu0 %v3563
        %v3603 = vpop.f32.mrf.mxu0
        %v3604 = vadd.f32 %v3524, %v3603
        %v3605 = vpop.f32.mrf.mxu0
        %v3606 = vadd.f32 %v3524, %v3605
        %3607 = vmatmul.bf16.gmra.mxu0 %v3566
        %v3608 = vpop.f32.mrf.mxu0
        %v3609 = vadd.f32 %v3524, %v3608
        %v3610 = vpop.f32.mrf.mxu0
        %v3611 = vadd.f32 %v3524, %v3610
        %3612 = vmatmul.bf16.gmra.mxu0 %v3569
        %v3613 = vpop.f32.mrf.mxu0
        %v3614 = vadd.f32 %v3524, %v3613
        %v3615 = vpop.f32.mrf.mxu0
        %v3616 = vadd.f32 %v3524, %v3615
        %3617 = vmatmul.bf16.gmra.mxu0 %v3572
        %v3618 = vpop.f32.mrf.mxu0
        %v3619 = vadd.f32 %v3524, %v3618
        %v3620 = vpop.f32.mrf.mxu0
        %v3621 = vadd.f32 %v3524, %v3620
        %3622 = vdwg.mxu0
        %v3623 = vadd.f32 %v1054, %v3584
        %v3624 = vadd.f32 %v1055, %v3586
        %v3625 = vadd.f32 %v1056, %v3589
        %v3626 = vadd.f32 %v1057, %v3591
        %v3627 = vadd.f32 %v1058, %v3594
        %v3628 = vadd.f32 %v1059, %v3596
        %v3629 = vadd.f32 %v1060, %v3599
        %v3630 = vadd.f32 %v1061, %v3601
        %v3631 = vadd.f32 %v1062, %v3604
        %v3632 = vadd.f32 %v1063, %v3606
        %v3633 = vadd.f32 %v1064, %v3609
        %v3634 = vadd.f32 %v1065, %v3611
        %v3635 = vadd.f32 %v1066, %v3614
        %v3636 = vadd.f32 %v1067, %v3616
        %v3637 = vadd.f32 %v1068, %v3619
        %v3638 = vadd.f32 %v1069, %v3621
        %v3639 = vld [vmem:[%s843] sm:$0x1]
        %v3640 = vld [vmem:[%s846] sm:$0x1]
        %v3641 = vsel %vm1072, %v3623, 0.0
        %3642 = vadd.xlane.f32.xlu0 %v3641
        %v3643 = vpop.xlane.xlu0 %3642
        %v3644 = vsel %vm1072, %v3624, 0.0
        %3645 = vadd.xlane.f32.xlu0 %v3644
        %v3646 = vpop.xlane.xlu0 %3645
        %v3647 = vsel %vm1072, %v3625, 0.0
        %3648 = vadd.xlane.f32.xlu0 %v3647
        %v3649 = vpop.xlane.xlu0 %3648
        %v3650 = vsel %vm1072, %v3626, 0.0
        %3651 = vadd.xlane.f32.xlu0 %v3650
        %v3652 = vpop.xlane.xlu0 %3651
        %v3653 = vsel %vm1072, %v3627, 0.0
        %3654 = vadd.xlane.f32.xlu0 %v3653
        %v3655 = vpop.xlane.xlu0 %3654
        %v3656 = vsel %vm1072, %v3628, 0.0
        %3657 = vadd.xlane.f32.xlu0 %v3656
        %v3658 = vpop.xlane.xlu0 %3657
        %v3659 = vsel %vm1072, %v3629, 0.0
        %3660 = vadd.xlane.f32.xlu0 %v3659
        %v3661 = vpop.xlane.xlu0 %3660
        %v3662 = vsel %vm1072, %v3630, 0.0
        %3663 = vadd.xlane.f32.xlu0 %v3662
        %v3664 = vpop.xlane.xlu0 %3663
        %v3665 = vsel %vm1072, %v3631, 0.0
        %3666 = vadd.xlane.f32.xlu0 %v3665
        %v3667 = vpop.xlane.xlu0 %3666
        %v3668 = vsel %vm1072, %v3632, 0.0
        %3669 = vadd.xlane.f32.xlu0 %v3668
        %v3670 = vpop.xlane.xlu0 %3669
        %v3671 = vsel %vm1072, %v3633, 0.0
        %3672 = vadd.xlane.f32.xlu0 %v3671
        %v3673 = vpop.xlane.xlu0 %3672
        %v3674 = vsel %vm1072, %v3634, 0.0
        %3675 = vadd.xlane.f32.xlu0 %v3674
        %v3676 = vpop.xlane.xlu0 %3675
        %v3677 = vsel %vm1072, %v3635, 0.0
        %3678 = vadd.xlane.f32.xlu0 %v3677
        %v3679 = vpop.xlane.xlu0 %3678
        %v3680 = vsel %vm1072, %v3636, 0.0
        %3681 = vadd.xlane.f32.xlu0 %v3680
        %v3682 = vpop.xlane.xlu0 %3681
        %v3683 = vsel %vm1072, %v3637, 0.0
        %3684 = vadd.xlane.f32.xlu0 %v3683
        %v3685 = vpop.xlane.xlu0 %3684
        %v3686 = vsel %vm1072, %v3638, 0.0
        %3687 = vadd.xlane.f32.xlu0 %v3686
        %v3688 = vpop.xlane.xlu0 %3687
        %v3689 = vmul.f32 %v3643, %v1127
        %v3690 = vmul.f32 %v3646, %v1127
        %v3691 = vmul.f32 %v3649, %v1127
        %v3692 = vmul.f32 %v3652, %v1127
        %v3693 = vmul.f32 %v3655, %v1127
        %v3694 = vmul.f32 %v3658, %v1127
        %v3695 = vmul.f32 %v3661, %v1127
        %v3696 = vmul.f32 %v3664, %v1127
        %v3697 = vmul.f32 %v3667, %v1127
        %v3698 = vmul.f32 %v3670, %v1127
        %v3699 = vmul.f32 %v3673, %v1127
        %v3700 = vmul.f32 %v3676, %v1127
        %v3701 = vmul.f32 %v3679, %v1127
        %v3702 = vmul.f32 %v3682, %v1127
        %v3703 = vmul.f32 %v3685, %v1127
        %v3704 = vmul.f32 %v3688, %v1127
        %v3705 = vsub.f32 %v3623, %v3689
        %v3706 = vsub.f32 %v3624, %v3690
        %v3707 = vsub.f32 %v3625, %v3691
        %v3708 = vsub.f32 %v3626, %v3692
        %v3709 = vsub.f32 %v3627, %v3693
        %v3710 = vsub.f32 %v3628, %v3694
        %v3711 = vsub.f32 %v3629, %v3695
        %v3712 = vsub.f32 %v3630, %v3696
        %v3713 = vsub.f32 %v3631, %v3697
        %v3714 = vsub.f32 %v3632, %v3698
        %v3715 = vsub.f32 %v3633, %v3699
        %v3716 = vsub.f32 %v3634, %v3700
        %v3717 = vsub.f32 %v3635, %v3701
        %v3718 = vsub.f32 %v3636, %v3702
        %v3719 = vsub.f32 %v3637, %v3703
        %v3720 = vsub.f32 %v3638, %v3704
        %v3721 = vmul.f32 %v3705, %v3705
        %v3722 = vmul.f32 %v3706, %v3706
        %v3723 = vmul.f32 %v3707, %v3707
        %v3724 = vmul.f32 %v3708, %v3708
        %v3725 = vmul.f32 %v3709, %v3709
        %v3726 = vmul.f32 %v3710, %v3710
        %v3727 = vmul.f32 %v3711, %v3711
        %v3728 = vmul.f32 %v3712, %v3712
        %v3729 = vmul.f32 %v3713, %v3713
        %v3730 = vmul.f32 %v3714, %v3714
        %v3731 = vmul.f32 %v3715, %v3715
        %v3732 = vmul.f32 %v3716, %v3716
        %v3733 = vmul.f32 %v3717, %v3717
        %v3734 = vmul.f32 %v3718, %v3718
        %v3735 = vmul.f32 %v3719, %v3719
        %v3736 = vmul.f32 %v3720, %v3720
        %v3737 = vsel %vm1072, %v3721, 0.0
        %3738 = vadd.xlane.f32.xlu0 %v3737
        %v3739 = vpop.xlane.xlu0 %3738
        %v3740 = vsel %vm1072, %v3722, 0.0
        %3741 = vadd.xlane.f32.xlu0 %v3740
        %v3742 = vpop.xlane.xlu0 %3741
        %v3743 = vsel %vm1072, %v3723, 0.0
        %3744 = vadd.xlane.f32.xlu0 %v3743
        %v3745 = vpop.xlane.xlu0 %3744
        %v3746 = vsel %vm1072, %v3724, 0.0
        %3747 = vadd.xlane.f32.xlu0 %v3746
        %v3748 = vpop.xlane.xlu0 %3747
        %v3749 = vsel %vm1072, %v3725, 0.0
        %3750 = vadd.xlane.f32.xlu0 %v3749
        %v3751 = vpop.xlane.xlu0 %3750
        %v3752 = vsel %vm1072, %v3726, 0.0
        %3753 = vadd.xlane.f32.xlu0 %v3752
        %v3754 = vpop.xlane.xlu0 %3753
        %v3755 = vsel %vm1072, %v3727, 0.0
        %3756 = vadd.xlane.f32.xlu0 %v3755
        %v3757 = vpop.xlane.xlu0 %3756
        %v3758 = vsel %vm1072, %v3728, 0.0
        %3759 = vadd.xlane.f32.xlu0 %v3758
        %v3760 = vpop.xlane.xlu0 %3759
        %v3761 = vsel %vm1072, %v3729, 0.0
        %3762 = vadd.xlane.f32.xlu0 %v3761
        %v3763 = vpop.xlane.xlu0 %3762
        %v3764 = vsel %vm1072, %v3730, 0.0
        %3765 = vadd.xlane.f32.xlu0 %v3764
        %v3766 = vpop.xlane.xlu0 %3765
        %v3767 = vsel %vm1072, %v3731, 0.0
        %3768 = vadd.xlane.f32.xlu0 %v3767
        %v3769 = vpop.xlane.xlu0 %3768
        %v3770 = vsel %vm1072, %v3732, 0.0
        %3771 = vadd.xlane.f32.xlu0 %v3770
        %v3772 = vpop.xlane.xlu0 %3771
        %v3773 = vsel %vm1072, %v3733, 0.0
        %3774 = vadd.xlane.f32.xlu0 %v3773
        %v3775 = vpop.xlane.xlu0 %3774
        %v3776 = vsel %vm1072, %v3734, 0.0
        %3777 = vadd.xlane.f32.xlu0 %v3776
        %v3778 = vpop.xlane.xlu0 %3777
        %v3779 = vsel %vm1072, %v3735, 0.0
        %3780 = vadd.xlane.f32.xlu0 %v3779
        %v3781 = vpop.xlane.xlu0 %3780
        %v3782 = vsel %vm1072, %v3736, 0.0
        %3783 = vadd.xlane.f32.xlu0 %v3782
        %v3784 = vpop.xlane.xlu0 %3783
        %v3785 = vmul.f32 %v3739, %v1127
        %v3786 = vmul.f32 %v3742, %v1127
        %v3787 = vmul.f32 %v3745, %v1127
        %v3788 = vmul.f32 %v3748, %v1127
        %v3789 = vmul.f32 %v3751, %v1127
        %v3790 = vmul.f32 %v3754, %v1127
        %v3791 = vmul.f32 %v3757, %v1127
        %v3792 = vmul.f32 %v3760, %v1127
        %v3793 = vmul.f32 %v3763, %v1127
        %v3794 = vmul.f32 %v3766, %v1127
        %v3795 = vmul.f32 %v3769, %v1127
        %v3796 = vmul.f32 %v3772, %v1127
        %v3797 = vmul.f32 %v3775, %v1127
        %v3798 = vmul.f32 %v3778, %v1127
        %v3799 = vmul.f32 %v3781, %v1127
        %v3800 = vmul.f32 %v3784, %v1127
        %v3801 = vadd.f32 %v3785, 1e-06
        %v3802 = vadd.f32 %v3786, 1e-06
        %v3803 = vadd.f32 %v3787, 1e-06
        %v3804 = vadd.f32 %v3788, 1e-06
        %v3805 = vadd.f32 %v3789, 1e-06
        %v3806 = vadd.f32 %v3790, 1e-06
        %v3807 = vadd.f32 %v3791, 1e-06
        %v3808 = vadd.f32 %v3792, 1e-06
        %v3809 = vadd.f32 %v3793, 1e-06
        %v3810 = vadd.f32 %v3794, 1e-06
        %v3811 = vadd.f32 %v3795, 1e-06
        %v3812 = vadd.f32 %v3796, 1e-06
        %v3813 = vadd.f32 %v3797, 1e-06
        %v3814 = vadd.f32 %v3798, 1e-06
        %v3815 = vadd.f32 %v3799, 1e-06
        %v3816 = vadd.f32 %v3800, 1e-06
        %v3817 = vrsqrt.pop %v3801
        %v3818 = vmul.f32 %v3817, %v3801
        %v3819 = vmul.f32 %v3818, %v3817
        %v3820 = vmul.f32 0.5, %v3819
        %v3821 = vsub.f32 1.5, %v3820
        %v3822 = vmul.f32 %v3817, %v3821
        %vm3823 = vweird.f32 %v3801
        %vm3824 = vweird.f32 %v3817
        %vm3825 = vmor %vm3823, %vm3824
        %v3826 = vsel %vm3825, %v3817, %v3822
        %v3827 = vrsqrt.pop %v3802
        %v3828 = vmul.f32 %v3827, %v3802
        %v3829 = vmul.f32 %v3828, %v3827
        %v3830 = vmul.f32 0.5, %v3829
        %v3831 = vsub.f32 1.5, %v3830
        %v3832 = vmul.f32 %v3827, %v3831
        %vm3833 = vweird.f32 %v3802
        %vm3834 = vweird.f32 %v3827
        %vm3835 = vmor %vm3833, %vm3834
        %v3836 = vsel %vm3835, %v3827, %v3832
        %v3837 = vrsqrt.pop %v3803
        %v3838 = vmul.f32 %v3837, %v3803
        %v3839 = vmul.f32 %v3838, %v3837
        %v3840 = vmul.f32 0.5, %v3839
        %v3841 = vsub.f32 1.5, %v3840
        %v3842 = vmul.f32 %v3837, %v3841
        %vm3843 = vweird.f32 %v3803
        %vm3844 = vweird.f32 %v3837
        %vm3845 = vmor %vm3843, %vm3844
        %v3846 = vsel %vm3845, %v3837, %v3842
        %v3847 = vrsqrt.pop %v3804
        %v3848 = vmul.f32 %v3847, %v3804
        %v3849 = vmul.f32 %v3848, %v3847
        %v3850 = vmul.f32 0.5, %v3849
        %v3851 = vsub.f32 1.5, %v3850
        %v3852 = vmul.f32 %v3847, %v3851
        %vm3853 = vweird.f32 %v3804
        %vm3854 = vweird.f32 %v3847
        %vm3855 = vmor %vm3853, %vm3854
        %v3856 = vsel %vm3855, %v3847, %v3852
        %v3857 = vrsqrt.pop %v3805
        %v3858 = vmul.f32 %v3857, %v3805
        %v3859 = vmul.f32 %v3858, %v3857
        %v3860 = vmul.f32 0.5, %v3859
        %v3861 = vsub.f32 1.5, %v3860
        %v3862 = vmul.f32 %v3857, %v3861
        %vm3863 = vweird.f32 %v3805
        %vm3864 = vweird.f32 %v3857
        %vm3865 = vmor %vm3863, %vm3864
        %v3866 = vsel %vm3865, %v3857, %v3862
        %v3867 = vrsqrt.pop %v3806
        %v3868 = vmul.f32 %v3867, %v3806
        %v3869 = vmul.f32 %v3868, %v3867
        %v3870 = vmul.f32 0.5, %v3869
        %v3871 = vsub.f32 1.5, %v3870
        %v3872 = vmul.f32 %v3867, %v3871
        %vm3873 = vweird.f32 %v3806
        %vm3874 = vweird.f32 %v3867
        %vm3875 = vmor %vm3873, %vm3874
        %v3876 = vsel %vm3875, %v3867, %v3872
        %v3877 = vrsqrt.pop %v3807
        %v3878 = vmul.f32 %v3877, %v3807
        %v3879 = vmul.f32 %v3878, %v3877
        %v3880 = vmul.f32 0.5, %v3879
        %v3881 = vsub.f32 1.5, %v3880
        %v3882 = vmul.f32 %v3877, %v3881
        %vm3883 = vweird.f32 %v3807
        %vm3884 = vweird.f32 %v3877
        %vm3885 = vmor %vm3883, %vm3884
        %v3886 = vsel %vm3885, %v3877, %v3882
        %v3887 = vrsqrt.pop %v3808
        %v3888 = vmul.f32 %v3887, %v3808
        %v3889 = vmul.f32 %v3888, %v3887
        %v3890 = vmul.f32 0.5, %v3889
        %v3891 = vsub.f32 1.5, %v3890
        %v3892 = vmul.f32 %v3887, %v3891
        %vm3893 = vweird.f32 %v3808
        %vm3894 = vweird.f32 %v3887
        %vm3895 = vmor %vm3893, %vm3894
        %v3896 = vsel %vm3895, %v3887, %v3892
        %v3897 = vrsqrt.pop %v3809
        %v3898 = vmul.f32 %v3897, %v3809
        %v3899 = vmul.f32 %v3898, %v3897
        %v3900 = vmul.f32 0.5, %v3899
        %v3901 = vsub.f32 1.5, %v3900
        %v3902 = vmul.f32 %v3897, %v3901
        %vm3903 = vweird.f32 %v3809
        %vm3904 = vweird.f32 %v3897
        %vm3905 = vmor %vm3903, %vm3904
        %v3906 = vsel %vm3905, %v3897, %v3902
        %v3907 = vrsqrt.pop %v3810
        %v3908 = vmul.f32 %v3907, %v3810
        %v3909 = vmul.f32 %v3908, %v3907
        %v3910 = vmul.f32 0.5, %v3909
        %v3911 = vsub.f32 1.5, %v3910
        %v3912 = vmul.f32 %v3907, %v3911
        %vm3913 = vweird.f32 %v3810
        %vm3914 = vweird.f32 %v3907
        %vm3915 = vmor %vm3913, %vm3914
        %v3916 = vsel %vm3915, %v3907, %v3912
        %v3917 = vrsqrt.pop %v3811
        %v3918 = vmul.f32 %v3917, %v3811
        %v3919 = vmul.f32 %v3918, %v3917
        %v3920 = vmul.f32 0.5, %v3919
        %v3921 = vsub.f32 1.5, %v3920
        %v3922 = vmul.f32 %v3917, %v3921
        %vm3923 = vweird.f32 %v3811
        %vm3924 = vweird.f32 %v3917
        %vm3925 = vmor %vm3923, %vm3924
        %v3926 = vsel %vm3925, %v3917, %v3922
        %v3927 = vrsqrt.pop %v3812
        %v3928 = vmul.f32 %v3927, %v3812
        %v3929 = vmul.f32 %v3928, %v3927
        %v3930 = vmul.f32 0.5, %v3929
        %v3931 = vsub.f32 1.5, %v3930
        %v3932 = vmul.f32 %v3927, %v3931
        %vm3933 = vweird.f32 %v3812
        %vm3934 = vweird.f32 %v3927
        %vm3935 = vmor %vm3933, %vm3934
        %v3936 = vsel %vm3935, %v3927, %v3932
        %v3937 = vrsqrt.pop %v3813
        %v3938 = vmul.f32 %v3937, %v3813
        %v3939 = vmul.f32 %v3938, %v3937
        %v3940 = vmul.f32 0.5, %v3939
        %v3941 = vsub.f32 1.5, %v3940
        %v3942 = vmul.f32 %v3937, %v3941
        %vm3943 = vweird.f32 %v3813
        %vm3944 = vweird.f32 %v3937
        %vm3945 = vmor %vm3943, %vm3944
        %v3946 = vsel %vm3945, %v3937, %v3942
        %v3947 = vrsqrt.pop %v3814
        %v3948 = vmul.f32 %v3947, %v3814
        %v3949 = vmul.f32 %v3948, %v3947
        %v3950 = vmul.f32 0.5, %v3949
        %v3951 = vsub.f32 1.5, %v3950
        %v3952 = vmul.f32 %v3947, %v3951
        %vm3953 = vweird.f32 %v3814
        %vm3954 = vweird.f32 %v3947
        %vm3955 = vmor %vm3953, %vm3954
        %v3956 = vsel %vm3955, %v3947, %v3952
        %v3957 = vrsqrt.pop %v3815
        %v3958 = vmul.f32 %v3957, %v3815
        %v3959 = vmul.f32 %v3958, %v3957
        %v3960 = vmul.f32 0.5, %v3959
        %v3961 = vsub.f32 1.5, %v3960
        %v3962 = vmul.f32 %v3957, %v3961
        %vm3963 = vweird.f32 %v3815
        %vm3964 = vweird.f32 %v3957
        %vm3965 = vmor %vm3963, %vm3964
        %v3966 = vsel %vm3965, %v3957, %v3962
        %v3967 = vrsqrt.pop %v3816
        %v3968 = vmul.f32 %v3967, %v3816
        %v3969 = vmul.f32 %v3968, %v3967
        %v3970 = vmul.f32 0.5, %v3969
        %v3971 = vsub.f32 1.5, %v3970
        %v3972 = vmul.f32 %v3967, %v3971
        %vm3973 = vweird.f32 %v3816
        %vm3974 = vweird.f32 %v3967
        %vm3975 = vmor %vm3973, %vm3974
        %v3976 = vsel %vm3975, %v3967, %v3972
        %v3977 = vmul.f32 %v3705, %v3826
        %v3978 = vmul.f32 %v3706, %v3836
        %v3979 = vmul.f32 %v3707, %v3846
        %v3980 = vmul.f32 %v3708, %v3856
        %v3981 = vmul.f32 %v3709, %v3866
        %v3982 = vmul.f32 %v3710, %v3876
        %v3983 = vmul.f32 %v3711, %v3886
        %v3984 = vmul.f32 %v3712, %v3896
        %v3985 = vmul.f32 %v3713, %v3906
        %v3986 = vmul.f32 %v3714, %v3916
        %v3987 = vmul.f32 %v3715, %v3926
        %v3988 = vmul.f32 %v3716, %v3936
        %v3989 = vmul.f32 %v3717, %v3946
        %v3990 = vmul.f32 %v3718, %v3956
        %v3991 = vmul.f32 %v3719, %v3966
        %v3992 = vmul.f32 %v3720, %v3976
        %v3994 = vperm.slane %v3639, 0
        %v3996 = vmul.f32 %v3977, %v3994
        %v3997 = vmul.f32 %v3978, %v3994
        %v3998 = vmul.f32 %v3979, %v3994
        %v3999 = vmul.f32 %v3980, %v3994
        %v4000 = vmul.f32 %v3981, %v3994
        %v4001 = vmul.f32 %v3982, %v3994
        %v4002 = vmul.f32 %v3983, %v3994
        %v4003 = vmul.f32 %v3984, %v3994
        %v4004 = vmul.f32 %v3985, %v3994
        %v4005 = vmul.f32 %v3986, %v3994
        %v4006 = vmul.f32 %v3987, %v3994
        %v4007 = vmul.f32 %v3988, %v3994
        %v4008 = vmul.f32 %v3989, %v3994
        %v4009 = vmul.f32 %v3990, %v3994
        %v4010 = vmul.f32 %v3991, %v3994
        %v4011 = vmul.f32 %v3992, %v3994
        %v4013 = vperm.slane %v3640, 0
        %v4015 = vadd.f32 %v3996, %v4013
        %v4016 = vadd.f32 %v3997, %v4013
        %v4017 = vadd.f32 %v3998, %v4013
        %v4018 = vadd.f32 %v3999, %v4013
        %v4019 = vadd.f32 %v4000, %v4013
        %v4020 = vadd.f32 %v4001, %v4013
        %v4021 = vadd.f32 %v4002, %v4013
        %v4022 = vadd.f32 %v4003, %v4013
        %v4023 = vadd.f32 %v4004, %v4013
        %v4024 = vadd.f32 %v4005, %v4013
        %v4025 = vadd.f32 %v4006, %v4013
        %v4026 = vadd.f32 %v4007, %v4013
        %v4027 = vadd.f32 %v4008, %v4013
        %v4028 = vadd.f32 %v4009, %v4013
        %v4029 = vadd.f32 %v4010, %v4013
        %v4030 = vadd.f32 %v4011, %v4013
        %v4031 = vpack.c.bf16 %v4016, %v4015
        %v4032 = vpack.c.bf16 %v4018, %v4017
        %v4033 = vpack.c.bf16 %v4020, %v4019
        %v4034 = vpack.c.bf16 %v4022, %v4021
        %v4035 = vpack.c.bf16 %v4024, %v4023
        %v4036 = vpack.c.bf16 %v4026, %v4025
        %v4037 = vpack.c.bf16 %v4028, %v4027
        %v4038 = vpack.c.bf16 %v4030, %v4029
        %v4039 = vld [vmem:[%s851] sm:$0xff]
        %v4040 = vld [vmem:[%s851 + $0x8] sm:$0xff]
        %v4041 = vld [vmem:[%s851 + $0x10] sm:$0xff]
        %v4042 = vld [vmem:[%s851 + $0x18] sm:$0xff]
        %v4043 = vld [vmem:[%s851 + $0x20] sm:$0xff]
        %v4044 = vld [vmem:[%s851 + $0x28] sm:$0xff]
        %v4045 = vld [vmem:[%s851 + $0x30] sm:$0xff]
        %v4046 = vld [vmem:[%s851 + $0x38] sm:$0xff]
        %v4047 = vld [vmem:[%s855] sm:$0x3]
        %v4049 = vperm.slane %v4047, 0
        %v4050 = vperm.slane %v4047, 1
        %v4061 = vunpack.c.l.b16 %v4039
        %v4062 = vunpack.c.h.b16 %v4039
        %v4063 = vunpack.c.l.b16 %v4040
        %v4064 = vunpack.c.h.b16 %v4040
        %v4065 = vunpack.c.l.b16 %v4041
        %v4066 = vunpack.c.h.b16 %v4041
        %v4067 = vunpack.c.l.b16 %v4042
        %v4068 = vunpack.c.h.b16 %v4042
        %v4069 = vunpack.c.l.b16 %v4043
        %v4070 = vunpack.c.h.b16 %v4043
        %v4071 = vunpack.c.l.b16 %v4044
        %v4072 = vunpack.c.h.b16 %v4044
        %v4073 = vunpack.c.l.b16 %v4045
        %v4074 = vunpack.c.h.b16 %v4045
        %v4075 = vunpack.c.l.b16 %v4046
        %v4076 = vunpack.c.h.b16 %v4046
        %v4077 = vpack.c.b16 %v4063, %v4061
        %v4078 = vpack.c.b16 %v4064, %v4062
        %v4079 = vpack.c.b16 %v4067, %v4065
        %v4080 = vpack.c.b16 %v4068, %v4066
        %v4081 = vpack.c.b16 %v4071, %v4069
        %v4082 = vpack.c.b16 %v4072, %v4070
        %v4083 = vpack.c.b16 %v4075, %v4073
        %v4084 = vpack.c.b16 %v4076, %v4074
        %v4094 = vsel %vm1072, %v4031, 0
        %v4097 = vsel %vm1072, %v4032, 0
        %v4100 = vsel %vm1072, %v4033, 0
        %v4103 = vsel %vm1072, %v4034, 0
        %v4106 = vsel %vm1072, %v4035, 0
        %v4109 = vsel %vm1072, %v4036, 0
        %v4112 = vsel %vm1072, %v4037, 0
        %v4115 = vsel %vm1072, %v4038, 0
        %4117 = vmatpush.bf16.msra.mxu0 0
        %4118 = vmatpush.bf16.msra.mxu0 0
        %4119 = vmatpush.bf16.msra.mxu0 0
        %4120 = vmatpush.bf16.msra.mxu0 0
        %4121 = vmatpush.bf16.msra.mxu0 %v4083
        %4122 = vmatpush.bf16.msra.mxu0 %v4081
        %4123 = vmatpush.bf16.msra.mxu0 %v4079
        %4124 = vmatpush.bf16.msra.mxu0 %v4077
        %4125 = vmatmul.bf16.gmra.mxu0 %v4094
        %v4126 = vpop.f32.mrf.mxu0
        %v4127 = vadd.f32 %v4049, %v4126
        %v4128 = vpop.f32.mrf.mxu0
        %v4129 = vadd.f32 %v4049, %v4128
        %4130 = vmatmul.bf16.gmra.mxu0 %v4097
        %v4131 = vpop.f32.mrf.mxu0
        %v4132 = vadd.f32 %v4049, %v4131
        %v4133 = vpop.f32.mrf.mxu0
        %v4134 = vadd.f32 %v4049, %v4133
        %4135 = vmatmul.bf16.gmra.mxu0 %v4100
        %v4136 = vpop.f32.mrf.mxu0
        %v4137 = vadd.f32 %v4049, %v4136
        %v4138 = vpop.f32.mrf.mxu0
        %v4139 = vadd.f32 %v4049, %v4138
        %4140 = vmatmul.bf16.gmra.mxu0 %v4103
        %v4141 = vpop.f32.mrf.mxu0
        %v4142 = vadd.f32 %v4049, %v4141
        %v4143 = vpop.f32.mrf.mxu0
        %v4144 = vadd.f32 %v4049, %v4143
        %4145 = vmatmul.bf16.gmra.mxu0 %v4106
        %v4146 = vpop.f32.mrf.mxu0
        %v4147 = vadd.f32 %v4049, %v4146
        %v4148 = vpop.f32.mrf.mxu0
        %v4149 = vadd.f32 %v4049, %v4148
        %4150 = vmatmul.bf16.gmra.mxu0 %v4109
        %v4151 = vpop.f32.mrf.mxu0
        %v4152 = vadd.f32 %v4049, %v4151
        %v4153 = vpop.f32.mrf.mxu0
        %v4154 = vadd.f32 %v4049, %v4153
        %4155 = vmatmul.bf16.gmra.mxu0 %v4112
        %v4156 = vpop.f32.mrf.mxu0
        %v4157 = vadd.f32 %v4049, %v4156
        %v4158 = vpop.f32.mrf.mxu0
        %v4159 = vadd.f32 %v4049, %v4158
        %4160 = vmatmul.bf16.gmra.mxu0 %v4115
        %v4161 = vpop.f32.mrf.mxu0
        %v4162 = vadd.f32 %v4049, %v4161
        %v4163 = vpop.f32.mrf.mxu0
        %v4164 = vadd.f32 %v4049, %v4163
        %4165 = vdwg.mxu0
        %4166 = vmatpush.bf16.msra.mxu0 0
        %4167 = vmatpush.bf16.msra.mxu0 0
        %4168 = vmatpush.bf16.msra.mxu0 0
        %4169 = vmatpush.bf16.msra.mxu0 0
        %4170 = vmatpush.bf16.msra.mxu0 %v4084
        %4171 = vmatpush.bf16.msra.mxu0 %v4082
        %4172 = vmatpush.bf16.msra.mxu0 %v4080
        %4173 = vmatpush.bf16.msra.mxu0 %v4078
        %4174 = vmatmul.bf16.gmra.mxu0 %v4094
        %v4175 = vpop.f32.mrf.mxu0
        %v4176 = vadd.f32 %v4050, %v4175
        %v4177 = vpop.f32.mrf.mxu0
        %v4178 = vadd.f32 %v4050, %v4177
        %4179 = vmatmul.bf16.gmra.mxu0 %v4097
        %v4180 = vpop.f32.mrf.mxu0
        %v4181 = vadd.f32 %v4050, %v4180
        %v4182 = vpop.f32.mrf.mxu0
        %v4183 = vadd.f32 %v4050, %v4182
        %4184 = vmatmul.bf16.gmra.mxu0 %v4100
        %v4185 = vpop.f32.mrf.mxu0
        %v4186 = vadd.f32 %v4050, %v4185
        %v4187 = vpop.f32.mrf.mxu0
        %v4188 = vadd.f32 %v4050, %v4187
        %4189 = vmatmul.bf16.gmra.mxu0 %v4103
        %v4190 = vpop.f32.mrf.mxu0
        %v4191 = vadd.f32 %v4050, %v4190
        %v4192 = vpop.f32.mrf.mxu0
        %v4193 = vadd.f32 %v4050, %v4192
        %4194 = vmatmul.bf16.gmra.mxu0 %v4106
        %v4195 = vpop.f32.mrf.mxu0
        %v4196 = vadd.f32 %v4050, %v4195
        %v4197 = vpop.f32.mrf.mxu0
        %v4198 = vadd.f32 %v4050, %v4197
        %4199 = vmatmul.bf16.gmra.mxu0 %v4109
        %v4200 = vpop.f32.mrf.mxu0
        %v4201 = vadd.f32 %v4050, %v4200
        %v4202 = vpop.f32.mrf.mxu0
        %v4203 = vadd.f32 %v4050, %v4202
        %4204 = vmatmul.bf16.gmra.mxu0 %v4112
        %v4205 = vpop.f32.mrf.mxu0
        %v4206 = vadd.f32 %v4050, %v4205
        %v4207 = vpop.f32.mrf.mxu0
        %v4208 = vadd.f32 %v4050, %v4207
        %4209 = vmatmul.bf16.gmra.mxu0 %v4115
        %v4210 = vpop.f32.mrf.mxu0
        %v4211 = vadd.f32 %v4050, %v4210
        %v4212 = vpop.f32.mrf.mxu0
        %v4213 = vadd.f32 %v4050, %v4212
        %4214 = vdwg.mxu0
        %v4215 = vmul.f32 %v4127, 0.5
        %v4216 = vmul.f32 %v4176, 0.5
        %v4217 = vmul.f32 %v4129, 0.5
        %v4218 = vmul.f32 %v4178, 0.5
        %v4219 = vmul.f32 %v4132, 0.5
        %v4220 = vmul.f32 %v4181, 0.5
        %v4221 = vmul.f32 %v4134, 0.5
        %v4222 = vmul.f32 %v4183, 0.5
        %v4223 = vmul.f32 %v4137, 0.5
        %v4224 = vmul.f32 %v4186, 0.5
        %v4225 = vmul.f32 %v4139, 0.5
        %v4226 = vmul.f32 %v4188, 0.5
        %v4227 = vmul.f32 %v4142, 0.5
        %v4228 = vmul.f32 %v4191, 0.5
        %v4229 = vmul.f32 %v4144, 0.5
        %v4230 = vmul.f32 %v4193, 0.5
        %v4231 = vmul.f32 %v4147, 0.5
        %v4232 = vmul.f32 %v4196, 0.5
        %v4233 = vmul.f32 %v4149, 0.5
        %v4234 = vmul.f32 %v4198, 0.5
        %v4235 = vmul.f32 %v4152, 0.5
        %v4236 = vmul.f32 %v4201, 0.5
        %v4237 = vmul.f32 %v4154, 0.5
        %v4238 = vmul.f32 %v4203, 0.5
        %v4239 = vmul.f32 %v4157, 0.5
        %v4240 = vmul.f32 %v4206, 0.5
        %v4241 = vmul.f32 %v4159, 0.5
        %v4242 = vmul.f32 %v4208, 0.5
        %v4243 = vmul.f32 %v4162, 0.5
        %v4244 = vmul.f32 %v4211, 0.5
        %v4245 = vmul.f32 %v4164, 0.5
        %v4246 = vmul.f32 %v4213, 0.5
        %v4247 = vmul.f32 %v4127, 0.70710677
        %v4248 = vmul.f32 %v4176, 0.70710677
        %v4249 = vmul.f32 %v4129, 0.70710677
        %v4250 = vmul.f32 %v4178, 0.70710677
        %v4251 = vmul.f32 %v4132, 0.70710677
        %v4252 = vmul.f32 %v4181, 0.70710677
        %v4253 = vmul.f32 %v4134, 0.70710677
        %v4254 = vmul.f32 %v4183, 0.70710677
        %v4255 = vmul.f32 %v4137, 0.70710677
        %v4256 = vmul.f32 %v4186, 0.70710677
        %v4257 = vmul.f32 %v4139, 0.70710677
        %v4258 = vmul.f32 %v4188, 0.70710677
        %v4259 = vmul.f32 %v4142, 0.70710677
        %v4260 = vmul.f32 %v4191, 0.70710677
        %v4261 = vmul.f32 %v4144, 0.70710677
        %v4262 = vmul.f32 %v4193, 0.70710677
        %v4263 = vmul.f32 %v4147, 0.70710677
        %v4264 = vmul.f32 %v4196, 0.70710677
        %v4265 = vmul.f32 %v4149, 0.70710677
        %v4266 = vmul.f32 %v4198, 0.70710677
        %v4267 = vmul.f32 %v4152, 0.70710677
        %v4268 = vmul.f32 %v4201, 0.70710677
        %v4269 = vmul.f32 %v4154, 0.70710677
        %v4270 = vmul.f32 %v4203, 0.70710677
        %v4271 = vmul.f32 %v4157, 0.70710677
        %v4272 = vmul.f32 %v4206, 0.70710677
        %v4273 = vmul.f32 %v4159, 0.70710677
        %v4274 = vmul.f32 %v4208, 0.70710677
        %v4275 = vmul.f32 %v4162, 0.70710677
        %v4276 = vmul.f32 %v4211, 0.70710677
        %v4277 = vmul.f32 %v4164, 0.70710677
        %v4278 = vmul.f32 %v4213, 0.70710677
        %v4279 = vmul.f32 %v4247, %v4247
        %v4280 = vmin.f32 16.0, %v4279
        %v4281 = vmul.f32 %v4280, 2.1237322e-06
        %v4282 = vadd.f32 %v4281, 0.00028619796
        %v4283 = vmul.f32 %v4280, %v4282
        %v4284 = vadd.f32 %v4283, 0.0036580483
        %v4285 = vmul.f32 %v4280, %v4284
        %v4286 = vadd.f32 %v4285, 0.05243302
        %v4287 = vmul.f32 %v4280, %v4286
        %v4288 = vadd.f32 %v4287, 0.18741608
        %v4289 = vmul.f32 %v4280, %v4288
        %v4290 = vadd.f32 %v4289, 1.1283791
        %v4291 = vmul.f32 %v4247, %v4290
        %v4292 = vmul.f32 %v4280, 3.8918573e-05
        %v4293 = vadd.f32 %v4292, 0.001143296
        %v4294 = vmul.f32 %v4280, %v4293
        %v4295 = vadd.f32 %v4294, 0.014752088
        %v4296 = vmul.f32 %v4280, %v4295
        %v4297 = vadd.f32 %v4296, 0.112945676
        %v4298 = vmul.f32 %v4280, %v4297
        %v4299 = vadd.f32 %v4298, 0.4994258
        %v4300 = vmul.f32 %v4280, %v4299
        %v4301 = vadd.f32 %v4300, 1.0
        %v4302 = vrcp.pop %v4301
        %v4303 = vmul.f32 %v4301, %v4302
        %v4304 = vsub.f32 1.0, %v4303
        %v4305 = vmul.f32 %v4302, %v4304
        %v4306 = vadd.f32 %v4302, %v4305
        %vm4307 = vweird.f32 %v4301
        %vm4308 = vweird.f32 %v4302
        %vm4309 = vmor %vm4307, %vm4308
        %v4310 = vsel %vm4309, %v4302, %v4306
        %v4311 = vand.u32 2147483647, %v4301
        %vm4312 = vcmp.eq.f32.partialorder %v4311, 8.507059e+37
        %v4313 = vand.u32 %v4301, 2147483648
        %v4314 = vor.u32 1.1754944e-38, %v4313
        %v4315 = vsel %vm4312, %v4314, %v4310
        %v4316 = vmul.f32 %v4291, %v4315
        %v4317 = vmin.f32 %v4316, 1.0
        %v4318 = vmax.f32 %v4317, -1.0
        %v4319 = vmul.f32 %v4248, %v4248
        %v4320 = vmin.f32 16.0, %v4319
        %v4321 = vmul.f32 %v4320, 2.1237322e-06
        %v4322 = vadd.f32 %v4321, 0.00028619796
        %v4323 = vmul.f32 %v4320, %v4322
        %v4324 = vadd.f32 %v4323, 0.0036580483
        %v4325 = vmul.f32 %v4320, %v4324
        %v4326 = vadd.f32 %v4325, 0.05243302
        %v4327 = vmul.f32 %v4320, %v4326
        %v4328 = vadd.f32 %v4327, 0.18741608
        %v4329 = vmul.f32 %v4320, %v4328
        %v4330 = vadd.f32 %v4329, 1.1283791
        %v4331 = vmul.f32 %v4248, %v4330
        %v4332 = vmul.f32 %v4320, 3.8918573e-05
        %v4333 = vadd.f32 %v4332, 0.001143296
        %v4334 = vmul.f32 %v4320, %v4333
        %v4335 = vadd.f32 %v4334, 0.014752088
        %v4336 = vmul.f32 %v4320, %v4335
        %v4337 = vadd.f32 %v4336, 0.112945676
        %v4338 = vmul.f32 %v4320, %v4337
        %v4339 = vadd.f32 %v4338, 0.4994258
        %v4340 = vmul.f32 %v4320, %v4339
        %v4341 = vadd.f32 %v4340, 1.0
        %v4342 = vrcp.pop %v4341
        %v4343 = vmul.f32 %v4341, %v4342
        %v4344 = vsub.f32 1.0, %v4343
        %v4345 = vmul.f32 %v4342, %v4344
        %v4346 = vadd.f32 %v4342, %v4345
        %vm4347 = vweird.f32 %v4341
        %vm4348 = vweird.f32 %v4342
        %vm4349 = vmor %vm4347, %vm4348
        %v4350 = vsel %vm4349, %v4342, %v4346
        %v4351 = vand.u32 2147483647, %v4341
        %vm4352 = vcmp.eq.f32.partialorder %v4351, 8.507059e+37
        %v4353 = vand.u32 %v4341, 2147483648
        %v4354 = vor.u32 1.1754944e-38, %v4353
        %v4355 = vsel %vm4352, %v4354, %v4350
        %v4356 = vmul.f32 %v4331, %v4355
        %v4357 = vmin.f32 %v4356, 1.0
        %v4358 = vmax.f32 %v4357, -1.0
        %v4359 = vmul.f32 %v4249, %v4249
        %v4360 = vmin.f32 16.0, %v4359
        %v4361 = vmul.f32 %v4360, 2.1237322e-06
        %v4362 = vadd.f32 %v4361, 0.00028619796
        %v4363 = vmul.f32 %v4360, %v4362
        %v4364 = vadd.f32 %v4363, 0.0036580483
        %v4365 = vmul.f32 %v4360, %v4364
        %v4366 = vadd.f32 %v4365, 0.05243302
        %v4367 = vmul.f32 %v4360, %v4366
        %v4368 = vadd.f32 %v4367, 0.18741608
        %v4369 = vmul.f32 %v4360, %v4368
        %v4370 = vadd.f32 %v4369, 1.1283791
        %v4371 = vmul.f32 %v4249, %v4370
        %v4372 = vmul.f32 %v4360, 3.8918573e-05
        %v4373 = vadd.f32 %v4372, 0.001143296
        %v4374 = vmul.f32 %v4360, %v4373
        %v4375 = vadd.f32 %v4374, 0.014752088
        %v4376 = vmul.f32 %v4360, %v4375
        %v4377 = vadd.f32 %v4376, 0.112945676
        %v4378 = vmul.f32 %v4360, %v4377
        %v4379 = vadd.f32 %v4378, 0.4994258
        %v4380 = vmul.f32 %v4360, %v4379
        %v4381 = vadd.f32 %v4380, 1.0
        %v4382 = vrcp.pop %v4381
        %v4383 = vmul.f32 %v4381, %v4382
        %v4384 = vsub.f32 1.0, %v4383
        %v4385 = vmul.f32 %v4382, %v4384
        %v4386 = vadd.f32 %v4382, %v4385
        %vm4387 = vweird.f32 %v4381
        %vm4388 = vweird.f32 %v4382
        %vm4389 = vmor %vm4387, %vm4388
        %v4390 = vsel %vm4389, %v4382, %v4386
        %v4391 = vand.u32 2147483647, %v4381
        %vm4392 = vcmp.eq.f32.partialorder %v4391, 8.507059e+37
        %v4393 = vand.u32 %v4381, 2147483648
        %v4394 = vor.u32 1.1754944e-38, %v4393
        %v4395 = vsel %vm4392, %v4394, %v4390
        %v4396 = vmul.f32 %v4371, %v4395
        %v4397 = vmin.f32 %v4396, 1.0
        %v4398 = vmax.f32 %v4397, -1.0
        %v4399 = vmul.f32 %v4250, %v4250
        %v4400 = vmin.f32 16.0, %v4399
        %v4401 = vmul.f32 %v4400, 2.1237322e-06
        %v4402 = vadd.f32 %v4401, 0.00028619796
        %v4403 = vmul.f32 %v4400, %v4402
        %v4404 = vadd.f32 %v4403, 0.0036580483
        %v4405 = vmul.f32 %v4400, %v4404
        %v4406 = vadd.f32 %v4405, 0.05243302
        %v4407 = vmul.f32 %v4400, %v4406
        %v4408 = vadd.f32 %v4407, 0.18741608
        %v4409 = vmul.f32 %v4400, %v4408
        %v4410 = vadd.f32 %v4409, 1.1283791
        %v4411 = vmul.f32 %v4250, %v4410
        %v4412 = vmul.f32 %v4400, 3.8918573e-05
        %v4413 = vadd.f32 %v4412, 0.001143296
        %v4414 = vmul.f32 %v4400, %v4413
        %v4415 = vadd.f32 %v4414, 0.014752088
        %v4416 = vmul.f32 %v4400, %v4415
        %v4417 = vadd.f32 %v4416, 0.112945676
        %v4418 = vmul.f32 %v4400, %v4417
        %v4419 = vadd.f32 %v4418, 0.4994258
        %v4420 = vmul.f32 %v4400, %v4419
        %v4421 = vadd.f32 %v4420, 1.0
        %v4422 = vrcp.pop %v4421
        %v4423 = vmul.f32 %v4421, %v4422
        %v4424 = vsub.f32 1.0, %v4423
        %v4425 = vmul.f32 %v4422, %v4424
        %v4426 = vadd.f32 %v4422, %v4425
        %vm4427 = vweird.f32 %v4421
        %vm4428 = vweird.f32 %v4422
        %vm4429 = vmor %vm4427, %vm4428
        %v4430 = vsel %vm4429, %v4422, %v4426
        %v4431 = vand.u32 2147483647, %v4421
        %vm4432 = vcmp.eq.f32.partialorder %v4431, 8.507059e+37
        %v4433 = vand.u32 %v4421, 2147483648
        %v4434 = vor.u32 1.1754944e-38, %v4433
        %v4435 = vsel %vm4432, %v4434, %v4430
        %v4436 = vmul.f32 %v4411, %v4435
        %v4437 = vmin.f32 %v4436, 1.0
        %v4438 = vmax.f32 %v4437, -1.0
        %v4439 = vmul.f32 %v4251, %v4251
        %v4440 = vmin.f32 16.0, %v4439
        %v4441 = vmul.f32 %v4440, 2.1237322e-06
        %v4442 = vadd.f32 %v4441, 0.00028619796
        %v4443 = vmul.f32 %v4440, %v4442
        %v4444 = vadd.f32 %v4443, 0.0036580483
        %v4445 = vmul.f32 %v4440, %v4444
        %v4446 = vadd.f32 %v4445, 0.05243302
        %v4447 = vmul.f32 %v4440, %v4446
        %v4448 = vadd.f32 %v4447, 0.18741608
        %v4449 = vmul.f32 %v4440, %v4448
        %v4450 = vadd.f32 %v4449, 1.1283791
        %v4451 = vmul.f32 %v4251, %v4450
        %v4452 = vmul.f32 %v4440, 3.8918573e-05
        %v4453 = vadd.f32 %v4452, 0.001143296
        %v4454 = vmul.f32 %v4440, %v4453
        %v4455 = vadd.f32 %v4454, 0.014752088
        %v4456 = vmul.f32 %v4440, %v4455
        %v4457 = vadd.f32 %v4456, 0.112945676
        %v4458 = vmul.f32 %v4440, %v4457
        %v4459 = vadd.f32 %v4458, 0.4994258
        %v4460 = vmul.f32 %v4440, %v4459
        %v4461 = vadd.f32 %v4460, 1.0
        %v4462 = vrcp.pop %v4461
        %v4463 = vmul.f32 %v4461, %v4462
        %v4464 = vsub.f32 1.0, %v4463
        %v4465 = vmul.f32 %v4462, %v4464
        %v4466 = vadd.f32 %v4462, %v4465
        %vm4467 = vweird.f32 %v4461
        %vm4468 = vweird.f32 %v4462
        %vm4469 = vmor %vm4467, %vm4468
        %v4470 = vsel %vm4469, %v4462, %v4466
        %v4471 = vand.u32 2147483647, %v4461
        %vm4472 = vcmp.eq.f32.partialorder %v4471, 8.507059e+37
        %v4473 = vand.u32 %v4461, 2147483648
        %v4474 = vor.u32 1.1754944e-38, %v4473
        %v4475 = vsel %vm4472, %v4474, %v4470
        %v4476 = vmul.f32 %v4451, %v4475
        %v4477 = vmin.f32 %v4476, 1.0
        %v4478 = vmax.f32 %v4477, -1.0
        %v4479 = vmul.f32 %v4252, %v4252
        %v4480 = vmin.f32 16.0, %v4479
        %v4481 = vmul.f32 %v4480, 2.1237322e-06
        %v4482 = vadd.f32 %v4481, 0.00028619796
        %v4483 = vmul.f32 %v4480, %v4482
        %v4484 = vadd.f32 %v4483, 0.0036580483
        %v4485 = vmul.f32 %v4480, %v4484
        %v4486 = vadd.f32 %v4485, 0.05243302
        %v4487 = vmul.f32 %v4480, %v4486
        %v4488 = vadd.f32 %v4487, 0.18741608
        %v4489 = vmul.f32 %v4480, %v4488
        %v4490 = vadd.f32 %v4489, 1.1283791
        %v4491 = vmul.f32 %v4252, %v4490
        %v4492 = vmul.f32 %v4480, 3.8918573e-05
        %v4493 = vadd.f32 %v4492, 0.001143296
        %v4494 = vmul.f32 %v4480, %v4493
        %v4495 = vadd.f32 %v4494, 0.014752088
        %v4496 = vmul.f32 %v4480, %v4495
        %v4497 = vadd.f32 %v4496, 0.112945676
        %v4498 = vmul.f32 %v4480, %v4497
        %v4499 = vadd.f32 %v4498, 0.4994258
        %v4500 = vmul.f32 %v4480, %v4499
        %v4501 = vadd.f32 %v4500, 1.0
        %v4502 = vrcp.pop %v4501
        %v4503 = vmul.f32 %v4501, %v4502
        %v4504 = vsub.f32 1.0, %v4503
        %v4505 = vmul.f32 %v4502, %v4504
        %v4506 = vadd.f32 %v4502, %v4505
        %vm4507 = vweird.f32 %v4501
        %vm4508 = vweird.f32 %v4502
        %vm4509 = vmor %vm4507, %vm4508
        %v4510 = vsel %vm4509, %v4502, %v4506
        %v4511 = vand.u32 2147483647, %v4501
        %vm4512 = vcmp.eq.f32.partialorder %v4511, 8.507059e+37
        %v4513 = vand.u32 %v4501, 2147483648
        %v4514 = vor.u32 1.1754944e-38, %v4513
        %v4515 = vsel %vm4512, %v4514, %v4510
        %v4516 = vmul.f32 %v4491, %v4515
        %v4517 = vmin.f32 %v4516, 1.0
        %v4518 = vmax.f32 %v4517, -1.0
        %v4519 = vmul.f32 %v4253, %v4253
        %v4520 = vmin.f32 16.0, %v4519
        %v4521 = vmul.f32 %v4520, 2.1237322e-06
        %v4522 = vadd.f32 %v4521, 0.00028619796
        %v4523 = vmul.f32 %v4520, %v4522
        %v4524 = vadd.f32 %v4523, 0.0036580483
        %v4525 = vmul.f32 %v4520, %v4524
        %v4526 = vadd.f32 %v4525, 0.05243302
        %v4527 = vmul.f32 %v4520, %v4526
        %v4528 = vadd.f32 %v4527, 0.18741608
        %v4529 = vmul.f32 %v4520, %v4528
        %v4530 = vadd.f32 %v4529, 1.1283791
        %v4531 = vmul.f32 %v4253, %v4530
        %v4532 = vmul.f32 %v4520, 3.8918573e-05
        %v4533 = vadd.f32 %v4532, 0.001143296
        %v4534 = vmul.f32 %v4520, %v4533
        %v4535 = vadd.f32 %v4534, 0.014752088
        %v4536 = vmul.f32 %v4520, %v4535
        %v4537 = vadd.f32 %v4536, 0.112945676
        %v4538 = vmul.f32 %v4520, %v4537
        %v4539 = vadd.f32 %v4538, 0.4994258
        %v4540 = vmul.f32 %v4520, %v4539
        %v4541 = vadd.f32 %v4540, 1.0
        %v4542 = vrcp.pop %v4541
        %v4543 = vmul.f32 %v4541, %v4542
        %v4544 = vsub.f32 1.0, %v4543
        %v4545 = vmul.f32 %v4542, %v4544
        %v4546 = vadd.f32 %v4542, %v4545
        %vm4547 = vweird.f32 %v4541
        %vm4548 = vweird.f32 %v4542
        %vm4549 = vmor %vm4547, %vm4548
        %v4550 = vsel %vm4549, %v4542, %v4546
        %v4551 = vand.u32 2147483647, %v4541
        %vm4552 = vcmp.eq.f32.partialorder %v4551, 8.507059e+37
        %v4553 = vand.u32 %v4541, 2147483648
        %v4554 = vor.u32 1.1754944e-38, %v4553
        %v4555 = vsel %vm4552, %v4554, %v4550
        %v4556 = vmul.f32 %v4531, %v4555
        %v4557 = vmin.f32 %v4556, 1.0
        %v4558 = vmax.f32 %v4557, -1.0
        %v4559 = vmul.f32 %v4254, %v4254
        %v4560 = vmin.f32 16.0, %v4559
        %v4561 = vmul.f32 %v4560, 2.1237322e-06
        %v4562 = vadd.f32 %v4561, 0.00028619796
        %v4563 = vmul.f32 %v4560, %v4562
        %v4564 = vadd.f32 %v4563, 0.0036580483
        %v4565 = vmul.f32 %v4560, %v4564
        %v4566 = vadd.f32 %v4565, 0.05243302
        %v4567 = vmul.f32 %v4560, %v4566
        %v4568 = vadd.f32 %v4567, 0.18741608
        %v4569 = vmul.f32 %v4560, %v4568
        %v4570 = vadd.f32 %v4569, 1.1283791
        %v4571 = vmul.f32 %v4254, %v4570
        %v4572 = vmul.f32 %v4560, 3.8918573e-05
        %v4573 = vadd.f32 %v4572, 0.001143296
        %v4574 = vmul.f32 %v4560, %v4573
        %v4575 = vadd.f32 %v4574, 0.014752088
        %v4576 = vmul.f32 %v4560, %v4575
        %v4577 = vadd.f32 %v4576, 0.112945676
        %v4578 = vmul.f32 %v4560, %v4577
        %v4579 = vadd.f32 %v4578, 0.4994258
        %v4580 = vmul.f32 %v4560, %v4579
        %v4581 = vadd.f32 %v4580, 1.0
        %v4582 = vrcp.pop %v4581
        %v4583 = vmul.f32 %v4581, %v4582
        %v4584 = vsub.f32 1.0, %v4583
        %v4585 = vmul.f32 %v4582, %v4584
        %v4586 = vadd.f32 %v4582, %v4585
        %vm4587 = vweird.f32 %v4581
        %vm4588 = vweird.f32 %v4582
        %vm4589 = vmor %vm4587, %vm4588
        %v4590 = vsel %vm4589, %v4582, %v4586
        %v4591 = vand.u32 2147483647, %v4581
        %vm4592 = vcmp.eq.f32.partialorder %v4591, 8.507059e+37
        %v4593 = vand.u32 %v4581, 2147483648
        %v4594 = vor.u32 1.1754944e-38, %v4593
        %v4595 = vsel %vm4592, %v4594, %v4590
        %v4596 = vmul.f32 %v4571, %v4595
        %v4597 = vmin.f32 %v4596, 1.0
        %v4598 = vmax.f32 %v4597, -1.0
        %v4599 = vmul.f32 %v4255, %v4255
        %v4600 = vmin.f32 16.0, %v4599
        %v4601 = vmul.f32 %v4600, 2.1237322e-06
        %v4602 = vadd.f32 %v4601, 0.00028619796
        %v4603 = vmul.f32 %v4600, %v4602
        %v4604 = vadd.f32 %v4603, 0.0036580483
        %v4605 = vmul.f32 %v4600, %v4604
        %v4606 = vadd.f32 %v4605, 0.05243302
        %v4607 = vmul.f32 %v4600, %v4606
        %v4608 = vadd.f32 %v4607, 0.18741608
        %v4609 = vmul.f32 %v4600, %v4608
        %v4610 = vadd.f32 %v4609, 1.1283791
        %v4611 = vmul.f32 %v4255, %v4610
        %v4612 = vmul.f32 %v4600, 3.8918573e-05
        %v4613 = vadd.f32 %v4612, 0.001143296
        %v4614 = vmul.f32 %v4600, %v4613
        %v4615 = vadd.f32 %v4614, 0.014752088
        %v4616 = vmul.f32 %v4600, %v4615
        %v4617 = vadd.f32 %v4616, 0.112945676
        %v4618 = vmul.f32 %v4600, %v4617
        %v4619 = vadd.f32 %v4618, 0.4994258
        %v4620 = vmul.f32 %v4600, %v4619
        %v4621 = vadd.f32 %v4620, 1.0
        %v4622 = vrcp.pop %v4621
        %v4623 = vmul.f32 %v4621, %v4622
        %v4624 = vsub.f32 1.0, %v4623
        %v4625 = vmul.f32 %v4622, %v4624
        %v4626 = vadd.f32 %v4622, %v4625
        %vm4627 = vweird.f32 %v4621
        %vm4628 = vweird.f32 %v4622
        %vm4629 = vmor %vm4627, %vm4628
        %v4630 = vsel %vm4629, %v4622, %v4626
        %v4631 = vand.u32 2147483647, %v4621
        %vm4632 = vcmp.eq.f32.partialorder %v4631, 8.507059e+37
        %v4633 = vand.u32 %v4621, 2147483648
        %v4634 = vor.u32 1.1754944e-38, %v4633
        %v4635 = vsel %vm4632, %v4634, %v4630
        %v4636 = vmul.f32 %v4611, %v4635
        %v4637 = vmin.f32 %v4636, 1.0
        %v4638 = vmax.f32 %v4637, -1.0
        %v4639 = vmul.f32 %v4256, %v4256
        %v4640 = vmin.f32 16.0, %v4639
        %v4641 = vmul.f32 %v4640, 2.1237322e-06
        %v4642 = vadd.f32 %v4641, 0.00028619796
        %v4643 = vmul.f32 %v4640, %v4642
        %v4644 = vadd.f32 %v4643, 0.0036580483
        %v4645 = vmul.f32 %v4640, %v4644
        %v4646 = vadd.f32 %v4645, 0.05243302
        %v4647 = vmul.f32 %v4640, %v4646
        %v4648 = vadd.f32 %v4647, 0.18741608
        %v4649 = vmul.f32 %v4640, %v4648
        %v4650 = vadd.f32 %v4649, 1.1283791
        %v4651 = vmul.f32 %v4256, %v4650
        %v4652 = vmul.f32 %v4640, 3.8918573e-05
        %v4653 = vadd.f32 %v4652, 0.001143296
        %v4654 = vmul.f32 %v4640, %v4653
        %v4655 = vadd.f32 %v4654, 0.014752088
        %v4656 = vmul.f32 %v4640, %v4655
        %v4657 = vadd.f32 %v4656, 0.112945676
        %v4658 = vmul.f32 %v4640, %v4657
        %v4659 = vadd.f32 %v4658, 0.4994258
        %v4660 = vmul.f32 %v4640, %v4659
        %v4661 = vadd.f32 %v4660, 1.0
        %v4662 = vrcp.pop %v4661
        %v4663 = vmul.f32 %v4661, %v4662
        %v4664 = vsub.f32 1.0, %v4663
        %v4665 = vmul.f32 %v4662, %v4664
        %v4666 = vadd.f32 %v4662, %v4665
        %vm4667 = vweird.f32 %v4661
        %vm4668 = vweird.f32 %v4662
        %vm4669 = vmor %vm4667, %vm4668
        %v4670 = vsel %vm4669, %v4662, %v4666
        %v4671 = vand.u32 2147483647, %v4661
        %vm4672 = vcmp.eq.f32.partialorder %v4671, 8.507059e+37
        %v4673 = vand.u32 %v4661, 2147483648
        %v4674 = vor.u32 1.1754944e-38, %v4673
        %v4675 = vsel %vm4672, %v4674, %v4670
        %v4676 = vmul.f32 %v4651, %v4675
        %v4677 = vmin.f32 %v4676, 1.0
        %v4678 = vmax.f32 %v4677, -1.0
        %v4679 = vmul.f32 %v4257, %v4257
        %v4680 = vmin.f32 16.0, %v4679
        %v4681 = vmul.f32 %v4680, 2.1237322e-06
        %v4682 = vadd.f32 %v4681, 0.00028619796
        %v4683 = vmul.f32 %v4680, %v4682
        %v4684 = vadd.f32 %v4683, 0.0036580483
        %v4685 = vmul.f32 %v4680, %v4684
        %v4686 = vadd.f32 %v4685, 0.05243302
        %v4687 = vmul.f32 %v4680, %v4686
        %v4688 = vadd.f32 %v4687, 0.18741608
        %v4689 = vmul.f32 %v4680, %v4688
        %v4690 = vadd.f32 %v4689, 1.1283791
        %v4691 = vmul.f32 %v4257, %v4690
        %v4692 = vmul.f32 %v4680, 3.8918573e-05
        %v4693 = vadd.f32 %v4692, 0.001143296
        %v4694 = vmul.f32 %v4680, %v4693
        %v4695 = vadd.f32 %v4694, 0.014752088
        %v4696 = vmul.f32 %v4680, %v4695
        %v4697 = vadd.f32 %v4696, 0.112945676
        %v4698 = vmul.f32 %v4680, %v4697
        %v4699 = vadd.f32 %v4698, 0.4994258
        %v4700 = vmul.f32 %v4680, %v4699
        %v4701 = vadd.f32 %v4700, 1.0
        %v4702 = vrcp.pop %v4701
        %v4703 = vmul.f32 %v4701, %v4702
        %v4704 = vsub.f32 1.0, %v4703
        %v4705 = vmul.f32 %v4702, %v4704
        %v4706 = vadd.f32 %v4702, %v4705
        %vm4707 = vweird.f32 %v4701
        %vm4708 = vweird.f32 %v4702
        %vm4709 = vmor %vm4707, %vm4708
        %v4710 = vsel %vm4709, %v4702, %v4706
        %v4711 = vand.u32 2147483647, %v4701
        %vm4712 = vcmp.eq.f32.partialorder %v4711, 8.507059e+37
        %v4713 = vand.u32 %v4701, 2147483648
        %v4714 = vor.u32 1.1754944e-38, %v4713
        %v4715 = vsel %vm4712, %v4714, %v4710
        %v4716 = vmul.f32 %v4691, %v4715
        %v4717 = vmin.f32 %v4716, 1.0
        %v4718 = vmax.f32 %v4717, -1.0
        %v4719 = vmul.f32 %v4258, %v4258
        %v4720 = vmin.f32 16.0, %v4719
        %v4721 = vmul.f32 %v4720, 2.1237322e-06
        %v4722 = vadd.f32 %v4721, 0.00028619796
        %v4723 = vmul.f32 %v4720, %v4722
        %v4724 = vadd.f32 %v4723, 0.0036580483
        %v4725 = vmul.f32 %v4720, %v4724
        %v4726 = vadd.f32 %v4725, 0.05243302
        %v4727 = vmul.f32 %v4720, %v4726
        %v4728 = vadd.f32 %v4727, 0.18741608
        %v4729 = vmul.f32 %v4720, %v4728
        %v4730 = vadd.f32 %v4729, 1.1283791
        %v4731 = vmul.f32 %v4258, %v4730
        %v4732 = vmul.f32 %v4720, 3.8918573e-05
        %v4733 = vadd.f32 %v4732, 0.001143296
        %v4734 = vmul.f32 %v4720, %v4733
        %v4735 = vadd.f32 %v4734, 0.014752088
        %v4736 = vmul.f32 %v4720, %v4735
        %v4737 = vadd.f32 %v4736, 0.112945676
        %v4738 = vmul.f32 %v4720, %v4737
        %v4739 = vadd.f32 %v4738, 0.4994258
        %v4740 = vmul.f32 %v4720, %v4739
        %v4741 = vadd.f32 %v4740, 1.0
        %v4742 = vrcp.pop %v4741
        %v4743 = vmul.f32 %v4741, %v4742
        %v4744 = vsub.f32 1.0, %v4743
        %v4745 = vmul.f32 %v4742, %v4744
        %v4746 = vadd.f32 %v4742, %v4745
        %vm4747 = vweird.f32 %v4741
        %vm4748 = vweird.f32 %v4742
        %vm4749 = vmor %vm4747, %vm4748
        %v4750 = vsel %vm4749, %v4742, %v4746
        %v4751 = vand.u32 2147483647, %v4741
        %vm4752 = vcmp.eq.f32.partialorder %v4751, 8.507059e+37
        %v4753 = vand.u32 %v4741, 2147483648
        %v4754 = vor.u32 1.1754944e-38, %v4753
        %v4755 = vsel %vm4752, %v4754, %v4750
        %v4756 = vmul.f32 %v4731, %v4755
        %v4757 = vmin.f32 %v4756, 1.0
        %v4758 = vmax.f32 %v4757, -1.0
        %v4759 = vmul.f32 %v4259, %v4259
        %v4760 = vmin.f32 16.0, %v4759
        %v4761 = vmul.f32 %v4760, 2.1237322e-06
        %v4762 = vadd.f32 %v4761, 0.00028619796
        %v4763 = vmul.f32 %v4760, %v4762
        %v4764 = vadd.f32 %v4763, 0.0036580483
        %v4765 = vmul.f32 %v4760, %v4764
        %v4766 = vadd.f32 %v4765, 0.05243302
        %v4767 = vmul.f32 %v4760, %v4766
        %v4768 = vadd.f32 %v4767, 0.18741608
        %v4769 = vmul.f32 %v4760, %v4768
        %v4770 = vadd.f32 %v4769, 1.1283791
        %v4771 = vmul.f32 %v4259, %v4770
        %v4772 = vmul.f32 %v4760, 3.8918573e-05
        %v4773 = vadd.f32 %v4772, 0.001143296
        %v4774 = vmul.f32 %v4760, %v4773
        %v4775 = vadd.f32 %v4774, 0.014752088
        %v4776 = vmul.f32 %v4760, %v4775
        %v4777 = vadd.f32 %v4776, 0.112945676
        %v4778 = vmul.f32 %v4760, %v4777
        %v4779 = vadd.f32 %v4778, 0.4994258
        %v4780 = vmul.f32 %v4760, %v4779
        %v4781 = vadd.f32 %v4780, 1.0
        %v4782 = vrcp.pop %v4781
        %v4783 = vmul.f32 %v4781, %v4782
        %v4784 = vsub.f32 1.0, %v4783
        %v4785 = vmul.f32 %v4782, %v4784
        %v4786 = vadd.f32 %v4782, %v4785
        %vm4787 = vweird.f32 %v4781
        %vm4788 = vweird.f32 %v4782
        %vm4789 = vmor %vm4787, %vm4788
        %v4790 = vsel %vm4789, %v4782, %v4786
        %v4791 = vand.u32 2147483647, %v4781
        %vm4792 = vcmp.eq.f32.partialorder %v4791, 8.507059e+37
        %v4793 = vand.u32 %v4781, 2147483648
        %v4794 = vor.u32 1.1754944e-38, %v4793
        %v4795 = vsel %vm4792, %v4794, %v4790
        %v4796 = vmul.f32 %v4771, %v4795
        %v4797 = vmin.f32 %v4796, 1.0
        %v4798 = vmax.f32 %v4797, -1.0
        %v4799 = vmul.f32 %v4260, %v4260
        %v4800 = vmin.f32 16.0, %v4799
        %v4801 = vmul.f32 %v4800, 2.1237322e-06
        %v4802 = vadd.f32 %v4801, 0.00028619796
        %v4803 = vmul.f32 %v4800, %v4802
        %v4804 = vadd.f32 %v4803, 0.0036580483
        %v4805 = vmul.f32 %v4800, %v4804
        %v4806 = vadd.f32 %v4805, 0.05243302
        %v4807 = vmul.f32 %v4800, %v4806
        %v4808 = vadd.f32 %v4807, 0.18741608
        %v4809 = vmul.f32 %v4800, %v4808
        %v4810 = vadd.f32 %v4809, 1.1283791
        %v4811 = vmul.f32 %v4260, %v4810
        %v4812 = vmul.f32 %v4800, 3.8918573e-05
        %v4813 = vadd.f32 %v4812, 0.001143296
        %v4814 = vmul.f32 %v4800, %v4813
        %v4815 = vadd.f32 %v4814, 0.014752088
        %v4816 = vmul.f32 %v4800, %v4815
        %v4817 = vadd.f32 %v4816, 0.112945676
        %v4818 = vmul.f32 %v4800, %v4817
        %v4819 = vadd.f32 %v4818, 0.4994258
        %v4820 = vmul.f32 %v4800, %v4819
        %v4821 = vadd.f32 %v4820, 1.0
        %v4822 = vrcp.pop %v4821
        %v4823 = vmul.f32 %v4821, %v4822
        %v4824 = vsub.f32 1.0, %v4823
        %v4825 = vmul.f32 %v4822, %v4824
        %v4826 = vadd.f32 %v4822, %v4825
        %vm4827 = vweird.f32 %v4821
        %vm4828 = vweird.f32 %v4822
        %vm4829 = vmor %vm4827, %vm4828
        %v4830 = vsel %vm4829, %v4822, %v4826
        %v4831 = vand.u32 2147483647, %v4821
        %vm4832 = vcmp.eq.f32.partialorder %v4831, 8.507059e+37
        %v4833 = vand.u32 %v4821, 2147483648
        %v4834 = vor.u32 1.1754944e-38, %v4833
        %v4835 = vsel %vm4832, %v4834, %v4830
        %v4836 = vmul.f32 %v4811, %v4835
        %v4837 = vmin.f32 %v4836, 1.0
        %v4838 = vmax.f32 %v4837, -1.0
        %v4839 = vmul.f32 %v4261, %v4261
        %v4840 = vmin.f32 16.0, %v4839
        %v4841 = vmul.f32 %v4840, 2.1237322e-06
        %v4842 = vadd.f32 %v4841, 0.00028619796
        %v4843 = vmul.f32 %v4840, %v4842
        %v4844 = vadd.f32 %v4843, 0.0036580483
        %v4845 = vmul.f32 %v4840, %v4844
        %v4846 = vadd.f32 %v4845, 0.05243302
        %v4847 = vmul.f32 %v4840, %v4846
        %v4848 = vadd.f32 %v4847, 0.18741608
        %v4849 = vmul.f32 %v4840, %v4848
        %v4850 = vadd.f32 %v4849, 1.1283791
        %v4851 = vmul.f32 %v4261, %v4850
        %v4852 = vmul.f32 %v4840, 3.8918573e-05
        %v4853 = vadd.f32 %v4852, 0.001143296
        %v4854 = vmul.f32 %v4840, %v4853
        %v4855 = vadd.f32 %v4854, 0.014752088
        %v4856 = vmul.f32 %v4840, %v4855
        %v4857 = vadd.f32 %v4856, 0.112945676
        %v4858 = vmul.f32 %v4840, %v4857
        %v4859 = vadd.f32 %v4858, 0.4994258
        %v4860 = vmul.f32 %v4840, %v4859
        %v4861 = vadd.f32 %v4860, 1.0
        %v4862 = vrcp.pop %v4861
        %v4863 = vmul.f32 %v4861, %v4862
        %v4864 = vsub.f32 1.0, %v4863
        %v4865 = vmul.f32 %v4862, %v4864
        %v4866 = vadd.f32 %v4862, %v4865
        %vm4867 = vweird.f32 %v4861
        %vm4868 = vweird.f32 %v4862
        %vm4869 = vmor %vm4867, %vm4868
        %v4870 = vsel %vm4869, %v4862, %v4866
        %v4871 = vand.u32 2147483647, %v4861
        %vm4872 = vcmp.eq.f32.partialorder %v4871, 8.507059e+37
        %v4873 = vand.u32 %v4861, 2147483648
        %v4874 = vor.u32 1.1754944e-38, %v4873
        %v4875 = vsel %vm4872, %v4874, %v4870
        %v4876 = vmul.f32 %v4851, %v4875
        %v4877 = vmin.f32 %v4876, 1.0
        %v4878 = vmax.f32 %v4877, -1.0
        %v4879 = vmul.f32 %v4262, %v4262
        %v4880 = vmin.f32 16.0, %v4879
        %v4881 = vmul.f32 %v4880, 2.1237322e-06
        %v4882 = vadd.f32 %v4881, 0.00028619796
        %v4883 = vmul.f32 %v4880, %v4882
        %v4884 = vadd.f32 %v4883, 0.0036580483
        %v4885 = vmul.f32 %v4880, %v4884
        %v4886 = vadd.f32 %v4885, 0.05243302
        %v4887 = vmul.f32 %v4880, %v4886
        %v4888 = vadd.f32 %v4887, 0.18741608
        %v4889 = vmul.f32 %v4880, %v4888
        %v4890 = vadd.f32 %v4889, 1.1283791
        %v4891 = vmul.f32 %v4262, %v4890
        %v4892 = vmul.f32 %v4880, 3.8918573e-05
        %v4893 = vadd.f32 %v4892, 0.001143296
        %v4894 = vmul.f32 %v4880, %v4893
        %v4895 = vadd.f32 %v4894, 0.014752088
        %v4896 = vmul.f32 %v4880, %v4895
        %v4897 = vadd.f32 %v4896, 0.112945676
        %v4898 = vmul.f32 %v4880, %v4897
        %v4899 = vadd.f32 %v4898, 0.4994258
        %v4900 = vmul.f32 %v4880, %v4899
        %v4901 = vadd.f32 %v4900, 1.0
        %v4902 = vrcp.pop %v4901
        %v4903 = vmul.f32 %v4901, %v4902
        %v4904 = vsub.f32 1.0, %v4903
        %v4905 = vmul.f32 %v4902, %v4904
        %v4906 = vadd.f32 %v4902, %v4905
        %vm4907 = vweird.f32 %v4901
        %vm4908 = vweird.f32 %v4902
        %vm4909 = vmor %vm4907, %vm4908
        %v4910 = vsel %vm4909, %v4902, %v4906
        %v4911 = vand.u32 2147483647, %v4901
        %vm4912 = vcmp.eq.f32.partialorder %v4911, 8.507059e+37
        %v4913 = vand.u32 %v4901, 2147483648
        %v4914 = vor.u32 1.1754944e-38, %v4913
        %v4915 = vsel %vm4912, %v4914, %v4910
        %v4916 = vmul.f32 %v4891, %v4915
        %v4917 = vmin.f32 %v4916, 1.0
        %v4918 = vmax.f32 %v4917, -1.0
        %v4919 = vmul.f32 %v4263, %v4263
        %v4920 = vmin.f32 16.0, %v4919
        %v4921 = vmul.f32 %v4920, 2.1237322e-06
        %v4922 = vadd.f32 %v4921, 0.00028619796
        %v4923 = vmul.f32 %v4920, %v4922
        %v4924 = vadd.f32 %v4923, 0.0036580483
        %v4925 = vmul.f32 %v4920, %v4924
        %v4926 = vadd.f32 %v4925, 0.05243302
        %v4927 = vmul.f32 %v4920, %v4926
        %v4928 = vadd.f32 %v4927, 0.18741608
        %v4929 = vmul.f32 %v4920, %v4928
        %v4930 = vadd.f32 %v4929, 1.1283791
        %v4931 = vmul.f32 %v4263, %v4930
        %v4932 = vmul.f32 %v4920, 3.8918573e-05
        %v4933 = vadd.f32 %v4932, 0.001143296
        %v4934 = vmul.f32 %v4920, %v4933
        %v4935 = vadd.f32 %v4934, 0.014752088
        %v4936 = vmul.f32 %v4920, %v4935
        %v4937 = vadd.f32 %v4936, 0.112945676
        %v4938 = vmul.f32 %v4920, %v4937
        %v4939 = vadd.f32 %v4938, 0.4994258
        %v4940 = vmul.f32 %v4920, %v4939
        %v4941 = vadd.f32 %v4940, 1.0
        %v4942 = vrcp.pop %v4941
        %v4943 = vmul.f32 %v4941, %v4942
        %v4944 = vsub.f32 1.0, %v4943
        %v4945 = vmul.f32 %v4942, %v4944
        %v4946 = vadd.f32 %v4942, %v4945
        %vm4947 = vweird.f32 %v4941
        %vm4948 = vweird.f32 %v4942
        %vm4949 = vmor %vm4947, %vm4948
        %v4950 = vsel %vm4949, %v4942, %v4946
        %v4951 = vand.u32 2147483647, %v4941
        %vm4952 = vcmp.eq.f32.partialorder %v4951, 8.507059e+37
        %v4953 = vand.u32 %v4941, 2147483648
        %v4954 = vor.u32 1.1754944e-38, %v4953
        %v4955 = vsel %vm4952, %v4954, %v4950
        %v4956 = vmul.f32 %v4931, %v4955
        %v4957 = vmin.f32 %v4956, 1.0
        %v4958 = vmax.f32 %v4957, -1.0
        %v4959 = vmul.f32 %v4264, %v4264
        %v4960 = vmin.f32 16.0, %v4959
        %v4961 = vmul.f32 %v4960, 2.1237322e-06
        %v4962 = vadd.f32 %v4961, 0.00028619796
        %v4963 = vmul.f32 %v4960, %v4962
        %v4964 = vadd.f32 %v4963, 0.0036580483
        %v4965 = vmul.f32 %v4960, %v4964
        %v4966 = vadd.f32 %v4965, 0.05243302
        %v4967 = vmul.f32 %v4960, %v4966
        %v4968 = vadd.f32 %v4967, 0.18741608
        %v4969 = vmul.f32 %v4960, %v4968
        %v4970 = vadd.f32 %v4969, 1.1283791
        %v4971 = vmul.f32 %v4264, %v4970
        %v4972 = vmul.f32 %v4960, 3.8918573e-05
        %v4973 = vadd.f32 %v4972, 0.001143296
        %v4974 = vmul.f32 %v4960, %v4973
        %v4975 = vadd.f32 %v4974, 0.014752088
        %v4976 = vmul.f32 %v4960, %v4975
        %v4977 = vadd.f32 %v4976, 0.112945676
        %v4978 = vmul.f32 %v4960, %v4977
        %v4979 = vadd.f32 %v4978, 0.4994258
        %v4980 = vmul.f32 %v4960, %v4979
        %v4981 = vadd.f32 %v4980, 1.0
        %v4982 = vrcp.pop %v4981
        %v4983 = vmul.f32 %v4981, %v4982
        %v4984 = vsub.f32 1.0, %v4983
        %v4985 = vmul.f32 %v4982, %v4984
        %v4986 = vadd.f32 %v4982, %v4985
        %vm4987 = vweird.f32 %v4981
        %vm4988 = vweird.f32 %v4982
        %vm4989 = vmor %vm4987, %vm4988
        %v4990 = vsel %vm4989, %v4982, %v4986
        %v4991 = vand.u32 2147483647, %v4981
        %vm4992 = vcmp.eq.f32.partialorder %v4991, 8.507059e+37
        %v4993 = vand.u32 %v4981, 2147483648
        %v4994 = vor.u32 1.1754944e-38, %v4993
        %v4995 = vsel %vm4992, %v4994, %v4990
        %v4996 = vmul.f32 %v4971, %v4995
        %v4997 = vmin.f32 %v4996, 1.0
        %v4998 = vmax.f32 %v4997, -1.0
        %v4999 = vmul.f32 %v4265, %v4265
        %v5000 = vmin.f32 16.0, %v4999
        %v5001 = vmul.f32 %v5000, 2.1237322e-06
        %v5002 = vadd.f32 %v5001, 0.00028619796
        %v5003 = vmul.f32 %v5000, %v5002
        %v5004 = vadd.f32 %v5003, 0.0036580483
        %v5005 = vmul.f32 %v5000, %v5004
        %v5006 = vadd.f32 %v5005, 0.05243302
        %v5007 = vmul.f32 %v5000, %v5006
        %v5008 = vadd.f32 %v5007, 0.18741608
        %v5009 = vmul.f32 %v5000, %v5008
        %v5010 = vadd.f32 %v5009, 1.1283791
        %v5011 = vmul.f32 %v4265, %v5010
        %v5012 = vmul.f32 %v5000, 3.8918573e-05
        %v5013 = vadd.f32 %v5012, 0.001143296
        %v5014 = vmul.f32 %v5000, %v5013
        %v5015 = vadd.f32 %v5014, 0.014752088
        %v5016 = vmul.f32 %v5000, %v5015
        %v5017 = vadd.f32 %v5016, 0.112945676
        %v5018 = vmul.f32 %v5000, %v5017
        %v5019 = vadd.f32 %v5018, 0.4994258
        %v5020 = vmul.f32 %v5000, %v5019
        %v5021 = vadd.f32 %v5020, 1.0
        %v5022 = vrcp.pop %v5021
        %v5023 = vmul.f32 %v5021, %v5022
        %v5024 = vsub.f32 1.0, %v5023
        %v5025 = vmul.f32 %v5022, %v5024
        %v5026 = vadd.f32 %v5022, %v5025
        %vm5027 = vweird.f32 %v5021
        %vm5028 = vweird.f32 %v5022
        %vm5029 = vmor %vm5027, %vm5028
        %v5030 = vsel %vm5029, %v5022, %v5026
        %v5031 = vand.u32 2147483647, %v5021
        %vm5032 = vcmp.eq.f32.partialorder %v5031, 8.507059e+37
        %v5033 = vand.u32 %v5021, 2147483648
        %v5034 = vor.u32 1.1754944e-38, %v5033
        %v5035 = vsel %vm5032, %v5034, %v5030
        %v5036 = vmul.f32 %v5011, %v5035
        %v5037 = vmin.f32 %v5036, 1.0
        %v5038 = vmax.f32 %v5037, -1.0
        %v5039 = vmul.f32 %v4266, %v4266
        %v5040 = vmin.f32 16.0, %v5039
        %v5041 = vmul.f32 %v5040, 2.1237322e-06
        %v5042 = vadd.f32 %v5041, 0.00028619796
        %v5043 = vmul.f32 %v5040, %v5042
        %v5044 = vadd.f32 %v5043, 0.0036580483
        %v5045 = vmul.f32 %v5040, %v5044
        %v5046 = vadd.f32 %v5045, 0.05243302
        %v5047 = vmul.f32 %v5040, %v5046
        %v5048 = vadd.f32 %v5047, 0.18741608
        %v5049 = vmul.f32 %v5040, %v5048
        %v5050 = vadd.f32 %v5049, 1.1283791
        %v5051 = vmul.f32 %v4266, %v5050
        %v5052 = vmul.f32 %v5040, 3.8918573e-05
        %v5053 = vadd.f32 %v5052, 0.001143296
        %v5054 = vmul.f32 %v5040, %v5053
        %v5055 = vadd.f32 %v5054, 0.014752088
        %v5056 = vmul.f32 %v5040, %v5055
        %v5057 = vadd.f32 %v5056, 0.112945676
        %v5058 = vmul.f32 %v5040, %v5057
        %v5059 = vadd.f32 %v5058, 0.4994258
        %v5060 = vmul.f32 %v5040, %v5059
        %v5061 = vadd.f32 %v5060, 1.0
        %v5062 = vrcp.pop %v5061
        %v5063 = vmul.f32 %v5061, %v5062
        %v5064 = vsub.f32 1.0, %v5063
        %v5065 = vmul.f32 %v5062, %v5064
        %v5066 = vadd.f32 %v5062, %v5065
        %vm5067 = vweird.f32 %v5061
        %vm5068 = vweird.f32 %v5062
        %vm5069 = vmor %vm5067, %vm5068
        %v5070 = vsel %vm5069, %v5062, %v5066
        %v5071 = vand.u32 2147483647, %v5061
        %vm5072 = vcmp.eq.f32.partialorder %v5071, 8.507059e+37
        %v5073 = vand.u32 %v5061, 2147483648
        %v5074 = vor.u32 1.1754944e-38, %v5073
        %v5075 = vsel %vm5072, %v5074, %v5070
        %v5076 = vmul.f32 %v5051, %v5075
        %v5077 = vmin.f32 %v5076, 1.0
        %v5078 = vmax.f32 %v5077, -1.0
        %v5079 = vmul.f32 %v4267, %v4267
        %v5080 = vmin.f32 16.0, %v5079
        %v5081 = vmul.f32 %v5080, 2.1237322e-06
        %v5082 = vadd.f32 %v5081, 0.00028619796
        %v5083 = vmul.f32 %v5080, %v5082
        %v5084 = vadd.f32 %v5083, 0.0036580483
        %v5085 = vmul.f32 %v5080, %v5084
        %v5086 = vadd.f32 %v5085, 0.05243302
        %v5087 = vmul.f32 %v5080, %v5086
        %v5088 = vadd.f32 %v5087, 0.18741608
        %v5089 = vmul.f32 %v5080, %v5088
        %v5090 = vadd.f32 %v5089, 1.1283791
        %v5091 = vmul.f32 %v4267, %v5090
        %v5092 = vmul.f32 %v5080, 3.8918573e-05
        %v5093 = vadd.f32 %v5092, 0.001143296
        %v5094 = vmul.f32 %v5080, %v5093
        %v5095 = vadd.f32 %v5094, 0.014752088
        %v5096 = vmul.f32 %v5080, %v5095
        %v5097 = vadd.f32 %v5096, 0.112945676
        %v5098 = vmul.f32 %v5080, %v5097
        %v5099 = vadd.f32 %v5098, 0.4994258
        %v5100 = vmul.f32 %v5080, %v5099
        %v5101 = vadd.f32 %v5100, 1.0
        %v5102 = vrcp.pop %v5101
        %v5103 = vmul.f32 %v5101, %v5102
        %v5104 = vsub.f32 1.0, %v5103
        %v5105 = vmul.f32 %v5102, %v5104
        %v5106 = vadd.f32 %v5102, %v5105
        %vm5107 = vweird.f32 %v5101
        %vm5108 = vweird.f32 %v5102
        %vm5109 = vmor %vm5107, %vm5108
        %v5110 = vsel %vm5109, %v5102, %v5106
        %v5111 = vand.u32 2147483647, %v5101
        %vm5112 = vcmp.eq.f32.partialorder %v5111, 8.507059e+37
        %v5113 = vand.u32 %v5101, 2147483648
        %v5114 = vor.u32 1.1754944e-38, %v5113
        %v5115 = vsel %vm5112, %v5114, %v5110
        %v5116 = vmul.f32 %v5091, %v5115
        %v5117 = vmin.f32 %v5116, 1.0
        %v5118 = vmax.f32 %v5117, -1.0
        %v5119 = vmul.f32 %v4268, %v4268
        %v5120 = vmin.f32 16.0, %v5119
        %v5121 = vmul.f32 %v5120, 2.1237322e-06
        %v5122 = vadd.f32 %v5121, 0.00028619796
        %v5123 = vmul.f32 %v5120, %v5122
        %v5124 = vadd.f32 %v5123, 0.0036580483
        %v5125 = vmul.f32 %v5120, %v5124
        %v5126 = vadd.f32 %v5125, 0.05243302
        %v5127 = vmul.f32 %v5120, %v5126
        %v5128 = vadd.f32 %v5127, 0.18741608
        %v5129 = vmul.f32 %v5120, %v5128
        %v5130 = vadd.f32 %v5129, 1.1283791
        %v5131 = vmul.f32 %v4268, %v5130
        %v5132 = vmul.f32 %v5120, 3.8918573e-05
        %v5133 = vadd.f32 %v5132, 0.001143296
        %v5134 = vmul.f32 %v5120, %v5133
        %v5135 = vadd.f32 %v5134, 0.014752088
        %v5136 = vmul.f32 %v5120, %v5135
        %v5137 = vadd.f32 %v5136, 0.112945676
        %v5138 = vmul.f32 %v5120, %v5137
        %v5139 = vadd.f32 %v5138, 0.4994258
        %v5140 = vmul.f32 %v5120, %v5139
        %v5141 = vadd.f32 %v5140, 1.0
        %v5142 = vrcp.pop %v5141
        %v5143 = vmul.f32 %v5141, %v5142
        %v5144 = vsub.f32 1.0, %v5143
        %v5145 = vmul.f32 %v5142, %v5144
        %v5146 = vadd.f32 %v5142, %v5145
        %vm5147 = vweird.f32 %v5141
        %vm5148 = vweird.f32 %v5142
        %vm5149 = vmor %vm5147, %vm5148
        %v5150 = vsel %vm5149, %v5142, %v5146
        %v5151 = vand.u32 2147483647, %v5141
        %vm5152 = vcmp.eq.f32.partialorder %v5151, 8.507059e+37
        %v5153 = vand.u32 %v5141, 2147483648
        %v5154 = vor.u32 1.1754944e-38, %v5153
        %v5155 = vsel %vm5152, %v5154, %v5150
        %v5156 = vmul.f32 %v5131, %v5155
        %v5157 = vmin.f32 %v5156, 1.0
        %v5158 = vmax.f32 %v5157, -1.0
        %v5159 = vmul.f32 %v4269, %v4269
        %v5160 = vmin.f32 16.0, %v5159
        %v5161 = vmul.f32 %v5160, 2.1237322e-06
        %v5162 = vadd.f32 %v5161, 0.00028619796
        %v5163 = vmul.f32 %v5160, %v5162
        %v5164 = vadd.f32 %v5163, 0.0036580483
        %v5165 = vmul.f32 %v5160, %v5164
        %v5166 = vadd.f32 %v5165, 0.05243302
        %v5167 = vmul.f32 %v5160, %v5166
        %v5168 = vadd.f32 %v5167, 0.18741608
        %v5169 = vmul.f32 %v5160, %v5168
        %v5170 = vadd.f32 %v5169, 1.1283791
        %v5171 = vmul.f32 %v4269, %v5170
        %v5172 = vmul.f32 %v5160, 3.8918573e-05
        %v5173 = vadd.f32 %v5172, 0.001143296
        %v5174 = vmul.f32 %v5160, %v5173
        %v5175 = vadd.f32 %v5174, 0.014752088
        %v5176 = vmul.f32 %v5160, %v5175
        %v5177 = vadd.f32 %v5176, 0.112945676
        %v5178 = vmul.f32 %v5160, %v5177
        %v5179 = vadd.f32 %v5178, 0.4994258
        %v5180 = vmul.f32 %v5160, %v5179
        %v5181 = vadd.f32 %v5180, 1.0
        %v5182 = vrcp.pop %v5181
        %v5183 = vmul.f32 %v5181, %v5182
        %v5184 = vsub.f32 1.0, %v5183
        %v5185 = vmul.f32 %v5182, %v5184
        %v5186 = vadd.f32 %v5182, %v5185
        %vm5187 = vweird.f32 %v5181
        %vm5188 = vweird.f32 %v5182
        %vm5189 = vmor %vm5187, %vm5188
        %v5190 = vsel %vm5189, %v5182, %v5186
        %v5191 = vand.u32 2147483647, %v5181
        %vm5192 = vcmp.eq.f32.partialorder %v5191, 8.507059e+37
        %v5193 = vand.u32 %v5181, 2147483648
        %v5194 = vor.u32 1.1754944e-38, %v5193
        %v5195 = vsel %vm5192, %v5194, %v5190
        %v5196 = vmul.f32 %v5171, %v5195
        %v5197 = vmin.f32 %v5196, 1.0
        %v5198 = vmax.f32 %v5197, -1.0
        %v5199 = vmul.f32 %v4270, %v4270
        %v5200 = vmin.f32 16.0, %v5199
        %v5201 = vmul.f32 %v5200, 2.1237322e-06
        %v5202 = vadd.f32 %v5201, 0.00028619796
        %v5203 = vmul.f32 %v5200, %v5202
        %v5204 = vadd.f32 %v5203, 0.0036580483
        %v5205 = vmul.f32 %v5200, %v5204
        %v5206 = vadd.f32 %v5205, 0.05243302
        %v5207 = vmul.f32 %v5200, %v5206
        %v5208 = vadd.f32 %v5207, 0.18741608
        %v5209 = vmul.f32 %v5200, %v5208
        %v5210 = vadd.f32 %v5209, 1.1283791
        %v5211 = vmul.f32 %v4270, %v5210
        %v5212 = vmul.f32 %v5200, 3.8918573e-05
        %v5213 = vadd.f32 %v5212, 0.001143296
        %v5214 = vmul.f32 %v5200, %v5213
        %v5215 = vadd.f32 %v5214, 0.014752088
        %v5216 = vmul.f32 %v5200, %v5215
        %v5217 = vadd.f32 %v5216, 0.112945676
        %v5218 = vmul.f32 %v5200, %v5217
        %v5219 = vadd.f32 %v5218, 0.4994258
        %v5220 = vmul.f32 %v5200, %v5219
        %v5221 = vadd.f32 %v5220, 1.0
        %v5222 = vrcp.pop %v5221
        %v5223 = vmul.f32 %v5221, %v5222
        %v5224 = vsub.f32 1.0, %v5223
        %v5225 = vmul.f32 %v5222, %v5224
        %v5226 = vadd.f32 %v5222, %v5225
        %vm5227 = vweird.f32 %v5221
        %vm5228 = vweird.f32 %v5222
        %vm5229 = vmor %vm5227, %vm5228
        %v5230 = vsel %vm5229, %v5222, %v5226
        %v5231 = vand.u32 2147483647, %v5221
        %vm5232 = vcmp.eq.f32.partialorder %v5231, 8.507059e+37
        %v5233 = vand.u32 %v5221, 2147483648
        %v5234 = vor.u32 1.1754944e-38, %v5233
        %v5235 = vsel %vm5232, %v5234, %v5230
        %v5236 = vmul.f32 %v5211, %v5235
        %v5237 = vmin.f32 %v5236, 1.0
        %v5238 = vmax.f32 %v5237, -1.0
        %v5239 = vmul.f32 %v4271, %v4271
        %v5240 = vmin.f32 16.0, %v5239
        %v5241 = vmul.f32 %v5240, 2.1237322e-06
        %v5242 = vadd.f32 %v5241, 0.00028619796
        %v5243 = vmul.f32 %v5240, %v5242
        %v5244 = vadd.f32 %v5243, 0.0036580483
        %v5245 = vmul.f32 %v5240, %v5244
        %v5246 = vadd.f32 %v5245, 0.05243302
        %v5247 = vmul.f32 %v5240, %v5246
        %v5248 = vadd.f32 %v5247, 0.18741608
        %v5249 = vmul.f32 %v5240, %v5248
        %v5250 = vadd.f32 %v5249, 1.1283791
        %v5251 = vmul.f32 %v4271, %v5250
        %v5252 = vmul.f32 %v5240, 3.8918573e-05
        %v5253 = vadd.f32 %v5252, 0.001143296
        %v5254 = vmul.f32 %v5240, %v5253
        %v5255 = vadd.f32 %v5254, 0.014752088
        %v5256 = vmul.f32 %v5240, %v5255
        %v5257 = vadd.f32 %v5256, 0.112945676
        %v5258 = vmul.f32 %v5240, %v5257
        %v5259 = vadd.f32 %v5258, 0.4994258
        %v5260 = vmul.f32 %v5240, %v5259
        %v5261 = vadd.f32 %v5260, 1.0
        %v5262 = vrcp.pop %v5261
        %v5263 = vmul.f32 %v5261, %v5262
        %v5264 = vsub.f32 1.0, %v5263
        %v5265 = vmul.f32 %v5262, %v5264
        %v5266 = vadd.f32 %v5262, %v5265
        %vm5267 = vweird.f32 %v5261
        %vm5268 = vweird.f32 %v5262
        %vm5269 = vmor %vm5267, %vm5268
        %v5270 = vsel %vm5269, %v5262, %v5266
        %v5271 = vand.u32 2147483647, %v5261
        %vm5272 = vcmp.eq.f32.partialorder %v5271, 8.507059e+37
        %v5273 = vand.u32 %v5261, 2147483648
        %v5274 = vor.u32 1.1754944e-38, %v5273
        %v5275 = vsel %vm5272, %v5274, %v5270
        %v5276 = vmul.f32 %v5251, %v5275
        %v5277 = vmin.f32 %v5276, 1.0
        %v5278 = vmax.f32 %v5277, -1.0
        %v5279 = vmul.f32 %v4272, %v4272
        %v5280 = vmin.f32 16.0, %v5279
        %v5281 = vmul.f32 %v5280, 2.1237322e-06
        %v5282 = vadd.f32 %v5281, 0.00028619796
        %v5283 = vmul.f32 %v5280, %v5282
        %v5284 = vadd.f32 %v5283, 0.0036580483
        %v5285 = vmul.f32 %v5280, %v5284
        %v5286 = vadd.f32 %v5285, 0.05243302
        %v5287 = vmul.f32 %v5280, %v5286
        %v5288 = vadd.f32 %v5287, 0.18741608
        %v5289 = vmul.f32 %v5280, %v5288
        %v5290 = vadd.f32 %v5289, 1.1283791
        %v5291 = vmul.f32 %v4272, %v5290
        %v5292 = vmul.f32 %v5280, 3.8918573e-05
        %v5293 = vadd.f32 %v5292, 0.001143296
        %v5294 = vmul.f32 %v5280, %v5293
        %v5295 = vadd.f32 %v5294, 0.014752088
        %v5296 = vmul.f32 %v5280, %v5295
        %v5297 = vadd.f32 %v5296, 0.112945676
        %v5298 = vmul.f32 %v5280, %v5297
        %v5299 = vadd.f32 %v5298, 0.4994258
        %v5300 = vmul.f32 %v5280, %v5299
        %v5301 = vadd.f32 %v5300, 1.0
        %v5302 = vrcp.pop %v5301
        %v5303 = vmul.f32 %v5301, %v5302
        %v5304 = vsub.f32 1.0, %v5303
        %v5305 = vmul.f32 %v5302, %v5304
        %v5306 = vadd.f32 %v5302, %v5305
        %vm5307 = vweird.f32 %v5301
        %vm5308 = vweird.f32 %v5302
        %vm5309 = vmor %vm5307, %vm5308
        %v5310 = vsel %vm5309, %v5302, %v5306
        %v5311 = vand.u32 2147483647, %v5301
        %vm5312 = vcmp.eq.f32.partialorder %v5311, 8.507059e+37
        %v5313 = vand.u32 %v5301, 2147483648
        %v5314 = vor.u32 1.1754944e-38, %v5313
        %v5315 = vsel %vm5312, %v5314, %v5310
        %v5316 = vmul.f32 %v5291, %v5315
        %v5317 = vmin.f32 %v5316, 1.0
        %v5318 = vmax.f32 %v5317, -1.0
        %v5319 = vmul.f32 %v4273, %v4273
        %v5320 = vmin.f32 16.0, %v5319
        %v5321 = vmul.f32 %v5320, 2.1237322e-06
        %v5322 = vadd.f32 %v5321, 0.00028619796
        %v5323 = vmul.f32 %v5320, %v5322
        %v5324 = vadd.f32 %v5323, 0.0036580483
        %v5325 = vmul.f32 %v5320, %v5324
        %v5326 = vadd.f32 %v5325, 0.05243302
        %v5327 = vmul.f32 %v5320, %v5326
        %v5328 = vadd.f32 %v5327, 0.18741608
        %v5329 = vmul.f32 %v5320, %v5328
        %v5330 = vadd.f32 %v5329, 1.1283791
        %v5331 = vmul.f32 %v4273, %v5330
        %v5332 = vmul.f32 %v5320, 3.8918573e-05
        %v5333 = vadd.f32 %v5332, 0.001143296
        %v5334 = vmul.f32 %v5320, %v5333
        %v5335 = vadd.f32 %v5334, 0.014752088
        %v5336 = vmul.f32 %v5320, %v5335
        %v5337 = vadd.f32 %v5336, 0.112945676
        %v5338 = vmul.f32 %v5320, %v5337
        %v5339 = vadd.f32 %v5338, 0.4994258
        %v5340 = vmul.f32 %v5320, %v5339
        %v5341 = vadd.f32 %v5340, 1.0
        %v5342 = vrcp.pop %v5341
        %v5343 = vmul.f32 %v5341, %v5342
        %v5344 = vsub.f32 1.0, %v5343
        %v5345 = vmul.f32 %v5342, %v5344
        %v5346 = vadd.f32 %v5342, %v5345
        %vm5347 = vweird.f32 %v5341
        %vm5348 = vweird.f32 %v5342
        %vm5349 = vmor %vm5347, %vm5348
        %v5350 = vsel %vm5349, %v5342, %v5346
        %v5351 = vand.u32 2147483647, %v5341
        %vm5352 = vcmp.eq.f32.partialorder %v5351, 8.507059e+37
        %v5353 = vand.u32 %v5341, 2147483648
        %v5354 = vor.u32 1.1754944e-38, %v5353
        %v5355 = vsel %vm5352, %v5354, %v5350
        %v5356 = vmul.f32 %v5331, %v5355
        %v5357 = vmin.f32 %v5356, 1.0
        %v5358 = vmax.f32 %v5357, -1.0
        %v5359 = vmul.f32 %v4274, %v4274
        %v5360 = vmin.f32 16.0, %v5359
        %v5361 = vmul.f32 %v5360, 2.1237322e-06
        %v5362 = vadd.f32 %v5361, 0.00028619796
        %v5363 = vmul.f32 %v5360, %v5362
        %v5364 = vadd.f32 %v5363, 0.0036580483
        %v5365 = vmul.f32 %v5360, %v5364
        %v5366 = vadd.f32 %v5365, 0.05243302
        %v5367 = vmul.f32 %v5360, %v5366
        %v5368 = vadd.f32 %v5367, 0.18741608
        %v5369 = vmul.f32 %v5360, %v5368
        %v5370 = vadd.f32 %v5369, 1.1283791
        %v5371 = vmul.f32 %v4274, %v5370
        %v5372 = vmul.f32 %v5360, 3.8918573e-05
        %v5373 = vadd.f32 %v5372, 0.001143296
        %v5374 = vmul.f32 %v5360, %v5373
        %v5375 = vadd.f32 %v5374, 0.014752088
        %v5376 = vmul.f32 %v5360, %v5375
        %v5377 = vadd.f32 %v5376, 0.112945676
        %v5378 = vmul.f32 %v5360, %v5377
        %v5379 = vadd.f32 %v5378, 0.4994258
        %v5380 = vmul.f32 %v5360, %v5379
        %v5381 = vadd.f32 %v5380, 1.0
        %v5382 = vrcp.pop %v5381
        %v5383 = vmul.f32 %v5381, %v5382
        %v5384 = vsub.f32 1.0, %v5383
        %v5385 = vmul.f32 %v5382, %v5384
        %v5386 = vadd.f32 %v5382, %v5385
        %vm5387 = vweird.f32 %v5381
        %vm5388 = vweird.f32 %v5382
        %vm5389 = vmor %vm5387, %vm5388
        %v5390 = vsel %vm5389, %v5382, %v5386
        %v5391 = vand.u32 2147483647, %v5381
        %vm5392 = vcmp.eq.f32.partialorder %v5391, 8.507059e+37
        %v5393 = vand.u32 %v5381, 2147483648
        %v5394 = vor.u32 1.1754944e-38, %v5393
        %v5395 = vsel %vm5392, %v5394, %v5390
        %v5396 = vmul.f32 %v5371, %v5395
        %v5397 = vmin.f32 %v5396, 1.0
        %v5398 = vmax.f32 %v5397, -1.0
        %v5399 = vmul.f32 %v4275, %v4275
        %v5400 = vmin.f32 16.0, %v5399
        %v5401 = vmul.f32 %v5400, 2.1237322e-06
        %v5402 = vadd.f32 %v5401, 0.00028619796
        %v5403 = vmul.f32 %v5400, %v5402
        %v5404 = vadd.f32 %v5403, 0.0036580483
        %v5405 = vmul.f32 %v5400, %v5404
        %v5406 = vadd.f32 %v5405, 0.05243302
        %v5407 = vmul.f32 %v5400, %v5406
        %v5408 = vadd.f32 %v5407, 0.18741608
        %v5409 = vmul.f32 %v5400, %v5408
        %v5410 = vadd.f32 %v5409, 1.1283791
        %v5411 = vmul.f32 %v4275, %v5410
        %v5412 = vmul.f32 %v5400, 3.8918573e-05
        %v5413 = vadd.f32 %v5412, 0.001143296
        %v5414 = vmul.f32 %v5400, %v5413
        %v5415 = vadd.f32 %v5414, 0.014752088
        %v5416 = vmul.f32 %v5400, %v5415
        %v5417 = vadd.f32 %v5416, 0.112945676
        %v5418 = vmul.f32 %v5400, %v5417
        %v5419 = vadd.f32 %v5418, 0.4994258
        %v5420 = vmul.f32 %v5400, %v5419
        %v5421 = vadd.f32 %v5420, 1.0
        %v5422 = vrcp.pop %v5421
        %v5423 = vmul.f32 %v5421, %v5422
        %v5424 = vsub.f32 1.0, %v5423
        %v5425 = vmul.f32 %v5422, %v5424
        %v5426 = vadd.f32 %v5422, %v5425
        %vm5427 = vweird.f32 %v5421
        %vm5428 = vweird.f32 %v5422
        %vm5429 = vmor %vm5427, %vm5428
        %v5430 = vsel %vm5429, %v5422, %v5426
        %v5431 = vand.u32 2147483647, %v5421
        %vm5432 = vcmp.eq.f32.partialorder %v5431, 8.507059e+37
        %v5433 = vand.u32 %v5421, 2147483648
        %v5434 = vor.u32 1.1754944e-38, %v5433
        %v5435 = vsel %vm5432, %v5434, %v5430
        %v5436 = vmul.f32 %v5411, %v5435
        %v5437 = vmin.f32 %v5436, 1.0
        %v5438 = vmax.f32 %v5437, -1.0
        %v5439 = vmul.f32 %v4276, %v4276
        %v5440 = vmin.f32 16.0, %v5439
        %v5441 = vmul.f32 %v5440, 2.1237322e-06
        %v5442 = vadd.f32 %v5441, 0.00028619796
        %v5443 = vmul.f32 %v5440, %v5442
        %v5444 = vadd.f32 %v5443, 0.0036580483
        %v5445 = vmul.f32 %v5440, %v5444
        %v5446 = vadd.f32 %v5445, 0.05243302
        %v5447 = vmul.f32 %v5440, %v5446
        %v5448 = vadd.f32 %v5447, 0.18741608
        %v5449 = vmul.f32 %v5440, %v5448
        %v5450 = vadd.f32 %v5449, 1.1283791
        %v5451 = vmul.f32 %v4276, %v5450
        %v5452 = vmul.f32 %v5440, 3.8918573e-05
        %v5453 = vadd.f32 %v5452, 0.001143296
        %v5454 = vmul.f32 %v5440, %v5453
        %v5455 = vadd.f32 %v5454, 0.014752088
        %v5456 = vmul.f32 %v5440, %v5455
        %v5457 = vadd.f32 %v5456, 0.112945676
        %v5458 = vmul.f32 %v5440, %v5457
        %v5459 = vadd.f32 %v5458, 0.4994258
        %v5460 = vmul.f32 %v5440, %v5459
        %v5461 = vadd.f32 %v5460, 1.0
        %v5462 = vrcp.pop %v5461
        %v5463 = vmul.f32 %v5461, %v5462
        %v5464 = vsub.f32 1.0, %v5463
        %v5465 = vmul.f32 %v5462, %v5464
        %v5466 = vadd.f32 %v5462, %v5465
        %vm5467 = vweird.f32 %v5461
        %vm5468 = vweird.f32 %v5462
        %vm5469 = vmor %vm5467, %vm5468
        %v5470 = vsel %vm5469, %v5462, %v5466
        %v5471 = vand.u32 2147483647, %v5461
        %vm5472 = vcmp.eq.f32.partialorder %v5471, 8.507059e+37
        %v5473 = vand.u32 %v5461, 2147483648
        %v5474 = vor.u32 1.1754944e-38, %v5473
        %v5475 = vsel %vm5472, %v5474, %v5470
        %v5476 = vmul.f32 %v5451, %v5475
        %v5477 = vmin.f32 %v5476, 1.0
        %v5478 = vmax.f32 %v5477, -1.0
        %v5479 = vmul.f32 %v4277, %v4277
        %v5480 = vmin.f32 16.0, %v5479
        %v5481 = vmul.f32 %v5480, 2.1237322e-06
        %v5482 = vadd.f32 %v5481, 0.00028619796
        %v5483 = vmul.f32 %v5480, %v5482
        %v5484 = vadd.f32 %v5483, 0.0036580483
        %v5485 = vmul.f32 %v5480, %v5484
        %v5486 = vadd.f32 %v5485, 0.05243302
        %v5487 = vmul.f32 %v5480, %v5486
        %v5488 = vadd.f32 %v5487, 0.18741608
        %v5489 = vmul.f32 %v5480, %v5488
        %v5490 = vadd.f32 %v5489, 1.1283791
        %v5491 = vmul.f32 %v4277, %v5490
        %v5492 = vmul.f32 %v5480, 3.8918573e-05
        %v5493 = vadd.f32 %v5492, 0.001143296
        %v5494 = vmul.f32 %v5480, %v5493
        %v5495 = vadd.f32 %v5494, 0.014752088
        %v5496 = vmul.f32 %v5480, %v5495
        %v5497 = vadd.f32 %v5496, 0.112945676
        %v5498 = vmul.f32 %v5480, %v5497
        %v5499 = vadd.f32 %v5498, 0.4994258
        %v5500 = vmul.f32 %v5480, %v5499
        %v5501 = vadd.f32 %v5500, 1.0
        %v5502 = vrcp.pop %v5501
        %v5503 = vmul.f32 %v5501, %v5502
        %v5504 = vsub.f32 1.0, %v5503
        %v5505 = vmul.f32 %v5502, %v5504
        %v5506 = vadd.f32 %v5502, %v5505
        %vm5507 = vweird.f32 %v5501
        %vm5508 = vweird.f32 %v5502
        %vm5509 = vmor %vm5507, %vm5508
        %v5510 = vsel %vm5509, %v5502, %v5506
        %v5511 = vand.u32 2147483647, %v5501
        %vm5512 = vcmp.eq.f32.partialorder %v5511, 8.507059e+37
        %v5513 = vand.u32 %v5501, 2147483648
        %v5514 = vor.u32 1.1754944e-38, %v5513
        %v5515 = vsel %vm5512, %v5514, %v5510
        %v5516 = vmul.f32 %v5491, %v5515
        %v5517 = vmin.f32 %v5516, 1.0
        %v5518 = vmax.f32 %v5517, -1.0
        %v5519 = vmul.f32 %v4278, %v4278
        %v5520 = vmin.f32 16.0, %v5519
        %v5521 = vmul.f32 %v5520, 2.1237322e-06
        %v5522 = vadd.f32 %v5521, 0.00028619796
        %v5523 = vmul.f32 %v5520, %v5522
        %v5524 = vadd.f32 %v5523, 0.0036580483
        %v5525 = vmul.f32 %v5520, %v5524
        %v5526 = vadd.f32 %v5525, 0.05243302
        %v5527 = vmul.f32 %v5520, %v5526
        %v5528 = vadd.f32 %v5527, 0.18741608
        %v5529 = vmul.f32 %v5520, %v5528
        %v5530 = vadd.f32 %v5529, 1.1283791
        %v5531 = vmul.f32 %v4278, %v5530
        %v5532 = vmul.f32 %v5520, 3.8918573e-05
        %v5533 = vadd.f32 %v5532, 0.001143296
        %v5534 = vmul.f32 %v5520, %v5533
        %v5535 = vadd.f32 %v5534, 0.014752088
        %v5536 = vmul.f32 %v5520, %v5535
        %v5537 = vadd.f32 %v5536, 0.112945676
        %v5538 = vmul.f32 %v5520, %v5537
        %v5539 = vadd.f32 %v5538, 0.4994258
        %v5540 = vmul.f32 %v5520, %v5539
        %v5541 = vadd.f32 %v5540, 1.0
        %v5542 = vrcp.pop %v5541
        %v5543 = vmul.f32 %v5541, %v5542
        %v5544 = vsub.f32 1.0, %v5543
        %v5545 = vmul.f32 %v5542, %v5544
        %v5546 = vadd.f32 %v5542, %v5545
        %vm5547 = vweird.f32 %v5541
        %vm5548 = vweird.f32 %v5542
        %vm5549 = vmor %vm5547, %vm5548
        %v5550 = vsel %vm5549, %v5542, %v5546
        %v5551 = vand.u32 2147483647, %v5541
        %vm5552 = vcmp.eq.f32.partialorder %v5551, 8.507059e+37
        %v5553 = vand.u32 %v5541, 2147483648
        %v5554 = vor.u32 1.1754944e-38, %v5553
        %v5555 = vsel %vm5552, %v5554, %v5550
        %v5556 = vmul.f32 %v5531, %v5555
        %v5557 = vmin.f32 %v5556, 1.0
        %v5558 = vmax.f32 %v5557, -1.0
        %v5559 = vadd.f32 %v4318, 1.0
        %v5560 = vadd.f32 %v4358, 1.0
        %v5561 = vadd.f32 %v4398, 1.0
        %v5562 = vadd.f32 %v4438, 1.0
        %v5563 = vadd.f32 %v4478, 1.0
        %v5564 = vadd.f32 %v4518, 1.0
        %v5565 = vadd.f32 %v4558, 1.0
        %v5566 = vadd.f32 %v4598, 1.0
        %v5567 = vadd.f32 %v4638, 1.0
        %v5568 = vadd.f32 %v4678, 1.0
        %v5569 = vadd.f32 %v4718, 1.0
        %v5570 = vadd.f32 %v4758, 1.0
        %v5571 = vadd.f32 %v4798, 1.0
        %v5572 = vadd.f32 %v4838, 1.0
        %v5573 = vadd.f32 %v4878, 1.0
        %v5574 = vadd.f32 %v4918, 1.0
        %v5575 = vadd.f32 %v4958, 1.0
        %v5576 = vadd.f32 %v4998, 1.0
        %v5577 = vadd.f32 %v5038, 1.0
        %v5578 = vadd.f32 %v5078, 1.0
        %v5579 = vadd.f32 %v5118, 1.0
        %v5580 = vadd.f32 %v5158, 1.0
        %v5581 = vadd.f32 %v5198, 1.0
        %v5582 = vadd.f32 %v5238, 1.0
        %v5583 = vadd.f32 %v5278, 1.0
        %v5584 = vadd.f32 %v5318, 1.0
        %v5585 = vadd.f32 %v5358, 1.0
        %v5586 = vadd.f32 %v5398, 1.0
        %v5587 = vadd.f32 %v5438, 1.0
        %v5588 = vadd.f32 %v5478, 1.0
        %v5589 = vadd.f32 %v5518, 1.0
        %v5590 = vadd.f32 %v5558, 1.0
        %v5591 = vmul.f32 %v4215, %v5559
        %v5592 = vmul.f32 %v4216, %v5560
        %v5593 = vmul.f32 %v4217, %v5561
        %v5594 = vmul.f32 %v4218, %v5562
        %v5595 = vmul.f32 %v4219, %v5563
        %v5596 = vmul.f32 %v4220, %v5564
        %v5597 = vmul.f32 %v4221, %v5565
        %v5598 = vmul.f32 %v4222, %v5566
        %v5599 = vmul.f32 %v4223, %v5567
        %v5600 = vmul.f32 %v4224, %v5568
        %v5601 = vmul.f32 %v4225, %v5569
        %v5602 = vmul.f32 %v4226, %v5570
        %v5603 = vmul.f32 %v4227, %v5571
        %v5604 = vmul.f32 %v4228, %v5572
        %v5605 = vmul.f32 %v4229, %v5573
        %v5606 = vmul.f32 %v4230, %v5574
        %v5607 = vmul.f32 %v4231, %v5575
        %v5608 = vmul.f32 %v4232, %v5576
        %v5609 = vmul.f32 %v4233, %v5577
        %v5610 = vmul.f32 %v4234, %v5578
        %v5611 = vmul.f32 %v4235, %v5579
        %v5612 = vmul.f32 %v4236, %v5580
        %v5613 = vmul.f32 %v4237, %v5581
        %v5614 = vmul.f32 %v4238, %v5582
        %v5615 = vmul.f32 %v4239, %v5583
        %v5616 = vmul.f32 %v4240, %v5584
        %v5617 = vmul.f32 %v4241, %v5585
        %v5618 = vmul.f32 %v4242, %v5586
        %v5619 = vmul.f32 %v4243, %v5587
        %v5620 = vmul.f32 %v4244, %v5588
        %v5621 = vmul.f32 %v4245, %v5589
        %v5622 = vmul.f32 %v4246, %v5590
        %v5623 = vpack.c.bf16 %v5593, %v5591
        %v5624 = vpack.c.bf16 %v5594, %v5592
        %v5625 = vpack.c.bf16 %v5597, %v5595
        %v5626 = vpack.c.bf16 %v5598, %v5596
        %v5627 = vpack.c.bf16 %v5601, %v5599
        %v5628 = vpack.c.bf16 %v5602, %v5600
        %v5629 = vpack.c.bf16 %v5605, %v5603
        %v5630 = vpack.c.bf16 %v5606, %v5604
        %v5631 = vpack.c.bf16 %v5609, %v5607
        %v5632 = vpack.c.bf16 %v5610, %v5608
        %v5633 = vpack.c.bf16 %v5613, %v5611
        %v5634 = vpack.c.bf16 %v5614, %v5612
        %v5635 = vpack.c.bf16 %v5617, %v5615
        %v5636 = vpack.c.bf16 %v5618, %v5616
        %v5637 = vpack.c.bf16 %v5621, %v5619
        %v5638 = vpack.c.bf16 %v5622, %v5620
        %v5639 = vld [vmem:[%s860] sm:$0xf]
        %v5640 = vld [vmem:[%s860 + $0x4] sm:$0xf]
        %v5641 = vld [vmem:[%s860 + $0x8] sm:$0xf]
        %v5642 = vld [vmem:[%s860 + $0xc] sm:$0xf]
        %v5643 = vld [vmem:[%s860 + $0x10] sm:$0xf]
        %v5644 = vld [vmem:[%s860 + $0x14] sm:$0xf]
        %v5645 = vld [vmem:[%s860 + $0x18] sm:$0xf]
        %v5646 = vld [vmem:[%s860 + $0x1c] sm:$0xf]
        %v5647 = vld [vmem:[%s860 + $0x20] sm:$0xf]
        %v5648 = vld [vmem:[%s860 + $0x24] sm:$0xf]
        %v5649 = vld [vmem:[%s860 + $0x28] sm:$0xf]
        %v5650 = vld [vmem:[%s860 + $0x2c] sm:$0xf]
        %v5651 = vld [vmem:[%s860 + $0x30] sm:$0xf]
        %v5652 = vld [vmem:[%s860 + $0x34] sm:$0xf]
        %v5653 = vld [vmem:[%s860 + $0x38] sm:$0xf]
        %v5654 = vld [vmem:[%s860 + $0x3c] sm:$0xf]
        %v5655 = vld [vmem:[%s860 + $0x40] sm:$0xf]
        %v5656 = vld [vmem:[%s860 + $0x44] sm:$0xf]
        %v5657 = vld [vmem:[%s860 + $0x48] sm:$0xf]
        %v5658 = vld [vmem:[%s860 + $0x4c] sm:$0xf]
        %v5659 = vld [vmem:[%s860 + $0x50] sm:$0xf]
        %v5660 = vld [vmem:[%s860 + $0x54] sm:$0xf]
        %v5661 = vld [vmem:[%s860 + $0x58] sm:$0xf]
        %v5662 = vld [vmem:[%s860 + $0x5c] sm:$0xf]
        %v5663 = vld [vmem:[%s860 + $0x60] sm:$0xf]
        %v5664 = vld [vmem:[%s860 + $0x64] sm:$0xf]
        %v5665 = vld [vmem:[%s860 + $0x68] sm:$0xf]
        %v5666 = vld [vmem:[%s860 + $0x6c] sm:$0xf]
        %v5667 = vld [vmem:[%s860 + $0x70] sm:$0xf]
        %v5668 = vld [vmem:[%s860 + $0x74] sm:$0xf]
        %v5669 = vld [vmem:[%s860 + $0x78] sm:$0xf]
        %v5670 = vld [vmem:[%s860 + $0x7c] sm:$0xf]
        %v5671 = vld [vmem:[%s863] sm:$0x1]
        %v5673 = vperm.slane %v5671, 0
        %v5707 = vunpack.c.l.b16 %v5639
        %v5708 = vunpack.c.l.b16 %v5640
        %v5709 = vunpack.c.l.b16 %v5641
        %v5710 = vunpack.c.l.b16 %v5642
        %v5711 = vunpack.c.l.b16 %v5643
        %v5712 = vunpack.c.l.b16 %v5644
        %v5713 = vunpack.c.l.b16 %v5645
        %v5714 = vunpack.c.l.b16 %v5646
        %v5715 = vunpack.c.l.b16 %v5647
        %v5716 = vunpack.c.l.b16 %v5648
        %v5717 = vunpack.c.l.b16 %v5649
        %v5718 = vunpack.c.l.b16 %v5650
        %v5719 = vunpack.c.l.b16 %v5651
        %v5720 = vunpack.c.l.b16 %v5652
        %v5721 = vunpack.c.l.b16 %v5653
        %v5722 = vunpack.c.l.b16 %v5654
        %v5723 = vunpack.c.l.b16 %v5655
        %v5724 = vunpack.c.l.b16 %v5656
        %v5725 = vunpack.c.l.b16 %v5657
        %v5726 = vunpack.c.l.b16 %v5658
        %v5727 = vunpack.c.l.b16 %v5659
        %v5728 = vunpack.c.l.b16 %v5660
        %v5729 = vunpack.c.l.b16 %v5661
        %v5730 = vunpack.c.l.b16 %v5662
        %v5731 = vunpack.c.l.b16 %v5663
        %v5732 = vunpack.c.l.b16 %v5664
        %v5733 = vunpack.c.l.b16 %v5665
        %v5734 = vunpack.c.l.b16 %v5666
        %v5735 = vunpack.c.l.b16 %v5667
        %v5736 = vunpack.c.l.b16 %v5668
        %v5737 = vunpack.c.l.b16 %v5669
        %v5738 = vunpack.c.l.b16 %v5670
        %v5739 = vpack.c.b16 %v5708, %v5707
        %v5740 = vpack.c.b16 %v5710, %v5709
        %v5741 = vpack.c.b16 %v5712, %v5711
        %v5742 = vpack.c.b16 %v5714, %v5713
        %v5743 = vpack.c.b16 %v5716, %v5715
        %v5744 = vpack.c.b16 %v5718, %v5717
        %v5745 = vpack.c.b16 %v5720, %v5719
        %v5746 = vpack.c.b16 %v5722, %v5721
        %v5747 = vpack.c.b16 %v5724, %v5723
        %v5748 = vpack.c.b16 %v5726, %v5725
        %v5749 = vpack.c.b16 %v5728, %v5727
        %v5750 = vpack.c.b16 %v5730, %v5729
        %v5751 = vpack.c.b16 %v5732, %v5731
        %v5752 = vpack.c.b16 %v5734, %v5733
        %v5753 = vpack.c.b16 %v5736, %v5735
        %v5754 = vpack.c.b16 %v5738, %v5737
        %5771 = vmatpush.bf16.msra.mxu0 %v5746
        %5772 = vmatpush.bf16.msra.mxu0 %v5745
        %5773 = vmatpush.bf16.msra.mxu0 %v5744
        %5774 = vmatpush.bf16.msra.mxu0 %v5743
        %5775 = vmatpush.bf16.msra.mxu0 %v5742
        %5776 = vmatpush.bf16.msra.mxu0 %v5741
        %5777 = vmatpush.bf16.msra.mxu0 %v5740
        %5778 = vmatpush.bf16.msra.mxu0 %v5739
        %5779 = vmatmul.bf16.gmra.mxu0 %v5623
        %v5780 = vpop.f32.mrf.mxu0
        %v5781 = vadd.f32 %v5673, %v5780
        %v5782 = vpop.f32.mrf.mxu0
        %v5783 = vadd.f32 %v5673, %v5782
        %5784 = vmatmul.bf16.gmra.mxu0 %v5625
        %v5785 = vpop.f32.mrf.mxu0
        %v5786 = vadd.f32 %v5673, %v5785
        %v5787 = vpop.f32.mrf.mxu0
        %v5788 = vadd.f32 %v5673, %v5787
        %5789 = vmatmul.bf16.gmra.mxu0 %v5627
        %v5790 = vpop.f32.mrf.mxu0
        %v5791 = vadd.f32 %v5673, %v5790
        %v5792 = vpop.f32.mrf.mxu0
        %v5793 = vadd.f32 %v5673, %v5792
        %5794 = vmatmul.bf16.gmra.mxu0 %v5629
        %v5795 = vpop.f32.mrf.mxu0
        %v5796 = vadd.f32 %v5673, %v5795
        %v5797 = vpop.f32.mrf.mxu0
        %v5798 = vadd.f32 %v5673, %v5797
        %5799 = vmatmul.bf16.gmra.mxu0 %v5631
        %v5800 = vpop.f32.mrf.mxu0
        %v5801 = vadd.f32 %v5673, %v5800
        %v5802 = vpop.f32.mrf.mxu0
        %v5803 = vadd.f32 %v5673, %v5802
        %5804 = vmatmul.bf16.gmra.mxu0 %v5633
        %v5805 = vpop.f32.mrf.mxu0
        %v5806 = vadd.f32 %v5673, %v5805
        %v5807 = vpop.f32.mrf.mxu0
        %v5808 = vadd.f32 %v5673, %v5807
        %5809 = vmatmul.bf16.gmra.mxu0 %v5635
        %v5810 = vpop.f32.mrf.mxu0
        %v5811 = vadd.f32 %v5673, %v5810
        %v5812 = vpop.f32.mrf.mxu0
        %v5813 = vadd.f32 %v5673, %v5812
        %5814 = vmatmul.bf16.gmra.mxu0 %v5637
        %v5815 = vpop.f32.mrf.mxu0
        %v5816 = vadd.f32 %v5673, %v5815
        %v5817 = vpop.f32.mrf.mxu0
        %v5818 = vadd.f32 %v5673, %v5817
        %5819 = vdwg.mxu0
        %5820 = vmatpush.bf16.msra.mxu0 %v5754
        %5821 = vmatpush.bf16.msra.mxu0 %v5753
        %5822 = vmatpush.bf16.msra.mxu0 %v5752
        %5823 = vmatpush.bf16.msra.mxu0 %v5751
        %5824 = vmatpush.bf16.msra.mxu0 %v5750
        %5825 = vmatpush.bf16.msra.mxu0 %v5749
        %5826 = vmatpush.bf16.msra.mxu0 %v5748
        %5827 = vmatpush.bf16.msra.mxu0 %v5747
        %5828 = vmatmul.bf16.gmra.mxu0 %v5624
        %v5829 = vpop.f32.mrf.mxu0
        %v5830 = vadd.f32 %v5781, %v5829
        %v5831 = vpop.f32.mrf.mxu0
        %v5832 = vadd.f32 %v5783, %v5831
        %5833 = vmatmul.bf16.gmra.mxu0 %v5626
        %v5834 = vpop.f32.mrf.mxu0
        %v5835 = vadd.f32 %v5786, %v5834
        %v5836 = vpop.f32.mrf.mxu0
        %v5837 = vadd.f32 %v5788, %v5836
        %5838 = vmatmul.bf16.gmra.mxu0 %v5628
        %v5839 = vpop.f32.mrf.mxu0
        %v5840 = vadd.f32 %v5791, %v5839
        %v5841 = vpop.f32.mrf.mxu0
        %v5842 = vadd.f32 %v5793, %v5841
        %5843 = vmatmul.bf16.gmra.mxu0 %v5630
        %v5844 = vpop.f32.mrf.mxu0
        %v5845 = vadd.f32 %v5796, %v5844
        %v5846 = vpop.f32.mrf.mxu0
        %v5847 = vadd.f32 %v5798, %v5846
        %5848 = vmatmul.bf16.gmra.mxu0 %v5632
        %v5849 = vpop.f32.mrf.mxu0
        %v5850 = vadd.f32 %v5801, %v5849
        %v5851 = vpop.f32.mrf.mxu0
        %v5852 = vadd.f32 %v5803, %v5851
        %5853 = vmatmul.bf16.gmra.mxu0 %v5634
        %v5854 = vpop.f32.mrf.mxu0
        %v5855 = vadd.f32 %v5806, %v5854
        %v5856 = vpop.f32.mrf.mxu0
        %v5857 = vadd.f32 %v5808, %v5856
        %5858 = vmatmul.bf16.gmra.mxu0 %v5636
        %v5859 = vpop.f32.mrf.mxu0
        %v5860 = vadd.f32 %v5811, %v5859
        %v5861 = vpop.f32.mrf.mxu0
        %v5862 = vadd.f32 %v5813, %v5861
        %5863 = vmatmul.bf16.gmra.mxu0 %v5638
        %v5864 = vpop.f32.mrf.mxu0
        %v5865 = vadd.f32 %v5816, %v5864
        %v5866 = vpop.f32.mrf.mxu0
        %v5867 = vadd.f32 %v5818, %v5866
        %5868 = vdwg.mxu0
        %v5869 = vadd.f32 %v3623, %v5830
        %v5870 = vadd.f32 %v3624, %v5832
        %v5871 = vadd.f32 %v3625, %v5835
        %v5872 = vadd.f32 %v3626, %v5837
        %v5873 = vadd.f32 %v3627, %v5840
        %v5874 = vadd.f32 %v3628, %v5842
        %v5875 = vadd.f32 %v3629, %v5845
        %v5876 = vadd.f32 %v3630, %v5847
        %v5877 = vadd.f32 %v3631, %v5850
        %v5878 = vadd.f32 %v3632, %v5852
        %v5879 = vadd.f32 %v3633, %v5855
        %v5880 = vadd.f32 %v3634, %v5857
        %v5881 = vadd.f32 %v3635, %v5860
        %v5882 = vadd.f32 %v3636, %v5862
        %v5883 = vadd.f32 %v3637, %v5865
        %v5884 = vadd.f32 %v3638, %v5867
        %5885 = vst.msk [vmem:[#allocation2] sm:$0xff] %vm1072, %v5869
        %5886 = vst.msk [vmem:[#allocation2 + $0x8] sm:$0xff] %vm1072, %v5870
        %5887 = vst.msk [vmem:[#allocation2 + $0x10] sm:$0xff] %vm1072, %v5871
        %5888 = vst.msk [vmem:[#allocation2 + $0x18] sm:$0xff] %vm1072, %v5872
        %5889 = vst.msk [vmem:[#allocation2 + $0x20] sm:$0xff] %vm1072, %v5873
        %5890 = vst.msk [vmem:[#allocation2 + $0x28] sm:$0xff] %vm1072, %v5874
        %5891 = vst.msk [vmem:[#allocation2 + $0x30] sm:$0xff] %vm1072, %v5875
        %5892 = vst.msk [vmem:[#allocation2 + $0x38] sm:$0xff] %vm1072, %v5876
        %5893 = vst.msk [vmem:[#allocation2 + $0x40] sm:$0xff] %vm1072, %v5877
        %5894 = vst.msk [vmem:[#allocation2 + $0x48] sm:$0xff] %vm1072, %v5878
        %5895 = vst.msk [vmem:[#allocation2 + $0x50] sm:$0xff] %vm1072, %v5879
        %5896 = vst.msk [vmem:[#allocation2 + $0x58] sm:$0xff] %vm1072, %v5880
        %5897 = vst.msk [vmem:[#allocation2 + $0x60] sm:$0xff] %vm1072, %v5881
        %5898 = vst.msk [vmem:[#allocation2 + $0x68] sm:$0xff] %vm1072, %v5882
        %5899 = vst.msk [vmem:[#allocation2 + $0x70] sm:$0xff] %vm1072, %v5883
        %5900 = vst.msk [vmem:[#allocation2 + $0x78] sm:$0xff] %vm1072, %v5884
        %p5901 = scmp.eq.s32.totalorder %s40, 1
        // Predicated region
        $region109: #{my_passt_forward.3} parent=103 // pred_check
          %p5902 = pneg %p5901
        $region110: #{my_passt_forward.3} parent=103 // pred_check_branch
          %5904 = sbr.rel (%p5902) target = $region112
        $region111: #{my_passt_forward.3} parent=103 // pred_region
          %v5905 = vld [vmem:[%s17] sm:$0x1]
          %v5906 = vld [vmem:[%s18] sm:$0x1]
          %vm5907 = vcmask 517120
          %v5908 = vsel %vm5907, %v5869, 0.0
          %5909 = vadd.xlane.f32.xlu0 %v5908
          %v5910 = vpop.xlane.xlu0 %5909
          %v5911 = vmul.f32 %v5910, %v1127
          %v5912 = vsub.f32 %v5869, %v5911
          %v5913 = vmul.f32 %v5912, %v5912
          %v5914 = vsel %vm5907, %v5913, 0.0
          %5915 = vadd.xlane.f32.xlu0 %v5914
          %v5916 = vpop.xlane.xlu0 %5915
          %v5917 = vmul.f32 %v5916, %v1127
          %v5918 = vadd.f32 %v5917, 1e-06
          %v5919 = vrsqrt.pop %v5918
          %v5920 = vmul.f32 %v5919, %v5918
          %v5921 = vmul.f32 %v5920, %v5919
          %v5922 = vmul.f32 0.5, %v5921
          %v5923 = vsub.f32 1.5, %v5922
          %v5924 = vmul.f32 %v5919, %v5923
          %vm5925 = vweird.f32 %v5918
          %vm5926 = vweird.f32 %v5919
          %vm5927 = vmor %vm5925, %vm5926
          %v5928 = vsel %vm5927, %v5919, %v5924
          %v5929 = vmul.f32 %v5912, %v5928
          %v5931 = vperm.slane %v5905, 0
          %v5933 = vmul.f32 %v5929, %v5931
          %v5935 = vperm.slane %v5906, 0
          %v5937 = vadd.f32 %v5933, %v5935
          %v5939 = vrot.slane %v5937, 1
          %v5941 = vadd.f32 %v5937, %v5939
          %v5942 = vmul.f32 %v5941, 0.5
          %v5943 = vpack.c.bf16 %v5942, %v5942
          %v5944 = vld [vmem:[%s19] sm:$0xf]
          %v5945 = vld [vmem:[%s19 + $0x4] sm:$0xf]
          %v5946 = vld [vmem:[%s19 + $0x8] sm:$0xf]
          %v5947 = vld [vmem:[%s19 + $0xc] sm:$0xf]
          %v5948 = vld [vmem:[%s19 + $0x10] sm:$0xf]
          %v5949 = vld [vmem:[%s19 + $0x14] sm:$0xf]
          %v5950 = vld [vmem:[%s19 + $0x18] sm:$0xf]
          %v5951 = vld [vmem:[%s19 + $0x1c] sm:$0xf]
          %v5952 = vld [vmem:[%s20] sm:$0x1]
          %v5961 = vunpack.c.l.b16 %v5944
          %v5962 = vunpack.c.l.b16 %v5945
          %v5963 = vunpack.c.l.b16 %v5946
          %v5964 = vunpack.c.l.b16 %v5947
          %v5965 = vunpack.c.l.b16 %v5948
          %v5966 = vunpack.c.l.b16 %v5949
          %v5967 = vunpack.c.l.b16 %v5950
          %v5968 = vunpack.c.l.b16 %v5951
          %v5969 = vpack.c.b16 %v5962, %v5961
          %v5970 = vpack.c.b16 %v5964, %v5963
          %v5971 = vpack.c.b16 %v5966, %v5965
          %v5972 = vpack.c.b16 %v5968, %v5967
          %v5978 = vsel %vm1072, %v5943, 0
          %5980 = vmatpush.bf16.msra.mxu0 0
          %5981 = vmatpush.bf16.msra.mxu0 0
          %5982 = vmatpush.bf16.msra.mxu0 0
          %5983 = vmatpush.bf16.msra.mxu0 0
          %5984 = vmatpush.bf16.msra.mxu0 %v5972
          %5985 = vmatpush.bf16.msra.mxu0 %v5971
          %5986 = vmatpush.bf16.msra.mxu0 %v5970
          %5987 = vmatpush.bf16.msra.mxu0 %v5969
          %5988 = vmatmul.bf16.gmra.mxu0 %v5978
          %v5989 = vpop.f32.mrf.mxu0
          %v5990 = vadd.f32 %v5952, %v5989
          %v5991 = vpop.f32.mrf.mxu0
          %5992 = vdwg.mxu0
          %vm5993 = vcmask 253952
          %5994 = vst.msk [vmem:[%s812] sm:$0x1] %vm5993, %v5990
        $region112: #{my_passt_forward.3} parent=103 // pred_fallthru
          _
        %s5995 = sand.u32 %s561, 1
        %s5996 = scalar_lea.sflag [#allocation5], %s5995
        %s5997 = sand.u32 %s561, 1
        %s5998 = scalar_lea.vmem [#allocation4], %s5997
        // Predicated region
        $region113: #{my_passt_forward.3} parent=103 // pred_check
          %p5999 = pneg %p571
        $region114: #{my_passt_forward.3} parent=103 // pred_check_branch
          %6001 = sbr.rel (%p5999) target = $region116
        $region115: #{my_passt_forward.3} parent=103 // pred_region
          %6003 = vsyncadd %s5996, 0
          %s6004 = scalar_lea.hbm %s21, %s39
          %s6006 = sshll.u32 %s5998, 4
          %s6007 = int_to_ptr.vmem [resolvable:$true] %s6006
          %s6008 = sshll.u32 %s6004, 4
          %s6009 = int_to_ptr.hbm [resolvable:$true] %s6008
          %6011 = dma.vmem_to_hbm [thread:$0]  %s6007, 16, %s6009, %s5996
        $region116: #{my_passt_forward.3} parent=103 // pred_fallthru
          _
      $region104: #{my_passt_forward.3} parent=5 // pred_fallthru
        _
      %p6012 = scmp.le.s32.totalorder 2, %s30
      // Predicated region
      $region117: #{my_passt_forward.3} parent=5 // pred_check
        %p6013 = pneg %p6012
      $region118: #{my_passt_forward.3} parent=5 // pred_check_branch
        %6015 = sbr.rel (%p6013) target = $region120
      $region119: #{my_passt_forward.3} parent=5 // pred_region
        %s6016 = ssub.s32 %s30, 2
        // Predicated region
        $region121: #{my_passt_forward.3} parent=119 // pred_check
          %p6017 = pneg %p577
        $region122: #{my_passt_forward.3} parent=119 // pred_check_branch
          %6019 = sbr.rel (%p6017) target = $region124
        $region123: #{my_passt_forward.3} parent=119 // pred_region
          %s6020 = sand.u32 %s562, 1
          %s6021 = scalar_lea.sflag [#allocation5], %s6020
          %s6022 = sand.u32 %s562, 1
          %s6023 = scalar_lea.vmem [#allocation4], %s6022
          %6025 = dma.done %s6021, 16
        $region124: #{my_passt_forward.3} parent=119 // pred_fallthru
          _
      $region120: #{my_passt_forward.3} parent=5 // pred_fallthru
        _
    $region6: #{my_passt_forward.3} parent=1 // loop_footer
      %s34 = sadd.s32 1, %s30
    $region7: #{my_passt_forward.3} parent=1 // loop_footer_branch
      %29 = sbr.rel target = $region3
    $region8: #{my_passt_forward.3} parent=1 // loop_exit
      _
    %6026 = vsyncpa [#allocation5], 1
    %s6027 = scalar_lea.sflag [#allocation5], 1
    %6028 = vsyncpa %s6027, 1

</llo_original>
